<compile_context>
chip_gen: v6e
topology: v6e:2x2x1
jax: 0.10.0
libtpu: 0.0.40
codegen_flags: <defaults>
</compile_context>

<pallas_src>
import functools

import numpy as np
import jax
import jax.numpy as jnp
from jax import lax
from jax.experimental import pallas as pl
from jax.experimental.pallas import tpu as pltpu

KMAX = 7            # largest depthwise kernel; 5x5 / 3x3 / identity folded in
PAD = KMAX // 2     # 'same' padding for the 7x7 window
LANES = 128         # TPU lane width; channel blocking size


def _pick_row_block(H, W):
    """Output rows computed per inner step (band slices shared across them)."""
    w_vregs = (W + 7) // 8                 # f32 vregs per (W, 128) row
    max_r = max(1, 32 // w_vregs)          # keep accumulators <= ~32 vregs
    for r in (8, 4, 2):
        if r <= max_r and H % r == 0:
            return r
    return 1


def _pick_copy_chunk(H, W):
    """Image rows per (misaligned +1-offset) token-slab read when filling scratch."""
    if W % 8 != 0:
        return 1
    max_c = max(1, 256 // W)               # keep the staged slab <= ~32 vregs
    for c in (8, 4, 2):
        if c <= max_c and H % c == 0:
            return c
    return 1


def _make_ppeg_kernel(H, W, CB, R, CCHUNK):
    Wp = W + 2 * PAD
    f32 = jnp.float32

    def kernel(x_ref, w_ref, b_ref, out_ref, xp_ref, wsp_ref):
        # x_ref  : (1, 1+H*W, CB) tokens (row 0 = cls) for one batch / C-block
        # w_ref  : (7, 7, CB)     folded depthwise filter
        # b_ref  : (1, CB)        folded bias
        # out_ref: (1, 1+H*W, CB)
        # xp_ref : (H+6, W+6, CB) f32 zero-padded feature scratch (VMEM)
        # wsp_ref: (49, W, CB)    f32 pre-splat (full-row-width) taps (VMEM)

        # cls token passes through untouched.
        out_ref[0, 0:1, :] = x_ref[0, 0:1, :]

        # Halo zeroing: only the 3 top / 3 bottom padded rows here; the 3-column
        # left/right strips are zeroed inside the copy loop.  The interior is
        # fully rewritten every grid step, so no stale data can leak in.
        zero_row = jnp.zeros((Wp, CB), f32)
        for i in range(PAD):
            xp_ref[i] = zero_row
            xp_ref[H + PAD + i] = zero_row

        # Pre-splat the 49 folded taps to full row width once per grid step so
        # the row loop never re-broadcasts weights (JAX does not CSE
        # broadcast_in_dim inside a fori body).
        wf = w_ref[...].astype(f32)                        # (7, 7, CB)
        for dh in range(KMAX):
            for dw in range(KMAX):
                wsp_ref[dh * KMAX + dw] = jnp.broadcast_to(
                    wf[dh, dw:dw + 1, :], (W, CB))
        bias = b_ref[...].astype(f32)                      # (1, CB)

        # Fill the padded feature scratch.  Token rows are read CCHUNK image
        # rows per load so the +1 cls-offset realignment is paid once per chunk.
        zero_cols = jnp.zeros((PAD, CB), f32)

        def copy_body(c, carry):
            c0 = c * CCHUNK
            rows = x_ref[0, pl.ds(1 + c0 * W, CCHUNK * W), :].astype(f32)
            for j in range(CCHUNK):
                p = c0 + PAD + j
                xp_ref[p, 0:PAD, :] = zero_cols
                xp_ref[p, PAD + W:Wp, :] = zero_cols
                xp_ref[p, pl.ds(PAD, W), :] = rows[j * W:(j + 1) * W, :]
            return carry

        lax.fori_loop(0, H // CCHUNK, copy_body, 0)

        # Row-blocked convolution: R output rows per step share each padded band
        # row, so each band is loaded once and each dw-shifted slice (the
        # expensive sublane realignment) is reused by up to R output rows.
        # This also gives the scheduler a wide block to overlap loads/stores
        # with the VALU stream (subsumes a separate unroll of a thin row loop).
        def block_body(blk, carry):
            h0 = blk * R
            accs = [jnp.zeros((W, CB), f32) for _ in range(R)]
            for q in range(R + KMAX - 1):
                band = xp_ref[h0 + q]                      # (W+6, CB): 1 load
                for dw in range(KMAX):
                    shifted = band[dw:dw + W, :]           # one realignment
                    for r in range(R):
                        dh = q - r
                        if 0 <= dh < KMAX:
                            accs[r] = accs[r] + shifted * wsp_ref[dh * KMAX + dw]
            if W % 8 == 0:
                # The R rows are contiguous in token space: one dense store per
                # block amortizes the +1 cls-offset store misalignment.
                stacked = jnp.concatenate(accs, axis=0) + bias      # (R*W, CB)
                out_ref[0, pl.ds(1 + h0 * W, R * W), :] = stacked.astype(out_ref.dtype)
            else:
                for r in range(R):
                    out_ref[0, pl.ds(1 + (h0 + r) * W, W), :] = (
                        accs[r] + bias).astype(out_ref.dtype)
            return carry

        lax.fori_loop(0, H // R, block_body, 0)

    return kernel


@functools.partial(jax.jit, static_argnums=(1, 2))
def ppeg_forward(x, H, W, w7, b7, w5, b5, w3, b3):
    """x: (B, 1+H*W, C); w{k}: (C, 1, k, k) PyTorch depthwise layout; b{k}: (C,)."""
    B, N, C = x.shape
    assert N == H * W + 1
    # Lane-dense 128-channel blocks; fallback CB=C keeps correctness for odd C
    # (wastes lanes and collapses channel-axis parallelism in that case).
    CB = LANES if C % LANES == 0 else C
    n_cb = C // CB

    # Fold the three depthwise filters + identity into one 7x7 filter (exact).
    def to_kkc(w):                               # (C,1,k,k) -> (k,k,C)
        return jnp.transpose(w[:, 0, :, :], (1, 2, 0))

    wc = to_kkc(w7).astype(jnp.float32)
    wc = wc.at[1:6, 1:6, :].add(to_kkc(w5).astype(jnp.float32))
    wc = wc.at[2:5, 2:5, :].add(to_kkc(w3).astype(jnp.float32))
    wc = wc.at[3, 3, :].add(1.0)                 # "+ cnn_feat" identity term
    bc = (b7 + b5 + b3).astype(jnp.float32).reshape(1, C)

    R = _pick_row_block(H, W)
    CCHUNK = _pick_copy_chunk(H, W)
    kernel = _make_ppeg_kernel(H, W, CB, R, CCHUNK)

    # Right-size the VMEM request from the real footprint (v7x has only 64 MiB).
    itemsize = jnp.dtype(x.dtype).itemsize
    est = (2 * 2 * N * CB * itemsize                     # double-buffered in+out blocks
           + (H + 2 * PAD) * (W + 2 * PAD) * CB * 4      # padded feature scratch
           + KMAX * KMAX * W * CB * 4                    # pre-splat weight scratch
           + 2 * (KMAX * KMAX * CB + CB) * 4)            # weights + bias blocks
    vmem_limit = int(min(112 * 2**20, max(32 * 2**20, int(1.5 * est))))

    return pl.pallas_call(
        kernel,
        out_shape=jax.ShapeDtypeStruct((B, N, C), x.dtype),
        grid_spec=pltpu.PrefetchScalarGridSpec(
            num_scalar_prefetch=0,
            grid=(B, n_cb),
            in_specs=[
                pl.BlockSpec((1, N, CB), lambda b, cb: (b, 0, cb)),
                pl.BlockSpec((KMAX, KMAX, CB), lambda b, cb: (0, 0, cb)),
                pl.BlockSpec((1, CB), lambda b, cb: (0, cb)),
            ],
            out_specs=pl.BlockSpec((1, N, CB), lambda b, cb: (b, 0, cb)),
            scratch_shapes=[
                pltpu.VMEM((H + 2 * PAD, W + 2 * PAD, CB), jnp.float32),
                pltpu.VMEM((KMAX * KMAX, W, CB), jnp.float32),
            ],
        ),
        compiler_params=pltpu.CompilerParams(
            dimension_semantics=("parallel", "parallel"),
            vmem_limit_bytes=vmem_limit,
        ),
    )(x, wc, bc)


def ppeg_reference(x, H, W, w7, b7, w5, b5, w3, b3):
    """Pure-JAX reference mirroring the PyTorch NCHW code path."""
    B, N, C = x.shape
    cls_token = x[:, :1, :]
    feat = jnp.transpose(x[:, 1:, :], (0, 2, 1)).reshape(B, C, H, W)

    def dwconv(inp, w, b, k):
        out = lax.conv_general_dilated(
            inp, w, window_strides=(1, 1), padding=[(k // 2, k // 2)] * 2,
            dimension_numbers=('NCHW', 'OIHW', 'NCHW'),
            feature_group_count=C, precision=lax.Precision.HIGHEST)
        return out + b.reshape(1, C, 1, 1)

    y = dwconv(feat, w7, b7, 7) + feat + dwconv(feat, w5, b5, 5) + dwconv(feat, w3, b3, 3)
    tokens = jnp.transpose(y.reshape(B, C, H * W), (0, 2, 1))
    return jnp.concatenate([cls_token, tokens], axis=1)


if __name__ == "__main__":
    # Small PPEG: one lane-dense channel block, B=2, 8x8 spatial grid.
    B, C, H, W = 2, 128, 8, 8
    N = 1 + H * W

    key = jax.random.PRNGKey(0)
    kx, k7, k5, k3, kb7, kb5, kb3 = jax.random.split(key, 7)

    x = jax.random.normal(kx, (B, N, C), dtype=jnp.float32)
    # PyTorch shapes: Conv2d(C, C, k, groups=C) -> weight (C, 1, k, k), bias (C,)
    w7 = jax.random.normal(k7, (C, 1, 7, 7), dtype=jnp.float32) * 0.05
    w5 = jax.random.normal(k5, (C, 1, 5, 5), dtype=jnp.float32) * 0.05
    w3 = jax.random.normal(k3, (C, 1, 3, 3), dtype=jnp.float32) * 0.05
    b7 = jax.random.normal(kb7, (C,), dtype=jnp.float32) * 0.05
    b5 = jax.random.normal(kb5, (C,), dtype=jnp.float32) * 0.05
    b3 = jax.random.normal(kb3, (C,), dtype=jnp.float32) * 0.05

    out = ppeg_forward(x, H, W, w7, b7, w5, b5, w3, b3)
    out = jax.block_until_ready(out)

    ref = ppeg_reference(x, H, W, w7, b7, w5, b5, w3, b3)
    ref = jax.block_until_ready(ref)

    assert out.shape == (B, N, C), out.shape
    np.testing.assert_allclose(np.asarray(out), np.asarray(ref), rtol=1e-4, atol=1e-4)
    print("KERNEL_OK")
</pallas_src>

<mosaic_0001>
module attributes {stable_mosaic.version = 11 : i64} {
  func.func @kernel(%arg0: i32, %arg1: i32, %arg2: memref<1x65x128xf32, #tpu.memory_space<vmem>>, %arg3: memref<7x7x128xf32, #tpu.memory_space<vmem>>, %arg4: memref<1x128xf32, #tpu.memory_space<vmem>>, %arg5: memref<1x65x128xf32, #tpu.memory_space<vmem>>, %arg6: memref<14x14x128xf32, #tpu.memory_space<vmem>>, %arg7: memref<49x8x128xf32, #tpu.memory_space<vmem>>) attributes {dimension_semantics = [#tpu.dimension_semantics<parallel>, #tpu.dimension_semantics<parallel>], iteration_bounds = array<i64: 2, 1>, scalar_prefetch = 0 : i64, scratch_operands = 2 : i64, tpu.core_type = #tpu.core_type<tc>, window_params = [{transform_indices = @transform_0, window_bounds = array<i64: 1, 65, 128>}, {transform_indices = @transform_1, window_bounds = array<i64: 7, 7, 128>}, {transform_indices = @transform_2, window_bounds = array<i64: 1, 128>}, {transform_indices = @transform_3, window_bounds = array<i64: 1, 65, 128>}]} {
    %c0 = arith.constant 0 : index
    %c0_0 = arith.constant 0 : index
    %c0_1 = arith.constant 0 : index
    %0 = vector.load %arg2[%c0, %c0_0, %c0_1] : memref<1x65x128xf32, #tpu.memory_space<vmem>>, vector<1x1x128xf32>
    %1 = vector.shape_cast %0 : vector<1x1x128xf32> to vector<1x128xf32>
    %c0_2 = arith.constant 0 : index
    %c0_3 = arith.constant 0 : index
    %c0_4 = arith.constant 0 : index
    %2 = vector.load %arg5[%c0_2, %c0_3, %c0_4] : memref<1x65x128xf32, #tpu.memory_space<vmem>>, vector<1x1x128xf32>
    %3 = vector.shape_cast %2 : vector<1x1x128xf32> to vector<1x128xf32>
    %4 = vector.shape_cast %1 : vector<1x128xf32> to vector<1x1x128xf32>
    tpu.vector_store %arg5[%c0_2, %c0_3, %c0_4], %4 {strides = array<i32>} : memref<1x65x128xf32, #tpu.memory_space<vmem>>, vector<1x1x128xf32>,
    %cst = arith.constant 0.000000e+00 : f32
    %5 = vector.broadcast %cst : f32 to vector<14x128xf32>
    %c0_5 = arith.constant 0 : index
    %c0_6 = arith.constant 0 : index
    %c0_7 = arith.constant 0 : index
    %6 = vector.load %arg6[%c0_5, %c0_6, %c0_7] : memref<14x14x128xf32, #tpu.memory_space<vmem>>, vector<1x14x128xf32>
    %7 = vector.shape_cast %6 : vector<1x14x128xf32> to vector<14x128xf32>
    %8 = vector.shape_cast %5 : vector<14x128xf32> to vector<1x14x128xf32>
    tpu.vector_store %arg6[%c0_5, %c0_6, %c0_7], %8 {strides = array<i32>} : memref<14x14x128xf32, #tpu.memory_space<vmem>>, vector<1x14x128xf32>,
    %c11 = arith.constant 11 : index
    %c0_8 = arith.constant 0 : index
    %c0_9 = arith.constant 0 : index
    %9 = vector.load %arg6[%c11, %c0_8, %c0_9] : memref<14x14x128xf32, #tpu.memory_space<vmem>>, vector<1x14x128xf32>
    %10 = vector.shape_cast %9 : vector<1x14x128xf32> to vector<14x128xf32>
    %11 = vector.shape_cast %5 : vector<14x128xf32> to vector<1x14x128xf32>
    tpu.vector_store %arg6[%c11, %c0_8, %c0_9], %11 {strides = array<i32>} : memref<14x14x128xf32, #tpu.memory_space<vmem>>, vector<1x14x128xf32>,
    %c1 = arith.constant 1 : index
    %c0_10 = arith.constant 0 : index
    %c0_11 = arith.constant 0 : index
    %12 = vector.load %arg6[%c1, %c0_10, %c0_11] : memref<14x14x128xf32, #tpu.memory_space<vmem>>, vector<1x14x128xf32>
    %13 = vector.shape_cast %12 : vector<1x14x128xf32> to vector<14x128xf32>
    %14 = vector.shape_cast %5 : vector<14x128xf32> to vector<1x14x128xf32>
    tpu.vector_store %arg6[%c1, %c0_10, %c0_11], %14 {strides = array<i32>} : memref<14x14x128xf32, #tpu.memory_space<vmem>>, vector<1x14x128xf32>,
    %c12 = arith.constant 12 : index
    %c0_12 = arith.constant 0 : index
    %c0_13 = arith.constant 0 : index
    %15 = vector.load %arg6[%c12, %c0_12, %c0_13] : memref<14x14x128xf32, #tpu.memory_space<vmem>>, vector<1x14x128xf32>
    %16 = vector.shape_cast %15 : vector<1x14x128xf32> to vector<14x128xf32>
    %17 = vector.shape_cast %5 : vector<14x128xf32> to vector<1x14x128xf32>
    tpu.vector_store %arg6[%c12, %c0_12, %c0_13], %17 {strides = array<i32>} : memref<14x14x128xf32, #tpu.memory_space<vmem>>, vector<1x14x128xf32>,
    %c2 = arith.constant 2 : index
    %c0_14 = arith.constant 0 : index
    %c0_15 = arith.constant 0 : index
    %18 = vector.load %arg6[%c2, %c0_14, %c0_15] : memref<14x14x128xf32, #tpu.memory_space<vmem>>, vector<1x14x128xf32>
    %19 = vector.shape_cast %18 : vector<1x14x128xf32> to vector<14x128xf32>
    %20 = vector.shape_cast %5 : vector<14x128xf32> to vector<1x14x128xf32>
    tpu.vector_store %arg6[%c2, %c0_14, %c0_15], %20 {strides = array<i32>} : memref<14x14x128xf32, #tpu.memory_space<vmem>>, vector<1x14x128xf32>,
    %c13 = arith.constant 13 : index
    %c0_16 = arith.constant 0 : index
    %c0_17 = arith.constant 0 : index
    %21 = vector.load %arg6[%c13, %c0_16, %c0_17] : memref<14x14x128xf32, #tpu.memory_space<vmem>>, vector<1x14x128xf32>
    %22 = vector.shape_cast %21 : vector<1x14x128xf32> to vector<14x128xf32>
    %23 = vector.shape_cast %5 : vector<14x128xf32> to vector<1x14x128xf32>
    tpu.vector_store %arg6[%c13, %c0_16, %c0_17], %23 {strides = array<i32>} : memref<14x14x128xf32, #tpu.memory_space<vmem>>, vector<1x14x128xf32>,
    %c0_18 = arith.constant 0 : index
    %c0_19 = arith.constant 0 : index
    %c0_20 = arith.constant 0 : index
    %24 = vector.load %arg3[%c0_18, %c0_19, %c0_20] : memref<7x7x128xf32, #tpu.memory_space<vmem>>, vector<7x7x128xf32>
    %25 = vector.extract_strided_slice %24 {offsets = [0, 0, 0], sizes = [1, 1, 128], strides = [1, 1, 1]} : vector<7x7x128xf32> to vector<1x1x128xf32>
    %26 = vector.shape_cast %25 : vector<1x1x128xf32> to vector<1x128xf32>
    %27 = vector.shape_cast %26 : vector<1x128xf32> to vector<1x128xf32>
    %28 = vector.broadcast %27 : vector<1x128xf32> to vector<8x128xf32>
    %c0_21 = arith.constant 0 : index
    %c0_22 = arith.constant 0 : index
    %c0_23 = arith.constant 0 : index
    %29 = vector.load %arg7[%c0_21, %c0_22, %c0_23] : memref<49x8x128xf32, #tpu.memory_space<vmem>>, vector<1x8x128xf32>
    %30 = vector.shape_cast %29 : vector<1x8x128xf32> to vector<8x128xf32>
    %31 = vector.shape_cast %28 : vector<8x128xf32> to vector<1x8x128xf32>
    tpu.vector_store %arg7[%c0_21, %c0_22, %c0_23], %31 {strides = array<i32>} : memref<49x8x128xf32, #tpu.memory_space<vmem>>, vector<1x8x128xf32>,
    %32 = vector.extract_strided_slice %24 {offsets = [0, 1, 0], sizes = [1, 1, 128], strides = [1, 1, 1]} : vector<7x7x128xf32> to vector<1x1x128xf32>
    %33 = vector.shape_cast %32 : vector<1x1x128xf32> to vector<1x128xf32>
    %34 = vector.shape_cast %33 : vector<1x128xf32> to vector<1x128xf32>
    %35 = vector.broadcast %34 : vector<1x128xf32> to vector<8x128xf32>
    %c1_24 = arith.constant 1 : index
    %c0_25 = arith.constant 0 : index
    %c0_26 = arith.constant 0 : index
    %36 = vector.load %arg7[%c1_24, %c0_25, %c0_26] : memref<49x8x128xf32, #tpu.memory_space<vmem>>, vector<1x8x128xf32>
    %37 = vector.shape_cast %36 : vector<1x8x128xf32> to vector<8x128xf32>
    %38 = vector.shape_cast %35 : vector<8x128xf32> to vector<1x8x128xf32>
    tpu.vector_store %arg7[%c1_24, %c0_25, %c0_26], %38 {strides = array<i32>} : memref<49x8x128xf32, #tpu.memory_space<vmem>>, vector<1x8x128xf32>,
    %39 = vector.extract_strided_slice %24 {offsets = [0, 2, 0], sizes = [1, 1, 128], strides = [1, 1, 1]} : vector<7x7x128xf32> to vector<1x1x128xf32>
    %40 = vector.shape_cast %39 : vector<1x1x128xf32> to vector<1x128xf32>
    %41 = vector.shape_cast %40 : vector<1x128xf32> to vector<1x128xf32>
    %42 = vector.broadcast %41 : vector<1x128xf32> to vector<8x128xf32>
    %c2_27 = arith.constant 2 : index
    %c0_28 = arith.constant 0 : index
    %c0_29 = arith.constant 0 : index
    %43 = vector.load %arg7[%c2_27, %c0_28, %c0_29] : memref<49x8x128xf32, #tpu.memory_space<vmem>>, vector<1x8x128xf32>
    %44 = vector.shape_cast %43 : vector<1x8x128xf32> to vector<8x128xf32>
    %45 = vector.shape_cast %42 : vector<8x128xf32> to vector<1x8x128xf32>
    tpu.vector_store %arg7[%c2_27, %c0_28, %c0_29], %45 {strides = array<i32>} : memref<49x8x128xf32, #tpu.memory_space<vmem>>, vector<1x8x128xf32>,
    %46 = vector.extract_strided_slice %24 {offsets = [0, 3, 0], sizes = [1, 1, 128], strides = [1, 1, 1]} : vector<7x7x128xf32> to vector<1x1x128xf32>
    %47 = vector.shape_cast %46 : vector<1x1x128xf32> to vector<1x128xf32>
    %48 = vector.shape_cast %47 : vector<1x128xf32> to vector<1x128xf32>
    %49 = vector.broadcast %48 : vector<1x128xf32> to vector<8x128xf32>
    %c3 = arith.constant 3 : index
    %c0_30 = arith.constant 0 : index
    %c0_31 = arith.constant 0 : index
    %50 = vector.load %arg7[%c3, %c0_30, %c0_31] : memref<49x8x128xf32, #tpu.memory_space<vmem>>, vector<1x8x128xf32>
    %51 = vector.shape_cast %50 : vector<1x8x128xf32> to vector<8x128xf32>
    %52 = vector.shape_cast %49 : vector<8x128xf32> to vector<1x8x128xf32>
    tpu.vector_store %arg7[%c3, %c0_30, %c0_31], %52 {strides = array<i32>} : memref<49x8x128xf32, #tpu.memory_space<vmem>>, vector<1x8x128xf32>,
    %53 = vector.extract_strided_slice %24 {offsets = [0, 4, 0], sizes = [1, 1, 128], strides = [1, 1, 1]} : vector<7x7x128xf32> to vector<1x1x128xf32>
    %54 = vector.shape_cast %53 : vector<1x1x128xf32> to vector<1x128xf32>
    %55 = vector.shape_cast %54 : vector<1x128xf32> to vector<1x128xf32>
    %56 = vector.broadcast %55 : vector<1x128xf32> to vector<8x128xf32>
    %c4 = arith.constant 4 : index
    %c0_32 = arith.constant 0 : index
    %c0_33 = arith.constant 0 : index
    %57 = vector.load %arg7[%c4, %c0_32, %c0_33] : memref<49x8x128xf32, #tpu.memory_space<vmem>>, vector<1x8x128xf32>
    %58 = vector.shape_cast %57 : vector<1x8x128xf32> to vector<8x128xf32>
    %59 = vector.shape_cast %56 : vector<8x128xf32> to vector<1x8x128xf32>
    tpu.vector_store %arg7[%c4, %c0_32, %c0_33], %59 {strides = array<i32>} : memref<49x8x128xf32, #tpu.memory_space<vmem>>, vector<1x8x128xf32>,
    %60 = vector.extract_strided_slice %24 {offsets = [0, 5, 0], sizes = [1, 1, 128], strides = [1, 1, 1]} : vector<7x7x128xf32> to vector<1x1x128xf32>
    %61 = vector.shape_cast %60 : vector<1x1x128xf32> to vector<1x128xf32>
    %62 = vector.shape_cast %61 : vector<1x128xf32> to vector<1x128xf32>
    %63 = vector.broadcast %62 : vector<1x128xf32> to vector<8x128xf32>
    %c5 = arith.constant 5 : index
    %c0_34 = arith.constant 0 : index
    %c0_35 = arith.constant 0 : index
    %64 = vector.load %arg7[%c5, %c0_34, %c0_35] : memref<49x8x128xf32, #tpu.memory_space<vmem>>, vector<1x8x128xf32>
    %65 = vector.shape_cast %64 : vector<1x8x128xf32> to vector<8x128xf32>
    %66 = vector.shape_cast %63 : vector<8x128xf32> to vector<1x8x128xf32>
    tpu.vector_store %arg7[%c5, %c0_34, %c0_35], %66 {strides = array<i32>} : memref<49x8x128xf32, #tpu.memory_space<vmem>>, vector<1x8x128xf32>,
    %67 = vector.extract_strided_slice %24 {offsets = [0, 6, 0], sizes = [1, 1, 128], strides = [1, 1, 1]} : vector<7x7x128xf32> to vector<1x1x128xf32>
    %68 = vector.shape_cast %67 : vector<1x1x128xf32> to vector<1x128xf32>
    %69 = vector.shape_cast %68 : vector<1x128xf32> to vector<1x128xf32>
    %70 = vector.broadcast %69 : vector<1x128xf32> to vector<8x128xf32>
    %c6 = arith.constant 6 : index
    %c0_36 = arith.constant 0 : index
    %c0_37 = arith.constant 0 : index
    %71 = vector.load %arg7[%c6, %c0_36, %c0_37] : memref<49x8x128xf32, #tpu.memory_space<vmem>>, vector<1x8x128xf32>
    %72 = vector.shape_cast %71 : vector<1x8x128xf32> to vector<8x128xf32>
    %73 = vector.shape_cast %70 : vector<8x128xf32> to vector<1x8x128xf32>
    tpu.vector_store %arg7[%c6, %c0_36, %c0_37], %73 {strides = array<i32>} : memref<49x8x128xf32, #tpu.memory_space<vmem>>, vector<1x8x128xf32>,
    %74 = vector.extract_strided_slice %24 {offsets = [1, 0, 0], sizes = [1, 1, 128], strides = [1, 1, 1]} : vector<7x7x128xf32> to vector<1x1x128xf32>
    %75 = vector.shape_cast %74 : vector<1x1x128xf32> to vector<1x128xf32>
    %76 = vector.shape_cast %75 : vector<1x128xf32> to vector<1x128xf32>
    %77 = vector.broadcast %76 : vector<1x128xf32> to vector<8x128xf32>
    %c7 = arith.constant 7 : index
    %c0_38 = arith.constant 0 : index
    %c0_39 = arith.constant 0 : index
    %78 = vector.load %arg7[%c7, %c0_38, %c0_39] : memref<49x8x128xf32, #tpu.memory_space<vmem>>, vector<1x8x128xf32>
    %79 = vector.shape_cast %78 : vector<1x8x128xf32> to vector<8x128xf32>
    %80 = vector.shape_cast %77 : vector<8x128xf32> to vector<1x8x128xf32>
    tpu.vector_store %arg7[%c7, %c0_38, %c0_39], %80 {strides = array<i32>} : memref<49x8x128xf32, #tpu.memory_space<vmem>>, vector<1x8x128xf32>,
    %81 = vector.extract_strided_slice %24 {offsets = [1, 1, 0], sizes = [1, 1, 128], strides = [1, 1, 1]} : vector<7x7x128xf32> to vector<1x1x128xf32>
    %82 = vector.shape_cast %81 : vector<1x1x128xf32> to vector<1x128xf32>
    %83 = vector.shape_cast %82 : vector<1x128xf32> to vector<1x128xf32>
    %84 = vector.broadcast %83 : vector<1x128xf32> to vector<8x128xf32>
    %c8 = arith.constant 8 : index
    %c0_40 = arith.constant 0 : index
    %c0_41 = arith.constant 0 : index
    %85 = vector.load %arg7[%c8, %c0_40, %c0_41] : memref<49x8x128xf32, #tpu.memory_space<vmem>>, vector<1x8x128xf32>
    %86 = vector.shape_cast %85 : vector<1x8x128xf32> to vector<8x128xf32>
    %87 = vector.shape_cast %84 : vector<8x128xf32> to vector<1x8x128xf32>
    tpu.vector_store %arg7[%c8, %c0_40, %c0_41], %87 {strides = array<i32>} : memref<49x8x128xf32, #tpu.memory_space<vmem>>, vector<1x8x128xf32>,
    %88 = vector.extract_strided_slice %24 {offsets = [1, 2, 0], sizes = [1, 1, 128], strides = [1, 1, 1]} : vector<7x7x128xf32> to vector<1x1x128xf32>
    %89 = vector.shape_cast %88 : vector<1x1x128xf32> to vector<1x128xf32>
    %90 = vector.shape_cast %89 : vector<1x128xf32> to vector<1x128xf32>
    %91 = vector.broadcast %90 : vector<1x128xf32> to vector<8x128xf32>
    %c9 = arith.constant 9 : index
    %c0_42 = arith.constant 0 : index
    %c0_43 = arith.constant 0 : index
    %92 = vector.load %arg7[%c9, %c0_42, %c0_43] : memref<49x8x128xf32, #tpu.memory_space<vmem>>, vector<1x8x128xf32>
    %93 = vector.shape_cast %92 : vector<1x8x128xf32> to vector<8x128xf32>
    %94 = vector.shape_cast %91 : vector<8x128xf32> to vector<1x8x128xf32>
    tpu.vector_store %arg7[%c9, %c0_42, %c0_43], %94 {strides = array<i32>} : memref<49x8x128xf32, #tpu.memory_space<vmem>>, vector<1x8x128xf32>,
    %95 = vector.extract_strided_slice %24 {offsets = [1, 3, 0], sizes = [1, 1, 128], strides = [1, 1, 1]} : vector<7x7x128xf32> to vector<1x1x128xf32>
    %96 = vector.shape_cast %95 : vector<1x1x128xf32> to vector<1x128xf32>
    %97 = vector.shape_cast %96 : vector<1x128xf32> to vector<1x128xf32>
    %98 = vector.broadcast %97 : vector<1x128xf32> to vector<8x128xf32>
    %c10 = arith.constant 10 : index
    %c0_44 = arith.constant 0 : index
    %c0_45 = arith.constant 0 : index
    %99 = vector.load %arg7[%c10, %c0_44, %c0_45] : memref<49x8x128xf32, #tpu.memory_space<vmem>>, vector<1x8x128xf32>
    %100 = vector.shape_cast %99 : vector<1x8x128xf32> to vector<8x128xf32>
    %101 = vector.shape_cast %98 : vector<8x128xf32> to vector<1x8x128xf32>
    tpu.vector_store %arg7[%c10, %c0_44, %c0_45], %101 {strides = array<i32>} : memref<49x8x128xf32, #tpu.memory_space<vmem>>, vector<1x8x128xf32>,
    %102 = vector.extract_strided_slice %24 {offsets = [1, 4, 0], sizes = [1, 1, 128], strides = [1, 1, 1]} : vector<7x7x128xf32> to vector<1x1x128xf32>
    %103 = vector.shape_cast %102 : vector<1x1x128xf32> to vector<1x128xf32>
    %104 = vector.shape_cast %103 : vector<1x128xf32> to vector<1x128xf32>
    %105 = vector.broadcast %104 : vector<1x128xf32> to vector<8x128xf32>
    %c11_46 = arith.constant 11 : index
    %c0_47 = arith.constant 0 : index
    %c0_48 = arith.constant 0 : index
    %106 = vector.load %arg7[%c11_46, %c0_47, %c0_48] : memref<49x8x128xf32, #tpu.memory_space<vmem>>, vector<1x8x128xf32>
    %107 = vector.shape_cast %106 : vector<1x8x128xf32> to vector<8x128xf32>
    %108 = vector.shape_cast %105 : vector<8x128xf32> to vector<1x8x128xf32>
    tpu.vector_store %arg7[%c11_46, %c0_47, %c0_48], %108 {strides = array<i32>} : memref<49x8x128xf32, #tpu.memory_space<vmem>>, vector<1x8x128xf32>,
    %109 = vector.extract_strided_slice %24 {offsets = [1, 5, 0], sizes = [1, 1, 128], strides = [1, 1, 1]} : vector<7x7x128xf32> to vector<1x1x128xf32>
    %110 = vector.shape_cast %109 : vector<1x1x128xf32> to vector<1x128xf32>
    %111 = vector.shape_cast %110 : vector<1x128xf32> to vector<1x128xf32>
    %112 = vector.broadcast %111 : vector<1x128xf32> to vector<8x128xf32>
    %c12_49 = arith.constant 12 : index
    %c0_50 = arith.constant 0 : index
    %c0_51 = arith.constant 0 : index
    %113 = vector.load %arg7[%c12_49, %c0_50, %c0_51] : memref<49x8x128xf32, #tpu.memory_space<vmem>>, vector<1x8x128xf32>
    %114 = vector.shape_cast %113 : vector<1x8x128xf32> to vector<8x128xf32>
    %115 = vector.shape_cast %112 : vector<8x128xf32> to vector<1x8x128xf32>
    tpu.vector_store %arg7[%c12_49, %c0_50, %c0_51], %115 {strides = array<i32>} : memref<49x8x128xf32, #tpu.memory_space<vmem>>, vector<1x8x128xf32>,
    %116 = vector.extract_strided_slice %24 {offsets = [1, 6, 0], sizes = [1, 1, 128], strides = [1, 1, 1]} : vector<7x7x128xf32> to vector<1x1x128xf32>
    %117 = vector.shape_cast %116 : vector<1x1x128xf32> to vector<1x128xf32>
    %118 = vector.shape_cast %117 : vector<1x128xf32> to vector<1x128xf32>
    %119 = vector.broadcast %118 : vector<1x128xf32> to vector<8x128xf32>
    %c13_52 = arith.constant 13 : index
    %c0_53 = arith.constant 0 : index
    %c0_54 = arith.constant 0 : index
    %120 = vector.load %arg7[%c13_52, %c0_53, %c0_54] : memref<49x8x128xf32, #tpu.memory_space<vmem>>, vector<1x8x128xf32>
    %121 = vector.shape_cast %120 : vector<1x8x128xf32> to vector<8x128xf32>
    %122 = vector.shape_cast %119 : vector<8x128xf32> to vector<1x8x128xf32>
    tpu.vector_store %arg7[%c13_52, %c0_53, %c0_54], %122 {strides = array<i32>} : memref<49x8x128xf32, #tpu.memory_space<vmem>>, vector<1x8x128xf32>,
    %123 = vector.extract_strided_slice %24 {offsets = [2, 0, 0], sizes = [1, 1, 128], strides = [1, 1, 1]} : vector<7x7x128xf32> to vector<1x1x128xf32>
    %124 = vector.shape_cast %123 : vector<1x1x128xf32> to vector<1x128xf32>
    %125 = vector.shape_cast %124 : vector<1x128xf32> to vector<1x128xf32>
    %126 = vector.broadcast %125 : vector<1x128xf32> to vector<8x128xf32>
    %c14 = arith.constant 14 : index
    %c0_55 = arith.constant 0 : index
    %c0_56 = arith.constant 0 : index
    %127 = vector.load %arg7[%c14, %c0_55, %c0_56] : memref<49x8x128xf32, #tpu.memory_space<vmem>>, vector<1x8x128xf32>
    %128 = vector.shape_cast %127 : vector<1x8x128xf32> to vector<8x128xf32>
    %129 = vector.shape_cast %126 : vector<8x128xf32> to vector<1x8x128xf32>
    tpu.vector_store %arg7[%c14, %c0_55, %c0_56], %129 {strides = array<i32>} : memref<49x8x128xf32, #tpu.memory_space<vmem>>, vector<1x8x128xf32>,
    %130 = vector.extract_strided_slice %24 {offsets = [2, 1, 0], sizes = [1, 1, 128], strides = [1, 1, 1]} : vector<7x7x128xf32> to vector<1x1x128xf32>
    %131 = vector.shape_cast %130 : vector<1x1x128xf32> to vector<1x128xf32>
    %132 = vector.shape_cast %131 : vector<1x128xf32> to vector<1x128xf32>
    %133 = vector.broadcast %132 : vector<1x128xf32> to vector<8x128xf32>
    %c15 = arith.constant 15 : index
    %c0_57 = arith.constant 0 : index
    %c0_58 = arith.constant 0 : index
    %134 = vector.load %arg7[%c15, %c0_57, %c0_58] : memref<49x8x128xf32, #tpu.memory_space<vmem>>, vector<1x8x128xf32>
    %135 = vector.shape_cast %134 : vector<1x8x128xf32> to vector<8x128xf32>
    %136 = vector.shape_cast %133 : vector<8x128xf32> to vector<1x8x128xf32>
    tpu.vector_store %arg7[%c15, %c0_57, %c0_58], %136 {strides = array<i32>} : memref<49x8x128xf32, #tpu.memory_space<vmem>>, vector<1x8x128xf32>,
    %137 = vector.extract_strided_slice %24 {offsets = [2, 2, 0], sizes = [1, 1, 128], strides = [1, 1, 1]} : vector<7x7x128xf32> to vector<1x1x128xf32>
    %138 = vector.shape_cast %137 : vector<1x1x128xf32> to vector<1x128xf32>
    %139 = vector.shape_cast %138 : vector<1x128xf32> to vector<1x128xf32>
    %140 = vector.broadcast %139 : vector<1x128xf32> to vector<8x128xf32>
    %c16 = arith.constant 16 : index
    %c0_59 = arith.constant 0 : index
    %c0_60 = arith.constant 0 : index
    %141 = vector.load %arg7[%c16, %c0_59, %c0_60] : memref<49x8x128xf32, #tpu.memory_space<vmem>>, vector<1x8x128xf32>
    %142 = vector.shape_cast %141 : vector<1x8x128xf32> to vector<8x128xf32>
    %143 = vector.shape_cast %140 : vector<8x128xf32> to vector<1x8x128xf32>
    tpu.vector_store %arg7[%c16, %c0_59, %c0_60], %143 {strides = array<i32>} : memref<49x8x128xf32, #tpu.memory_space<vmem>>, vector<1x8x128xf32>,
    %144 = vector.extract_strided_slice %24 {offsets = [2, 3, 0], sizes = [1, 1, 128], strides = [1, 1, 1]} : vector<7x7x128xf32> to vector<1x1x128xf32>
    %145 = vector.shape_cast %144 : vector<1x1x128xf32> to vector<1x128xf32>
    %146 = vector.shape_cast %145 : vector<1x128xf32> to vector<1x128xf32>
    %147 = vector.broadcast %146 : vector<1x128xf32> to vector<8x128xf32>
    %c17 = arith.constant 17 : index
    %c0_61 = arith.constant 0 : index
    %c0_62 = arith.constant 0 : index
    %148 = vector.load %arg7[%c17, %c0_61, %c0_62] : memref<49x8x128xf32, #tpu.memory_space<vmem>>, vector<1x8x128xf32>
    %149 = vector.shape_cast %148 : vector<1x8x128xf32> to vector<8x128xf32>
    %150 = vector.shape_cast %147 : vector<8x128xf32> to vector<1x8x128xf32>
    tpu.vector_store %arg7[%c17, %c0_61, %c0_62], %150 {strides = array<i32>} : memref<49x8x128xf32, #tpu.memory_space<vmem>>, vector<1x8x128xf32>,
    %151 = vector.extract_strided_slice %24 {offsets = [2, 4, 0], sizes = [1, 1, 128], strides = [1, 1, 1]} : vector<7x7x128xf32> to vector<1x1x128xf32>
    %152 = vector.shape_cast %151 : vector<1x1x128xf32> to vector<1x128xf32>
    %153 = vector.shape_cast %152 : vector<1x128xf32> to vector<1x128xf32>
    %154 = vector.broadcast %153 : vector<1x128xf32> to vector<8x128xf32>
    %c18 = arith.constant 18 : index
    %c0_63 = arith.constant 0 : index
    %c0_64 = arith.constant 0 : index
    %155 = vector.load %arg7[%c18, %c0_63, %c0_64] : memref<49x8x128xf32, #tpu.memory_space<vmem>>, vector<1x8x128xf32>
    %156 = vector.shape_cast %155 : vector<1x8x128xf32> to vector<8x128xf32>
    %157 = vector.shape_cast %154 : vector<8x128xf32> to vector<1x8x128xf32>
    tpu.vector_store %arg7[%c18, %c0_63, %c0_64], %157 {strides = array<i32>} : memref<49x8x128xf32, #tpu.memory_space<vmem>>, vector<1x8x128xf32>,
    %158 = vector.extract_strided_slice %24 {offsets = [2, 5, 0], sizes = [1, 1, 128], strides = [1, 1, 1]} : vector<7x7x128xf32> to vector<1x1x128xf32>
    %159 = vector.shape_cast %158 : vector<1x1x128xf32> to vector<1x128xf32>
    %160 = vector.shape_cast %159 : vector<1x128xf32> to vector<1x128xf32>
    %161 = vector.broadcast %160 : vector<1x128xf32> to vector<8x128xf32>
    %c19 = arith.constant 19 : index
    %c0_65 = arith.constant 0 : index
    %c0_66 = arith.constant 0 : index
    %162 = vector.load %arg7[%c19, %c0_65, %c0_66] : memref<49x8x128xf32, #tpu.memory_space<vmem>>, vector<1x8x128xf32>
    %163 = vector.shape_cast %162 : vector<1x8x128xf32> to vector<8x128xf32>
    %164 = vector.shape_cast %161 : vector<8x128xf32> to vector<1x8x128xf32>
    tpu.vector_store %arg7[%c19, %c0_65, %c0_66], %164 {strides = array<i32>} : memref<49x8x128xf32, #tpu.memory_space<vmem>>, vector<1x8x128xf32>,
    %165 = vector.extract_strided_slice %24 {offsets = [2, 6, 0], sizes = [1, 1, 128], strides = [1, 1, 1]} : vector<7x7x128xf32> to vector<1x1x128xf32>
    %166 = vector.shape_cast %165 : vector<1x1x128xf32> to vector<1x128xf32>
    %167 = vector.shape_cast %166 : vector<1x128xf32> to vector<1x128xf32>
    %168 = vector.broadcast %167 : vector<1x128xf32> to vector<8x128xf32>
    %c20 = arith.constant 20 : index
    %c0_67 = arith.constant 0 : index
    %c0_68 = arith.constant 0 : index
    %169 = vector.load %arg7[%c20, %c0_67, %c0_68] : memref<49x8x128xf32, #tpu.memory_space<vmem>>, vector<1x8x128xf32>
    %170 = vector.shape_cast %169 : vector<1x8x128xf32> to vector<8x128xf32>
    %171 = vector.shape_cast %168 : vector<8x128xf32> to vector<1x8x128xf32>
    tpu.vector_store %arg7[%c20, %c0_67, %c0_68], %171 {strides = array<i32>} : memref<49x8x128xf32, #tpu.memory_space<vmem>>, vector<1x8x128xf32>,
    %172 = vector.extract_strided_slice %24 {offsets = [3, 0, 0], sizes = [1, 1, 128], strides = [1, 1, 1]} : vector<7x7x128xf32> to vector<1x1x128xf32>
    %173 = vector.shape_cast %172 : vector<1x1x128xf32> to vector<1x128xf32>
    %174 = vector.shape_cast %173 : vector<1x128xf32> to vector<1x128xf32>
    %175 = vector.broadcast %174 : vector<1x128xf32> to vector<8x128xf32>
    %c21 = arith.constant 21 : index
    %c0_69 = arith.constant 0 : index
    %c0_70 = arith.constant 0 : index
    %176 = vector.load %arg7[%c21, %c0_69, %c0_70] : memref<49x8x128xf32, #tpu.memory_space<vmem>>, vector<1x8x128xf32>
    %177 = vector.shape_cast %176 : vector<1x8x128xf32> to vector<8x128xf32>
    %178 = vector.shape_cast %175 : vector<8x128xf32> to vector<1x8x128xf32>
    tpu.vector_store %arg7[%c21, %c0_69, %c0_70], %178 {strides = array<i32>} : memref<49x8x128xf32, #tpu.memory_space<vmem>>, vector<1x8x128xf32>,
    %179 = vector.extract_strided_slice %24 {offsets = [3, 1, 0], sizes = [1, 1, 128], strides = [1, 1, 1]} : vector<7x7x128xf32> to vector<1x1x128xf32>
    %180 = vector.shape_cast %179 : vector<1x1x128xf32> to vector<1x128xf32>
    %181 = vector.shape_cast %180 : vector<1x128xf32> to vector<1x128xf32>
    %182 = vector.broadcast %181 : vector<1x128xf32> to vector<8x128xf32>
    %c22 = arith.constant 22 : index
    %c0_71 = arith.constant 0 : index
    %c0_72 = arith.constant 0 : index
    %183 = vector.load %arg7[%c22, %c0_71, %c0_72] : memref<49x8x128xf32, #tpu.memory_space<vmem>>, vector<1x8x128xf32>
    %184 = vector.shape_cast %183 : vector<1x8x128xf32> to vector<8x128xf32>
    %185 = vector.shape_cast %182 : vector<8x128xf32> to vector<1x8x128xf32>
    tpu.vector_store %arg7[%c22, %c0_71, %c0_72], %185 {strides = array<i32>} : memref<49x8x128xf32, #tpu.memory_space<vmem>>, vector<1x8x128xf32>,
    %186 = vector.extract_strided_slice %24 {offsets = [3, 2, 0], sizes = [1, 1, 128], strides = [1, 1, 1]} : vector<7x7x128xf32> to vector<1x1x128xf32>
    %187 = vector.shape_cast %186 : vector<1x1x128xf32> to vector<1x128xf32>
    %188 = vector.shape_cast %187 : vector<1x128xf32> to vector<1x128xf32>
    %189 = vector.broadcast %188 : vector<1x128xf32> to vector<8x128xf32>
    %c23 = arith.constant 23 : index
    %c0_73 = arith.constant 0 : index
    %c0_74 = arith.constant 0 : index
    %190 = vector.load %arg7[%c23, %c0_73, %c0_74] : memref<49x8x128xf32, #tpu.memory_space<vmem>>, vector<1x8x128xf32>
    %191 = vector.shape_cast %190 : vector<1x8x128xf32> to vector<8x128xf32>
    %192 = vector.shape_cast %189 : vector<8x128xf32> to vector<1x8x128xf32>
    tpu.vector_store %arg7[%c23, %c0_73, %c0_74], %192 {strides = array<i32>} : memref<49x8x128xf32, #tpu.memory_space<vmem>>, vector<1x8x128xf32>,
    %193 = vector.extract_strided_slice %24 {offsets = [3, 3, 0], sizes = [1, 1, 128], strides = [1, 1, 1]} : vector<7x7x128xf32> to vector<1x1x128xf32>
    %194 = vector.shape_cast %193 : vector<1x1x128xf32> to vector<1x128xf32>
    %195 = vector.shape_cast %194 : vector<1x128xf32> to vector<1x128xf32>
    %196 = vector.broadcast %195 : vector<1x128xf32> to vector<8x128xf32>
    %c24 = arith.constant 24 : index
    %c0_75 = arith.constant 0 : index
    %c0_76 = arith.constant 0 : index
    %197 = vector.load %arg7[%c24, %c0_75, %c0_76] : memref<49x8x128xf32, #tpu.memory_space<vmem>>, vector<1x8x128xf32>
    %198 = vector.shape_cast %197 : vector<1x8x128xf32> to vector<8x128xf32>
    %199 = vector.shape_cast %196 : vector<8x128xf32> to vector<1x8x128xf32>
    tpu.vector_store %arg7[%c24, %c0_75, %c0_76], %199 {strides = array<i32>} : memref<49x8x128xf32, #tpu.memory_space<vmem>>, vector<1x8x128xf32>,
    %200 = vector.extract_strided_slice %24 {offsets = [3, 4, 0], sizes = [1, 1, 128], strides = [1, 1, 1]} : vector<7x7x128xf32> to vector<1x1x128xf32>
    %201 = vector.shape_cast %200 : vector<1x1x128xf32> to vector<1x128xf32>
    %202 = vector.shape_cast %201 : vector<1x128xf32> to vector<1x128xf32>
    %203 = vector.broadcast %202 : vector<1x128xf32> to vector<8x128xf32>
    %c25 = arith.constant 25 : index
    %c0_77 = arith.constant 0 : index
    %c0_78 = arith.constant 0 : index
    %204 = vector.load %arg7[%c25, %c0_77, %c0_78] : memref<49x8x128xf32, #tpu.memory_space<vmem>>, vector<1x8x128xf32>
    %205 = vector.shape_cast %204 : vector<1x8x128xf32> to vector<8x128xf32>
    %206 = vector.shape_cast %203 : vector<8x128xf32> to vector<1x8x128xf32>
    tpu.vector_store %arg7[%c25, %c0_77, %c0_78], %206 {strides = array<i32>} : memref<49x8x128xf32, #tpu.memory_space<vmem>>, vector<1x8x128xf32>,
    %207 = vector.extract_strided_slice %24 {offsets = [3, 5, 0], sizes = [1, 1, 128], strides = [1, 1, 1]} : vector<7x7x128xf32> to vector<1x1x128xf32>
    %208 = vector.shape_cast %207 : vector<1x1x128xf32> to vector<1x128xf32>
    %209 = vector.shape_cast %208 : vector<1x128xf32> to vector<1x128xf32>
    %210 = vector.broadcast %209 : vector<1x128xf32> to vector<8x128xf32>
    %c26 = arith.constant 26 : index
    %c0_79 = arith.constant 0 : index
    %c0_80 = arith.constant 0 : index
    %211 = vector.load %arg7[%c26, %c0_79, %c0_80] : memref<49x8x128xf32, #tpu.memory_space<vmem>>, vector<1x8x128xf32>
    %212 = vector.shape_cast %211 : vector<1x8x128xf32> to vector<8x128xf32>
    %213 = vector.shape_cast %210 : vector<8x128xf32> to vector<1x8x128xf32>
    tpu.vector_store %arg7[%c26, %c0_79, %c0_80], %213 {strides = array<i32>} : memref<49x8x128xf32, #tpu.memory_space<vmem>>, vector<1x8x128xf32>,
    %214 = vector.extract_strided_slice %24 {offsets = [3, 6, 0], sizes = [1, 1, 128], strides = [1, 1, 1]} : vector<7x7x128xf32> to vector<1x1x128xf32>
    %215 = vector.shape_cast %214 : vector<1x1x128xf32> to vector<1x128xf32>
    %216 = vector.shape_cast %215 : vector<1x128xf32> to vector<1x128xf32>
    %217 = vector.broadcast %216 : vector<1x128xf32> to vector<8x128xf32>
    %c27 = arith.constant 27 : index
    %c0_81 = arith.constant 0 : index
    %c0_82 = arith.constant 0 : index
    %218 = vector.load %arg7[%c27, %c0_81, %c0_82] : memref<49x8x128xf32, #tpu.memory_space<vmem>>, vector<1x8x128xf32>
    %219 = vector.shape_cast %218 : vector<1x8x128xf32> to vector<8x128xf32>
    %220 = vector.shape_cast %217 : vector<8x128xf32> to vector<1x8x128xf32>
    tpu.vector_store %arg7[%c27, %c0_81, %c0_82], %220 {strides = array<i32>} : memref<49x8x128xf32, #tpu.memory_space<vmem>>, vector<1x8x128xf32>,
    %221 = vector.extract_strided_slice %24 {offsets = [4, 0, 0], sizes = [1, 1, 128], strides = [1, 1, 1]} : vector<7x7x128xf32> to vector<1x1x128xf32>
    %222 = vector.shape_cast %221 : vector<1x1x128xf32> to vector<1x128xf32>
    %223 = vector.shape_cast %222 : vector<1x128xf32> to vector<1x128xf32>
    %224 = vector.broadcast %223 : vector<1x128xf32> to vector<8x128xf32>
    %c28 = arith.constant 28 : index
    %c0_83 = arith.constant 0 : index
    %c0_84 = arith.constant 0 : index
    %225 = vector.load %arg7[%c28, %c0_83, %c0_84] : memref<49x8x128xf32, #tpu.memory_space<vmem>>, vector<1x8x128xf32>
    %226 = vector.shape_cast %225 : vector<1x8x128xf32> to vector<8x128xf32>
    %227 = vector.shape_cast %224 : vector<8x128xf32> to vector<1x8x128xf32>
    tpu.vector_store %arg7[%c28, %c0_83, %c0_84], %227 {strides = array<i32>} : memref<49x8x128xf32, #tpu.memory_space<vmem>>, vector<1x8x128xf32>,
    %228 = vector.extract_strided_slice %24 {offsets = [4, 1, 0], sizes = [1, 1, 128], strides = [1, 1, 1]} : vector<7x7x128xf32> to vector<1x1x128xf32>
    %229 = vector.shape_cast %228 : vector<1x1x128xf32> to vector<1x128xf32>
    %230 = vector.shape_cast %229 : vector<1x128xf32> to vector<1x128xf32>
    %231 = vector.broadcast %230 : vector<1x128xf32> to vector<8x128xf32>
    %c29 = arith.constant 29 : index
    %c0_85 = arith.constant 0 : index
    %c0_86 = arith.constant 0 : index
    %232 = vector.load %arg7[%c29, %c0_85, %c0_86] : memref<49x8x128xf32, #tpu.memory_space<vmem>>, vector<1x8x128xf32>
    %233 = vector.shape_cast %232 : vector<1x8x128xf32> to vector<8x128xf32>
    %234 = vector.shape_cast %231 : vector<8x128xf32> to vector<1x8x128xf32>
    tpu.vector_store %arg7[%c29, %c0_85, %c0_86], %234 {strides = array<i32>} : memref<49x8x128xf32, #tpu.memory_space<vmem>>, vector<1x8x128xf32>,
    %235 = vector.extract_strided_slice %24 {offsets = [4, 2, 0], sizes = [1, 1, 128], strides = [1, 1, 1]} : vector<7x7x128xf32> to vector<1x1x128xf32>
    %236 = vector.shape_cast %235 : vector<1x1x128xf32> to vector<1x128xf32>
    %237 = vector.shape_cast %236 : vector<1x128xf32> to vector<1x128xf32>
    %238 = vector.broadcast %237 : vector<1x128xf32> to vector<8x128xf32>
    %c30 = arith.constant 30 : index
    %c0_87 = arith.constant 0 : index
    %c0_88 = arith.constant 0 : index
    %239 = vector.load %arg7[%c30, %c0_87, %c0_88] : memref<49x8x128xf32, #tpu.memory_space<vmem>>, vector<1x8x128xf32>
    %240 = vector.shape_cast %239 : vector<1x8x128xf32> to vector<8x128xf32>
    %241 = vector.shape_cast %238 : vector<8x128xf32> to vector<1x8x128xf32>
    tpu.vector_store %arg7[%c30, %c0_87, %c0_88], %241 {strides = array<i32>} : memref<49x8x128xf32, #tpu.memory_space<vmem>>, vector<1x8x128xf32>,
    %242 = vector.extract_strided_slice %24 {offsets = [4, 3, 0], sizes = [1, 1, 128], strides = [1, 1, 1]} : vector<7x7x128xf32> to vector<1x1x128xf32>
    %243 = vector.shape_cast %242 : vector<1x1x128xf32> to vector<1x128xf32>
    %244 = vector.shape_cast %243 : vector<1x128xf32> to vector<1x128xf32>
    %245 = vector.broadcast %244 : vector<1x128xf32> to vector<8x128xf32>
    %c31 = arith.constant 31 : index
    %c0_89 = arith.constant 0 : index
    %c0_90 = arith.constant 0 : index
    %246 = vector.load %arg7[%c31, %c0_89, %c0_90] : memref<49x8x128xf32, #tpu.memory_space<vmem>>, vector<1x8x128xf32>
    %247 = vector.shape_cast %246 : vector<1x8x128xf32> to vector<8x128xf32>
    %248 = vector.shape_cast %245 : vector<8x128xf32> to vector<1x8x128xf32>
    tpu.vector_store %arg7[%c31, %c0_89, %c0_90], %248 {strides = array<i32>} : memref<49x8x128xf32, #tpu.memory_space<vmem>>, vector<1x8x128xf32>,
    %249 = vector.extract_strided_slice %24 {offsets = [4, 4, 0], sizes = [1, 1, 128], strides = [1, 1, 1]} : vector<7x7x128xf32> to vector<1x1x128xf32>
    %250 = vector.shape_cast %249 : vector<1x1x128xf32> to vector<1x128xf32>
    %251 = vector.shape_cast %250 : vector<1x128xf32> to vector<1x128xf32>
    %252 = vector.broadcast %251 : vector<1x128xf32> to vector<8x128xf32>
    %c32 = arith.constant 32 : index
    %c0_91 = arith.constant 0 : index
    %c0_92 = arith.constant 0 : index
    %253 = vector.load %arg7[%c32, %c0_91, %c0_92] : memref<49x8x128xf32, #tpu.memory_space<vmem>>, vector<1x8x128xf32>
    %254 = vector.shape_cast %253 : vector<1x8x128xf32> to vector<8x128xf32>
    %255 = vector.shape_cast %252 : vector<8x128xf32> to vector<1x8x128xf32>
    tpu.vector_store %arg7[%c32, %c0_91, %c0_92], %255 {strides = array<i32>} : memref<49x8x128xf32, #tpu.memory_space<vmem>>, vector<1x8x128xf32>,
    %256 = vector.extract_strided_slice %24 {offsets = [4, 5, 0], sizes = [1, 1, 128], strides = [1, 1, 1]} : vector<7x7x128xf32> to vector<1x1x128xf32>
    %257 = vector.shape_cast %256 : vector<1x1x128xf32> to vector<1x128xf32>
    %258 = vector.shape_cast %257 : vector<1x128xf32> to vector<1x128xf32>
    %259 = vector.broadcast %258 : vector<1x128xf32> to vector<8x128xf32>
    %c33 = arith.constant 33 : index
    %c0_93 = arith.constant 0 : index
    %c0_94 = arith.constant 0 : index
    %260 = vector.load %arg7[%c33, %c0_93, %c0_94] : memref<49x8x128xf32, #tpu.memory_space<vmem>>, vector<1x8x128xf32>
    %261 = vector.shape_cast %260 : vector<1x8x128xf32> to vector<8x128xf32>
    %262 = vector.shape_cast %259 : vector<8x128xf32> to vector<1x8x128xf32>
    tpu.vector_store %arg7[%c33, %c0_93, %c0_94], %262 {strides = array<i32>} : memref<49x8x128xf32, #tpu.memory_space<vmem>>, vector<1x8x128xf32>,
    %263 = vector.extract_strided_slice %24 {offsets = [4, 6, 0], sizes = [1, 1, 128], strides = [1, 1, 1]} : vector<7x7x128xf32> to vector<1x1x128xf32>
    %264 = vector.shape_cast %263 : vector<1x1x128xf32> to vector<1x128xf32>
    %265 = vector.shape_cast %264 : vector<1x128xf32> to vector<1x128xf32>
    %266 = vector.broadcast %265 : vector<1x128xf32> to vector<8x128xf32>
    %c34 = arith.constant 34 : index
    %c0_95 = arith.constant 0 : index
    %c0_96 = arith.constant 0 : index
    %267 = vector.load %arg7[%c34, %c0_95, %c0_96] : memref<49x8x128xf32, #tpu.memory_space<vmem>>, vector<1x8x128xf32>
    %268 = vector.shape_cast %267 : vector<1x8x128xf32> to vector<8x128xf32>
    %269 = vector.shape_cast %266 : vector<8x128xf32> to vector<1x8x128xf32>
    tpu.vector_store %arg7[%c34, %c0_95, %c0_96], %269 {strides = array<i32>} : memref<49x8x128xf32, #tpu.memory_space<vmem>>, vector<1x8x128xf32>,
    %270 = vector.extract_strided_slice %24 {offsets = [5, 0, 0], sizes = [1, 1, 128], strides = [1, 1, 1]} : vector<7x7x128xf32> to vector<1x1x128xf32>
    %271 = vector.shape_cast %270 : vector<1x1x128xf32> to vector<1x128xf32>
    %272 = vector.shape_cast %271 : vector<1x128xf32> to vector<1x128xf32>
    %273 = vector.broadcast %272 : vector<1x128xf32> to vector<8x128xf32>
    %c35 = arith.constant 35 : index
    %c0_97 = arith.constant 0 : index
    %c0_98 = arith.constant 0 : index
    %274 = vector.load %arg7[%c35, %c0_97, %c0_98] : memref<49x8x128xf32, #tpu.memory_space<vmem>>, vector<1x8x128xf32>
    %275 = vector.shape_cast %274 : vector<1x8x128xf32> to vector<8x128xf32>
    %276 = vector.shape_cast %273 : vector<8x128xf32> to vector<1x8x128xf32>
    tpu.vector_store %arg7[%c35, %c0_97, %c0_98], %276 {strides = array<i32>} : memref<49x8x128xf32, #tpu.memory_space<vmem>>, vector<1x8x128xf32>,
    %277 = vector.extract_strided_slice %24 {offsets = [5, 1, 0], sizes = [1, 1, 128], strides = [1, 1, 1]} : vector<7x7x128xf32> to vector<1x1x128xf32>
    %278 = vector.shape_cast %277 : vector<1x1x128xf32> to vector<1x128xf32>
    %279 = vector.shape_cast %278 : vector<1x128xf32> to vector<1x128xf32>
    %280 = vector.broadcast %279 : vector<1x128xf32> to vector<8x128xf32>
    %c36 = arith.constant 36 : index
    %c0_99 = arith.constant 0 : index
    %c0_100 = arith.constant 0 : index
    %281 = vector.load %arg7[%c36, %c0_99, %c0_100] : memref<49x8x128xf32, #tpu.memory_space<vmem>>, vector<1x8x128xf32>
    %282 = vector.shape_cast %281 : vector<1x8x128xf32> to vector<8x128xf32>
    %283 = vector.shape_cast %280 : vector<8x128xf32> to vector<1x8x128xf32>
    tpu.vector_store %arg7[%c36, %c0_99, %c0_100], %283 {strides = array<i32>} : memref<49x8x128xf32, #tpu.memory_space<vmem>>, vector<1x8x128xf32>,
    %284 = vector.extract_strided_slice %24 {offsets = [5, 2, 0], sizes = [1, 1, 128], strides = [1, 1, 1]} : vector<7x7x128xf32> to vector<1x1x128xf32>
    %285 = vector.shape_cast %284 : vector<1x1x128xf32> to vector<1x128xf32>
    %286 = vector.shape_cast %285 : vector<1x128xf32> to vector<1x128xf32>
    %287 = vector.broadcast %286 : vector<1x128xf32> to vector<8x128xf32>
    %c37 = arith.constant 37 : index
    %c0_101 = arith.constant 0 : index
    %c0_102 = arith.constant 0 : index
    %288 = vector.load %arg7[%c37, %c0_101, %c0_102] : memref<49x8x128xf32, #tpu.memory_space<vmem>>, vector<1x8x128xf32>
    %289 = vector.shape_cast %288 : vector<1x8x128xf32> to vector<8x128xf32>
    %290 = vector.shape_cast %287 : vector<8x128xf32> to vector<1x8x128xf32>
    tpu.vector_store %arg7[%c37, %c0_101, %c0_102], %290 {strides = array<i32>} : memref<49x8x128xf32, #tpu.memory_space<vmem>>, vector<1x8x128xf32>,
    %291 = vector.extract_strided_slice %24 {offsets = [5, 3, 0], sizes = [1, 1, 128], strides = [1, 1, 1]} : vector<7x7x128xf32> to vector<1x1x128xf32>
    %292 = vector.shape_cast %291 : vector<1x1x128xf32> to vector<1x128xf32>
    %293 = vector.shape_cast %292 : vector<1x128xf32> to vector<1x128xf32>
    %294 = vector.broadcast %293 : vector<1x128xf32> to vector<8x128xf32>
    %c38 = arith.constant 38 : index
    %c0_103 = arith.constant 0 : index
    %c0_104 = arith.constant 0 : index
    %295 = vector.load %arg7[%c38, %c0_103, %c0_104] : memref<49x8x128xf32, #tpu.memory_space<vmem>>, vector<1x8x128xf32>
    %296 = vector.shape_cast %295 : vector<1x8x128xf32> to vector<8x128xf32>
    %297 = vector.shape_cast %294 : vector<8x128xf32> to vector<1x8x128xf32>
    tpu.vector_store %arg7[%c38, %c0_103, %c0_104], %297 {strides = array<i32>} : memref<49x8x128xf32, #tpu.memory_space<vmem>>, vector<1x8x128xf32>,
    %298 = vector.extract_strided_slice %24 {offsets = [5, 4, 0], sizes = [1, 1, 128], strides = [1, 1, 1]} : vector<7x7x128xf32> to vector<1x1x128xf32>
    %299 = vector.shape_cast %298 : vector<1x1x128xf32> to vector<1x128xf32>
    %300 = vector.shape_cast %299 : vector<1x128xf32> to vector<1x128xf32>
    %301 = vector.broadcast %300 : vector<1x128xf32> to vector<8x128xf32>
    %c39 = arith.constant 39 : index
    %c0_105 = arith.constant 0 : index
    %c0_106 = arith.constant 0 : index
    %302 = vector.load %arg7[%c39, %c0_105, %c0_106] : memref<49x8x128xf32, #tpu.memory_space<vmem>>, vector<1x8x128xf32>
    %303 = vector.shape_cast %302 : vector<1x8x128xf32> to vector<8x128xf32>
    %304 = vector.shape_cast %301 : vector<8x128xf32> to vector<1x8x128xf32>
    tpu.vector_store %arg7[%c39, %c0_105, %c0_106], %304 {strides = array<i32>} : memref<49x8x128xf32, #tpu.memory_space<vmem>>, vector<1x8x128xf32>,
    %305 = vector.extract_strided_slice %24 {offsets = [5, 5, 0], sizes = [1, 1, 128], strides = [1, 1, 1]} : vector<7x7x128xf32> to vector<1x1x128xf32>
    %306 = vector.shape_cast %305 : vector<1x1x128xf32> to vector<1x128xf32>
    %307 = vector.shape_cast %306 : vector<1x128xf32> to vector<1x128xf32>
    %308 = vector.broadcast %307 : vector<1x128xf32> to vector<8x128xf32>
    %c40 = arith.constant 40 : index
    %c0_107 = arith.constant 0 : index
    %c0_108 = arith.constant 0 : index
    %309 = vector.load %arg7[%c40, %c0_107, %c0_108] : memref<49x8x128xf32, #tpu.memory_space<vmem>>, vector<1x8x128xf32>
    %310 = vector.shape_cast %309 : vector<1x8x128xf32> to vector<8x128xf32>
    %311 = vector.shape_cast %308 : vector<8x128xf32> to vector<1x8x128xf32>
    tpu.vector_store %arg7[%c40, %c0_107, %c0_108], %311 {strides = array<i32>} : memref<49x8x128xf32, #tpu.memory_space<vmem>>, vector<1x8x128xf32>,
    %312 = vector.extract_strided_slice %24 {offsets = [5, 6, 0], sizes = [1, 1, 128], strides = [1, 1, 1]} : vector<7x7x128xf32> to vector<1x1x128xf32>
    %313 = vector.shape_cast %312 : vector<1x1x128xf32> to vector<1x128xf32>
    %314 = vector.shape_cast %313 : vector<1x128xf32> to vector<1x128xf32>
    %315 = vector.broadcast %314 : vector<1x128xf32> to vector<8x128xf32>
    %c41 = arith.constant 41 : index
    %c0_109 = arith.constant 0 : index
    %c0_110 = arith.constant 0 : index
    %316 = vector.load %arg7[%c41, %c0_109, %c0_110] : memref<49x8x128xf32, #tpu.memory_space<vmem>>, vector<1x8x128xf32>
    %317 = vector.shape_cast %316 : vector<1x8x128xf32> to vector<8x128xf32>
    %318 = vector.shape_cast %315 : vector<8x128xf32> to vector<1x8x128xf32>
    tpu.vector_store %arg7[%c41, %c0_109, %c0_110], %318 {strides = array<i32>} : memref<49x8x128xf32, #tpu.memory_space<vmem>>, vector<1x8x128xf32>,
    %319 = vector.extract_strided_slice %24 {offsets = [6, 0, 0], sizes = [1, 1, 128], strides = [1, 1, 1]} : vector<7x7x128xf32> to vector<1x1x128xf32>
    %320 = vector.shape_cast %319 : vector<1x1x128xf32> to vector<1x128xf32>
    %321 = vector.shape_cast %320 : vector<1x128xf32> to vector<1x128xf32>
    %322 = vector.broadcast %321 : vector<1x128xf32> to vector<8x128xf32>
    %c42 = arith.constant 42 : index
    %c0_111 = arith.constant 0 : index
    %c0_112 = arith.constant 0 : index
    %323 = vector.load %arg7[%c42, %c0_111, %c0_112] : memref<49x8x128xf32, #tpu.memory_space<vmem>>, vector<1x8x128xf32>
    %324 = vector.shape_cast %323 : vector<1x8x128xf32> to vector<8x128xf32>
    %325 = vector.shape_cast %322 : vector<8x128xf32> to vector<1x8x128xf32>
    tpu.vector_store %arg7[%c42, %c0_111, %c0_112], %325 {strides = array<i32>} : memref<49x8x128xf32, #tpu.memory_space<vmem>>, vector<1x8x128xf32>,
    %326 = vector.extract_strided_slice %24 {offsets = [6, 1, 0], sizes = [1, 1, 128], strides = [1, 1, 1]} : vector<7x7x128xf32> to vector<1x1x128xf32>
    %327 = vector.shape_cast %326 : vector<1x1x128xf32> to vector<1x128xf32>
    %328 = vector.shape_cast %327 : vector<1x128xf32> to vector<1x128xf32>
    %329 = vector.broadcast %328 : vector<1x128xf32> to vector<8x128xf32>
    %c43 = arith.constant 43 : index
    %c0_113 = arith.constant 0 : index
    %c0_114 = arith.constant 0 : index
    %330 = vector.load %arg7[%c43, %c0_113, %c0_114] : memref<49x8x128xf32, #tpu.memory_space<vmem>>, vector<1x8x128xf32>
    %331 = vector.shape_cast %330 : vector<1x8x128xf32> to vector<8x128xf32>
    %332 = vector.shape_cast %329 : vector<8x128xf32> to vector<1x8x128xf32>
    tpu.vector_store %arg7[%c43, %c0_113, %c0_114], %332 {strides = array<i32>} : memref<49x8x128xf32, #tpu.memory_space<vmem>>, vector<1x8x128xf32>,
    %333 = vector.extract_strided_slice %24 {offsets = [6, 2, 0], sizes = [1, 1, 128], strides = [1, 1, 1]} : vector<7x7x128xf32> to vector<1x1x128xf32>
    %334 = vector.shape_cast %333 : vector<1x1x128xf32> to vector<1x128xf32>
    %335 = vector.shape_cast %334 : vector<1x128xf32> to vector<1x128xf32>
    %336 = vector.broadcast %335 : vector<1x128xf32> to vector<8x128xf32>
    %c44 = arith.constant 44 : index
    %c0_115 = arith.constant 0 : index
    %c0_116 = arith.constant 0 : index
    %337 = vector.load %arg7[%c44, %c0_115, %c0_116] : memref<49x8x128xf32, #tpu.memory_space<vmem>>, vector<1x8x128xf32>
    %338 = vector.shape_cast %337 : vector<1x8x128xf32> to vector<8x128xf32>
    %339 = vector.shape_cast %336 : vector<8x128xf32> to vector<1x8x128xf32>
    tpu.vector_store %arg7[%c44, %c0_115, %c0_116], %339 {strides = array<i32>} : memref<49x8x128xf32, #tpu.memory_space<vmem>>, vector<1x8x128xf32>,
    %340 = vector.extract_strided_slice %24 {offsets = [6, 3, 0], sizes = [1, 1, 128], strides = [1, 1, 1]} : vector<7x7x128xf32> to vector<1x1x128xf32>
    %341 = vector.shape_cast %340 : vector<1x1x128xf32> to vector<1x128xf32>
    %342 = vector.shape_cast %341 : vector<1x128xf32> to vector<1x128xf32>
    %343 = vector.broadcast %342 : vector<1x128xf32> to vector<8x128xf32>
    %c45 = arith.constant 45 : index
    %c0_117 = arith.constant 0 : index
    %c0_118 = arith.constant 0 : index
    %344 = vector.load %arg7[%c45, %c0_117, %c0_118] : memref<49x8x128xf32, #tpu.memory_space<vmem>>, vector<1x8x128xf32>
    %345 = vector.shape_cast %344 : vector<1x8x128xf32> to vector<8x128xf32>
    %346 = vector.shape_cast %343 : vector<8x128xf32> to vector<1x8x128xf32>
    tpu.vector_store %arg7[%c45, %c0_117, %c0_118], %346 {strides = array<i32>} : memref<49x8x128xf32, #tpu.memory_space<vmem>>, vector<1x8x128xf32>,
    %347 = vector.extract_strided_slice %24 {offsets = [6, 4, 0], sizes = [1, 1, 128], strides = [1, 1, 1]} : vector<7x7x128xf32> to vector<1x1x128xf32>
    %348 = vector.shape_cast %347 : vector<1x1x128xf32> to vector<1x128xf32>
    %349 = vector.shape_cast %348 : vector<1x128xf32> to vector<1x128xf32>
    %350 = vector.broadcast %349 : vector<1x128xf32> to vector<8x128xf32>
    %c46 = arith.constant 46 : index
    %c0_119 = arith.constant 0 : index
    %c0_120 = arith.constant 0 : index
    %351 = vector.load %arg7[%c46, %c0_119, %c0_120] : memref<49x8x128xf32, #tpu.memory_space<vmem>>, vector<1x8x128xf32>
    %352 = vector.shape_cast %351 : vector<1x8x128xf32> to vector<8x128xf32>
    %353 = vector.shape_cast %350 : vector<8x128xf32> to vector<1x8x128xf32>
    tpu.vector_store %arg7[%c46, %c0_119, %c0_120], %353 {strides = array<i32>} : memref<49x8x128xf32, #tpu.memory_space<vmem>>, vector<1x8x128xf32>,
    %354 = vector.extract_strided_slice %24 {offsets = [6, 5, 0], sizes = [1, 1, 128], strides = [1, 1, 1]} : vector<7x7x128xf32> to vector<1x1x128xf32>
    %355 = vector.shape_cast %354 : vector<1x1x128xf32> to vector<1x128xf32>
    %356 = vector.shape_cast %355 : vector<1x128xf32> to vector<1x128xf32>
    %357 = vector.broadcast %356 : vector<1x128xf32> to vector<8x128xf32>
    %c47 = arith.constant 47 : index
    %c0_121 = arith.constant 0 : index
    %c0_122 = arith.constant 0 : index
    %358 = vector.load %arg7[%c47, %c0_121, %c0_122] : memref<49x8x128xf32, #tpu.memory_space<vmem>>, vector<1x8x128xf32>
    %359 = vector.shape_cast %358 : vector<1x8x128xf32> to vector<8x128xf32>
    %360 = vector.shape_cast %357 : vector<8x128xf32> to vector<1x8x128xf32>
    tpu.vector_store %arg7[%c47, %c0_121, %c0_122], %360 {strides = array<i32>} : memref<49x8x128xf32, #tpu.memory_space<vmem>>, vector<1x8x128xf32>,
    %361 = vector.extract_strided_slice %24 {offsets = [6, 6, 0], sizes = [1, 1, 128], strides = [1, 1, 1]} : vector<7x7x128xf32> to vector<1x1x128xf32>
    %362 = vector.shape_cast %361 : vector<1x1x128xf32> to vector<1x128xf32>
    %363 = vector.shape_cast %362 : vector<1x128xf32> to vector<1x128xf32>
    %364 = vector.broadcast %363 : vector<1x128xf32> to vector<8x128xf32>
    %c48 = arith.constant 48 : index
    %c0_123 = arith.constant 0 : index
    %c0_124 = arith.constant 0 : index
    %365 = vector.load %arg7[%c48, %c0_123, %c0_124] : memref<49x8x128xf32, #tpu.memory_space<vmem>>, vector<1x8x128xf32>
    %366 = vector.shape_cast %365 : vector<1x8x128xf32> to vector<8x128xf32>
    %367 = vector.shape_cast %364 : vector<8x128xf32> to vector<1x8x128xf32>
    tpu.vector_store %arg7[%c48, %c0_123, %c0_124], %367 {strides = array<i32>} : memref<49x8x128xf32, #tpu.memory_space<vmem>>, vector<1x8x128xf32>,
    %c0_125 = arith.constant 0 : index
    %c0_126 = arith.constant 0 : index
    %368 = vector.load %arg4[%c0_125, %c0_126] : memref<1x128xf32, #tpu.memory_space<vmem>>, vector<1x128xf32>
    %cst_127 = arith.constant 0.000000e+00 : f32
    %369 = vector.broadcast %cst_127 : f32 to vector<3x128xf32>
    %c0_i32 = arith.constant 0 : i32
    %c8_i32 = arith.constant 8 : i32
    %370 = arith.muli %c0_i32, %c8_i32 : i32
    %c8_i32_128 = arith.constant 8 : i32
    %371 = arith.muli %370, %c8_i32_128 : i32
    %c1_i32 = arith.constant 1 : i32
    %372 = arith.addi %c1_i32, %371 : i32
    %c0_129 = arith.constant 0 : index
    %373 = arith.index_cast %372 : i32 to index
    %c0_130 = arith.constant 0 : index
    %374 = vector.load %arg2[%c0_129, %373, %c0_130] : memref<1x65x128xf32, #tpu.memory_space<vmem>>, vector<1x64x128xf32>
    %375 = vector.shape_cast %374 : vector<1x64x128xf32> to vector<64x128xf32>
    %c3_i32 = arith.constant 3 : i32
    %376 = arith.addi %370, %c3_i32 : i32
    %c0_i32_131 = arith.constant 0 : i32
    %377 = arith.addi %376, %c0_i32_131 : i32
    %378 = arith.index_cast %377 : i32 to index
    %c0_132 = arith.constant 0 : index
    %c0_133 = arith.constant 0 : index
    %379 = vector.load %arg6[%378, %c0_132, %c0_133] : memref<14x14x128xf32, #tpu.memory_space<vmem>>, vector<1x3x128xf32>
    %380 = vector.shape_cast %379 : vector<1x3x128xf32> to vector<3x128xf32>
    %381 = vector.shape_cast %369 : vector<3x128xf32> to vector<1x3x128xf32>
    tpu.vector_store %arg6[%378, %c0_132, %c0_133], %381 {strides = array<i32>} : memref<14x14x128xf32, #tpu.memory_space<vmem>>, vector<1x3x128xf32>,
    %382 = arith.index_cast %377 : i32 to index
    %c11_134 = arith.constant 11 : index
    %c0_135 = arith.constant 0 : index
    %383 = vector.load %arg6[%382, %c11_134, %c0_135] : memref<14x14x128xf32, #tpu.memory_space<vmem>>, vector<1x3x128xf32>
    %384 = vector.shape_cast %383 : vector<1x3x128xf32> to vector<3x128xf32>
    %385 = vector.shape_cast %369 : vector<3x128xf32> to vector<1x3x128xf32>
    tpu.vector_store %arg6[%382, %c11_134, %c0_135], %385 {strides = array<i32>} : memref<14x14x128xf32, #tpu.memory_space<vmem>>, vector<1x3x128xf32>,
    %386 = vector.extract_strided_slice %375 {offsets = [0, 0], sizes = [8, 128], strides = [1, 1]} : vector<64x128xf32> to vector<8x128xf32>
    %387 = arith.index_cast %377 : i32 to index
    %c3_136 = arith.constant 3 : index
    %c0_137 = arith.constant 0 : index
    %388 = vector.load %arg6[%387, %c3_136, %c0_137] : memref<14x14x128xf32, #tpu.memory_space<vmem>>, vector<1x8x128xf32>
    %389 = vector.shape_cast %388 : vector<1x8x128xf32> to vector<8x128xf32>
    %390 = vector.shape_cast %386 : vector<8x128xf32> to vector<1x8x128xf32>
    tpu.vector_store %arg6[%387, %c3_136, %c0_137], %390 {strides = array<i32>} : memref<14x14x128xf32, #tpu.memory_space<vmem>>, vector<1x8x128xf32>,
    %c3_i32_138 = arith.constant 3 : i32
    %391 = arith.addi %370, %c3_i32_138 : i32
    %c1_i32_139 = arith.constant 1 : i32
    %392 = arith.addi %391, %c1_i32_139 : i32
    %393 = arith.index_cast %392 : i32 to index
    %c0_140 = arith.constant 0 : index
    %c0_141 = arith.constant 0 : index
    %394 = vector.load %arg6[%393, %c0_140, %c0_141] : memref<14x14x128xf32, #tpu.memory_space<vmem>>, vector<1x3x128xf32>
    %395 = vector.shape_cast %394 : vector<1x3x128xf32> to vector<3x128xf32>
    %396 = vector.shape_cast %369 : vector<3x128xf32> to vector<1x3x128xf32>
    tpu.vector_store %arg6[%393, %c0_140, %c0_141], %396 {strides = array<i32>} : memref<14x14x128xf32, #tpu.memory_space<vmem>>, vector<1x3x128xf32>,
    %397 = arith.index_cast %392 : i32 to index
    %c11_142 = arith.constant 11 : index
    %c0_143 = arith.constant 0 : index
    %398 = vector.load %arg6[%397, %c11_142, %c0_143] : memref<14x14x128xf32, #tpu.memory_space<vmem>>, vector<1x3x128xf32>
    %399 = vector.shape_cast %398 : vector<1x3x128xf32> to vector<3x128xf32>
    %400 = vector.shape_cast %369 : vector<3x128xf32> to vector<1x3x128xf32>
    tpu.vector_store %arg6[%397, %c11_142, %c0_143], %400 {strides = array<i32>} : memref<14x14x128xf32, #tpu.memory_space<vmem>>, vector<1x3x128xf32>,
    %401 = vector.extract_strided_slice %375 {offsets = [8, 0], sizes = [8, 128], strides = [1, 1]} : vector<64x128xf32> to vector<8x128xf32>
    %402 = arith.index_cast %392 : i32 to index
    %c3_144 = arith.constant 3 : index
    %c0_145 = arith.constant 0 : index
    %403 = vector.load %arg6[%402, %c3_144, %c0_145] : memref<14x14x128xf32, #tpu.memory_space<vmem>>, vector<1x8x128xf32>
    %404 = vector.shape_cast %403 : vector<1x8x128xf32> to vector<8x128xf32>
    %405 = vector.shape_cast %401 : vector<8x128xf32> to vector<1x8x128xf32>
    tpu.vector_store %arg6[%402, %c3_144, %c0_145], %405 {strides = array<i32>} : memref<14x14x128xf32, #tpu.memory_space<vmem>>, vector<1x8x128xf32>,
    %c3_i32_146 = arith.constant 3 : i32
    %406 = arith.addi %370, %c3_i32_146 : i32
    %c2_i32 = arith.constant 2 : i32
    %407 = arith.addi %406, %c2_i32 : i32
    %408 = arith.index_cast %407 : i32 to index
    %c0_147 = arith.constant 0 : index
    %c0_148 = arith.constant 0 : index
    %409 = vector.load %arg6[%408, %c0_147, %c0_148] : memref<14x14x128xf32, #tpu.memory_space<vmem>>, vector<1x3x128xf32>
    %410 = vector.shape_cast %409 : vector<1x3x128xf32> to vector<3x128xf32>
    %411 = vector.shape_cast %369 : vector<3x128xf32> to vector<1x3x128xf32>
    tpu.vector_store %arg6[%408, %c0_147, %c0_148], %411 {strides = array<i32>} : memref<14x14x128xf32, #tpu.memory_space<vmem>>, vector<1x3x128xf32>,
    %412 = arith.index_cast %407 : i32 to index
    %c11_149 = arith.constant 11 : index
    %c0_150 = arith.constant 0 : index
    %413 = vector.load %arg6[%412, %c11_149, %c0_150] : memref<14x14x128xf32, #tpu.memory_space<vmem>>, vector<1x3x128xf32>
    %414 = vector.shape_cast %413 : vector<1x3x128xf32> to vector<3x128xf32>
    %415 = vector.shape_cast %369 : vector<3x128xf32> to vector<1x3x128xf32>
    tpu.vector_store %arg6[%412, %c11_149, %c0_150], %415 {strides = array<i32>} : memref<14x14x128xf32, #tpu.memory_space<vmem>>, vector<1x3x128xf32>,
    %416 = vector.extract_strided_slice %375 {offsets = [16, 0], sizes = [8, 128], strides = [1, 1]} : vector<64x128xf32> to vector<8x128xf32>
    %417 = arith.index_cast %407 : i32 to index
    %c3_151 = arith.constant 3 : index
    %c0_152 = arith.constant 0 : index
    %418 = vector.load %arg6[%417, %c3_151, %c0_152] : memref<14x14x128xf32, #tpu.memory_space<vmem>>, vector<1x8x128xf32>
    %419 = vector.shape_cast %418 : vector<1x8x128xf32> to vector<8x128xf32>
    %420 = vector.shape_cast %416 : vector<8x128xf32> to vector<1x8x128xf32>
    tpu.vector_store %arg6[%417, %c3_151, %c0_152], %420 {strides = array<i32>} : memref<14x14x128xf32, #tpu.memory_space<vmem>>, vector<1x8x128xf32>,
    %c3_i32_153 = arith.constant 3 : i32
    %421 = arith.addi %370, %c3_i32_153 : i32
    %c3_i32_154 = arith.constant 3 : i32
    %422 = arith.addi %421, %c3_i32_154 : i32
    %423 = arith.index_cast %422 : i32 to index
    %c0_155 = arith.constant 0 : index
    %c0_156 = arith.constant 0 : index
    %424 = vector.load %arg6[%423, %c0_155, %c0_156] : memref<14x14x128xf32, #tpu.memory_space<vmem>>, vector<1x3x128xf32>
    %425 = vector.shape_cast %424 : vector<1x3x128xf32> to vector<3x128xf32>
    %426 = vector.shape_cast %369 : vector<3x128xf32> to vector<1x3x128xf32>
    tpu.vector_store %arg6[%423, %c0_155, %c0_156], %426 {strides = array<i32>} : memref<14x14x128xf32, #tpu.memory_space<vmem>>, vector<1x3x128xf32>,
    %427 = arith.index_cast %422 : i32 to index
    %c11_157 = arith.constant 11 : index
    %c0_158 = arith.constant 0 : index
    %428 = vector.load %arg6[%427, %c11_157, %c0_158] : memref<14x14x128xf32, #tpu.memory_space<vmem>>, vector<1x3x128xf32>
    %429 = vector.shape_cast %428 : vector<1x3x128xf32> to vector<3x128xf32>
    %430 = vector.shape_cast %369 : vector<3x128xf32> to vector<1x3x128xf32>
    tpu.vector_store %arg6[%427, %c11_157, %c0_158], %430 {strides = array<i32>} : memref<14x14x128xf32, #tpu.memory_space<vmem>>, vector<1x3x128xf32>,
    %431 = vector.extract_strided_slice %375 {offsets = [24, 0], sizes = [8, 128], strides = [1, 1]} : vector<64x128xf32> to vector<8x128xf32>
    %432 = arith.index_cast %422 : i32 to index
    %c3_159 = arith.constant 3 : index
    %c0_160 = arith.constant 0 : index
    %433 = vector.load %arg6[%432, %c3_159, %c0_160] : memref<14x14x128xf32, #tpu.memory_space<vmem>>, vector<1x8x128xf32>
    %434 = vector.shape_cast %433 : vector<1x8x128xf32> to vector<8x128xf32>
    %435 = vector.shape_cast %431 : vector<8x128xf32> to vector<1x8x128xf32>
    tpu.vector_store %arg6[%432, %c3_159, %c0_160], %435 {strides = array<i32>} : memref<14x14x128xf32, #tpu.memory_space<vmem>>, vector<1x8x128xf32>,
    %c3_i32_161 = arith.constant 3 : i32
    %436 = arith.addi %370, %c3_i32_161 : i32
    %c4_i32 = arith.constant 4 : i32
    %437 = arith.addi %436, %c4_i32 : i32
    %438 = arith.index_cast %437 : i32 to index
    %c0_162 = arith.constant 0 : index
    %c0_163 = arith.constant 0 : index
    %439 = vector.load %arg6[%438, %c0_162, %c0_163] : memref<14x14x128xf32, #tpu.memory_space<vmem>>, vector<1x3x128xf32>
    %440 = vector.shape_cast %439 : vector<1x3x128xf32> to vector<3x128xf32>
    %441 = vector.shape_cast %369 : vector<3x128xf32> to vector<1x3x128xf32>
    tpu.vector_store %arg6[%438, %c0_162, %c0_163], %441 {strides = array<i32>} : memref<14x14x128xf32, #tpu.memory_space<vmem>>, vector<1x3x128xf32>,
    %442 = arith.index_cast %437 : i32 to index
    %c11_164 = arith.constant 11 : index
    %c0_165 = arith.constant 0 : index
    %443 = vector.load %arg6[%442, %c11_164, %c0_165] : memref<14x14x128xf32, #tpu.memory_space<vmem>>, vector<1x3x128xf32>
    %444 = vector.shape_cast %443 : vector<1x3x128xf32> to vector<3x128xf32>
    %445 = vector.shape_cast %369 : vector<3x128xf32> to vector<1x3x128xf32>
    tpu.vector_store %arg6[%442, %c11_164, %c0_165], %445 {strides = array<i32>} : memref<14x14x128xf32, #tpu.memory_space<vmem>>, vector<1x3x128xf32>,
    %446 = vector.extract_strided_slice %375 {offsets = [32, 0], sizes = [8, 128], strides = [1, 1]} : vector<64x128xf32> to vector<8x128xf32>
    %447 = arith.index_cast %437 : i32 to index
    %c3_166 = arith.constant 3 : index
    %c0_167 = arith.constant 0 : index
    %448 = vector.load %arg6[%447, %c3_166, %c0_167] : memref<14x14x128xf32, #tpu.memory_space<vmem>>, vector<1x8x128xf32>
    %449 = vector.shape_cast %448 : vector<1x8x128xf32> to vector<8x128xf32>
    %450 = vector.shape_cast %446 : vector<8x128xf32> to vector<1x8x128xf32>
    tpu.vector_store %arg6[%447, %c3_166, %c0_167], %450 {strides = array<i32>} : memref<14x14x128xf32, #tpu.memory_space<vmem>>, vector<1x8x128xf32>,
    %c3_i32_168 = arith.constant 3 : i32
    %451 = arith.addi %370, %c3_i32_168 : i32
    %c5_i32 = arith.constant 5 : i32
    %452 = arith.addi %451, %c5_i32 : i32
    %453 = arith.index_cast %452 : i32 to index
    %c0_169 = arith.constant 0 : index
    %c0_170 = arith.constant 0 : index
    %454 = vector.load %arg6[%453, %c0_169, %c0_170] : memref<14x14x128xf32, #tpu.memory_space<vmem>>, vector<1x3x128xf32>
    %455 = vector.shape_cast %454 : vector<1x3x128xf32> to vector<3x128xf32>
    %456 = vector.shape_cast %369 : vector<3x128xf32> to vector<1x3x128xf32>
    tpu.vector_store %arg6[%453, %c0_169, %c0_170], %456 {strides = array<i32>} : memref<14x14x128xf32, #tpu.memory_space<vmem>>, vector<1x3x128xf32>,
    %457 = arith.index_cast %452 : i32 to index
    %c11_171 = arith.constant 11 : index
    %c0_172 = arith.constant 0 : index
    %458 = vector.load %arg6[%457, %c11_171, %c0_172] : memref<14x14x128xf32, #tpu.memory_space<vmem>>, vector<1x3x128xf32>
    %459 = vector.shape_cast %458 : vector<1x3x128xf32> to vector<3x128xf32>
    %460 = vector.shape_cast %369 : vector<3x128xf32> to vector<1x3x128xf32>
    tpu.vector_store %arg6[%457, %c11_171, %c0_172], %460 {strides = array<i32>} : memref<14x14x128xf32, #tpu.memory_space<vmem>>, vector<1x3x128xf32>,
    %461 = vector.extract_strided_slice %375 {offsets = [40, 0], sizes = [8, 128], strides = [1, 1]} : vector<64x128xf32> to vector<8x128xf32>
    %462 = arith.index_cast %452 : i32 to index
    %c3_173 = arith.constant 3 : index
    %c0_174 = arith.constant 0 : index
    %463 = vector.load %arg6[%462, %c3_173, %c0_174] : memref<14x14x128xf32, #tpu.memory_space<vmem>>, vector<1x8x128xf32>
    %464 = vector.shape_cast %463 : vector<1x8x128xf32> to vector<8x128xf32>
    %465 = vector.shape_cast %461 : vector<8x128xf32> to vector<1x8x128xf32>
    tpu.vector_store %arg6[%462, %c3_173, %c0_174], %465 {strides = array<i32>} : memref<14x14x128xf32, #tpu.memory_space<vmem>>, vector<1x8x128xf32>,
    %c3_i32_175 = arith.constant 3 : i32
    %466 = arith.addi %370, %c3_i32_175 : i32
    %c6_i32 = arith.constant 6 : i32
    %467 = arith.addi %466, %c6_i32 : i32
    %468 = arith.index_cast %467 : i32 to index
    %c0_176 = arith.constant 0 : index
    %c0_177 = arith.constant 0 : index
    %469 = vector.load %arg6[%468, %c0_176, %c0_177] : memref<14x14x128xf32, #tpu.memory_space<vmem>>, vector<1x3x128xf32>
    %470 = vector.shape_cast %469 : vector<1x3x128xf32> to vector<3x128xf32>
    %471 = vector.shape_cast %369 : vector<3x128xf32> to vector<1x3x128xf32>
    tpu.vector_store %arg6[%468, %c0_176, %c0_177], %471 {strides = array<i32>} : memref<14x14x128xf32, #tpu.memory_space<vmem>>, vector<1x3x128xf32>,
    %472 = arith.index_cast %467 : i32 to index
    %c11_178 = arith.constant 11 : index
    %c0_179 = arith.constant 0 : index
    %473 = vector.load %arg6[%472, %c11_178, %c0_179] : memref<14x14x128xf32, #tpu.memory_space<vmem>>, vector<1x3x128xf32>
    %474 = vector.shape_cast %473 : vector<1x3x128xf32> to vector<3x128xf32>
    %475 = vector.shape_cast %369 : vector<3x128xf32> to vector<1x3x128xf32>
    tpu.vector_store %arg6[%472, %c11_178, %c0_179], %475 {strides = array<i32>} : memref<14x14x128xf32, #tpu.memory_space<vmem>>, vector<1x3x128xf32>,
    %476 = vector.extract_strided_slice %375 {offsets = [48, 0], sizes = [8, 128], strides = [1, 1]} : vector<64x128xf32> to vector<8x128xf32>
    %477 = arith.index_cast %467 : i32 to index
    %c3_180 = arith.constant 3 : index
    %c0_181 = arith.constant 0 : index
    %478 = vector.load %arg6[%477, %c3_180, %c0_181] : memref<14x14x128xf32, #tpu.memory_space<vmem>>, vector<1x8x128xf32>
    %479 = vector.shape_cast %478 : vector<1x8x128xf32> to vector<8x128xf32>
    %480 = vector.shape_cast %476 : vector<8x128xf32> to vector<1x8x128xf32>
    tpu.vector_store %arg6[%477, %c3_180, %c0_181], %480 {strides = array<i32>} : memref<14x14x128xf32, #tpu.memory_space<vmem>>, vector<1x8x128xf32>,
    %c3_i32_182 = arith.constant 3 : i32
    %481 = arith.addi %370, %c3_i32_182 : i32
    %c7_i32 = arith.constant 7 : i32
    %482 = arith.addi %481, %c7_i32 : i32
    %483 = arith.index_cast %482 : i32 to index
    %c0_183 = arith.constant 0 : index
    %c0_184 = arith.constant 0 : index
    %484 = vector.load %arg6[%483, %c0_183, %c0_184] : memref<14x14x128xf32, #tpu.memory_space<vmem>>, vector<1x3x128xf32>
    %485 = vector.shape_cast %484 : vector<1x3x128xf32> to vector<3x128xf32>
    %486 = vector.shape_cast %369 : vector<3x128xf32> to vector<1x3x128xf32>
    tpu.vector_store %arg6[%483, %c0_183, %c0_184], %486 {strides = array<i32>} : memref<14x14x128xf32, #tpu.memory_space<vmem>>, vector<1x3x128xf32>,
    %487 = arith.index_cast %482 : i32 to index
    %c11_185 = arith.constant 11 : index
    %c0_186 = arith.constant 0 : index
    %488 = vector.load %arg6[%487, %c11_185, %c0_186] : memref<14x14x128xf32, #tpu.memory_space<vmem>>, vector<1x3x128xf32>
    %489 = vector.shape_cast %488 : vector<1x3x128xf32> to vector<3x128xf32>
    %490 = vector.shape_cast %369 : vector<3x128xf32> to vector<1x3x128xf32>
    tpu.vector_store %arg6[%487, %c11_185, %c0_186], %490 {strides = array<i32>} : memref<14x14x128xf32, #tpu.memory_space<vmem>>, vector<1x3x128xf32>,
    %491 = vector.extract_strided_slice %375 {offsets = [56, 0], sizes = [8, 128], strides = [1, 1]} : vector<64x128xf32> to vector<8x128xf32>
    %492 = arith.index_cast %482 : i32 to index
    %c3_187 = arith.constant 3 : index
    %c0_188 = arith.constant 0 : index
    %493 = vector.load %arg6[%492, %c3_187, %c0_188] : memref<14x14x128xf32, #tpu.memory_space<vmem>>, vector<1x8x128xf32>
    %494 = vector.shape_cast %493 : vector<1x8x128xf32> to vector<8x128xf32>
    %495 = vector.shape_cast %491 : vector<8x128xf32> to vector<1x8x128xf32>
    tpu.vector_store %arg6[%492, %c3_187, %c0_188], %495 {strides = array<i32>} : memref<14x14x128xf32, #tpu.memory_space<vmem>>, vector<1x8x128xf32>,
    %c1_i32_189 = arith.constant 1 : i32
    %c0_i32_190 = arith.constant 0 : i32
    %c8_i32_191 = arith.constant 8 : i32
    %496 = arith.muli %c0_i32_190, %c8_i32_191 : i32
    %cst_192 = arith.constant 0.000000e+00 : f32
    %497 = vector.broadcast %cst_192 : f32 to vector<8x128xf32>
    %cst_193 = arith.constant 0.000000e+00 : f32
    %498 = vector.broadcast %cst_193 : f32 to vector<8x128xf32>
    %cst_194 = arith.constant 0.000000e+00 : f32
    %499 = vector.broadcast %cst_194 : f32 to vector<8x128xf32>
    %cst_195 = arith.constant 0.000000e+00 : f32
    %500 = vector.broadcast %cst_195 : f32 to vector<8x128xf32>
    %cst_196 = arith.constant 0.000000e+00 : f32
    %501 = vector.broadcast %cst_196 : f32 to vector<8x128xf32>
    %cst_197 = arith.constant 0.000000e+00 : f32
    %502 = vector.broadcast %cst_197 : f32 to vector<8x128xf32>
    %cst_198 = arith.constant 0.000000e+00 : f32
    %503 = vector.broadcast %cst_198 : f32 to vector<8x128xf32>
    %cst_199 = arith.constant 0.000000e+00 : f32
    %504 = vector.broadcast %cst_199 : f32 to vector<8x128xf32>
    %c0_i32_200 = arith.constant 0 : i32
    %505 = arith.addi %496, %c0_i32_200 : i32
    %506 = arith.index_cast %505 : i32 to index
    %c0_201 = arith.constant 0 : index
    %c0_202 = arith.constant 0 : index
    %507 = vector.load %arg6[%506, %c0_201, %c0_202] : memref<14x14x128xf32, #tpu.memory_space<vmem>>, vector<1x14x128xf32>
    %508 = vector.shape_cast %507 : vector<1x14x128xf32> to vector<14x128xf32>
    %509 = vector.extract_strided_slice %508 {offsets = [0, 0], sizes = [8, 128], strides = [1, 1]} : vector<14x128xf32> to vector<8x128xf32>
    %c0_203 = arith.constant 0 : index
    %c0_204 = arith.constant 0 : index
    %c0_205 = arith.constant 0 : index
    %510 = vector.load %arg7[%c0_203, %c0_204, %c0_205] : memref<49x8x128xf32, #tpu.memory_space<vmem>>, vector<1x8x128xf32>
    %511 = vector.shape_cast %510 : vector<1x8x128xf32> to vector<8x128xf32>
    %512 = arith.mulf %509, %511 : vector<8x128xf32>
    %513 = arith.addf %497, %512 : vector<8x128xf32>
    %514 = vector.extract_strided_slice %508 {offsets = [1, 0], sizes = [8, 128], strides = [1, 1]} : vector<14x128xf32> to vector<8x128xf32>
    %c1_206 = arith.constant 1 : index
    %c0_207 = arith.constant 0 : index
    %c0_208 = arith.constant 0 : index
    %515 = vector.load %arg7[%c1_206, %c0_207, %c0_208] : memref<49x8x128xf32, #tpu.memory_space<vmem>>, vector<1x8x128xf32>
    %516 = vector.shape_cast %515 : vector<1x8x128xf32> to vector<8x128xf32>
    %517 = arith.mulf %514, %516 : vector<8x128xf32>
    %518 = arith.addf %513, %517 : vector<8x128xf32>
    %519 = vector.extract_strided_slice %508 {offsets = [2, 0], sizes = [8, 128], strides = [1, 1]} : vector<14x128xf32> to vector<8x128xf32>
    %c2_209 = arith.constant 2 : index
    %c0_210 = arith.constant 0 : index
    %c0_211 = arith.constant 0 : index
    %520 = vector.load %arg7[%c2_209, %c0_210, %c0_211] : memref<49x8x128xf32, #tpu.memory_space<vmem>>, vector<1x8x128xf32>
    %521 = vector.shape_cast %520 : vector<1x8x128xf32> to vector<8x128xf32>
    %522 = arith.mulf %519, %521 : vector<8x128xf32>
    %523 = arith.addf %518, %522 : vector<8x128xf32>
    %524 = vector.extract_strided_slice %508 {offsets = [3, 0], sizes = [8, 128], strides = [1, 1]} : vector<14x128xf32> to vector<8x128xf32>
    %c3_212 = arith.constant 3 : index
    %c0_213 = arith.constant 0 : index
    %c0_214 = arith.constant 0 : index
    %525 = vector.load %arg7[%c3_212, %c0_213, %c0_214] : memref<49x8x128xf32, #tpu.memory_space<vmem>>, vector<1x8x128xf32>
    %526 = vector.shape_cast %525 : vector<1x8x128xf32> to vector<8x128xf32>
    %527 = arith.mulf %524, %526 : vector<8x128xf32>
    %528 = arith.addf %523, %527 : vector<8x128xf32>
    %529 = vector.extract_strided_slice %508 {offsets = [4, 0], sizes = [8, 128], strides = [1, 1]} : vector<14x128xf32> to vector<8x128xf32>
    %c4_215 = arith.constant 4 : index
    %c0_216 = arith.constant 0 : index
    %c0_217 = arith.constant 0 : index
    %530 = vector.load %arg7[%c4_215, %c0_216, %c0_217] : memref<49x8x128xf32, #tpu.memory_space<vmem>>, vector<1x8x128xf32>
    %531 = vector.shape_cast %530 : vector<1x8x128xf32> to vector<8x128xf32>
    %532 = arith.mulf %529, %531 : vector<8x128xf32>
    %533 = arith.addf %528, %532 : vector<8x128xf32>
    %534 = vector.extract_strided_slice %508 {offsets = [5, 0], sizes = [8, 128], strides = [1, 1]} : vector<14x128xf32> to vector<8x128xf32>
    %c5_218 = arith.constant 5 : index
    %c0_219 = arith.constant 0 : index
    %c0_220 = arith.constant 0 : index
    %535 = vector.load %arg7[%c5_218, %c0_219, %c0_220] : memref<49x8x128xf32, #tpu.memory_space<vmem>>, vector<1x8x128xf32>
    %536 = vector.shape_cast %535 : vector<1x8x128xf32> to vector<8x128xf32>
    %537 = arith.mulf %534, %536 : vector<8x128xf32>
    %538 = arith.addf %533, %537 : vector<8x128xf32>
    %539 = vector.extract_strided_slice %508 {offsets = [6, 0], sizes = [8, 128], strides = [1, 1]} : vector<14x128xf32> to vector<8x128xf32>
    %c6_221 = arith.constant 6 : index
    %c0_222 = arith.constant 0 : index
    %c0_223 = arith.constant 0 : index
    %540 = vector.load %arg7[%c6_221, %c0_222, %c0_223] : memref<49x8x128xf32, #tpu.memory_space<vmem>>, vector<1x8x128xf32>
    %541 = vector.shape_cast %540 : vector<1x8x128xf32> to vector<8x128xf32>
    %542 = arith.mulf %539, %541 : vector<8x128xf32>
    %543 = arith.addf %538, %542 : vector<8x128xf32>
    %c1_i32_224 = arith.constant 1 : i32
    %544 = arith.addi %496, %c1_i32_224 : i32
    %545 = arith.index_cast %544 : i32 to index
    %c0_225 = arith.constant 0 : index
    %c0_226 = arith.constant 0 : index
    %546 = vector.load %arg6[%545, %c0_225, %c0_226] : memref<14x14x128xf32, #tpu.memory_space<vmem>>, vector<1x14x128xf32>
    %547 = vector.shape_cast %546 : vector<1x14x128xf32> to vector<14x128xf32>
    %548 = vector.extract_strided_slice %547 {offsets = [0, 0], sizes = [8, 128], strides = [1, 1]} : vector<14x128xf32> to vector<8x128xf32>
    %c7_227 = arith.constant 7 : index
    %c0_228 = arith.constant 0 : index
    %c0_229 = arith.constant 0 : index
    %549 = vector.load %arg7[%c7_227, %c0_228, %c0_229] : memref<49x8x128xf32, #tpu.memory_space<vmem>>, vector<1x8x128xf32>
    %550 = vector.shape_cast %549 : vector<1x8x128xf32> to vector<8x128xf32>
    %551 = arith.mulf %548, %550 : vector<8x128xf32>
    %552 = arith.addf %543, %551 : vector<8x128xf32>
    %c0_230 = arith.constant 0 : index
    %c0_231 = arith.constant 0 : index
    %c0_232 = arith.constant 0 : index
    %553 = vector.load %arg7[%c0_230, %c0_231, %c0_232] : memref<49x8x128xf32, #tpu.memory_space<vmem>>, vector<1x8x128xf32>
    %554 = vector.shape_cast %553 : vector<1x8x128xf32> to vector<8x128xf32>
    %555 = arith.mulf %548, %554 : vector<8x128xf32>
    %556 = arith.addf %498, %555 : vector<8x128xf32>
    %557 = vector.extract_strided_slice %547 {offsets = [1, 0], sizes = [8, 128], strides = [1, 1]} : vector<14x128xf32> to vector<8x128xf32>
    %c8_233 = arith.constant 8 : index
    %c0_234 = arith.constant 0 : index
    %c0_235 = arith.constant 0 : index
    %558 = vector.load %arg7[%c8_233, %c0_234, %c0_235] : memref<49x8x128xf32, #tpu.memory_space<vmem>>, vector<1x8x128xf32>
    %559 = vector.shape_cast %558 : vector<1x8x128xf32> to vector<8x128xf32>
    %560 = arith.mulf %557, %559 : vector<8x128xf32>
    %561 = arith.addf %552, %560 : vector<8x128xf32>
    %c1_236 = arith.constant 1 : index
    %c0_237 = arith.constant 0 : index
    %c0_238 = arith.constant 0 : index
    %562 = vector.load %arg7[%c1_236, %c0_237, %c0_238] : memref<49x8x128xf32, #tpu.memory_space<vmem>>, vector<1x8x128xf32>
    %563 = vector.shape_cast %562 : vector<1x8x128xf32> to vector<8x128xf32>
    %564 = arith.mulf %557, %563 : vector<8x128xf32>
    %565 = arith.addf %556, %564 : vector<8x128xf32>
    %566 = vector.extract_strided_slice %547 {offsets = [2, 0], sizes = [8, 128], strides = [1, 1]} : vector<14x128xf32> to vector<8x128xf32>
    %c9_239 = arith.constant 9 : index
    %c0_240 = arith.constant 0 : index
    %c0_241 = arith.constant 0 : index
    %567 = vector.load %arg7[%c9_239, %c0_240, %c0_241] : memref<49x8x128xf32, #tpu.memory_space<vmem>>, vector<1x8x128xf32>
    %568 = vector.shape_cast %567 : vector<1x8x128xf32> to vector<8x128xf32>
    %569 = arith.mulf %566, %568 : vector<8x128xf32>
    %570 = arith.addf %561, %569 : vector<8x128xf32>
    %c2_242 = arith.constant 2 : index
    %c0_243 = arith.constant 0 : index
    %c0_244 = arith.constant 0 : index
    %571 = vector.load %arg7[%c2_242, %c0_243, %c0_244] : memref<49x8x128xf32, #tpu.memory_space<vmem>>, vector<1x8x128xf32>
    %572 = vector.shape_cast %571 : vector<1x8x128xf32> to vector<8x128xf32>
    %573 = arith.mulf %566, %572 : vector<8x128xf32>
    %574 = arith.addf %565, %573 : vector<8x128xf32>
    %575 = vector.extract_strided_slice %547 {offsets = [3, 0], sizes = [8, 128], strides = [1, 1]} : vector<14x128xf32> to vector<8x128xf32>
    %c10_245 = arith.constant 10 : index
    %c0_246 = arith.constant 0 : index
    %c0_247 = arith.constant 0 : index
    %576 = vector.load %arg7[%c10_245, %c0_246, %c0_247] : memref<49x8x128xf32, #tpu.memory_space<vmem>>, vector<1x8x128xf32>
    %577 = vector.shape_cast %576 : vector<1x8x128xf32> to vector<8x128xf32>
    %578 = arith.mulf %575, %577 : vector<8x128xf32>
    %579 = arith.addf %570, %578 : vector<8x128xf32>
    %c3_248 = arith.constant 3 : index
    %c0_249 = arith.constant 0 : index
    %c0_250 = arith.constant 0 : index
    %580 = vector.load %arg7[%c3_248, %c0_249, %c0_250] : memref<49x8x128xf32, #tpu.memory_space<vmem>>, vector<1x8x128xf32>
    %581 = vector.shape_cast %580 : vector<1x8x128xf32> to vector<8x128xf32>
    %582 = arith.mulf %575, %581 : vector<8x128xf32>
    %583 = arith.addf %574, %582 : vector<8x128xf32>
    %584 = vector.extract_strided_slice %547 {offsets = [4, 0], sizes = [8, 128], strides = [1, 1]} : vector<14x128xf32> to vector<8x128xf32>
    %c11_251 = arith.constant 11 : index
    %c0_252 = arith.constant 0 : index
    %c0_253 = arith.constant 0 : index
    %585 = vector.load %arg7[%c11_251, %c0_252, %c0_253] : memref<49x8x128xf32, #tpu.memory_space<vmem>>, vector<1x8x128xf32>
    %586 = vector.shape_cast %585 : vector<1x8x128xf32> to vector<8x128xf32>
    %587 = arith.mulf %584, %586 : vector<8x128xf32>
    %588 = arith.addf %579, %587 : vector<8x128xf32>
    %c4_254 = arith.constant 4 : index
    %c0_255 = arith.constant 0 : index
    %c0_256 = arith.constant 0 : index
    %589 = vector.load %arg7[%c4_254, %c0_255, %c0_256] : memref<49x8x128xf32, #tpu.memory_space<vmem>>, vector<1x8x128xf32>
    %590 = vector.shape_cast %589 : vector<1x8x128xf32> to vector<8x128xf32>
    %591 = arith.mulf %584, %590 : vector<8x128xf32>
    %592 = arith.addf %583, %591 : vector<8x128xf32>
    %593 = vector.extract_strided_slice %547 {offsets = [5, 0], sizes = [8, 128], strides = [1, 1]} : vector<14x128xf32> to vector<8x128xf32>
    %c12_257 = arith.constant 12 : index
    %c0_258 = arith.constant 0 : index
    %c0_259 = arith.constant 0 : index
    %594 = vector.load %arg7[%c12_257, %c0_258, %c0_259] : memref<49x8x128xf32, #tpu.memory_space<vmem>>, vector<1x8x128xf32>
    %595 = vector.shape_cast %594 : vector<1x8x128xf32> to vector<8x128xf32>
    %596 = arith.mulf %593, %595 : vector<8x128xf32>
    %597 = arith.addf %588, %596 : vector<8x128xf32>
    %c5_260 = arith.constant 5 : index
    %c0_261 = arith.constant 0 : index
    %c0_262 = arith.constant 0 : index
    %598 = vector.load %arg7[%c5_260, %c0_261, %c0_262] : memref<49x8x128xf32, #tpu.memory_space<vmem>>, vector<1x8x128xf32>
    %599 = vector.shape_cast %598 : vector<1x8x128xf32> to vector<8x128xf32>
    %600 = arith.mulf %593, %599 : vector<8x128xf32>
    %601 = arith.addf %592, %600 : vector<8x128xf32>
    %602 = vector.extract_strided_slice %547 {offsets = [6, 0], sizes = [8, 128], strides = [1, 1]} : vector<14x128xf32> to vector<8x128xf32>
    %c13_263 = arith.constant 13 : index
    %c0_264 = arith.constant 0 : index
    %c0_265 = arith.constant 0 : index
    %603 = vector.load %arg7[%c13_263, %c0_264, %c0_265] : memref<49x8x128xf32, #tpu.memory_space<vmem>>, vector<1x8x128xf32>
    %604 = vector.shape_cast %603 : vector<1x8x128xf32> to vector<8x128xf32>
    %605 = arith.mulf %602, %604 : vector<8x128xf32>
    %606 = arith.addf %597, %605 : vector<8x128xf32>
    %c6_266 = arith.constant 6 : index
    %c0_267 = arith.constant 0 : index
    %c0_268 = arith.constant 0 : index
    %607 = vector.load %arg7[%c6_266, %c0_267, %c0_268] : memref<49x8x128xf32, #tpu.memory_space<vmem>>, vector<1x8x128xf32>
    %608 = vector.shape_cast %607 : vector<1x8x128xf32> to vector<8x128xf32>
    %609 = arith.mulf %602, %608 : vector<8x128xf32>
    %610 = arith.addf %601, %609 : vector<8x128xf32>
    %c2_i32_269 = arith.constant 2 : i32
    %611 = arith.addi %496, %c2_i32_269 : i32
    %612 = arith.index_cast %611 : i32 to index
    %c0_270 = arith.constant 0 : index
    %c0_271 = arith.constant 0 : index
    %613 = vector.load %arg6[%612, %c0_270, %c0_271] : memref<14x14x128xf32, #tpu.memory_space<vmem>>, vector<1x14x128xf32>
    %614 = vector.shape_cast %613 : vector<1x14x128xf32> to vector<14x128xf32>
    %615 = vector.extract_strided_slice %614 {offsets = [0, 0], sizes = [8, 128], strides = [1, 1]} : vector<14x128xf32> to vector<8x128xf32>
    %c14_272 = arith.constant 14 : index
    %c0_273 = arith.constant 0 : index
    %c0_274 = arith.constant 0 : index
    %616 = vector.load %arg7[%c14_272, %c0_273, %c0_274] : memref<49x8x128xf32, #tpu.memory_space<vmem>>, vector<1x8x128xf32>
    %617 = vector.shape_cast %616 : vector<1x8x128xf32> to vector<8x128xf32>
    %618 = arith.mulf %615, %617 : vector<8x128xf32>
    %619 = arith.addf %606, %618 : vector<8x128xf32>
    %c7_275 = arith.constant 7 : index
    %c0_276 = arith.constant 0 : index
    %c0_277 = arith.constant 0 : index
    %620 = vector.load %arg7[%c7_275, %c0_276, %c0_277] : memref<49x8x128xf32, #tpu.memory_space<vmem>>, vector<1x8x128xf32>
    %621 = vector.shape_cast %620 : vector<1x8x128xf32> to vector<8x128xf32>
    %622 = arith.mulf %615, %621 : vector<8x128xf32>
    %623 = arith.addf %610, %622 : vector<8x128xf32>
    %c0_278 = arith.constant 0 : index
    %c0_279 = arith.constant 0 : index
    %c0_280 = arith.constant 0 : index
    %624 = vector.load %arg7[%c0_278, %c0_279, %c0_280] : memref<49x8x128xf32, #tpu.memory_space<vmem>>, vector<1x8x128xf32>
    %625 = vector.shape_cast %624 : vector<1x8x128xf32> to vector<8x128xf32>
    %626 = arith.mulf %615, %625 : vector<8x128xf32>
    %627 = arith.addf %499, %626 : vector<8x128xf32>
    %628 = vector.extract_strided_slice %614 {offsets = [1, 0], sizes = [8, 128], strides = [1, 1]} : vector<14x128xf32> to vector<8x128xf32>
    %c15_281 = arith.constant 15 : index
    %c0_282 = arith.constant 0 : index
    %c0_283 = arith.constant 0 : index
    %629 = vector.load %arg7[%c15_281, %c0_282, %c0_283] : memref<49x8x128xf32, #tpu.memory_space<vmem>>, vector<1x8x128xf32>
    %630 = vector.shape_cast %629 : vector<1x8x128xf32> to vector<8x128xf32>
    %631 = arith.mulf %628, %630 : vector<8x128xf32>
    %632 = arith.addf %619, %631 : vector<8x128xf32>
    %c8_284 = arith.constant 8 : index
    %c0_285 = arith.constant 0 : index
    %c0_286 = arith.constant 0 : index
    %633 = vector.load %arg7[%c8_284, %c0_285, %c0_286] : memref<49x8x128xf32, #tpu.memory_space<vmem>>, vector<1x8x128xf32>
    %634 = vector.shape_cast %633 : vector<1x8x128xf32> to vector<8x128xf32>
    %635 = arith.mulf %628, %634 : vector<8x128xf32>
    %636 = arith.addf %623, %635 : vector<8x128xf32>
    %c1_287 = arith.constant 1 : index
    %c0_288 = arith.constant 0 : index
    %c0_289 = arith.constant 0 : index
    %637 = vector.load %arg7[%c1_287, %c0_288, %c0_289] : memref<49x8x128xf32, #tpu.memory_space<vmem>>, vector<1x8x128xf32>
    %638 = vector.shape_cast %637 : vector<1x8x128xf32> to vector<8x128xf32>
    %639 = arith.mulf %628, %638 : vector<8x128xf32>
    %640 = arith.addf %627, %639 : vector<8x128xf32>
    %641 = vector.extract_strided_slice %614 {offsets = [2, 0], sizes = [8, 128], strides = [1, 1]} : vector<14x128xf32> to vector<8x128xf32>
    %c16_290 = arith.constant 16 : index
    %c0_291 = arith.constant 0 : index
    %c0_292 = arith.constant 0 : index
    %642 = vector.load %arg7[%c16_290, %c0_291, %c0_292] : memref<49x8x128xf32, #tpu.memory_space<vmem>>, vector<1x8x128xf32>
    %643 = vector.shape_cast %642 : vector<1x8x128xf32> to vector<8x128xf32>
    %644 = arith.mulf %641, %643 : vector<8x128xf32>
    %645 = arith.addf %632, %644 : vector<8x128xf32>
    %c9_293 = arith.constant 9 : index
    %c0_294 = arith.constant 0 : index
    %c0_295 = arith.constant 0 : index
    %646 = vector.load %arg7[%c9_293, %c0_294, %c0_295] : memref<49x8x128xf32, #tpu.memory_space<vmem>>, vector<1x8x128xf32>
    %647 = vector.shape_cast %646 : vector<1x8x128xf32> to vector<8x128xf32>
    %648 = arith.mulf %641, %647 : vector<8x128xf32>
    %649 = arith.addf %636, %648 : vector<8x128xf32>
    %c2_296 = arith.constant 2 : index
    %c0_297 = arith.constant 0 : index
    %c0_298 = arith.constant 0 : index
    %650 = vector.load %arg7[%c2_296, %c0_297, %c0_298] : memref<49x8x128xf32, #tpu.memory_space<vmem>>, vector<1x8x128xf32>
    %651 = vector.shape_cast %650 : vector<1x8x128xf32> to vector<8x128xf32>
    %652 = arith.mulf %641, %651 : vector<8x128xf32>
    %653 = arith.addf %640, %652 : vector<8x128xf32>
    %654 = vector.extract_strided_slice %614 {offsets = [3, 0], sizes = [8, 128], strides = [1, 1]} : vector<14x128xf32> to vector<8x128xf32>
    %c17_299 = arith.constant 17 : index
    %c0_300 = arith.constant 0 : index
    %c0_301 = arith.constant 0 : index
    %655 = vector.load %arg7[%c17_299, %c0_300, %c0_301] : memref<49x8x128xf32, #tpu.memory_space<vmem>>, vector<1x8x128xf32>
    %656 = vector.shape_cast %655 : vector<1x8x128xf32> to vector<8x128xf32>
    %657 = arith.mulf %654, %656 : vector<8x128xf32>
    %658 = arith.addf %645, %657 : vector<8x128xf32>
    %c10_302 = arith.constant 10 : index
    %c0_303 = arith.constant 0 : index
    %c0_304 = arith.constant 0 : index
    %659 = vector.load %arg7[%c10_302, %c0_303, %c0_304] : memref<49x8x128xf32, #tpu.memory_space<vmem>>, vector<1x8x128xf32>
    %660 = vector.shape_cast %659 : vector<1x8x128xf32> to vector<8x128xf32>
    %661 = arith.mulf %654, %660 : vector<8x128xf32>
    %662 = arith.addf %649, %661 : vector<8x128xf32>
    %c3_305 = arith.constant 3 : index
    %c0_306 = arith.constant 0 : index
    %c0_307 = arith.constant 0 : index
    %663 = vector.load %arg7[%c3_305, %c0_306, %c0_307] : memref<49x8x128xf32, #tpu.memory_space<vmem>>, vector<1x8x128xf32>
    %664 = vector.shape_cast %663 : vector<1x8x128xf32> to vector<8x128xf32>
    %665 = arith.mulf %654, %664 : vector<8x128xf32>
    %666 = arith.addf %653, %665 : vector<8x128xf32>
    %667 = vector.extract_strided_slice %614 {offsets = [4, 0], sizes = [8, 128], strides = [1, 1]} : vector<14x128xf32> to vector<8x128xf32>
    %c18_308 = arith.constant 18 : index
    %c0_309 = arith.constant 0 : index
    %c0_310 = arith.constant 0 : index
    %668 = vector.load %arg7[%c18_308, %c0_309, %c0_310] : memref<49x8x128xf32, #tpu.memory_space<vmem>>, vector<1x8x128xf32>
    %669 = vector.shape_cast %668 : vector<1x8x128xf32> to vector<8x128xf32>
    %670 = arith.mulf %667, %669 : vector<8x128xf32>
    %671 = arith.addf %658, %670 : vector<8x128xf32>
    %c11_311 = arith.constant 11 : index
    %c0_312 = arith.constant 0 : index
    %c0_313 = arith.constant 0 : index
    %672 = vector.load %arg7[%c11_311, %c0_312, %c0_313] : memref<49x8x128xf32, #tpu.memory_space<vmem>>, vector<1x8x128xf32>
    %673 = vector.shape_cast %672 : vector<1x8x128xf32> to vector<8x128xf32>
    %674 = arith.mulf %667, %673 : vector<8x128xf32>
    %675 = arith.addf %662, %674 : vector<8x128xf32>
    %c4_314 = arith.constant 4 : index
    %c0_315 = arith.constant 0 : index
    %c0_316 = arith.constant 0 : index
    %676 = vector.load %arg7[%c4_314, %c0_315, %c0_316] : memref<49x8x128xf32, #tpu.memory_space<vmem>>, vector<1x8x128xf32>
    %677 = vector.shape_cast %676 : vector<1x8x128xf32> to vector<8x128xf32>
    %678 = arith.mulf %667, %677 : vector<8x128xf32>
    %679 = arith.addf %666, %678 : vector<8x128xf32>
    %680 = vector.extract_strided_slice %614 {offsets = [5, 0], sizes = [8, 128], strides = [1, 1]} : vector<14x128xf32> to vector<8x128xf32>
    %c19_317 = arith.constant 19 : index
    %c0_318 = arith.constant 0 : index
    %c0_319 = arith.constant 0 : index
    %681 = vector.load %arg7[%c19_317, %c0_318, %c0_319] : memref<49x8x128xf32, #tpu.memory_space<vmem>>, vector<1x8x128xf32>
    %682 = vector.shape_cast %681 : vector<1x8x128xf32> to vector<8x128xf32>
    %683 = arith.mulf %680, %682 : vector<8x128xf32>
    %684 = arith.addf %671, %683 : vector<8x128xf32>
    %c12_320 = arith.constant 12 : index
    %c0_321 = arith.constant 0 : index
    %c0_322 = arith.constant 0 : index
    %685 = vector.load %arg7[%c12_320, %c0_321, %c0_322] : memref<49x8x128xf32, #tpu.memory_space<vmem>>, vector<1x8x128xf32>
    %686 = vector.shape_cast %685 : vector<1x8x128xf32> to vector<8x128xf32>
    %687 = arith.mulf %680, %686 : vector<8x128xf32>
    %688 = arith.addf %675, %687 : vector<8x128xf32>
    %c5_323 = arith.constant 5 : index
    %c0_324 = arith.constant 0 : index
    %c0_325 = arith.constant 0 : index
    %689 = vector.load %arg7[%c5_323, %c0_324, %c0_325] : memref<49x8x128xf32, #tpu.memory_space<vmem>>, vector<1x8x128xf32>
    %690 = vector.shape_cast %689 : vector<1x8x128xf32> to vector<8x128xf32>
    %691 = arith.mulf %680, %690 : vector<8x128xf32>
    %692 = arith.addf %679, %691 : vector<8x128xf32>
    %693 = vector.extract_strided_slice %614 {offsets = [6, 0], sizes = [8, 128], strides = [1, 1]} : vector<14x128xf32> to vector<8x128xf32>
    %c20_326 = arith.constant 20 : index
    %c0_327 = arith.constant 0 : index
    %c0_328 = arith.constant 0 : index
    %694 = vector.load %arg7[%c20_326, %c0_327, %c0_328] : memref<49x8x128xf32, #tpu.memory_space<vmem>>, vector<1x8x128xf32>
    %695 = vector.shape_cast %694 : vector<1x8x128xf32> to vector<8x128xf32>
    %696 = arith.mulf %693, %695 : vector<8x128xf32>
    %697 = arith.addf %684, %696 : vector<8x128xf32>
    %c13_329 = arith.constant 13 : index
    %c0_330 = arith.constant 0 : index
    %c0_331 = arith.constant 0 : index
    %698 = vector.load %arg7[%c13_329, %c0_330, %c0_331] : memref<49x8x128xf32, #tpu.memory_space<vmem>>, vector<1x8x128xf32>
    %699 = vector.shape_cast %698 : vector<1x8x128xf32> to vector<8x128xf32>
    %700 = arith.mulf %693, %699 : vector<8x128xf32>
    %701 = arith.addf %688, %700 : vector<8x128xf32>
    %c6_332 = arith.constant 6 : index
    %c0_333 = arith.constant 0 : index
    %c0_334 = arith.constant 0 : index
    %702 = vector.load %arg7[%c6_332, %c0_333, %c0_334] : memref<49x8x128xf32, #tpu.memory_space<vmem>>, vector<1x8x128xf32>
    %703 = vector.shape_cast %702 : vector<1x8x128xf32> to vector<8x128xf32>
    %704 = arith.mulf %693, %703 : vector<8x128xf32>
    %705 = arith.addf %692, %704 : vector<8x128xf32>
    %c3_i32_335 = arith.constant 3 : i32
    %706 = arith.addi %496, %c3_i32_335 : i32
    %707 = arith.index_cast %706 : i32 to index
    %c0_336 = arith.constant 0 : index
    %c0_337 = arith.constant 0 : index
    %708 = vector.load %arg6[%707, %c0_336, %c0_337] : memref<14x14x128xf32, #tpu.memory_space<vmem>>, vector<1x14x128xf32>
    %709 = vector.shape_cast %708 : vector<1x14x128xf32> to vector<14x128xf32>
    %710 = vector.extract_strided_slice %709 {offsets = [0, 0], sizes = [8, 128], strides = [1, 1]} : vector<14x128xf32> to vector<8x128xf32>
    %c21_338 = arith.constant 21 : index
    %c0_339 = arith.constant 0 : index
    %c0_340 = arith.constant 0 : index
    %711 = vector.load %arg7[%c21_338, %c0_339, %c0_340] : memref<49x8x128xf32, #tpu.memory_space<vmem>>, vector<1x8x128xf32>
    %712 = vector.shape_cast %711 : vector<1x8x128xf32> to vector<8x128xf32>
    %713 = arith.mulf %710, %712 : vector<8x128xf32>
    %714 = arith.addf %697, %713 : vector<8x128xf32>
    %c14_341 = arith.constant 14 : index
    %c0_342 = arith.constant 0 : index
    %c0_343 = arith.constant 0 : index
    %715 = vector.load %arg7[%c14_341, %c0_342, %c0_343] : memref<49x8x128xf32, #tpu.memory_space<vmem>>, vector<1x8x128xf32>
    %716 = vector.shape_cast %715 : vector<1x8x128xf32> to vector<8x128xf32>
    %717 = arith.mulf %710, %716 : vector<8x128xf32>
    %718 = arith.addf %701, %717 : vector<8x128xf32>
    %c7_344 = arith.constant 7 : index
    %c0_345 = arith.constant 0 : index
    %c0_346 = arith.constant 0 : index
    %719 = vector.load %arg7[%c7_344, %c0_345, %c0_346] : memref<49x8x128xf32, #tpu.memory_space<vmem>>, vector<1x8x128xf32>
    %720 = vector.shape_cast %719 : vector<1x8x128xf32> to vector<8x128xf32>
    %721 = arith.mulf %710, %720 : vector<8x128xf32>
    %722 = arith.addf %705, %721 : vector<8x128xf32>
    %c0_347 = arith.constant 0 : index
    %c0_348 = arith.constant 0 : index
    %c0_349 = arith.constant 0 : index
    %723 = vector.load %arg7[%c0_347, %c0_348, %c0_349] : memref<49x8x128xf32, #tpu.memory_space<vmem>>, vector<1x8x128xf32>
    %724 = vector.shape_cast %723 : vector<1x8x128xf32> to vector<8x128xf32>
    %725 = arith.mulf %710, %724 : vector<8x128xf32>
    %726 = arith.addf %500, %725 : vector<8x128xf32>
    %727 = vector.extract_strided_slice %709 {offsets = [1, 0], sizes = [8, 128], strides = [1, 1]} : vector<14x128xf32> to vector<8x128xf32>
    %c22_350 = arith.constant 22 : index
    %c0_351 = arith.constant 0 : index
    %c0_352 = arith.constant 0 : index
    %728 = vector.load %arg7[%c22_350, %c0_351, %c0_352] : memref<49x8x128xf32, #tpu.memory_space<vmem>>, vector<1x8x128xf32>
    %729 = vector.shape_cast %728 : vector<1x8x128xf32> to vector<8x128xf32>
    %730 = arith.mulf %727, %729 : vector<8x128xf32>
    %731 = arith.addf %714, %730 : vector<8x128xf32>
    %c15_353 = arith.constant 15 : index
    %c0_354 = arith.constant 0 : index
    %c0_355 = arith.constant 0 : index
    %732 = vector.load %arg7[%c15_353, %c0_354, %c0_355] : memref<49x8x128xf32, #tpu.memory_space<vmem>>, vector<1x8x128xf32>
    %733 = vector.shape_cast %732 : vector<1x8x128xf32> to vector<8x128xf32>
    %734 = arith.mulf %727, %733 : vector<8x128xf32>
    %735 = arith.addf %718, %734 : vector<8x128xf32>
    %c8_356 = arith.constant 8 : index
    %c0_357 = arith.constant 0 : index
    %c0_358 = arith.constant 0 : index
    %736 = vector.load %arg7[%c8_356, %c0_357, %c0_358] : memref<49x8x128xf32, #tpu.memory_space<vmem>>, vector<1x8x128xf32>
    %737 = vector.shape_cast %736 : vector<1x8x128xf32> to vector<8x128xf32>
    %738 = arith.mulf %727, %737 : vector<8x128xf32>
    %739 = arith.addf %722, %738 : vector<8x128xf32>
    %c1_359 = arith.constant 1 : index
    %c0_360 = arith.constant 0 : index
    %c0_361 = arith.constant 0 : index
    %740 = vector.load %arg7[%c1_359, %c0_360, %c0_361] : memref<49x8x128xf32, #tpu.memory_space<vmem>>, vector<1x8x128xf32>
    %741 = vector.shape_cast %740 : vector<1x8x128xf32> to vector<8x128xf32>
    %742 = arith.mulf %727, %741 : vector<8x128xf32>
    %743 = arith.addf %726, %742 : vector<8x128xf32>
    %744 = vector.extract_strided_slice %709 {offsets = [2, 0], sizes = [8, 128], strides = [1, 1]} : vector<14x128xf32> to vector<8x128xf32>
    %c23_362 = arith.constant 23 : index
    %c0_363 = arith.constant 0 : index
    %c0_364 = arith.constant 0 : index
    %745 = vector.load %arg7[%c23_362, %c0_363, %c0_364] : memref<49x8x128xf32, #tpu.memory_space<vmem>>, vector<1x8x128xf32>
    %746 = vector.shape_cast %745 : vector<1x8x128xf32> to vector<8x128xf32>
    %747 = arith.mulf %744, %746 : vector<8x128xf32>
    %748 = arith.addf %731, %747 : vector<8x128xf32>
    %c16_365 = arith.constant 16 : index
    %c0_366 = arith.constant 0 : index
    %c0_367 = arith.constant 0 : index
    %749 = vector.load %arg7[%c16_365, %c0_366, %c0_367] : memref<49x8x128xf32, #tpu.memory_space<vmem>>, vector<1x8x128xf32>
    %750 = vector.shape_cast %749 : vector<1x8x128xf32> to vector<8x128xf32>
    %751 = arith.mulf %744, %750 : vector<8x128xf32>
    %752 = arith.addf %735, %751 : vector<8x128xf32>
    %c9_368 = arith.constant 9 : index
    %c0_369 = arith.constant 0 : index
    %c0_370 = arith.constant 0 : index
    %753 = vector.load %arg7[%c9_368, %c0_369, %c0_370] : memref<49x8x128xf32, #tpu.memory_space<vmem>>, vector<1x8x128xf32>
    %754 = vector.shape_cast %753 : vector<1x8x128xf32> to vector<8x128xf32>
    %755 = arith.mulf %744, %754 : vector<8x128xf32>
    %756 = arith.addf %739, %755 : vector<8x128xf32>
    %c2_371 = arith.constant 2 : index
    %c0_372 = arith.constant 0 : index
    %c0_373 = arith.constant 0 : index
    %757 = vector.load %arg7[%c2_371, %c0_372, %c0_373] : memref<49x8x128xf32, #tpu.memory_space<vmem>>, vector<1x8x128xf32>
    %758 = vector.shape_cast %757 : vector<1x8x128xf32> to vector<8x128xf32>
    %759 = arith.mulf %744, %758 : vector<8x128xf32>
    %760 = arith.addf %743, %759 : vector<8x128xf32>
    %761 = vector.extract_strided_slice %709 {offsets = [3, 0], sizes = [8, 128], strides = [1, 1]} : vector<14x128xf32> to vector<8x128xf32>
    %c24_374 = arith.constant 24 : index
    %c0_375 = arith.constant 0 : index
    %c0_376 = arith.constant 0 : index
    %762 = vector.load %arg7[%c24_374, %c0_375, %c0_376] : memref<49x8x128xf32, #tpu.memory_space<vmem>>, vector<1x8x128xf32>
    %763 = vector.shape_cast %762 : vector<1x8x128xf32> to vector<8x128xf32>
    %764 = arith.mulf %761, %763 : vector<8x128xf32>
    %765 = arith.addf %748, %764 : vector<8x128xf32>
    %c17_377 = arith.constant 17 : index
    %c0_378 = arith.constant 0 : index
    %c0_379 = arith.constant 0 : index
    %766 = vector.load %arg7[%c17_377, %c0_378, %c0_379] : memref<49x8x128xf32, #tpu.memory_space<vmem>>, vector<1x8x128xf32>
    %767 = vector.shape_cast %766 : vector<1x8x128xf32> to vector<8x128xf32>
    %768 = arith.mulf %761, %767 : vector<8x128xf32>
    %769 = arith.addf %752, %768 : vector<8x128xf32>
    %c10_380 = arith.constant 10 : index
    %c0_381 = arith.constant 0 : index
    %c0_382 = arith.constant 0 : index
    %770 = vector.load %arg7[%c10_380, %c0_381, %c0_382] : memref<49x8x128xf32, #tpu.memory_space<vmem>>, vector<1x8x128xf32>
    %771 = vector.shape_cast %770 : vector<1x8x128xf32> to vector<8x128xf32>
    %772 = arith.mulf %761, %771 : vector<8x128xf32>
    %773 = arith.addf %756, %772 : vector<8x128xf32>
    %c3_383 = arith.constant 3 : index
    %c0_384 = arith.constant 0 : index
    %c0_385 = arith.constant 0 : index
    %774 = vector.load %arg7[%c3_383, %c0_384, %c0_385] : memref<49x8x128xf32, #tpu.memory_space<vmem>>, vector<1x8x128xf32>
    %775 = vector.shape_cast %774 : vector<1x8x128xf32> to vector<8x128xf32>
    %776 = arith.mulf %761, %775 : vector<8x128xf32>
    %777 = arith.addf %760, %776 : vector<8x128xf32>
    %778 = vector.extract_strided_slice %709 {offsets = [4, 0], sizes = [8, 128], strides = [1, 1]} : vector<14x128xf32> to vector<8x128xf32>
    %c25_386 = arith.constant 25 : index
    %c0_387 = arith.constant 0 : index
    %c0_388 = arith.constant 0 : index
    %779 = vector.load %arg7[%c25_386, %c0_387, %c0_388] : memref<49x8x128xf32, #tpu.memory_space<vmem>>, vector<1x8x128xf32>
    %780 = vector.shape_cast %779 : vector<1x8x128xf32> to vector<8x128xf32>
    %781 = arith.mulf %778, %780 : vector<8x128xf32>
    %782 = arith.addf %765, %781 : vector<8x128xf32>
    %c18_389 = arith.constant 18 : index
    %c0_390 = arith.constant 0 : index
    %c0_391 = arith.constant 0 : index
    %783 = vector.load %arg7[%c18_389, %c0_390, %c0_391] : memref<49x8x128xf32, #tpu.memory_space<vmem>>, vector<1x8x128xf32>
    %784 = vector.shape_cast %783 : vector<1x8x128xf32> to vector<8x128xf32>
    %785 = arith.mulf %778, %784 : vector<8x128xf32>
    %786 = arith.addf %769, %785 : vector<8x128xf32>
    %c11_392 = arith.constant 11 : index
    %c0_393 = arith.constant 0 : index
    %c0_394 = arith.constant 0 : index
    %787 = vector.load %arg7[%c11_392, %c0_393, %c0_394] : memref<49x8x128xf32, #tpu.memory_space<vmem>>, vector<1x8x128xf32>
    %788 = vector.shape_cast %787 : vector<1x8x128xf32> to vector<8x128xf32>
    %789 = arith.mulf %778, %788 : vector<8x128xf32>
    %790 = arith.addf %773, %789 : vector<8x128xf32>
    %c4_395 = arith.constant 4 : index
    %c0_396 = arith.constant 0 : index
    %c0_397 = arith.constant 0 : index
    %791 = vector.load %arg7[%c4_395, %c0_396, %c0_397] : memref<49x8x128xf32, #tpu.memory_space<vmem>>, vector<1x8x128xf32>
    %792 = vector.shape_cast %791 : vector<1x8x128xf32> to vector<8x128xf32>
    %793 = arith.mulf %778, %792 : vector<8x128xf32>
    %794 = arith.addf %777, %793 : vector<8x128xf32>
    %795 = vector.extract_strided_slice %709 {offsets = [5, 0], sizes = [8, 128], strides = [1, 1]} : vector<14x128xf32> to vector<8x128xf32>
    %c26_398 = arith.constant 26 : index
    %c0_399 = arith.constant 0 : index
    %c0_400 = arith.constant 0 : index
    %796 = vector.load %arg7[%c26_398, %c0_399, %c0_400] : memref<49x8x128xf32, #tpu.memory_space<vmem>>, vector<1x8x128xf32>
    %797 = vector.shape_cast %796 : vector<1x8x128xf32> to vector<8x128xf32>
    %798 = arith.mulf %795, %797 : vector<8x128xf32>
    %799 = arith.addf %782, %798 : vector<8x128xf32>
    %c19_401 = arith.constant 19 : index
    %c0_402 = arith.constant 0 : index
    %c0_403 = arith.constant 0 : index
    %800 = vector.load %arg7[%c19_401, %c0_402, %c0_403] : memref<49x8x128xf32, #tpu.memory_space<vmem>>, vector<1x8x128xf32>
    %801 = vector.shape_cast %800 : vector<1x8x128xf32> to vector<8x128xf32>
    %802 = arith.mulf %795, %801 : vector<8x128xf32>
    %803 = arith.addf %786, %802 : vector<8x128xf32>
    %c12_404 = arith.constant 12 : index
    %c0_405 = arith.constant 0 : index
    %c0_406 = arith.constant 0 : index
    %804 = vector.load %arg7[%c12_404, %c0_405, %c0_406] : memref<49x8x128xf32, #tpu.memory_space<vmem>>, vector<1x8x128xf32>
    %805 = vector.shape_cast %804 : vector<1x8x128xf32> to vector<8x128xf32>
    %806 = arith.mulf %795, %805 : vector<8x128xf32>
    %807 = arith.addf %790, %806 : vector<8x128xf32>
    %c5_407 = arith.constant 5 : index
    %c0_408 = arith.constant 0 : index
    %c0_409 = arith.constant 0 : index
    %808 = vector.load %arg7[%c5_407, %c0_408, %c0_409] : memref<49x8x128xf32, #tpu.memory_space<vmem>>, vector<1x8x128xf32>
    %809 = vector.shape_cast %808 : vector<1x8x128xf32> to vector<8x128xf32>
    %810 = arith.mulf %795, %809 : vector<8x128xf32>
    %811 = arith.addf %794, %810 : vector<8x128xf32>
    %812 = vector.extract_strided_slice %709 {offsets = [6, 0], sizes = [8, 128], strides = [1, 1]} : vector<14x128xf32> to vector<8x128xf32>
    %c27_410 = arith.constant 27 : index
    %c0_411 = arith.constant 0 : index
    %c0_412 = arith.constant 0 : index
    %813 = vector.load %arg7[%c27_410, %c0_411, %c0_412] : memref<49x8x128xf32, #tpu.memory_space<vmem>>, vector<1x8x128xf32>
    %814 = vector.shape_cast %813 : vector<1x8x128xf32> to vector<8x128xf32>
    %815 = arith.mulf %812, %814 : vector<8x128xf32>
    %816 = arith.addf %799, %815 : vector<8x128xf32>
    %c20_413 = arith.constant 20 : index
    %c0_414 = arith.constant 0 : index
    %c0_415 = arith.constant 0 : index
    %817 = vector.load %arg7[%c20_413, %c0_414, %c0_415] : memref<49x8x128xf32, #tpu.memory_space<vmem>>, vector<1x8x128xf32>
    %818 = vector.shape_cast %817 : vector<1x8x128xf32> to vector<8x128xf32>
    %819 = arith.mulf %812, %818 : vector<8x128xf32>
    %820 = arith.addf %803, %819 : vector<8x128xf32>
    %c13_416 = arith.constant 13 : index
    %c0_417 = arith.constant 0 : index
    %c0_418 = arith.constant 0 : index
    %821 = vector.load %arg7[%c13_416, %c0_417, %c0_418] : memref<49x8x128xf32, #tpu.memory_space<vmem>>, vector<1x8x128xf32>
    %822 = vector.shape_cast %821 : vector<1x8x128xf32> to vector<8x128xf32>
    %823 = arith.mulf %812, %822 : vector<8x128xf32>
    %824 = arith.addf %807, %823 : vector<8x128xf32>
    %c6_419 = arith.constant 6 : index
    %c0_420 = arith.constant 0 : index
    %c0_421 = arith.constant 0 : index
    %825 = vector.load %arg7[%c6_419, %c0_420, %c0_421] : memref<49x8x128xf32, #tpu.memory_space<vmem>>, vector<1x8x128xf32>
    %826 = vector.shape_cast %825 : vector<1x8x128xf32> to vector<8x128xf32>
    %827 = arith.mulf %812, %826 : vector<8x128xf32>
    %828 = arith.addf %811, %827 : vector<8x128xf32>
    %c4_i32_422 = arith.constant 4 : i32
    %829 = arith.addi %496, %c4_i32_422 : i32
    %830 = arith.index_cast %829 : i32 to index
    %c0_423 = arith.constant 0 : index
    %c0_424 = arith.constant 0 : index
    %831 = vector.load %arg6[%830, %c0_423, %c0_424] : memref<14x14x128xf32, #tpu.memory_space<vmem>>, vector<1x14x128xf32>
    %832 = vector.shape_cast %831 : vector<1x14x128xf32> to vector<14x128xf32>
    %833 = vector.extract_strided_slice %832 {offsets = [0, 0], sizes = [8, 128], strides = [1, 1]} : vector<14x128xf32> to vector<8x128xf32>
    %c28_425 = arith.constant 28 : index
    %c0_426 = arith.constant 0 : index
    %c0_427 = arith.constant 0 : index
    %834 = vector.load %arg7[%c28_425, %c0_426, %c0_427] : memref<49x8x128xf32, #tpu.memory_space<vmem>>, vector<1x8x128xf32>
    %835 = vector.shape_cast %834 : vector<1x8x128xf32> to vector<8x128xf32>
    %836 = arith.mulf %833, %835 : vector<8x128xf32>
    %837 = arith.addf %816, %836 : vector<8x128xf32>
    %c21_428 = arith.constant 21 : index
    %c0_429 = arith.constant 0 : index
    %c0_430 = arith.constant 0 : index
    %838 = vector.load %arg7[%c21_428, %c0_429, %c0_430] : memref<49x8x128xf32, #tpu.memory_space<vmem>>, vector<1x8x128xf32>
    %839 = vector.shape_cast %838 : vector<1x8x128xf32> to vector<8x128xf32>
    %840 = arith.mulf %833, %839 : vector<8x128xf32>
    %841 = arith.addf %820, %840 : vector<8x128xf32>
    %c14_431 = arith.constant 14 : index
    %c0_432 = arith.constant 0 : index
    %c0_433 = arith.constant 0 : index
    %842 = vector.load %arg7[%c14_431, %c0_432, %c0_433] : memref<49x8x128xf32, #tpu.memory_space<vmem>>, vector<1x8x128xf32>
    %843 = vector.shape_cast %842 : vector<1x8x128xf32> to vector<8x128xf32>
    %844 = arith.mulf %833, %843 : vector<8x128xf32>
    %845 = arith.addf %824, %844 : vector<8x128xf32>
    %c7_434 = arith.constant 7 : index
    %c0_435 = arith.constant 0 : index
    %c0_436 = arith.constant 0 : index
    %846 = vector.load %arg7[%c7_434, %c0_435, %c0_436] : memref<49x8x128xf32, #tpu.memory_space<vmem>>, vector<1x8x128xf32>
    %847 = vector.shape_cast %846 : vector<1x8x128xf32> to vector<8x128xf32>
    %848 = arith.mulf %833, %847 : vector<8x128xf32>
    %849 = arith.addf %828, %848 : vector<8x128xf32>
    %c0_437 = arith.constant 0 : index
    %c0_438 = arith.constant 0 : index
    %c0_439 = arith.constant 0 : index
    %850 = vector.load %arg7[%c0_437, %c0_438, %c0_439] : memref<49x8x128xf32, #tpu.memory_space<vmem>>, vector<1x8x128xf32>
    %851 = vector.shape_cast %850 : vector<1x8x128xf32> to vector<8x128xf32>
    %852 = arith.mulf %833, %851 : vector<8x128xf32>
    %853 = arith.addf %501, %852 : vector<8x128xf32>
    %854 = vector.extract_strided_slice %832 {offsets = [1, 0], sizes = [8, 128], strides = [1, 1]} : vector<14x128xf32> to vector<8x128xf32>
    %c29_440 = arith.constant 29 : index
    %c0_441 = arith.constant 0 : index
    %c0_442 = arith.constant 0 : index
    %855 = vector.load %arg7[%c29_440, %c0_441, %c0_442] : memref<49x8x128xf32, #tpu.memory_space<vmem>>, vector<1x8x128xf32>
    %856 = vector.shape_cast %855 : vector<1x8x128xf32> to vector<8x128xf32>
    %857 = arith.mulf %854, %856 : vector<8x128xf32>
    %858 = arith.addf %837, %857 : vector<8x128xf32>
    %c22_443 = arith.constant 22 : index
    %c0_444 = arith.constant 0 : index
    %c0_445 = arith.constant 0 : index
    %859 = vector.load %arg7[%c22_443, %c0_444, %c0_445] : memref<49x8x128xf32, #tpu.memory_space<vmem>>, vector<1x8x128xf32>
    %860 = vector.shape_cast %859 : vector<1x8x128xf32> to vector<8x128xf32>
    %861 = arith.mulf %854, %860 : vector<8x128xf32>
    %862 = arith.addf %841, %861 : vector<8x128xf32>
    %c15_446 = arith.constant 15 : index
    %c0_447 = arith.constant 0 : index
    %c0_448 = arith.constant 0 : index
    %863 = vector.load %arg7[%c15_446, %c0_447, %c0_448] : memref<49x8x128xf32, #tpu.memory_space<vmem>>, vector<1x8x128xf32>
    %864 = vector.shape_cast %863 : vector<1x8x128xf32> to vector<8x128xf32>
    %865 = arith.mulf %854, %864 : vector<8x128xf32>
    %866 = arith.addf %845, %865 : vector<8x128xf32>
    %c8_449 = arith.constant 8 : index
    %c0_450 = arith.constant 0 : index
    %c0_451 = arith.constant 0 : index
    %867 = vector.load %arg7[%c8_449, %c0_450, %c0_451] : memref<49x8x128xf32, #tpu.memory_space<vmem>>, vector<1x8x128xf32>
    %868 = vector.shape_cast %867 : vector<1x8x128xf32> to vector<8x128xf32>
    %869 = arith.mulf %854, %868 : vector<8x128xf32>
    %870 = arith.addf %849, %869 : vector<8x128xf32>
    %c1_452 = arith.constant 1 : index
    %c0_453 = arith.constant 0 : index
    %c0_454 = arith.constant 0 : index
    %871 = vector.load %arg7[%c1_452, %c0_453, %c0_454] : memref<49x8x128xf32, #tpu.memory_space<vmem>>, vector<1x8x128xf32>
    %872 = vector.shape_cast %871 : vector<1x8x128xf32> to vector<8x128xf32>
    %873 = arith.mulf %854, %872 : vector<8x128xf32>
    %874 = arith.addf %853, %873 : vector<8x128xf32>
    %875 = vector.extract_strided_slice %832 {offsets = [2, 0], sizes = [8, 128], strides = [1, 1]} : vector<14x128xf32> to vector<8x128xf32>
    %c30_455 = arith.constant 30 : index
    %c0_456 = arith.constant 0 : index
    %c0_457 = arith.constant 0 : index
    %876 = vector.load %arg7[%c30_455, %c0_456, %c0_457] : memref<49x8x128xf32, #tpu.memory_space<vmem>>, vector<1x8x128xf32>
    %877 = vector.shape_cast %876 : vector<1x8x128xf32> to vector<8x128xf32>
    %878 = arith.mulf %875, %877 : vector<8x128xf32>
    %879 = arith.addf %858, %878 : vector<8x128xf32>
    %c23_458 = arith.constant 23 : index
    %c0_459 = arith.constant 0 : index
    %c0_460 = arith.constant 0 : index
    %880 = vector.load %arg7[%c23_458, %c0_459, %c0_460] : memref<49x8x128xf32, #tpu.memory_space<vmem>>, vector<1x8x128xf32>
    %881 = vector.shape_cast %880 : vector<1x8x128xf32> to vector<8x128xf32>
    %882 = arith.mulf %875, %881 : vector<8x128xf32>
    %883 = arith.addf %862, %882 : vector<8x128xf32>
    %c16_461 = arith.constant 16 : index
    %c0_462 = arith.constant 0 : index
    %c0_463 = arith.constant 0 : index
    %884 = vector.load %arg7[%c16_461, %c0_462, %c0_463] : memref<49x8x128xf32, #tpu.memory_space<vmem>>, vector<1x8x128xf32>
    %885 = vector.shape_cast %884 : vector<1x8x128xf32> to vector<8x128xf32>
    %886 = arith.mulf %875, %885 : vector<8x128xf32>
    %887 = arith.addf %866, %886 : vector<8x128xf32>
    %c9_464 = arith.constant 9 : index
    %c0_465 = arith.constant 0 : index
    %c0_466 = arith.constant 0 : index
    %888 = vector.load %arg7[%c9_464, %c0_465, %c0_466] : memref<49x8x128xf32, #tpu.memory_space<vmem>>, vector<1x8x128xf32>
    %889 = vector.shape_cast %888 : vector<1x8x128xf32> to vector<8x128xf32>
    %890 = arith.mulf %875, %889 : vector<8x128xf32>
    %891 = arith.addf %870, %890 : vector<8x128xf32>
    %c2_467 = arith.constant 2 : index
    %c0_468 = arith.constant 0 : index
    %c0_469 = arith.constant 0 : index
    %892 = vector.load %arg7[%c2_467, %c0_468, %c0_469] : memref<49x8x128xf32, #tpu.memory_space<vmem>>, vector<1x8x128xf32>
    %893 = vector.shape_cast %892 : vector<1x8x128xf32> to vector<8x128xf32>
    %894 = arith.mulf %875, %893 : vector<8x128xf32>
    %895 = arith.addf %874, %894 : vector<8x128xf32>
    %896 = vector.extract_strided_slice %832 {offsets = [3, 0], sizes = [8, 128], strides = [1, 1]} : vector<14x128xf32> to vector<8x128xf32>
    %c31_470 = arith.constant 31 : index
    %c0_471 = arith.constant 0 : index
    %c0_472 = arith.constant 0 : index
    %897 = vector.load %arg7[%c31_470, %c0_471, %c0_472] : memref<49x8x128xf32, #tpu.memory_space<vmem>>, vector<1x8x128xf32>
    %898 = vector.shape_cast %897 : vector<1x8x128xf32> to vector<8x128xf32>
    %899 = arith.mulf %896, %898 : vector<8x128xf32>
    %900 = arith.addf %879, %899 : vector<8x128xf32>
    %c24_473 = arith.constant 24 : index
    %c0_474 = arith.constant 0 : index
    %c0_475 = arith.constant 0 : index
    %901 = vector.load %arg7[%c24_473, %c0_474, %c0_475] : memref<49x8x128xf32, #tpu.memory_space<vmem>>, vector<1x8x128xf32>
    %902 = vector.shape_cast %901 : vector<1x8x128xf32> to vector<8x128xf32>
    %903 = arith.mulf %896, %902 : vector<8x128xf32>
    %904 = arith.addf %883, %903 : vector<8x128xf32>
    %c17_476 = arith.constant 17 : index
    %c0_477 = arith.constant 0 : index
    %c0_478 = arith.constant 0 : index
    %905 = vector.load %arg7[%c17_476, %c0_477, %c0_478] : memref<49x8x128xf32, #tpu.memory_space<vmem>>, vector<1x8x128xf32>
    %906 = vector.shape_cast %905 : vector<1x8x128xf32> to vector<8x128xf32>
    %907 = arith.mulf %896, %906 : vector<8x128xf32>
    %908 = arith.addf %887, %907 : vector<8x128xf32>
    %c10_479 = arith.constant 10 : index
    %c0_480 = arith.constant 0 : index
    %c0_481 = arith.constant 0 : index
    %909 = vector.load %arg7[%c10_479, %c0_480, %c0_481] : memref<49x8x128xf32, #tpu.memory_space<vmem>>, vector<1x8x128xf32>
    %910 = vector.shape_cast %909 : vector<1x8x128xf32> to vector<8x128xf32>
    %911 = arith.mulf %896, %910 : vector<8x128xf32>
    %912 = arith.addf %891, %911 : vector<8x128xf32>
    %c3_482 = arith.constant 3 : index
    %c0_483 = arith.constant 0 : index
    %c0_484 = arith.constant 0 : index
    %913 = vector.load %arg7[%c3_482, %c0_483, %c0_484] : memref<49x8x128xf32, #tpu.memory_space<vmem>>, vector<1x8x128xf32>
    %914 = vector.shape_cast %913 : vector<1x8x128xf32> to vector<8x128xf32>
    %915 = arith.mulf %896, %914 : vector<8x128xf32>
    %916 = arith.addf %895, %915 : vector<8x128xf32>
    %917 = vector.extract_strided_slice %832 {offsets = [4, 0], sizes = [8, 128], strides = [1, 1]} : vector<14x128xf32> to vector<8x128xf32>
    %c32_485 = arith.constant 32 : index
    %c0_486 = arith.constant 0 : index
    %c0_487 = arith.constant 0 : index
    %918 = vector.load %arg7[%c32_485, %c0_486, %c0_487] : memref<49x8x128xf32, #tpu.memory_space<vmem>>, vector<1x8x128xf32>
    %919 = vector.shape_cast %918 : vector<1x8x128xf32> to vector<8x128xf32>
    %920 = arith.mulf %917, %919 : vector<8x128xf32>
    %921 = arith.addf %900, %920 : vector<8x128xf32>
    %c25_488 = arith.constant 25 : index
    %c0_489 = arith.constant 0 : index
    %c0_490 = arith.constant 0 : index
    %922 = vector.load %arg7[%c25_488, %c0_489, %c0_490] : memref<49x8x128xf32, #tpu.memory_space<vmem>>, vector<1x8x128xf32>
    %923 = vector.shape_cast %922 : vector<1x8x128xf32> to vector<8x128xf32>
    %924 = arith.mulf %917, %923 : vector<8x128xf32>
    %925 = arith.addf %904, %924 : vector<8x128xf32>
    %c18_491 = arith.constant 18 : index
    %c0_492 = arith.constant 0 : index
    %c0_493 = arith.constant 0 : index
    %926 = vector.load %arg7[%c18_491, %c0_492, %c0_493] : memref<49x8x128xf32, #tpu.memory_space<vmem>>, vector<1x8x128xf32>
    %927 = vector.shape_cast %926 : vector<1x8x128xf32> to vector<8x128xf32>
    %928 = arith.mulf %917, %927 : vector<8x128xf32>
    %929 = arith.addf %908, %928 : vector<8x128xf32>
    %c11_494 = arith.constant 11 : index
    %c0_495 = arith.constant 0 : index
    %c0_496 = arith.constant 0 : index
    %930 = vector.load %arg7[%c11_494, %c0_495, %c0_496] : memref<49x8x128xf32, #tpu.memory_space<vmem>>, vector<1x8x128xf32>
    %931 = vector.shape_cast %930 : vector<1x8x128xf32> to vector<8x128xf32>
    %932 = arith.mulf %917, %931 : vector<8x128xf32>
    %933 = arith.addf %912, %932 : vector<8x128xf32>
    %c4_497 = arith.constant 4 : index
    %c0_498 = arith.constant 0 : index
    %c0_499 = arith.constant 0 : index
    %934 = vector.load %arg7[%c4_497, %c0_498, %c0_499] : memref<49x8x128xf32, #tpu.memory_space<vmem>>, vector<1x8x128xf32>
    %935 = vector.shape_cast %934 : vector<1x8x128xf32> to vector<8x128xf32>
    %936 = arith.mulf %917, %935 : vector<8x128xf32>
    %937 = arith.addf %916, %936 : vector<8x128xf32>
    %938 = vector.extract_strided_slice %832 {offsets = [5, 0], sizes = [8, 128], strides = [1, 1]} : vector<14x128xf32> to vector<8x128xf32>
    %c33_500 = arith.constant 33 : index
    %c0_501 = arith.constant 0 : index
    %c0_502 = arith.constant 0 : index
    %939 = vector.load %arg7[%c33_500, %c0_501, %c0_502] : memref<49x8x128xf32, #tpu.memory_space<vmem>>, vector<1x8x128xf32>
    %940 = vector.shape_cast %939 : vector<1x8x128xf32> to vector<8x128xf32>
    %941 = arith.mulf %938, %940 : vector<8x128xf32>
    %942 = arith.addf %921, %941 : vector<8x128xf32>
    %c26_503 = arith.constant 26 : index
    %c0_504 = arith.constant 0 : index
    %c0_505 = arith.constant 0 : index
    %943 = vector.load %arg7[%c26_503, %c0_504, %c0_505] : memref<49x8x128xf32, #tpu.memory_space<vmem>>, vector<1x8x128xf32>
    %944 = vector.shape_cast %943 : vector<1x8x128xf32> to vector<8x128xf32>
    %945 = arith.mulf %938, %944 : vector<8x128xf32>
    %946 = arith.addf %925, %945 : vector<8x128xf32>
    %c19_506 = arith.constant 19 : index
    %c0_507 = arith.constant 0 : index
    %c0_508 = arith.constant 0 : index
    %947 = vector.load %arg7[%c19_506, %c0_507, %c0_508] : memref<49x8x128xf32, #tpu.memory_space<vmem>>, vector<1x8x128xf32>
    %948 = vector.shape_cast %947 : vector<1x8x128xf32> to vector<8x128xf32>
    %949 = arith.mulf %938, %948 : vector<8x128xf32>
    %950 = arith.addf %929, %949 : vector<8x128xf32>
    %c12_509 = arith.constant 12 : index
    %c0_510 = arith.constant 0 : index
    %c0_511 = arith.constant 0 : index
    %951 = vector.load %arg7[%c12_509, %c0_510, %c0_511] : memref<49x8x128xf32, #tpu.memory_space<vmem>>, vector<1x8x128xf32>
    %952 = vector.shape_cast %951 : vector<1x8x128xf32> to vector<8x128xf32>
    %953 = arith.mulf %938, %952 : vector<8x128xf32>
    %954 = arith.addf %933, %953 : vector<8x128xf32>
    %c5_512 = arith.constant 5 : index
    %c0_513 = arith.constant 0 : index
    %c0_514 = arith.constant 0 : index
    %955 = vector.load %arg7[%c5_512, %c0_513, %c0_514] : memref<49x8x128xf32, #tpu.memory_space<vmem>>, vector<1x8x128xf32>
    %956 = vector.shape_cast %955 : vector<1x8x128xf32> to vector<8x128xf32>
    %957 = arith.mulf %938, %956 : vector<8x128xf32>
    %958 = arith.addf %937, %957 : vector<8x128xf32>
    %959 = vector.extract_strided_slice %832 {offsets = [6, 0], sizes = [8, 128], strides = [1, 1]} : vector<14x128xf32> to vector<8x128xf32>
    %c34_515 = arith.constant 34 : index
    %c0_516 = arith.constant 0 : index
    %c0_517 = arith.constant 0 : index
    %960 = vector.load %arg7[%c34_515, %c0_516, %c0_517] : memref<49x8x128xf32, #tpu.memory_space<vmem>>, vector<1x8x128xf32>
    %961 = vector.shape_cast %960 : vector<1x8x128xf32> to vector<8x128xf32>
    %962 = arith.mulf %959, %961 : vector<8x128xf32>
    %963 = arith.addf %942, %962 : vector<8x128xf32>
    %c27_518 = arith.constant 27 : index
    %c0_519 = arith.constant 0 : index
    %c0_520 = arith.constant 0 : index
    %964 = vector.load %arg7[%c27_518, %c0_519, %c0_520] : memref<49x8x128xf32, #tpu.memory_space<vmem>>, vector<1x8x128xf32>
    %965 = vector.shape_cast %964 : vector<1x8x128xf32> to vector<8x128xf32>
    %966 = arith.mulf %959, %965 : vector<8x128xf32>
    %967 = arith.addf %946, %966 : vector<8x128xf32>
    %c20_521 = arith.constant 20 : index
    %c0_522 = arith.constant 0 : index
    %c0_523 = arith.constant 0 : index
    %968 = vector.load %arg7[%c20_521, %c0_522, %c0_523] : memref<49x8x128xf32, #tpu.memory_space<vmem>>, vector<1x8x128xf32>
    %969 = vector.shape_cast %968 : vector<1x8x128xf32> to vector<8x128xf32>
    %970 = arith.mulf %959, %969 : vector<8x128xf32>
    %971 = arith.addf %950, %970 : vector<8x128xf32>
    %c13_524 = arith.constant 13 : index
    %c0_525 = arith.constant 0 : index
    %c0_526 = arith.constant 0 : index
    %972 = vector.load %arg7[%c13_524, %c0_525, %c0_526] : memref<49x8x128xf32, #tpu.memory_space<vmem>>, vector<1x8x128xf32>
    %973 = vector.shape_cast %972 : vector<1x8x128xf32> to vector<8x128xf32>
    %974 = arith.mulf %959, %973 : vector<8x128xf32>
    %975 = arith.addf %954, %974 : vector<8x128xf32>
    %c6_527 = arith.constant 6 : index
    %c0_528 = arith.constant 0 : index
    %c0_529 = arith.constant 0 : index
    %976 = vector.load %arg7[%c6_527, %c0_528, %c0_529] : memref<49x8x128xf32, #tpu.memory_space<vmem>>, vector<1x8x128xf32>
    %977 = vector.shape_cast %976 : vector<1x8x128xf32> to vector<8x128xf32>
    %978 = arith.mulf %959, %977 : vector<8x128xf32>
    %979 = arith.addf %958, %978 : vector<8x128xf32>
    %c5_i32_530 = arith.constant 5 : i32
    %980 = arith.addi %496, %c5_i32_530 : i32
    %981 = arith.index_cast %980 : i32 to index
    %c0_531 = arith.constant 0 : index
    %c0_532 = arith.constant 0 : index
    %982 = vector.load %arg6[%981, %c0_531, %c0_532] : memref<14x14x128xf32, #tpu.memory_space<vmem>>, vector<1x14x128xf32>
    %983 = vector.shape_cast %982 : vector<1x14x128xf32> to vector<14x128xf32>
    %984 = vector.extract_strided_slice %983 {offsets = [0, 0], sizes = [8, 128], strides = [1, 1]} : vector<14x128xf32> to vector<8x128xf32>
    %c35_533 = arith.constant 35 : index
    %c0_534 = arith.constant 0 : index
    %c0_535 = arith.constant 0 : index
    %985 = vector.load %arg7[%c35_533, %c0_534, %c0_535] : memref<49x8x128xf32, #tpu.memory_space<vmem>>, vector<1x8x128xf32>
    %986 = vector.shape_cast %985 : vector<1x8x128xf32> to vector<8x128xf32>
    %987 = arith.mulf %984, %986 : vector<8x128xf32>
    %988 = arith.addf %963, %987 : vector<8x128xf32>
    %c28_536 = arith.constant 28 : index
    %c0_537 = arith.constant 0 : index
    %c0_538 = arith.constant 0 : index
    %989 = vector.load %arg7[%c28_536, %c0_537, %c0_538] : memref<49x8x128xf32, #tpu.memory_space<vmem>>, vector<1x8x128xf32>
    %990 = vector.shape_cast %989 : vector<1x8x128xf32> to vector<8x128xf32>
    %991 = arith.mulf %984, %990 : vector<8x128xf32>
    %992 = arith.addf %967, %991 : vector<8x128xf32>
    %c21_539 = arith.constant 21 : index
    %c0_540 = arith.constant 0 : index
    %c0_541 = arith.constant 0 : index
    %993 = vector.load %arg7[%c21_539, %c0_540, %c0_541] : memref<49x8x128xf32, #tpu.memory_space<vmem>>, vector<1x8x128xf32>
    %994 = vector.shape_cast %993 : vector<1x8x128xf32> to vector<8x128xf32>
    %995 = arith.mulf %984, %994 : vector<8x128xf32>
    %996 = arith.addf %971, %995 : vector<8x128xf32>
    %c14_542 = arith.constant 14 : index
    %c0_543 = arith.constant 0 : index
    %c0_544 = arith.constant 0 : index
    %997 = vector.load %arg7[%c14_542, %c0_543, %c0_544] : memref<49x8x128xf32, #tpu.memory_space<vmem>>, vector<1x8x128xf32>
    %998 = vector.shape_cast %997 : vector<1x8x128xf32> to vector<8x128xf32>
    %999 = arith.mulf %984, %998 : vector<8x128xf32>
    %1000 = arith.addf %975, %999 : vector<8x128xf32>
    %c7_545 = arith.constant 7 : index
    %c0_546 = arith.constant 0 : index
    %c0_547 = arith.constant 0 : index
    %1001 = vector.load %arg7[%c7_545, %c0_546, %c0_547] : memref<49x8x128xf32, #tpu.memory_space<vmem>>, vector<1x8x128xf32>
    %1002 = vector.shape_cast %1001 : vector<1x8x128xf32> to vector<8x128xf32>
    %1003 = arith.mulf %984, %1002 : vector<8x128xf32>
    %1004 = arith.addf %979, %1003 : vector<8x128xf32>
    %c0_548 = arith.constant 0 : index
    %c0_549 = arith.constant 0 : index
    %c0_550 = arith.constant 0 : index
    %1005 = vector.load %arg7[%c0_548, %c0_549, %c0_550] : memref<49x8x128xf32, #tpu.memory_space<vmem>>, vector<1x8x128xf32>
    %1006 = vector.shape_cast %1005 : vector<1x8x128xf32> to vector<8x128xf32>
    %1007 = arith.mulf %984, %1006 : vector<8x128xf32>
    %1008 = arith.addf %502, %1007 : vector<8x128xf32>
    %1009 = vector.extract_strided_slice %983 {offsets = [1, 0], sizes = [8, 128], strides = [1, 1]} : vector<14x128xf32> to vector<8x128xf32>
    %c36_551 = arith.constant 36 : index
    %c0_552 = arith.constant 0 : index
    %c0_553 = arith.constant 0 : index
    %1010 = vector.load %arg7[%c36_551, %c0_552, %c0_553] : memref<49x8x128xf32, #tpu.memory_space<vmem>>, vector<1x8x128xf32>
    %1011 = vector.shape_cast %1010 : vector<1x8x128xf32> to vector<8x128xf32>
    %1012 = arith.mulf %1009, %1011 : vector<8x128xf32>
    %1013 = arith.addf %988, %1012 : vector<8x128xf32>
    %c29_554 = arith.constant 29 : index
    %c0_555 = arith.constant 0 : index
    %c0_556 = arith.constant 0 : index
    %1014 = vector.load %arg7[%c29_554, %c0_555, %c0_556] : memref<49x8x128xf32, #tpu.memory_space<vmem>>, vector<1x8x128xf32>
    %1015 = vector.shape_cast %1014 : vector<1x8x128xf32> to vector<8x128xf32>
    %1016 = arith.mulf %1009, %1015 : vector<8x128xf32>
    %1017 = arith.addf %992, %1016 : vector<8x128xf32>
    %c22_557 = arith.constant 22 : index
    %c0_558 = arith.constant 0 : index
    %c0_559 = arith.constant 0 : index
    %1018 = vector.load %arg7[%c22_557, %c0_558, %c0_559] : memref<49x8x128xf32, #tpu.memory_space<vmem>>, vector<1x8x128xf32>
    %1019 = vector.shape_cast %1018 : vector<1x8x128xf32> to vector<8x128xf32>
    %1020 = arith.mulf %1009, %1019 : vector<8x128xf32>
    %1021 = arith.addf %996, %1020 : vector<8x128xf32>
    %c15_560 = arith.constant 15 : index
    %c0_561 = arith.constant 0 : index
    %c0_562 = arith.constant 0 : index
    %1022 = vector.load %arg7[%c15_560, %c0_561, %c0_562] : memref<49x8x128xf32, #tpu.memory_space<vmem>>, vector<1x8x128xf32>
    %1023 = vector.shape_cast %1022 : vector<1x8x128xf32> to vector<8x128xf32>
    %1024 = arith.mulf %1009, %1023 : vector<8x128xf32>
    %1025 = arith.addf %1000, %1024 : vector<8x128xf32>
    %c8_563 = arith.constant 8 : index
    %c0_564 = arith.constant 0 : index
    %c0_565 = arith.constant 0 : index
    %1026 = vector.load %arg7[%c8_563, %c0_564, %c0_565] : memref<49x8x128xf32, #tpu.memory_space<vmem>>, vector<1x8x128xf32>
    %1027 = vector.shape_cast %1026 : vector<1x8x128xf32> to vector<8x128xf32>
    %1028 = arith.mulf %1009, %1027 : vector<8x128xf32>
    %1029 = arith.addf %1004, %1028 : vector<8x128xf32>
    %c1_566 = arith.constant 1 : index
    %c0_567 = arith.constant 0 : index
    %c0_568 = arith.constant 0 : index
    %1030 = vector.load %arg7[%c1_566, %c0_567, %c0_568] : memref<49x8x128xf32, #tpu.memory_space<vmem>>, vector<1x8x128xf32>
    %1031 = vector.shape_cast %1030 : vector<1x8x128xf32> to vector<8x128xf32>
    %1032 = arith.mulf %1009, %1031 : vector<8x128xf32>
    %1033 = arith.addf %1008, %1032 : vector<8x128xf32>
    %1034 = vector.extract_strided_slice %983 {offsets = [2, 0], sizes = [8, 128], strides = [1, 1]} : vector<14x128xf32> to vector<8x128xf32>
    %c37_569 = arith.constant 37 : index
    %c0_570 = arith.constant 0 : index
    %c0_571 = arith.constant 0 : index
    %1035 = vector.load %arg7[%c37_569, %c0_570, %c0_571] : memref<49x8x128xf32, #tpu.memory_space<vmem>>, vector<1x8x128xf32>
    %1036 = vector.shape_cast %1035 : vector<1x8x128xf32> to vector<8x128xf32>
    %1037 = arith.mulf %1034, %1036 : vector<8x128xf32>
    %1038 = arith.addf %1013, %1037 : vector<8x128xf32>
    %c30_572 = arith.constant 30 : index
    %c0_573 = arith.constant 0 : index
    %c0_574 = arith.constant 0 : index
    %1039 = vector.load %arg7[%c30_572, %c0_573, %c0_574] : memref<49x8x128xf32, #tpu.memory_space<vmem>>, vector<1x8x128xf32>
    %1040 = vector.shape_cast %1039 : vector<1x8x128xf32> to vector<8x128xf32>
    %1041 = arith.mulf %1034, %1040 : vector<8x128xf32>
    %1042 = arith.addf %1017, %1041 : vector<8x128xf32>
    %c23_575 = arith.constant 23 : index
    %c0_576 = arith.constant 0 : index
    %c0_577 = arith.constant 0 : index
    %1043 = vector.load %arg7[%c23_575, %c0_576, %c0_577] : memref<49x8x128xf32, #tpu.memory_space<vmem>>, vector<1x8x128xf32>
    %1044 = vector.shape_cast %1043 : vector<1x8x128xf32> to vector<8x128xf32>
    %1045 = arith.mulf %1034, %1044 : vector<8x128xf32>
    %1046 = arith.addf %1021, %1045 : vector<8x128xf32>
    %c16_578 = arith.constant 16 : index
    %c0_579 = arith.constant 0 : index
    %c0_580 = arith.constant 0 : index
    %1047 = vector.load %arg7[%c16_578, %c0_579, %c0_580] : memref<49x8x128xf32, #tpu.memory_space<vmem>>, vector<1x8x128xf32>
    %1048 = vector.shape_cast %1047 : vector<1x8x128xf32> to vector<8x128xf32>
    %1049 = arith.mulf %1034, %1048 : vector<8x128xf32>
    %1050 = arith.addf %1025, %1049 : vector<8x128xf32>
    %c9_581 = arith.constant 9 : index
    %c0_582 = arith.constant 0 : index
    %c0_583 = arith.constant 0 : index
    %1051 = vector.load %arg7[%c9_581, %c0_582, %c0_583] : memref<49x8x128xf32, #tpu.memory_space<vmem>>, vector<1x8x128xf32>
    %1052 = vector.shape_cast %1051 : vector<1x8x128xf32> to vector<8x128xf32>
    %1053 = arith.mulf %1034, %1052 : vector<8x128xf32>
    %1054 = arith.addf %1029, %1053 : vector<8x128xf32>
    %c2_584 = arith.constant 2 : index
    %c0_585 = arith.constant 0 : index
    %c0_586 = arith.constant 0 : index
    %1055 = vector.load %arg7[%c2_584, %c0_585, %c0_586] : memref<49x8x128xf32, #tpu.memory_space<vmem>>, vector<1x8x128xf32>
    %1056 = vector.shape_cast %1055 : vector<1x8x128xf32> to vector<8x128xf32>
    %1057 = arith.mulf %1034, %1056 : vector<8x128xf32>
    %1058 = arith.addf %1033, %1057 : vector<8x128xf32>
    %1059 = vector.extract_strided_slice %983 {offsets = [3, 0], sizes = [8, 128], strides = [1, 1]} : vector<14x128xf32> to vector<8x128xf32>
    %c38_587 = arith.constant 38 : index
    %c0_588 = arith.constant 0 : index
    %c0_589 = arith.constant 0 : index
    %1060 = vector.load %arg7[%c38_587, %c0_588, %c0_589] : memref<49x8x128xf32, #tpu.memory_space<vmem>>, vector<1x8x128xf32>
    %1061 = vector.shape_cast %1060 : vector<1x8x128xf32> to vector<8x128xf32>
    %1062 = arith.mulf %1059, %1061 : vector<8x128xf32>
    %1063 = arith.addf %1038, %1062 : vector<8x128xf32>
    %c31_590 = arith.constant 31 : index
    %c0_591 = arith.constant 0 : index
    %c0_592 = arith.constant 0 : index
    %1064 = vector.load %arg7[%c31_590, %c0_591, %c0_592] : memref<49x8x128xf32, #tpu.memory_space<vmem>>, vector<1x8x128xf32>
    %1065 = vector.shape_cast %1064 : vector<1x8x128xf32> to vector<8x128xf32>
    %1066 = arith.mulf %1059, %1065 : vector<8x128xf32>
    %1067 = arith.addf %1042, %1066 : vector<8x128xf32>
    %c24_593 = arith.constant 24 : index
    %c0_594 = arith.constant 0 : index
    %c0_595 = arith.constant 0 : index
    %1068 = vector.load %arg7[%c24_593, %c0_594, %c0_595] : memref<49x8x128xf32, #tpu.memory_space<vmem>>, vector<1x8x128xf32>
    %1069 = vector.shape_cast %1068 : vector<1x8x128xf32> to vector<8x128xf32>
    %1070 = arith.mulf %1059, %1069 : vector<8x128xf32>
    %1071 = arith.addf %1046, %1070 : vector<8x128xf32>
    %c17_596 = arith.constant 17 : index
    %c0_597 = arith.constant 0 : index
    %c0_598 = arith.constant 0 : index
    %1072 = vector.load %arg7[%c17_596, %c0_597, %c0_598] : memref<49x8x128xf32, #tpu.memory_space<vmem>>, vector<1x8x128xf32>
    %1073 = vector.shape_cast %1072 : vector<1x8x128xf32> to vector<8x128xf32>
    %1074 = arith.mulf %1059, %1073 : vector<8x128xf32>
    %1075 = arith.addf %1050, %1074 : vector<8x128xf32>
    %c10_599 = arith.constant 10 : index
    %c0_600 = arith.constant 0 : index
    %c0_601 = arith.constant 0 : index
    %1076 = vector.load %arg7[%c10_599, %c0_600, %c0_601] : memref<49x8x128xf32, #tpu.memory_space<vmem>>, vector<1x8x128xf32>
    %1077 = vector.shape_cast %1076 : vector<1x8x128xf32> to vector<8x128xf32>
    %1078 = arith.mulf %1059, %1077 : vector<8x128xf32>
    %1079 = arith.addf %1054, %1078 : vector<8x128xf32>
    %c3_602 = arith.constant 3 : index
    %c0_603 = arith.constant 0 : index
    %c0_604 = arith.constant 0 : index
    %1080 = vector.load %arg7[%c3_602, %c0_603, %c0_604] : memref<49x8x128xf32, #tpu.memory_space<vmem>>, vector<1x8x128xf32>
    %1081 = vector.shape_cast %1080 : vector<1x8x128xf32> to vector<8x128xf32>
    %1082 = arith.mulf %1059, %1081 : vector<8x128xf32>
    %1083 = arith.addf %1058, %1082 : vector<8x128xf32>
    %1084 = vector.extract_strided_slice %983 {offsets = [4, 0], sizes = [8, 128], strides = [1, 1]} : vector<14x128xf32> to vector<8x128xf32>
    %c39_605 = arith.constant 39 : index
    %c0_606 = arith.constant 0 : index
    %c0_607 = arith.constant 0 : index
    %1085 = vector.load %arg7[%c39_605, %c0_606, %c0_607] : memref<49x8x128xf32, #tpu.memory_space<vmem>>, vector<1x8x128xf32>
    %1086 = vector.shape_cast %1085 : vector<1x8x128xf32> to vector<8x128xf32>
    %1087 = arith.mulf %1084, %1086 : vector<8x128xf32>
    %1088 = arith.addf %1063, %1087 : vector<8x128xf32>
    %c32_608 = arith.constant 32 : index
    %c0_609 = arith.constant 0 : index
    %c0_610 = arith.constant 0 : index
    %1089 = vector.load %arg7[%c32_608, %c0_609, %c0_610] : memref<49x8x128xf32, #tpu.memory_space<vmem>>, vector<1x8x128xf32>
    %1090 = vector.shape_cast %1089 : vector<1x8x128xf32> to vector<8x128xf32>
    %1091 = arith.mulf %1084, %1090 : vector<8x128xf32>
    %1092 = arith.addf %1067, %1091 : vector<8x128xf32>
    %c25_611 = arith.constant 25 : index
    %c0_612 = arith.constant 0 : index
    %c0_613 = arith.constant 0 : index
    %1093 = vector.load %arg7[%c25_611, %c0_612, %c0_613] : memref<49x8x128xf32, #tpu.memory_space<vmem>>, vector<1x8x128xf32>
    %1094 = vector.shape_cast %1093 : vector<1x8x128xf32> to vector<8x128xf32>
    %1095 = arith.mulf %1084, %1094 : vector<8x128xf32>
    %1096 = arith.addf %1071, %1095 : vector<8x128xf32>
    %c18_614 = arith.constant 18 : index
    %c0_615 = arith.constant 0 : index
    %c0_616 = arith.constant 0 : index
    %1097 = vector.load %arg7[%c18_614, %c0_615, %c0_616] : memref<49x8x128xf32, #tpu.memory_space<vmem>>, vector<1x8x128xf32>
    %1098 = vector.shape_cast %1097 : vector<1x8x128xf32> to vector<8x128xf32>
    %1099 = arith.mulf %1084, %1098 : vector<8x128xf32>
    %1100 = arith.addf %1075, %1099 : vector<8x128xf32>
    %c11_617 = arith.constant 11 : index
    %c0_618 = arith.constant 0 : index
    %c0_619 = arith.constant 0 : index
    %1101 = vector.load %arg7[%c11_617, %c0_618, %c0_619] : memref<49x8x128xf32, #tpu.memory_space<vmem>>, vector<1x8x128xf32>
    %1102 = vector.shape_cast %1101 : vector<1x8x128xf32> to vector<8x128xf32>
    %1103 = arith.mulf %1084, %1102 : vector<8x128xf32>
    %1104 = arith.addf %1079, %1103 : vector<8x128xf32>
    %c4_620 = arith.constant 4 : index
    %c0_621 = arith.constant 0 : index
    %c0_622 = arith.constant 0 : index
    %1105 = vector.load %arg7[%c4_620, %c0_621, %c0_622] : memref<49x8x128xf32, #tpu.memory_space<vmem>>, vector<1x8x128xf32>
    %1106 = vector.shape_cast %1105 : vector<1x8x128xf32> to vector<8x128xf32>
    %1107 = arith.mulf %1084, %1106 : vector<8x128xf32>
    %1108 = arith.addf %1083, %1107 : vector<8x128xf32>
    %1109 = vector.extract_strided_slice %983 {offsets = [5, 0], sizes = [8, 128], strides = [1, 1]} : vector<14x128xf32> to vector<8x128xf32>
    %c40_623 = arith.constant 40 : index
    %c0_624 = arith.constant 0 : index
    %c0_625 = arith.constant 0 : index
    %1110 = vector.load %arg7[%c40_623, %c0_624, %c0_625] : memref<49x8x128xf32, #tpu.memory_space<vmem>>, vector<1x8x128xf32>
    %1111 = vector.shape_cast %1110 : vector<1x8x128xf32> to vector<8x128xf32>
    %1112 = arith.mulf %1109, %1111 : vector<8x128xf32>
    %1113 = arith.addf %1088, %1112 : vector<8x128xf32>
    %c33_626 = arith.constant 33 : index
    %c0_627 = arith.constant 0 : index
    %c0_628 = arith.constant 0 : index
    %1114 = vector.load %arg7[%c33_626, %c0_627, %c0_628] : memref<49x8x128xf32, #tpu.memory_space<vmem>>, vector<1x8x128xf32>
    %1115 = vector.shape_cast %1114 : vector<1x8x128xf32> to vector<8x128xf32>
    %1116 = arith.mulf %1109, %1115 : vector<8x128xf32>
    %1117 = arith.addf %1092, %1116 : vector<8x128xf32>
    %c26_629 = arith.constant 26 : index
    %c0_630 = arith.constant 0 : index
    %c0_631 = arith.constant 0 : index
    %1118 = vector.load %arg7[%c26_629, %c0_630, %c0_631] : memref<49x8x128xf32, #tpu.memory_space<vmem>>, vector<1x8x128xf32>
    %1119 = vector.shape_cast %1118 : vector<1x8x128xf32> to vector<8x128xf32>
    %1120 = arith.mulf %1109, %1119 : vector<8x128xf32>
    %1121 = arith.addf %1096, %1120 : vector<8x128xf32>
    %c19_632 = arith.constant 19 : index
    %c0_633 = arith.constant 0 : index
    %c0_634 = arith.constant 0 : index
    %1122 = vector.load %arg7[%c19_632, %c0_633, %c0_634] : memref<49x8x128xf32, #tpu.memory_space<vmem>>, vector<1x8x128xf32>
    %1123 = vector.shape_cast %1122 : vector<1x8x128xf32> to vector<8x128xf32>
    %1124 = arith.mulf %1109, %1123 : vector<8x128xf32>
    %1125 = arith.addf %1100, %1124 : vector<8x128xf32>
    %c12_635 = arith.constant 12 : index
    %c0_636 = arith.constant 0 : index
    %c0_637 = arith.constant 0 : index
    %1126 = vector.load %arg7[%c12_635, %c0_636, %c0_637] : memref<49x8x128xf32, #tpu.memory_space<vmem>>, vector<1x8x128xf32>
    %1127 = vector.shape_cast %1126 : vector<1x8x128xf32> to vector<8x128xf32>
    %1128 = arith.mulf %1109, %1127 : vector<8x128xf32>
    %1129 = arith.addf %1104, %1128 : vector<8x128xf32>
    %c5_638 = arith.constant 5 : index
    %c0_639 = arith.constant 0 : index
    %c0_640 = arith.constant 0 : index
    %1130 = vector.load %arg7[%c5_638, %c0_639, %c0_640] : memref<49x8x128xf32, #tpu.memory_space<vmem>>, vector<1x8x128xf32>
    %1131 = vector.shape_cast %1130 : vector<1x8x128xf32> to vector<8x128xf32>
    %1132 = arith.mulf %1109, %1131 : vector<8x128xf32>
    %1133 = arith.addf %1108, %1132 : vector<8x128xf32>
    %1134 = vector.extract_strided_slice %983 {offsets = [6, 0], sizes = [8, 128], strides = [1, 1]} : vector<14x128xf32> to vector<8x128xf32>
    %c41_641 = arith.constant 41 : index
    %c0_642 = arith.constant 0 : index
    %c0_643 = arith.constant 0 : index
    %1135 = vector.load %arg7[%c41_641, %c0_642, %c0_643] : memref<49x8x128xf32, #tpu.memory_space<vmem>>, vector<1x8x128xf32>
    %1136 = vector.shape_cast %1135 : vector<1x8x128xf32> to vector<8x128xf32>
    %1137 = arith.mulf %1134, %1136 : vector<8x128xf32>
    %1138 = arith.addf %1113, %1137 : vector<8x128xf32>
    %c34_644 = arith.constant 34 : index
    %c0_645 = arith.constant 0 : index
    %c0_646 = arith.constant 0 : index
    %1139 = vector.load %arg7[%c34_644, %c0_645, %c0_646] : memref<49x8x128xf32, #tpu.memory_space<vmem>>, vector<1x8x128xf32>
    %1140 = vector.shape_cast %1139 : vector<1x8x128xf32> to vector<8x128xf32>
    %1141 = arith.mulf %1134, %1140 : vector<8x128xf32>
    %1142 = arith.addf %1117, %1141 : vector<8x128xf32>
    %c27_647 = arith.constant 27 : index
    %c0_648 = arith.constant 0 : index
    %c0_649 = arith.constant 0 : index
    %1143 = vector.load %arg7[%c27_647, %c0_648, %c0_649] : memref<49x8x128xf32, #tpu.memory_space<vmem>>, vector<1x8x128xf32>
    %1144 = vector.shape_cast %1143 : vector<1x8x128xf32> to vector<8x128xf32>
    %1145 = arith.mulf %1134, %1144 : vector<8x128xf32>
    %1146 = arith.addf %1121, %1145 : vector<8x128xf32>
    %c20_650 = arith.constant 20 : index
    %c0_651 = arith.constant 0 : index
    %c0_652 = arith.constant 0 : index
    %1147 = vector.load %arg7[%c20_650, %c0_651, %c0_652] : memref<49x8x128xf32, #tpu.memory_space<vmem>>, vector<1x8x128xf32>
    %1148 = vector.shape_cast %1147 : vector<1x8x128xf32> to vector<8x128xf32>
    %1149 = arith.mulf %1134, %1148 : vector<8x128xf32>
    %1150 = arith.addf %1125, %1149 : vector<8x128xf32>
    %c13_653 = arith.constant 13 : index
    %c0_654 = arith.constant 0 : index
    %c0_655 = arith.constant 0 : index
    %1151 = vector.load %arg7[%c13_653, %c0_654, %c0_655] : memref<49x8x128xf32, #tpu.memory_space<vmem>>, vector<1x8x128xf32>
    %1152 = vector.shape_cast %1151 : vector<1x8x128xf32> to vector<8x128xf32>
    %1153 = arith.mulf %1134, %1152 : vector<8x128xf32>
    %1154 = arith.addf %1129, %1153 : vector<8x128xf32>
    %c6_656 = arith.constant 6 : index
    %c0_657 = arith.constant 0 : index
    %c0_658 = arith.constant 0 : index
    %1155 = vector.load %arg7[%c6_656, %c0_657, %c0_658] : memref<49x8x128xf32, #tpu.memory_space<vmem>>, vector<1x8x128xf32>
    %1156 = vector.shape_cast %1155 : vector<1x8x128xf32> to vector<8x128xf32>
    %1157 = arith.mulf %1134, %1156 : vector<8x128xf32>
    %1158 = arith.addf %1133, %1157 : vector<8x128xf32>
    %c6_i32_659 = arith.constant 6 : i32
    %1159 = arith.addi %496, %c6_i32_659 : i32
    %1160 = arith.index_cast %1159 : i32 to index
    %c0_660 = arith.constant 0 : index
    %c0_661 = arith.constant 0 : index
    %1161 = vector.load %arg6[%1160, %c0_660, %c0_661] : memref<14x14x128xf32, #tpu.memory_space<vmem>>, vector<1x14x128xf32>
    %1162 = vector.shape_cast %1161 : vector<1x14x128xf32> to vector<14x128xf32>
    %1163 = vector.extract_strided_slice %1162 {offsets = [0, 0], sizes = [8, 128], strides = [1, 1]} : vector<14x128xf32> to vector<8x128xf32>
    %c42_662 = arith.constant 42 : index
    %c0_663 = arith.constant 0 : index
    %c0_664 = arith.constant 0 : index
    %1164 = vector.load %arg7[%c42_662, %c0_663, %c0_664] : memref<49x8x128xf32, #tpu.memory_space<vmem>>, vector<1x8x128xf32>
    %1165 = vector.shape_cast %1164 : vector<1x8x128xf32> to vector<8x128xf32>
    %1166 = arith.mulf %1163, %1165 : vector<8x128xf32>
    %1167 = arith.addf %1138, %1166 : vector<8x128xf32>
    %c35_665 = arith.constant 35 : index
    %c0_666 = arith.constant 0 : index
    %c0_667 = arith.constant 0 : index
    %1168 = vector.load %arg7[%c35_665, %c0_666, %c0_667] : memref<49x8x128xf32, #tpu.memory_space<vmem>>, vector<1x8x128xf32>
    %1169 = vector.shape_cast %1168 : vector<1x8x128xf32> to vector<8x128xf32>
    %1170 = arith.mulf %1163, %1169 : vector<8x128xf32>
    %1171 = arith.addf %1142, %1170 : vector<8x128xf32>
    %c28_668 = arith.constant 28 : index
    %c0_669 = arith.constant 0 : index
    %c0_670 = arith.constant 0 : index
    %1172 = vector.load %arg7[%c28_668, %c0_669, %c0_670] : memref<49x8x128xf32, #tpu.memory_space<vmem>>, vector<1x8x128xf32>
    %1173 = vector.shape_cast %1172 : vector<1x8x128xf32> to vector<8x128xf32>
    %1174 = arith.mulf %1163, %1173 : vector<8x128xf32>
    %1175 = arith.addf %1146, %1174 : vector<8x128xf32>
    %c21_671 = arith.constant 21 : index
    %c0_672 = arith.constant 0 : index
    %c0_673 = arith.constant 0 : index
    %1176 = vector.load %arg7[%c21_671, %c0_672, %c0_673] : memref<49x8x128xf32, #tpu.memory_space<vmem>>, vector<1x8x128xf32>
    %1177 = vector.shape_cast %1176 : vector<1x8x128xf32> to vector<8x128xf32>
    %1178 = arith.mulf %1163, %1177 : vector<8x128xf32>
    %1179 = arith.addf %1150, %1178 : vector<8x128xf32>
    %c14_674 = arith.constant 14 : index
    %c0_675 = arith.constant 0 : index
    %c0_676 = arith.constant 0 : index
    %1180 = vector.load %arg7[%c14_674, %c0_675, %c0_676] : memref<49x8x128xf32, #tpu.memory_space<vmem>>, vector<1x8x128xf32>
    %1181 = vector.shape_cast %1180 : vector<1x8x128xf32> to vector<8x128xf32>
    %1182 = arith.mulf %1163, %1181 : vector<8x128xf32>
    %1183 = arith.addf %1154, %1182 : vector<8x128xf32>
    %c7_677 = arith.constant 7 : index
    %c0_678 = arith.constant 0 : index
    %c0_679 = arith.constant 0 : index
    %1184 = vector.load %arg7[%c7_677, %c0_678, %c0_679] : memref<49x8x128xf32, #tpu.memory_space<vmem>>, vector<1x8x128xf32>
    %1185 = vector.shape_cast %1184 : vector<1x8x128xf32> to vector<8x128xf32>
    %1186 = arith.mulf %1163, %1185 : vector<8x128xf32>
    %1187 = arith.addf %1158, %1186 : vector<8x128xf32>
    %c0_680 = arith.constant 0 : index
    %c0_681 = arith.constant 0 : index
    %c0_682 = arith.constant 0 : index
    %1188 = vector.load %arg7[%c0_680, %c0_681, %c0_682] : memref<49x8x128xf32, #tpu.memory_space<vmem>>, vector<1x8x128xf32>
    %1189 = vector.shape_cast %1188 : vector<1x8x128xf32> to vector<8x128xf32>
    %1190 = arith.mulf %1163, %1189 : vector<8x128xf32>
    %1191 = arith.addf %503, %1190 : vector<8x128xf32>
    %1192 = vector.extract_strided_slice %1162 {offsets = [1, 0], sizes = [8, 128], strides = [1, 1]} : vector<14x128xf32> to vector<8x128xf32>
    %c43_683 = arith.constant 43 : index
    %c0_684 = arith.constant 0 : index
    %c0_685 = arith.constant 0 : index
    %1193 = vector.load %arg7[%c43_683, %c0_684, %c0_685] : memref<49x8x128xf32, #tpu.memory_space<vmem>>, vector<1x8x128xf32>
    %1194 = vector.shape_cast %1193 : vector<1x8x128xf32> to vector<8x128xf32>
    %1195 = arith.mulf %1192, %1194 : vector<8x128xf32>
    %1196 = arith.addf %1167, %1195 : vector<8x128xf32>
    %c36_686 = arith.constant 36 : index
    %c0_687 = arith.constant 0 : index
    %c0_688 = arith.constant 0 : index
    %1197 = vector.load %arg7[%c36_686, %c0_687, %c0_688] : memref<49x8x128xf32, #tpu.memory_space<vmem>>, vector<1x8x128xf32>
    %1198 = vector.shape_cast %1197 : vector<1x8x128xf32> to vector<8x128xf32>
    %1199 = arith.mulf %1192, %1198 : vector<8x128xf32>
    %1200 = arith.addf %1171, %1199 : vector<8x128xf32>
    %c29_689 = arith.constant 29 : index
    %c0_690 = arith.constant 0 : index
    %c0_691 = arith.constant 0 : index
    %1201 = vector.load %arg7[%c29_689, %c0_690, %c0_691] : memref<49x8x128xf32, #tpu.memory_space<vmem>>, vector<1x8x128xf32>
    %1202 = vector.shape_cast %1201 : vector<1x8x128xf32> to vector<8x128xf32>
    %1203 = arith.mulf %1192, %1202 : vector<8x128xf32>
    %1204 = arith.addf %1175, %1203 : vector<8x128xf32>
    %c22_692 = arith.constant 22 : index
    %c0_693 = arith.constant 0 : index
    %c0_694 = arith.constant 0 : index
    %1205 = vector.load %arg7[%c22_692, %c0_693, %c0_694] : memref<49x8x128xf32, #tpu.memory_space<vmem>>, vector<1x8x128xf32>
    %1206 = vector.shape_cast %1205 : vector<1x8x128xf32> to vector<8x128xf32>
    %1207 = arith.mulf %1192, %1206 : vector<8x128xf32>
    %1208 = arith.addf %1179, %1207 : vector<8x128xf32>
    %c15_695 = arith.constant 15 : index
    %c0_696 = arith.constant 0 : index
    %c0_697 = arith.constant 0 : index
    %1209 = vector.load %arg7[%c15_695, %c0_696, %c0_697] : memref<49x8x128xf32, #tpu.memory_space<vmem>>, vector<1x8x128xf32>
    %1210 = vector.shape_cast %1209 : vector<1x8x128xf32> to vector<8x128xf32>
    %1211 = arith.mulf %1192, %1210 : vector<8x128xf32>
    %1212 = arith.addf %1183, %1211 : vector<8x128xf32>
    %c8_698 = arith.constant 8 : index
    %c0_699 = arith.constant 0 : index
    %c0_700 = arith.constant 0 : index
    %1213 = vector.load %arg7[%c8_698, %c0_699, %c0_700] : memref<49x8x128xf32, #tpu.memory_space<vmem>>, vector<1x8x128xf32>
    %1214 = vector.shape_cast %1213 : vector<1x8x128xf32> to vector<8x128xf32>
    %1215 = arith.mulf %1192, %1214 : vector<8x128xf32>
    %1216 = arith.addf %1187, %1215 : vector<8x128xf32>
    %c1_701 = arith.constant 1 : index
    %c0_702 = arith.constant 0 : index
    %c0_703 = arith.constant 0 : index
    %1217 = vector.load %arg7[%c1_701, %c0_702, %c0_703] : memref<49x8x128xf32, #tpu.memory_space<vmem>>, vector<1x8x128xf32>
    %1218 = vector.shape_cast %1217 : vector<1x8x128xf32> to vector<8x128xf32>
    %1219 = arith.mulf %1192, %1218 : vector<8x128xf32>
    %1220 = arith.addf %1191, %1219 : vector<8x128xf32>
    %1221 = vector.extract_strided_slice %1162 {offsets = [2, 0], sizes = [8, 128], strides = [1, 1]} : vector<14x128xf32> to vector<8x128xf32>
    %c44_704 = arith.constant 44 : index
    %c0_705 = arith.constant 0 : index
    %c0_706 = arith.constant 0 : index
    %1222 = vector.load %arg7[%c44_704, %c0_705, %c0_706] : memref<49x8x128xf32, #tpu.memory_space<vmem>>, vector<1x8x128xf32>
    %1223 = vector.shape_cast %1222 : vector<1x8x128xf32> to vector<8x128xf32>
    %1224 = arith.mulf %1221, %1223 : vector<8x128xf32>
    %1225 = arith.addf %1196, %1224 : vector<8x128xf32>
    %c37_707 = arith.constant 37 : index
    %c0_708 = arith.constant 0 : index
    %c0_709 = arith.constant 0 : index
    %1226 = vector.load %arg7[%c37_707, %c0_708, %c0_709] : memref<49x8x128xf32, #tpu.memory_space<vmem>>, vector<1x8x128xf32>
    %1227 = vector.shape_cast %1226 : vector<1x8x128xf32> to vector<8x128xf32>
    %1228 = arith.mulf %1221, %1227 : vector<8x128xf32>
    %1229 = arith.addf %1200, %1228 : vector<8x128xf32>
    %c30_710 = arith.constant 30 : index
    %c0_711 = arith.constant 0 : index
    %c0_712 = arith.constant 0 : index
    %1230 = vector.load %arg7[%c30_710, %c0_711, %c0_712] : memref<49x8x128xf32, #tpu.memory_space<vmem>>, vector<1x8x128xf32>
    %1231 = vector.shape_cast %1230 : vector<1x8x128xf32> to vector<8x128xf32>
    %1232 = arith.mulf %1221, %1231 : vector<8x128xf32>
    %1233 = arith.addf %1204, %1232 : vector<8x128xf32>
    %c23_713 = arith.constant 23 : index
    %c0_714 = arith.constant 0 : index
    %c0_715 = arith.constant 0 : index
    %1234 = vector.load %arg7[%c23_713, %c0_714, %c0_715] : memref<49x8x128xf32, #tpu.memory_space<vmem>>, vector<1x8x128xf32>
    %1235 = vector.shape_cast %1234 : vector<1x8x128xf32> to vector<8x128xf32>
    %1236 = arith.mulf %1221, %1235 : vector<8x128xf32>
    %1237 = arith.addf %1208, %1236 : vector<8x128xf32>
    %c16_716 = arith.constant 16 : index
    %c0_717 = arith.constant 0 : index
    %c0_718 = arith.constant 0 : index
    %1238 = vector.load %arg7[%c16_716, %c0_717, %c0_718] : memref<49x8x128xf32, #tpu.memory_space<vmem>>, vector<1x8x128xf32>
    %1239 = vector.shape_cast %1238 : vector<1x8x128xf32> to vector<8x128xf32>
    %1240 = arith.mulf %1221, %1239 : vector<8x128xf32>
    %1241 = arith.addf %1212, %1240 : vector<8x128xf32>
    %c9_719 = arith.constant 9 : index
    %c0_720 = arith.constant 0 : index
    %c0_721 = arith.constant 0 : index
    %1242 = vector.load %arg7[%c9_719, %c0_720, %c0_721] : memref<49x8x128xf32, #tpu.memory_space<vmem>>, vector<1x8x128xf32>
    %1243 = vector.shape_cast %1242 : vector<1x8x128xf32> to vector<8x128xf32>
    %1244 = arith.mulf %1221, %1243 : vector<8x128xf32>
    %1245 = arith.addf %1216, %1244 : vector<8x128xf32>
    %c2_722 = arith.constant 2 : index
    %c0_723 = arith.constant 0 : index
    %c0_724 = arith.constant 0 : index
    %1246 = vector.load %arg7[%c2_722, %c0_723, %c0_724] : memref<49x8x128xf32, #tpu.memory_space<vmem>>, vector<1x8x128xf32>
    %1247 = vector.shape_cast %1246 : vector<1x8x128xf32> to vector<8x128xf32>
    %1248 = arith.mulf %1221, %1247 : vector<8x128xf32>
    %1249 = arith.addf %1220, %1248 : vector<8x128xf32>
    %1250 = vector.extract_strided_slice %1162 {offsets = [3, 0], sizes = [8, 128], strides = [1, 1]} : vector<14x128xf32> to vector<8x128xf32>
    %c45_725 = arith.constant 45 : index
    %c0_726 = arith.constant 0 : index
    %c0_727 = arith.constant 0 : index
    %1251 = vector.load %arg7[%c45_725, %c0_726, %c0_727] : memref<49x8x128xf32, #tpu.memory_space<vmem>>, vector<1x8x128xf32>
    %1252 = vector.shape_cast %1251 : vector<1x8x128xf32> to vector<8x128xf32>
    %1253 = arith.mulf %1250, %1252 : vector<8x128xf32>
    %1254 = arith.addf %1225, %1253 : vector<8x128xf32>
    %c38_728 = arith.constant 38 : index
    %c0_729 = arith.constant 0 : index
    %c0_730 = arith.constant 0 : index
    %1255 = vector.load %arg7[%c38_728, %c0_729, %c0_730] : memref<49x8x128xf32, #tpu.memory_space<vmem>>, vector<1x8x128xf32>
    %1256 = vector.shape_cast %1255 : vector<1x8x128xf32> to vector<8x128xf32>
    %1257 = arith.mulf %1250, %1256 : vector<8x128xf32>
    %1258 = arith.addf %1229, %1257 : vector<8x128xf32>
    %c31_731 = arith.constant 31 : index
    %c0_732 = arith.constant 0 : index
    %c0_733 = arith.constant 0 : index
    %1259 = vector.load %arg7[%c31_731, %c0_732, %c0_733] : memref<49x8x128xf32, #tpu.memory_space<vmem>>, vector<1x8x128xf32>
    %1260 = vector.shape_cast %1259 : vector<1x8x128xf32> to vector<8x128xf32>
    %1261 = arith.mulf %1250, %1260 : vector<8x128xf32>
    %1262 = arith.addf %1233, %1261 : vector<8x128xf32>
    %c24_734 = arith.constant 24 : index
    %c0_735 = arith.constant 0 : index
    %c0_736 = arith.constant 0 : index
    %1263 = vector.load %arg7[%c24_734, %c0_735, %c0_736] : memref<49x8x128xf32, #tpu.memory_space<vmem>>, vector<1x8x128xf32>
    %1264 = vector.shape_cast %1263 : vector<1x8x128xf32> to vector<8x128xf32>
    %1265 = arith.mulf %1250, %1264 : vector<8x128xf32>
    %1266 = arith.addf %1237, %1265 : vector<8x128xf32>
    %c17_737 = arith.constant 17 : index
    %c0_738 = arith.constant 0 : index
    %c0_739 = arith.constant 0 : index
    %1267 = vector.load %arg7[%c17_737, %c0_738, %c0_739] : memref<49x8x128xf32, #tpu.memory_space<vmem>>, vector<1x8x128xf32>
    %1268 = vector.shape_cast %1267 : vector<1x8x128xf32> to vector<8x128xf32>
    %1269 = arith.mulf %1250, %1268 : vector<8x128xf32>
    %1270 = arith.addf %1241, %1269 : vector<8x128xf32>
    %c10_740 = arith.constant 10 : index
    %c0_741 = arith.constant 0 : index
    %c0_742 = arith.constant 0 : index
    %1271 = vector.load %arg7[%c10_740, %c0_741, %c0_742] : memref<49x8x128xf32, #tpu.memory_space<vmem>>, vector<1x8x128xf32>
    %1272 = vector.shape_cast %1271 : vector<1x8x128xf32> to vector<8x128xf32>
    %1273 = arith.mulf %1250, %1272 : vector<8x128xf32>
    %1274 = arith.addf %1245, %1273 : vector<8x128xf32>
    %c3_743 = arith.constant 3 : index
    %c0_744 = arith.constant 0 : index
    %c0_745 = arith.constant 0 : index
    %1275 = vector.load %arg7[%c3_743, %c0_744, %c0_745] : memref<49x8x128xf32, #tpu.memory_space<vmem>>, vector<1x8x128xf32>
    %1276 = vector.shape_cast %1275 : vector<1x8x128xf32> to vector<8x128xf32>
    %1277 = arith.mulf %1250, %1276 : vector<8x128xf32>
    %1278 = arith.addf %1249, %1277 : vector<8x128xf32>
    %1279 = vector.extract_strided_slice %1162 {offsets = [4, 0], sizes = [8, 128], strides = [1, 1]} : vector<14x128xf32> to vector<8x128xf32>
    %c46_746 = arith.constant 46 : index
    %c0_747 = arith.constant 0 : index
    %c0_748 = arith.constant 0 : index
    %1280 = vector.load %arg7[%c46_746, %c0_747, %c0_748] : memref<49x8x128xf32, #tpu.memory_space<vmem>>, vector<1x8x128xf32>
    %1281 = vector.shape_cast %1280 : vector<1x8x128xf32> to vector<8x128xf32>
    %1282 = arith.mulf %1279, %1281 : vector<8x128xf32>
    %1283 = arith.addf %1254, %1282 : vector<8x128xf32>
    %c39_749 = arith.constant 39 : index
    %c0_750 = arith.constant 0 : index
    %c0_751 = arith.constant 0 : index
    %1284 = vector.load %arg7[%c39_749, %c0_750, %c0_751] : memref<49x8x128xf32, #tpu.memory_space<vmem>>, vector<1x8x128xf32>
    %1285 = vector.shape_cast %1284 : vector<1x8x128xf32> to vector<8x128xf32>
    %1286 = arith.mulf %1279, %1285 : vector<8x128xf32>
    %1287 = arith.addf %1258, %1286 : vector<8x128xf32>
    %c32_752 = arith.constant 32 : index
    %c0_753 = arith.constant 0 : index
    %c0_754 = arith.constant 0 : index
    %1288 = vector.load %arg7[%c32_752, %c0_753, %c0_754] : memref<49x8x128xf32, #tpu.memory_space<vmem>>, vector<1x8x128xf32>
    %1289 = vector.shape_cast %1288 : vector<1x8x128xf32> to vector<8x128xf32>
    %1290 = arith.mulf %1279, %1289 : vector<8x128xf32>
    %1291 = arith.addf %1262, %1290 : vector<8x128xf32>
    %c25_755 = arith.constant 25 : index
    %c0_756 = arith.constant 0 : index
    %c0_757 = arith.constant 0 : index
    %1292 = vector.load %arg7[%c25_755, %c0_756, %c0_757] : memref<49x8x128xf32, #tpu.memory_space<vmem>>, vector<1x8x128xf32>
    %1293 = vector.shape_cast %1292 : vector<1x8x128xf32> to vector<8x128xf32>
    %1294 = arith.mulf %1279, %1293 : vector<8x128xf32>
    %1295 = arith.addf %1266, %1294 : vector<8x128xf32>
    %c18_758 = arith.constant 18 : index
    %c0_759 = arith.constant 0 : index
    %c0_760 = arith.constant 0 : index
    %1296 = vector.load %arg7[%c18_758, %c0_759, %c0_760] : memref<49x8x128xf32, #tpu.memory_space<vmem>>, vector<1x8x128xf32>
    %1297 = vector.shape_cast %1296 : vector<1x8x128xf32> to vector<8x128xf32>
    %1298 = arith.mulf %1279, %1297 : vector<8x128xf32>
    %1299 = arith.addf %1270, %1298 : vector<8x128xf32>
    %c11_761 = arith.constant 11 : index
    %c0_762 = arith.constant 0 : index
    %c0_763 = arith.constant 0 : index
    %1300 = vector.load %arg7[%c11_761, %c0_762, %c0_763] : memref<49x8x128xf32, #tpu.memory_space<vmem>>, vector<1x8x128xf32>
    %1301 = vector.shape_cast %1300 : vector<1x8x128xf32> to vector<8x128xf32>
    %1302 = arith.mulf %1279, %1301 : vector<8x128xf32>
    %1303 = arith.addf %1274, %1302 : vector<8x128xf32>
    %c4_764 = arith.constant 4 : index
    %c0_765 = arith.constant 0 : index
    %c0_766 = arith.constant 0 : index
    %1304 = vector.load %arg7[%c4_764, %c0_765, %c0_766] : memref<49x8x128xf32, #tpu.memory_space<vmem>>, vector<1x8x128xf32>
    %1305 = vector.shape_cast %1304 : vector<1x8x128xf32> to vector<8x128xf32>
    %1306 = arith.mulf %1279, %1305 : vector<8x128xf32>
    %1307 = arith.addf %1278, %1306 : vector<8x128xf32>
    %1308 = vector.extract_strided_slice %1162 {offsets = [5, 0], sizes = [8, 128], strides = [1, 1]} : vector<14x128xf32> to vector<8x128xf32>
    %c47_767 = arith.constant 47 : index
    %c0_768 = arith.constant 0 : index
    %c0_769 = arith.constant 0 : index
    %1309 = vector.load %arg7[%c47_767, %c0_768, %c0_769] : memref<49x8x128xf32, #tpu.memory_space<vmem>>, vector<1x8x128xf32>
    %1310 = vector.shape_cast %1309 : vector<1x8x128xf32> to vector<8x128xf32>
    %1311 = arith.mulf %1308, %1310 : vector<8x128xf32>
    %1312 = arith.addf %1283, %1311 : vector<8x128xf32>
    %c40_770 = arith.constant 40 : index
    %c0_771 = arith.constant 0 : index
    %c0_772 = arith.constant 0 : index
    %1313 = vector.load %arg7[%c40_770, %c0_771, %c0_772] : memref<49x8x128xf32, #tpu.memory_space<vmem>>, vector<1x8x128xf32>
    %1314 = vector.shape_cast %1313 : vector<1x8x128xf32> to vector<8x128xf32>
    %1315 = arith.mulf %1308, %1314 : vector<8x128xf32>
    %1316 = arith.addf %1287, %1315 : vector<8x128xf32>
    %c33_773 = arith.constant 33 : index
    %c0_774 = arith.constant 0 : index
    %c0_775 = arith.constant 0 : index
    %1317 = vector.load %arg7[%c33_773, %c0_774, %c0_775] : memref<49x8x128xf32, #tpu.memory_space<vmem>>, vector<1x8x128xf32>
    %1318 = vector.shape_cast %1317 : vector<1x8x128xf32> to vector<8x128xf32>
    %1319 = arith.mulf %1308, %1318 : vector<8x128xf32>
    %1320 = arith.addf %1291, %1319 : vector<8x128xf32>
    %c26_776 = arith.constant 26 : index
    %c0_777 = arith.constant 0 : index
    %c0_778 = arith.constant 0 : index
    %1321 = vector.load %arg7[%c26_776, %c0_777, %c0_778] : memref<49x8x128xf32, #tpu.memory_space<vmem>>, vector<1x8x128xf32>
    %1322 = vector.shape_cast %1321 : vector<1x8x128xf32> to vector<8x128xf32>
    %1323 = arith.mulf %1308, %1322 : vector<8x128xf32>
    %1324 = arith.addf %1295, %1323 : vector<8x128xf32>
    %c19_779 = arith.constant 19 : index
    %c0_780 = arith.constant 0 : index
    %c0_781 = arith.constant 0 : index
    %1325 = vector.load %arg7[%c19_779, %c0_780, %c0_781] : memref<49x8x128xf32, #tpu.memory_space<vmem>>, vector<1x8x128xf32>
    %1326 = vector.shape_cast %1325 : vector<1x8x128xf32> to vector<8x128xf32>
    %1327 = arith.mulf %1308, %1326 : vector<8x128xf32>
    %1328 = arith.addf %1299, %1327 : vector<8x128xf32>
    %c12_782 = arith.constant 12 : index
    %c0_783 = arith.constant 0 : index
    %c0_784 = arith.constant 0 : index
    %1329 = vector.load %arg7[%c12_782, %c0_783, %c0_784] : memref<49x8x128xf32, #tpu.memory_space<vmem>>, vector<1x8x128xf32>
    %1330 = vector.shape_cast %1329 : vector<1x8x128xf32> to vector<8x128xf32>
    %1331 = arith.mulf %1308, %1330 : vector<8x128xf32>
    %1332 = arith.addf %1303, %1331 : vector<8x128xf32>
    %c5_785 = arith.constant 5 : index
    %c0_786 = arith.constant 0 : index
    %c0_787 = arith.constant 0 : index
    %1333 = vector.load %arg7[%c5_785, %c0_786, %c0_787] : memref<49x8x128xf32, #tpu.memory_space<vmem>>, vector<1x8x128xf32>
    %1334 = vector.shape_cast %1333 : vector<1x8x128xf32> to vector<8x128xf32>
    %1335 = arith.mulf %1308, %1334 : vector<8x128xf32>
    %1336 = arith.addf %1307, %1335 : vector<8x128xf32>
    %1337 = vector.extract_strided_slice %1162 {offsets = [6, 0], sizes = [8, 128], strides = [1, 1]} : vector<14x128xf32> to vector<8x128xf32>
    %c48_788 = arith.constant 48 : index
    %c0_789 = arith.constant 0 : index
    %c0_790 = arith.constant 0 : index
    %1338 = vector.load %arg7[%c48_788, %c0_789, %c0_790] : memref<49x8x128xf32, #tpu.memory_space<vmem>>, vector<1x8x128xf32>
    %1339 = vector.shape_cast %1338 : vector<1x8x128xf32> to vector<8x128xf32>
    %1340 = arith.mulf %1337, %1339 : vector<8x128xf32>
    %1341 = arith.addf %1312, %1340 : vector<8x128xf32>
    %c41_791 = arith.constant 41 : index
    %c0_792 = arith.constant 0 : index
    %c0_793 = arith.constant 0 : index
    %1342 = vector.load %arg7[%c41_791, %c0_792, %c0_793] : memref<49x8x128xf32, #tpu.memory_space<vmem>>, vector<1x8x128xf32>
    %1343 = vector.shape_cast %1342 : vector<1x8x128xf32> to vector<8x128xf32>
    %1344 = arith.mulf %1337, %1343 : vector<8x128xf32>
    %1345 = arith.addf %1316, %1344 : vector<8x128xf32>
    %c34_794 = arith.constant 34 : index
    %c0_795 = arith.constant 0 : index
    %c0_796 = arith.constant 0 : index
    %1346 = vector.load %arg7[%c34_794, %c0_795, %c0_796] : memref<49x8x128xf32, #tpu.memory_space<vmem>>, vector<1x8x128xf32>
    %1347 = vector.shape_cast %1346 : vector<1x8x128xf32> to vector<8x128xf32>
    %1348 = arith.mulf %1337, %1347 : vector<8x128xf32>
    %1349 = arith.addf %1320, %1348 : vector<8x128xf32>
    %c27_797 = arith.constant 27 : index
    %c0_798 = arith.constant 0 : index
    %c0_799 = arith.constant 0 : index
    %1350 = vector.load %arg7[%c27_797, %c0_798, %c0_799] : memref<49x8x128xf32, #tpu.memory_space<vmem>>, vector<1x8x128xf32>
    %1351 = vector.shape_cast %1350 : vector<1x8x128xf32> to vector<8x128xf32>
    %1352 = arith.mulf %1337, %1351 : vector<8x128xf32>
    %1353 = arith.addf %1324, %1352 : vector<8x128xf32>
    %c20_800 = arith.constant 20 : index
    %c0_801 = arith.constant 0 : index
    %c0_802 = arith.constant 0 : index
    %1354 = vector.load %arg7[%c20_800, %c0_801, %c0_802] : memref<49x8x128xf32, #tpu.memory_space<vmem>>, vector<1x8x128xf32>
    %1355 = vector.shape_cast %1354 : vector<1x8x128xf32> to vector<8x128xf32>
    %1356 = arith.mulf %1337, %1355 : vector<8x128xf32>
    %1357 = arith.addf %1328, %1356 : vector<8x128xf32>
    %c13_803 = arith.constant 13 : index
    %c0_804 = arith.constant 0 : index
    %c0_805 = arith.constant 0 : index
    %1358 = vector.load %arg7[%c13_803, %c0_804, %c0_805] : memref<49x8x128xf32, #tpu.memory_space<vmem>>, vector<1x8x128xf32>
    %1359 = vector.shape_cast %1358 : vector<1x8x128xf32> to vector<8x128xf32>
    %1360 = arith.mulf %1337, %1359 : vector<8x128xf32>
    %1361 = arith.addf %1332, %1360 : vector<8x128xf32>
    %c6_806 = arith.constant 6 : index
    %c0_807 = arith.constant 0 : index
    %c0_808 = arith.constant 0 : index
    %1362 = vector.load %arg7[%c6_806, %c0_807, %c0_808] : memref<49x8x128xf32, #tpu.memory_space<vmem>>, vector<1x8x128xf32>
    %1363 = vector.shape_cast %1362 : vector<1x8x128xf32> to vector<8x128xf32>
    %1364 = arith.mulf %1337, %1363 : vector<8x128xf32>
    %1365 = arith.addf %1336, %1364 : vector<8x128xf32>
    %c7_i32_809 = arith.constant 7 : i32
    %1366 = arith.addi %496, %c7_i32_809 : i32
    %1367 = arith.index_cast %1366 : i32 to index
    %c0_810 = arith.constant 0 : index
    %c0_811 = arith.constant 0 : index
    %1368 = vector.load %arg6[%1367, %c0_810, %c0_811] : memref<14x14x128xf32, #tpu.memory_space<vmem>>, vector<1x14x128xf32>
    %1369 = vector.shape_cast %1368 : vector<1x14x128xf32> to vector<14x128xf32>
    %1370 = vector.extract_strided_slice %1369 {offsets = [0, 0], sizes = [8, 128], strides = [1, 1]} : vector<14x128xf32> to vector<8x128xf32>
    %c42_812 = arith.constant 42 : index
    %c0_813 = arith.constant 0 : index
    %c0_814 = arith.constant 0 : index
    %1371 = vector.load %arg7[%c42_812, %c0_813, %c0_814] : memref<49x8x128xf32, #tpu.memory_space<vmem>>, vector<1x8x128xf32>
    %1372 = vector.shape_cast %1371 : vector<1x8x128xf32> to vector<8x128xf32>
    %1373 = arith.mulf %1370, %1372 : vector<8x128xf32>
    %1374 = arith.addf %1345, %1373 : vector<8x128xf32>
    %c35_815 = arith.constant 35 : index
    %c0_816 = arith.constant 0 : index
    %c0_817 = arith.constant 0 : index
    %1375 = vector.load %arg7[%c35_815, %c0_816, %c0_817] : memref<49x8x128xf32, #tpu.memory_space<vmem>>, vector<1x8x128xf32>
    %1376 = vector.shape_cast %1375 : vector<1x8x128xf32> to vector<8x128xf32>
    %1377 = arith.mulf %1370, %1376 : vector<8x128xf32>
    %1378 = arith.addf %1349, %1377 : vector<8x128xf32>
    %c28_818 = arith.constant 28 : index
    %c0_819 = arith.constant 0 : index
    %c0_820 = arith.constant 0 : index
    %1379 = vector.load %arg7[%c28_818, %c0_819, %c0_820] : memref<49x8x128xf32, #tpu.memory_space<vmem>>, vector<1x8x128xf32>
    %1380 = vector.shape_cast %1379 : vector<1x8x128xf32> to vector<8x128xf32>
    %1381 = arith.mulf %1370, %1380 : vector<8x128xf32>
    %1382 = arith.addf %1353, %1381 : vector<8x128xf32>
    %c21_821 = arith.constant 21 : index
    %c0_822 = arith.constant 0 : index
    %c0_823 = arith.constant 0 : index
    %1383 = vector.load %arg7[%c21_821, %c0_822, %c0_823] : memref<49x8x128xf32, #tpu.memory_space<vmem>>, vector<1x8x128xf32>
    %1384 = vector.shape_cast %1383 : vector<1x8x128xf32> to vector<8x128xf32>
    %1385 = arith.mulf %1370, %1384 : vector<8x128xf32>
    %1386 = arith.addf %1357, %1385 : vector<8x128xf32>
    %c14_824 = arith.constant 14 : index
    %c0_825 = arith.constant 0 : index
    %c0_826 = arith.constant 0 : index
    %1387 = vector.load %arg7[%c14_824, %c0_825, %c0_826] : memref<49x8x128xf32, #tpu.memory_space<vmem>>, vector<1x8x128xf32>
    %1388 = vector.shape_cast %1387 : vector<1x8x128xf32> to vector<8x128xf32>
    %1389 = arith.mulf %1370, %1388 : vector<8x128xf32>
    %1390 = arith.addf %1361, %1389 : vector<8x128xf32>
    %c7_827 = arith.constant 7 : index
    %c0_828 = arith.constant 0 : index
    %c0_829 = arith.constant 0 : index
    %1391 = vector.load %arg7[%c7_827, %c0_828, %c0_829] : memref<49x8x128xf32, #tpu.memory_space<vmem>>, vector<1x8x128xf32>
    %1392 = vector.shape_cast %1391 : vector<1x8x128xf32> to vector<8x128xf32>
    %1393 = arith.mulf %1370, %1392 : vector<8x128xf32>
    %1394 = arith.addf %1365, %1393 : vector<8x128xf32>
    %c0_830 = arith.constant 0 : index
    %c0_831 = arith.constant 0 : index
    %c0_832 = arith.constant 0 : index
    %1395 = vector.load %arg7[%c0_830, %c0_831, %c0_832] : memref<49x8x128xf32, #tpu.memory_space<vmem>>, vector<1x8x128xf32>
    %1396 = vector.shape_cast %1395 : vector<1x8x128xf32> to vector<8x128xf32>
    %1397 = arith.mulf %1370, %1396 : vector<8x128xf32>
    %1398 = arith.addf %504, %1397 : vector<8x128xf32>
    %1399 = vector.extract_strided_slice %1369 {offsets = [1, 0], sizes = [8, 128], strides = [1, 1]} : vector<14x128xf32> to vector<8x128xf32>
    %c43_833 = arith.constant 43 : index
    %c0_834 = arith.constant 0 : index
    %c0_835 = arith.constant 0 : index
    %1400 = vector.load %arg7[%c43_833, %c0_834, %c0_835] : memref<49x8x128xf32, #tpu.memory_space<vmem>>, vector<1x8x128xf32>
    %1401 = vector.shape_cast %1400 : vector<1x8x128xf32> to vector<8x128xf32>
    %1402 = arith.mulf %1399, %1401 : vector<8x128xf32>
    %1403 = arith.addf %1374, %1402 : vector<8x128xf32>
    %c36_836 = arith.constant 36 : index
    %c0_837 = arith.constant 0 : index
    %c0_838 = arith.constant 0 : index
    %1404 = vector.load %arg7[%c36_836, %c0_837, %c0_838] : memref<49x8x128xf32, #tpu.memory_space<vmem>>, vector<1x8x128xf32>
    %1405 = vector.shape_cast %1404 : vector<1x8x128xf32> to vector<8x128xf32>
    %1406 = arith.mulf %1399, %1405 : vector<8x128xf32>
    %1407 = arith.addf %1378, %1406 : vector<8x128xf32>
    %c29_839 = arith.constant 29 : index
    %c0_840 = arith.constant 0 : index
    %c0_841 = arith.constant 0 : index
    %1408 = vector.load %arg7[%c29_839, %c0_840, %c0_841] : memref<49x8x128xf32, #tpu.memory_space<vmem>>, vector<1x8x128xf32>
    %1409 = vector.shape_cast %1408 : vector<1x8x128xf32> to vector<8x128xf32>
    %1410 = arith.mulf %1399, %1409 : vector<8x128xf32>
    %1411 = arith.addf %1382, %1410 : vector<8x128xf32>
    %c22_842 = arith.constant 22 : index
    %c0_843 = arith.constant 0 : index
    %c0_844 = arith.constant 0 : index
    %1412 = vector.load %arg7[%c22_842, %c0_843, %c0_844] : memref<49x8x128xf32, #tpu.memory_space<vmem>>, vector<1x8x128xf32>
    %1413 = vector.shape_cast %1412 : vector<1x8x128xf32> to vector<8x128xf32>
    %1414 = arith.mulf %1399, %1413 : vector<8x128xf32>
    %1415 = arith.addf %1386, %1414 : vector<8x128xf32>
    %c15_845 = arith.constant 15 : index
    %c0_846 = arith.constant 0 : index
    %c0_847 = arith.constant 0 : index
    %1416 = vector.load %arg7[%c15_845, %c0_846, %c0_847] : memref<49x8x128xf32, #tpu.memory_space<vmem>>, vector<1x8x128xf32>
    %1417 = vector.shape_cast %1416 : vector<1x8x128xf32> to vector<8x128xf32>
    %1418 = arith.mulf %1399, %1417 : vector<8x128xf32>
    %1419 = arith.addf %1390, %1418 : vector<8x128xf32>
    %c8_848 = arith.constant 8 : index
    %c0_849 = arith.constant 0 : index
    %c0_850 = arith.constant 0 : index
    %1420 = vector.load %arg7[%c8_848, %c0_849, %c0_850] : memref<49x8x128xf32, #tpu.memory_space<vmem>>, vector<1x8x128xf32>
    %1421 = vector.shape_cast %1420 : vector<1x8x128xf32> to vector<8x128xf32>
    %1422 = arith.mulf %1399, %1421 : vector<8x128xf32>
    %1423 = arith.addf %1394, %1422 : vector<8x128xf32>
    %c1_851 = arith.constant 1 : index
    %c0_852 = arith.constant 0 : index
    %c0_853 = arith.constant 0 : index
    %1424 = vector.load %arg7[%c1_851, %c0_852, %c0_853] : memref<49x8x128xf32, #tpu.memory_space<vmem>>, vector<1x8x128xf32>
    %1425 = vector.shape_cast %1424 : vector<1x8x128xf32> to vector<8x128xf32>
    %1426 = arith.mulf %1399, %1425 : vector<8x128xf32>
    %1427 = arith.addf %1398, %1426 : vector<8x128xf32>
    %1428 = vector.extract_strided_slice %1369 {offsets = [2, 0], sizes = [8, 128], strides = [1, 1]} : vector<14x128xf32> to vector<8x128xf32>
    %c44_854 = arith.constant 44 : index
    %c0_855 = arith.constant 0 : index
    %c0_856 = arith.constant 0 : index
    %1429 = vector.load %arg7[%c44_854, %c0_855, %c0_856] : memref<49x8x128xf32, #tpu.memory_space<vmem>>, vector<1x8x128xf32>
    %1430 = vector.shape_cast %1429 : vector<1x8x128xf32> to vector<8x128xf32>
    %1431 = arith.mulf %1428, %1430 : vector<8x128xf32>
    %1432 = arith.addf %1403, %1431 : vector<8x128xf32>
    %c37_857 = arith.constant 37 : index
    %c0_858 = arith.constant 0 : index
    %c0_859 = arith.constant 0 : index
    %1433 = vector.load %arg7[%c37_857, %c0_858, %c0_859] : memref<49x8x128xf32, #tpu.memory_space<vmem>>, vector<1x8x128xf32>
    %1434 = vector.shape_cast %1433 : vector<1x8x128xf32> to vector<8x128xf32>
    %1435 = arith.mulf %1428, %1434 : vector<8x128xf32>
    %1436 = arith.addf %1407, %1435 : vector<8x128xf32>
    %c30_860 = arith.constant 30 : index
    %c0_861 = arith.constant 0 : index
    %c0_862 = arith.constant 0 : index
    %1437 = vector.load %arg7[%c30_860, %c0_861, %c0_862] : memref<49x8x128xf32, #tpu.memory_space<vmem>>, vector<1x8x128xf32>
    %1438 = vector.shape_cast %1437 : vector<1x8x128xf32> to vector<8x128xf32>
    %1439 = arith.mulf %1428, %1438 : vector<8x128xf32>
    %1440 = arith.addf %1411, %1439 : vector<8x128xf32>
    %c23_863 = arith.constant 23 : index
    %c0_864 = arith.constant 0 : index
    %c0_865 = arith.constant 0 : index
    %1441 = vector.load %arg7[%c23_863, %c0_864, %c0_865] : memref<49x8x128xf32, #tpu.memory_space<vmem>>, vector<1x8x128xf32>
    %1442 = vector.shape_cast %1441 : vector<1x8x128xf32> to vector<8x128xf32>
    %1443 = arith.mulf %1428, %1442 : vector<8x128xf32>
    %1444 = arith.addf %1415, %1443 : vector<8x128xf32>
    %c16_866 = arith.constant 16 : index
    %c0_867 = arith.constant 0 : index
    %c0_868 = arith.constant 0 : index
    %1445 = vector.load %arg7[%c16_866, %c0_867, %c0_868] : memref<49x8x128xf32, #tpu.memory_space<vmem>>, vector<1x8x128xf32>
    %1446 = vector.shape_cast %1445 : vector<1x8x128xf32> to vector<8x128xf32>
    %1447 = arith.mulf %1428, %1446 : vector<8x128xf32>
    %1448 = arith.addf %1419, %1447 : vector<8x128xf32>
    %c9_869 = arith.constant 9 : index
    %c0_870 = arith.constant 0 : index
    %c0_871 = arith.constant 0 : index
    %1449 = vector.load %arg7[%c9_869, %c0_870, %c0_871] : memref<49x8x128xf32, #tpu.memory_space<vmem>>, vector<1x8x128xf32>
    %1450 = vector.shape_cast %1449 : vector<1x8x128xf32> to vector<8x128xf32>
    %1451 = arith.mulf %1428, %1450 : vector<8x128xf32>
    %1452 = arith.addf %1423, %1451 : vector<8x128xf32>
    %c2_872 = arith.constant 2 : index
    %c0_873 = arith.constant 0 : index
    %c0_874 = arith.constant 0 : index
    %1453 = vector.load %arg7[%c2_872, %c0_873, %c0_874] : memref<49x8x128xf32, #tpu.memory_space<vmem>>, vector<1x8x128xf32>
    %1454 = vector.shape_cast %1453 : vector<1x8x128xf32> to vector<8x128xf32>
    %1455 = arith.mulf %1428, %1454 : vector<8x128xf32>
    %1456 = arith.addf %1427, %1455 : vector<8x128xf32>
    %1457 = vector.extract_strided_slice %1369 {offsets = [3, 0], sizes = [8, 128], strides = [1, 1]} : vector<14x128xf32> to vector<8x128xf32>
    %c45_875 = arith.constant 45 : index
    %c0_876 = arith.constant 0 : index
    %c0_877 = arith.constant 0 : index
    %1458 = vector.load %arg7[%c45_875, %c0_876, %c0_877] : memref<49x8x128xf32, #tpu.memory_space<vmem>>, vector<1x8x128xf32>
    %1459 = vector.shape_cast %1458 : vector<1x8x128xf32> to vector<8x128xf32>
    %1460 = arith.mulf %1457, %1459 : vector<8x128xf32>
    %1461 = arith.addf %1432, %1460 : vector<8x128xf32>
    %c38_878 = arith.constant 38 : index
    %c0_879 = arith.constant 0 : index
    %c0_880 = arith.constant 0 : index
    %1462 = vector.load %arg7[%c38_878, %c0_879, %c0_880] : memref<49x8x128xf32, #tpu.memory_space<vmem>>, vector<1x8x128xf32>
    %1463 = vector.shape_cast %1462 : vector<1x8x128xf32> to vector<8x128xf32>
    %1464 = arith.mulf %1457, %1463 : vector<8x128xf32>
    %1465 = arith.addf %1436, %1464 : vector<8x128xf32>
    %c31_881 = arith.constant 31 : index
    %c0_882 = arith.constant 0 : index
    %c0_883 = arith.constant 0 : index
    %1466 = vector.load %arg7[%c31_881, %c0_882, %c0_883] : memref<49x8x128xf32, #tpu.memory_space<vmem>>, vector<1x8x128xf32>
    %1467 = vector.shape_cast %1466 : vector<1x8x128xf32> to vector<8x128xf32>
    %1468 = arith.mulf %1457, %1467 : vector<8x128xf32>
    %1469 = arith.addf %1440, %1468 : vector<8x128xf32>
    %c24_884 = arith.constant 24 : index
    %c0_885 = arith.constant 0 : index
    %c0_886 = arith.constant 0 : index
    %1470 = vector.load %arg7[%c24_884, %c0_885, %c0_886] : memref<49x8x128xf32, #tpu.memory_space<vmem>>, vector<1x8x128xf32>
    %1471 = vector.shape_cast %1470 : vector<1x8x128xf32> to vector<8x128xf32>
    %1472 = arith.mulf %1457, %1471 : vector<8x128xf32>
    %1473 = arith.addf %1444, %1472 : vector<8x128xf32>
    %c17_887 = arith.constant 17 : index
    %c0_888 = arith.constant 0 : index
    %c0_889 = arith.constant 0 : index
    %1474 = vector.load %arg7[%c17_887, %c0_888, %c0_889] : memref<49x8x128xf32, #tpu.memory_space<vmem>>, vector<1x8x128xf32>
    %1475 = vector.shape_cast %1474 : vector<1x8x128xf32> to vector<8x128xf32>
    %1476 = arith.mulf %1457, %1475 : vector<8x128xf32>
    %1477 = arith.addf %1448, %1476 : vector<8x128xf32>
    %c10_890 = arith.constant 10 : index
    %c0_891 = arith.constant 0 : index
    %c0_892 = arith.constant 0 : index
    %1478 = vector.load %arg7[%c10_890, %c0_891, %c0_892] : memref<49x8x128xf32, #tpu.memory_space<vmem>>, vector<1x8x128xf32>
    %1479 = vector.shape_cast %1478 : vector<1x8x128xf32> to vector<8x128xf32>
    %1480 = arith.mulf %1457, %1479 : vector<8x128xf32>
    %1481 = arith.addf %1452, %1480 : vector<8x128xf32>
    %c3_893 = arith.constant 3 : index
    %c0_894 = arith.constant 0 : index
    %c0_895 = arith.constant 0 : index
    %1482 = vector.load %arg7[%c3_893, %c0_894, %c0_895] : memref<49x8x128xf32, #tpu.memory_space<vmem>>, vector<1x8x128xf32>
    %1483 = vector.shape_cast %1482 : vector<1x8x128xf32> to vector<8x128xf32>
    %1484 = arith.mulf %1457, %1483 : vector<8x128xf32>
    %1485 = arith.addf %1456, %1484 : vector<8x128xf32>
    %1486 = vector.extract_strided_slice %1369 {offsets = [4, 0], sizes = [8, 128], strides = [1, 1]} : vector<14x128xf32> to vector<8x128xf32>
    %c46_896 = arith.constant 46 : index
    %c0_897 = arith.constant 0 : index
    %c0_898 = arith.constant 0 : index
    %1487 = vector.load %arg7[%c46_896, %c0_897, %c0_898] : memref<49x8x128xf32, #tpu.memory_space<vmem>>, vector<1x8x128xf32>
    %1488 = vector.shape_cast %1487 : vector<1x8x128xf32> to vector<8x128xf32>
    %1489 = arith.mulf %1486, %1488 : vector<8x128xf32>
    %1490 = arith.addf %1461, %1489 : vector<8x128xf32>
    %c39_899 = arith.constant 39 : index
    %c0_900 = arith.constant 0 : index
    %c0_901 = arith.constant 0 : index
    %1491 = vector.load %arg7[%c39_899, %c0_900, %c0_901] : memref<49x8x128xf32, #tpu.memory_space<vmem>>, vector<1x8x128xf32>
    %1492 = vector.shape_cast %1491 : vector<1x8x128xf32> to vector<8x128xf32>
    %1493 = arith.mulf %1486, %1492 : vector<8x128xf32>
    %1494 = arith.addf %1465, %1493 : vector<8x128xf32>
    %c32_902 = arith.constant 32 : index
    %c0_903 = arith.constant 0 : index
    %c0_904 = arith.constant 0 : index
    %1495 = vector.load %arg7[%c32_902, %c0_903, %c0_904] : memref<49x8x128xf32, #tpu.memory_space<vmem>>, vector<1x8x128xf32>
    %1496 = vector.shape_cast %1495 : vector<1x8x128xf32> to vector<8x128xf32>
    %1497 = arith.mulf %1486, %1496 : vector<8x128xf32>
    %1498 = arith.addf %1469, %1497 : vector<8x128xf32>
    %c25_905 = arith.constant 25 : index
    %c0_906 = arith.constant 0 : index
    %c0_907 = arith.constant 0 : index
    %1499 = vector.load %arg7[%c25_905, %c0_906, %c0_907] : memref<49x8x128xf32, #tpu.memory_space<vmem>>, vector<1x8x128xf32>
    %1500 = vector.shape_cast %1499 : vector<1x8x128xf32> to vector<8x128xf32>
    %1501 = arith.mulf %1486, %1500 : vector<8x128xf32>
    %1502 = arith.addf %1473, %1501 : vector<8x128xf32>
    %c18_908 = arith.constant 18 : index
    %c0_909 = arith.constant 0 : index
    %c0_910 = arith.constant 0 : index
    %1503 = vector.load %arg7[%c18_908, %c0_909, %c0_910] : memref<49x8x128xf32, #tpu.memory_space<vmem>>, vector<1x8x128xf32>
    %1504 = vector.shape_cast %1503 : vector<1x8x128xf32> to vector<8x128xf32>
    %1505 = arith.mulf %1486, %1504 : vector<8x128xf32>
    %1506 = arith.addf %1477, %1505 : vector<8x128xf32>
    %c11_911 = arith.constant 11 : index
    %c0_912 = arith.constant 0 : index
    %c0_913 = arith.constant 0 : index
    %1507 = vector.load %arg7[%c11_911, %c0_912, %c0_913] : memref<49x8x128xf32, #tpu.memory_space<vmem>>, vector<1x8x128xf32>
    %1508 = vector.shape_cast %1507 : vector<1x8x128xf32> to vector<8x128xf32>
    %1509 = arith.mulf %1486, %1508 : vector<8x128xf32>
    %1510 = arith.addf %1481, %1509 : vector<8x128xf32>
    %c4_914 = arith.constant 4 : index
    %c0_915 = arith.constant 0 : index
    %c0_916 = arith.constant 0 : index
    %1511 = vector.load %arg7[%c4_914, %c0_915, %c0_916] : memref<49x8x128xf32, #tpu.memory_space<vmem>>, vector<1x8x128xf32>
    %1512 = vector.shape_cast %1511 : vector<1x8x128xf32> to vector<8x128xf32>
    %1513 = arith.mulf %1486, %1512 : vector<8x128xf32>
    %1514 = arith.addf %1485, %1513 : vector<8x128xf32>
    %1515 = vector.extract_strided_slice %1369 {offsets = [5, 0], sizes = [8, 128], strides = [1, 1]} : vector<14x128xf32> to vector<8x128xf32>
    %c47_917 = arith.constant 47 : index
    %c0_918 = arith.constant 0 : index
    %c0_919 = arith.constant 0 : index
    %1516 = vector.load %arg7[%c47_917, %c0_918, %c0_919] : memref<49x8x128xf32, #tpu.memory_space<vmem>>, vector<1x8x128xf32>
    %1517 = vector.shape_cast %1516 : vector<1x8x128xf32> to vector<8x128xf32>
    %1518 = arith.mulf %1515, %1517 : vector<8x128xf32>
    %1519 = arith.addf %1490, %1518 : vector<8x128xf32>
    %c40_920 = arith.constant 40 : index
    %c0_921 = arith.constant 0 : index
    %c0_922 = arith.constant 0 : index
    %1520 = vector.load %arg7[%c40_920, %c0_921, %c0_922] : memref<49x8x128xf32, #tpu.memory_space<vmem>>, vector<1x8x128xf32>
    %1521 = vector.shape_cast %1520 : vector<1x8x128xf32> to vector<8x128xf32>
    %1522 = arith.mulf %1515, %1521 : vector<8x128xf32>
    %1523 = arith.addf %1494, %1522 : vector<8x128xf32>
    %c33_923 = arith.constant 33 : index
    %c0_924 = arith.constant 0 : index
    %c0_925 = arith.constant 0 : index
    %1524 = vector.load %arg7[%c33_923, %c0_924, %c0_925] : memref<49x8x128xf32, #tpu.memory_space<vmem>>, vector<1x8x128xf32>
    %1525 = vector.shape_cast %1524 : vector<1x8x128xf32> to vector<8x128xf32>
    %1526 = arith.mulf %1515, %1525 : vector<8x128xf32>
    %1527 = arith.addf %1498, %1526 : vector<8x128xf32>
    %c26_926 = arith.constant 26 : index
    %c0_927 = arith.constant 0 : index
    %c0_928 = arith.constant 0 : index
    %1528 = vector.load %arg7[%c26_926, %c0_927, %c0_928] : memref<49x8x128xf32, #tpu.memory_space<vmem>>, vector<1x8x128xf32>
    %1529 = vector.shape_cast %1528 : vector<1x8x128xf32> to vector<8x128xf32>
    %1530 = arith.mulf %1515, %1529 : vector<8x128xf32>
    %1531 = arith.addf %1502, %1530 : vector<8x128xf32>
    %c19_929 = arith.constant 19 : index
    %c0_930 = arith.constant 0 : index
    %c0_931 = arith.constant 0 : index
    %1532 = vector.load %arg7[%c19_929, %c0_930, %c0_931] : memref<49x8x128xf32, #tpu.memory_space<vmem>>, vector<1x8x128xf32>
    %1533 = vector.shape_cast %1532 : vector<1x8x128xf32> to vector<8x128xf32>
    %1534 = arith.mulf %1515, %1533 : vector<8x128xf32>
    %1535 = arith.addf %1506, %1534 : vector<8x128xf32>
    %c12_932 = arith.constant 12 : index
    %c0_933 = arith.constant 0 : index
    %c0_934 = arith.constant 0 : index
    %1536 = vector.load %arg7[%c12_932, %c0_933, %c0_934] : memref<49x8x128xf32, #tpu.memory_space<vmem>>, vector<1x8x128xf32>
    %1537 = vector.shape_cast %1536 : vector<1x8x128xf32> to vector<8x128xf32>
    %1538 = arith.mulf %1515, %1537 : vector<8x128xf32>
    %1539 = arith.addf %1510, %1538 : vector<8x128xf32>
    %c5_935 = arith.constant 5 : index
    %c0_936 = arith.constant 0 : index
    %c0_937 = arith.constant 0 : index
    %1540 = vector.load %arg7[%c5_935, %c0_936, %c0_937] : memref<49x8x128xf32, #tpu.memory_space<vmem>>, vector<1x8x128xf32>
    %1541 = vector.shape_cast %1540 : vector<1x8x128xf32> to vector<8x128xf32>
    %1542 = arith.mulf %1515, %1541 : vector<8x128xf32>
    %1543 = arith.addf %1514, %1542 : vector<8x128xf32>
    %1544 = vector.extract_strided_slice %1369 {offsets = [6, 0], sizes = [8, 128], strides = [1, 1]} : vector<14x128xf32> to vector<8x128xf32>
    %c48_938 = arith.constant 48 : index
    %c0_939 = arith.constant 0 : index
    %c0_940 = arith.constant 0 : index
    %1545 = vector.load %arg7[%c48_938, %c0_939, %c0_940] : memref<49x8x128xf32, #tpu.memory_space<vmem>>, vector<1x8x128xf32>
    %1546 = vector.shape_cast %1545 : vector<1x8x128xf32> to vector<8x128xf32>
    %1547 = arith.mulf %1544, %1546 : vector<8x128xf32>
    %1548 = arith.addf %1519, %1547 : vector<8x128xf32>
    %c41_941 = arith.constant 41 : index
    %c0_942 = arith.constant 0 : index
    %c0_943 = arith.constant 0 : index
    %1549 = vector.load %arg7[%c41_941, %c0_942, %c0_943] : memref<49x8x128xf32, #tpu.memory_space<vmem>>, vector<1x8x128xf32>
    %1550 = vector.shape_cast %1549 : vector<1x8x128xf32> to vector<8x128xf32>
    %1551 = arith.mulf %1544, %1550 : vector<8x128xf32>
    %1552 = arith.addf %1523, %1551 : vector<8x128xf32>
    %c34_944 = arith.constant 34 : index
    %c0_945 = arith.constant 0 : index
    %c0_946 = arith.constant 0 : index
    %1553 = vector.load %arg7[%c34_944, %c0_945, %c0_946] : memref<49x8x128xf32, #tpu.memory_space<vmem>>, vector<1x8x128xf32>
    %1554 = vector.shape_cast %1553 : vector<1x8x128xf32> to vector<8x128xf32>
    %1555 = arith.mulf %1544, %1554 : vector<8x128xf32>
    %1556 = arith.addf %1527, %1555 : vector<8x128xf32>
    %c27_947 = arith.constant 27 : index
    %c0_948 = arith.constant 0 : index
    %c0_949 = arith.constant 0 : index
    %1557 = vector.load %arg7[%c27_947, %c0_948, %c0_949] : memref<49x8x128xf32, #tpu.memory_space<vmem>>, vector<1x8x128xf32>
    %1558 = vector.shape_cast %1557 : vector<1x8x128xf32> to vector<8x128xf32>
    %1559 = arith.mulf %1544, %1558 : vector<8x128xf32>
    %1560 = arith.addf %1531, %1559 : vector<8x128xf32>
    %c20_950 = arith.constant 20 : index
    %c0_951 = arith.constant 0 : index
    %c0_952 = arith.constant 0 : index
    %1561 = vector.load %arg7[%c20_950, %c0_951, %c0_952] : memref<49x8x128xf32, #tpu.memory_space<vmem>>, vector<1x8x128xf32>
    %1562 = vector.shape_cast %1561 : vector<1x8x128xf32> to vector<8x128xf32>
    %1563 = arith.mulf %1544, %1562 : vector<8x128xf32>
    %1564 = arith.addf %1535, %1563 : vector<8x128xf32>
    %c13_953 = arith.constant 13 : index
    %c0_954 = arith.constant 0 : index
    %c0_955 = arith.constant 0 : index
    %1565 = vector.load %arg7[%c13_953, %c0_954, %c0_955] : memref<49x8x128xf32, #tpu.memory_space<vmem>>, vector<1x8x128xf32>
    %1566 = vector.shape_cast %1565 : vector<1x8x128xf32> to vector<8x128xf32>
    %1567 = arith.mulf %1544, %1566 : vector<8x128xf32>
    %1568 = arith.addf %1539, %1567 : vector<8x128xf32>
    %c6_956 = arith.constant 6 : index
    %c0_957 = arith.constant 0 : index
    %c0_958 = arith.constant 0 : index
    %1569 = vector.load %arg7[%c6_956, %c0_957, %c0_958] : memref<49x8x128xf32, #tpu.memory_space<vmem>>, vector<1x8x128xf32>
    %1570 = vector.shape_cast %1569 : vector<1x8x128xf32> to vector<8x128xf32>
    %1571 = arith.mulf %1544, %1570 : vector<8x128xf32>
    %1572 = arith.addf %1543, %1571 : vector<8x128xf32>
    %c8_i32_959 = arith.constant 8 : i32
    %1573 = arith.addi %496, %c8_i32_959 : i32
    %1574 = arith.index_cast %1573 : i32 to index
    %c0_960 = arith.constant 0 : index
    %c0_961 = arith.constant 0 : index
    %1575 = vector.load %arg6[%1574, %c0_960, %c0_961] : memref<14x14x128xf32, #tpu.memory_space<vmem>>, vector<1x14x128xf32>
    %1576 = vector.shape_cast %1575 : vector<1x14x128xf32> to vector<14x128xf32>
    %1577 = vector.extract_strided_slice %1576 {offsets = [0, 0], sizes = [8, 128], strides = [1, 1]} : vector<14x128xf32> to vector<8x128xf32>
    %c42_962 = arith.constant 42 : index
    %c0_963 = arith.constant 0 : index
    %c0_964 = arith.constant 0 : index
    %1578 = vector.load %arg7[%c42_962, %c0_963, %c0_964] : memref<49x8x128xf32, #tpu.memory_space<vmem>>, vector<1x8x128xf32>
    %1579 = vector.shape_cast %1578 : vector<1x8x128xf32> to vector<8x128xf32>
    %1580 = arith.mulf %1577, %1579 : vector<8x128xf32>
    %1581 = arith.addf %1552, %1580 : vector<8x128xf32>
    %c35_965 = arith.constant 35 : index
    %c0_966 = arith.constant 0 : index
    %c0_967 = arith.constant 0 : index
    %1582 = vector.load %arg7[%c35_965, %c0_966, %c0_967] : memref<49x8x128xf32, #tpu.memory_space<vmem>>, vector<1x8x128xf32>
    %1583 = vector.shape_cast %1582 : vector<1x8x128xf32> to vector<8x128xf32>
    %1584 = arith.mulf %1577, %1583 : vector<8x128xf32>
    %1585 = arith.addf %1556, %1584 : vector<8x128xf32>
    %c28_968 = arith.constant 28 : index
    %c0_969 = arith.constant 0 : index
    %c0_970 = arith.constant 0 : index
    %1586 = vector.load %arg7[%c28_968, %c0_969, %c0_970] : memref<49x8x128xf32, #tpu.memory_space<vmem>>, vector<1x8x128xf32>
    %1587 = vector.shape_cast %1586 : vector<1x8x128xf32> to vector<8x128xf32>
    %1588 = arith.mulf %1577, %1587 : vector<8x128xf32>
    %1589 = arith.addf %1560, %1588 : vector<8x128xf32>
    %c21_971 = arith.constant 21 : index
    %c0_972 = arith.constant 0 : index
    %c0_973 = arith.constant 0 : index
    %1590 = vector.load %arg7[%c21_971, %c0_972, %c0_973] : memref<49x8x128xf32, #tpu.memory_space<vmem>>, vector<1x8x128xf32>
    %1591 = vector.shape_cast %1590 : vector<1x8x128xf32> to vector<8x128xf32>
    %1592 = arith.mulf %1577, %1591 : vector<8x128xf32>
    %1593 = arith.addf %1564, %1592 : vector<8x128xf32>
    %c14_974 = arith.constant 14 : index
    %c0_975 = arith.constant 0 : index
    %c0_976 = arith.constant 0 : index
    %1594 = vector.load %arg7[%c14_974, %c0_975, %c0_976] : memref<49x8x128xf32, #tpu.memory_space<vmem>>, vector<1x8x128xf32>
    %1595 = vector.shape_cast %1594 : vector<1x8x128xf32> to vector<8x128xf32>
    %1596 = arith.mulf %1577, %1595 : vector<8x128xf32>
    %1597 = arith.addf %1568, %1596 : vector<8x128xf32>
    %c7_977 = arith.constant 7 : index
    %c0_978 = arith.constant 0 : index
    %c0_979 = arith.constant 0 : index
    %1598 = vector.load %arg7[%c7_977, %c0_978, %c0_979] : memref<49x8x128xf32, #tpu.memory_space<vmem>>, vector<1x8x128xf32>
    %1599 = vector.shape_cast %1598 : vector<1x8x128xf32> to vector<8x128xf32>
    %1600 = arith.mulf %1577, %1599 : vector<8x128xf32>
    %1601 = arith.addf %1572, %1600 : vector<8x128xf32>
    %1602 = vector.extract_strided_slice %1576 {offsets = [1, 0], sizes = [8, 128], strides = [1, 1]} : vector<14x128xf32> to vector<8x128xf32>
    %c43_980 = arith.constant 43 : index
    %c0_981 = arith.constant 0 : index
    %c0_982 = arith.constant 0 : index
    %1603 = vector.load %arg7[%c43_980, %c0_981, %c0_982] : memref<49x8x128xf32, #tpu.memory_space<vmem>>, vector<1x8x128xf32>
    %1604 = vector.shape_cast %1603 : vector<1x8x128xf32> to vector<8x128xf32>
    %1605 = arith.mulf %1602, %1604 : vector<8x128xf32>
    %1606 = arith.addf %1581, %1605 : vector<8x128xf32>
    %c36_983 = arith.constant 36 : index
    %c0_984 = arith.constant 0 : index
    %c0_985 = arith.constant 0 : index
    %1607 = vector.load %arg7[%c36_983, %c0_984, %c0_985] : memref<49x8x128xf32, #tpu.memory_space<vmem>>, vector<1x8x128xf32>
    %1608 = vector.shape_cast %1607 : vector<1x8x128xf32> to vector<8x128xf32>
    %1609 = arith.mulf %1602, %1608 : vector<8x128xf32>
    %1610 = arith.addf %1585, %1609 : vector<8x128xf32>
    %c29_986 = arith.constant 29 : index
    %c0_987 = arith.constant 0 : index
    %c0_988 = arith.constant 0 : index
    %1611 = vector.load %arg7[%c29_986, %c0_987, %c0_988] : memref<49x8x128xf32, #tpu.memory_space<vmem>>, vector<1x8x128xf32>
    %1612 = vector.shape_cast %1611 : vector<1x8x128xf32> to vector<8x128xf32>
    %1613 = arith.mulf %1602, %1612 : vector<8x128xf32>
    %1614 = arith.addf %1589, %1613 : vector<8x128xf32>
    %c22_989 = arith.constant 22 : index
    %c0_990 = arith.constant 0 : index
    %c0_991 = arith.constant 0 : index
    %1615 = vector.load %arg7[%c22_989, %c0_990, %c0_991] : memref<49x8x128xf32, #tpu.memory_space<vmem>>, vector<1x8x128xf32>
    %1616 = vector.shape_cast %1615 : vector<1x8x128xf32> to vector<8x128xf32>
    %1617 = arith.mulf %1602, %1616 : vector<8x128xf32>
    %1618 = arith.addf %1593, %1617 : vector<8x128xf32>
    %c15_992 = arith.constant 15 : index
    %c0_993 = arith.constant 0 : index
    %c0_994 = arith.constant 0 : index
    %1619 = vector.load %arg7[%c15_992, %c0_993, %c0_994] : memref<49x8x128xf32, #tpu.memory_space<vmem>>, vector<1x8x128xf32>
    %1620 = vector.shape_cast %1619 : vector<1x8x128xf32> to vector<8x128xf32>
    %1621 = arith.mulf %1602, %1620 : vector<8x128xf32>
    %1622 = arith.addf %1597, %1621 : vector<8x128xf32>
    %c8_995 = arith.constant 8 : index
    %c0_996 = arith.constant 0 : index
    %c0_997 = arith.constant 0 : index
    %1623 = vector.load %arg7[%c8_995, %c0_996, %c0_997] : memref<49x8x128xf32, #tpu.memory_space<vmem>>, vector<1x8x128xf32>
    %1624 = vector.shape_cast %1623 : vector<1x8x128xf32> to vector<8x128xf32>
    %1625 = arith.mulf %1602, %1624 : vector<8x128xf32>
    %1626 = arith.addf %1601, %1625 : vector<8x128xf32>
    %1627 = vector.extract_strided_slice %1576 {offsets = [2, 0], sizes = [8, 128], strides = [1, 1]} : vector<14x128xf32> to vector<8x128xf32>
    %c44_998 = arith.constant 44 : index
    %c0_999 = arith.constant 0 : index
    %c0_1000 = arith.constant 0 : index
    %1628 = vector.load %arg7[%c44_998, %c0_999, %c0_1000] : memref<49x8x128xf32, #tpu.memory_space<vmem>>, vector<1x8x128xf32>
    %1629 = vector.shape_cast %1628 : vector<1x8x128xf32> to vector<8x128xf32>
    %1630 = arith.mulf %1627, %1629 : vector<8x128xf32>
    %1631 = arith.addf %1606, %1630 : vector<8x128xf32>
    %c37_1001 = arith.constant 37 : index
    %c0_1002 = arith.constant 0 : index
    %c0_1003 = arith.constant 0 : index
    %1632 = vector.load %arg7[%c37_1001, %c0_1002, %c0_1003] : memref<49x8x128xf32, #tpu.memory_space<vmem>>, vector<1x8x128xf32>
    %1633 = vector.shape_cast %1632 : vector<1x8x128xf32> to vector<8x128xf32>
    %1634 = arith.mulf %1627, %1633 : vector<8x128xf32>
    %1635 = arith.addf %1610, %1634 : vector<8x128xf32>
    %c30_1004 = arith.constant 30 : index
    %c0_1005 = arith.constant 0 : index
    %c0_1006 = arith.constant 0 : index
    %1636 = vector.load %arg7[%c30_1004, %c0_1005, %c0_1006] : memref<49x8x128xf32, #tpu.memory_space<vmem>>, vector<1x8x128xf32>
    %1637 = vector.shape_cast %1636 : vector<1x8x128xf32> to vector<8x128xf32>
    %1638 = arith.mulf %1627, %1637 : vector<8x128xf32>
    %1639 = arith.addf %1614, %1638 : vector<8x128xf32>
    %c23_1007 = arith.constant 23 : index
    %c0_1008 = arith.constant 0 : index
    %c0_1009 = arith.constant 0 : index
    %1640 = vector.load %arg7[%c23_1007, %c0_1008, %c0_1009] : memref<49x8x128xf32, #tpu.memory_space<vmem>>, vector<1x8x128xf32>
    %1641 = vector.shape_cast %1640 : vector<1x8x128xf32> to vector<8x128xf32>
    %1642 = arith.mulf %1627, %1641 : vector<8x128xf32>
    %1643 = arith.addf %1618, %1642 : vector<8x128xf32>
    %c16_1010 = arith.constant 16 : index
    %c0_1011 = arith.constant 0 : index
    %c0_1012 = arith.constant 0 : index
    %1644 = vector.load %arg7[%c16_1010, %c0_1011, %c0_1012] : memref<49x8x128xf32, #tpu.memory_space<vmem>>, vector<1x8x128xf32>
    %1645 = vector.shape_cast %1644 : vector<1x8x128xf32> to vector<8x128xf32>
    %1646 = arith.mulf %1627, %1645 : vector<8x128xf32>
    %1647 = arith.addf %1622, %1646 : vector<8x128xf32>
    %c9_1013 = arith.constant 9 : index
    %c0_1014 = arith.constant 0 : index
    %c0_1015 = arith.constant 0 : index
    %1648 = vector.load %arg7[%c9_1013, %c0_1014, %c0_1015] : memref<49x8x128xf32, #tpu.memory_space<vmem>>, vector<1x8x128xf32>
    %1649 = vector.shape_cast %1648 : vector<1x8x128xf32> to vector<8x128xf32>
    %1650 = arith.mulf %1627, %1649 : vector<8x128xf32>
    %1651 = arith.addf %1626, %1650 : vector<8x128xf32>
    %1652 = vector.extract_strided_slice %1576 {offsets = [3, 0], sizes = [8, 128], strides = [1, 1]} : vector<14x128xf32> to vector<8x128xf32>
    %c45_1016 = arith.constant 45 : index
    %c0_1017 = arith.constant 0 : index
    %c0_1018 = arith.constant 0 : index
    %1653 = vector.load %arg7[%c45_1016, %c0_1017, %c0_1018] : memref<49x8x128xf32, #tpu.memory_space<vmem>>, vector<1x8x128xf32>
    %1654 = vector.shape_cast %1653 : vector<1x8x128xf32> to vector<8x128xf32>
    %1655 = arith.mulf %1652, %1654 : vector<8x128xf32>
    %1656 = arith.addf %1631, %1655 : vector<8x128xf32>
    %c38_1019 = arith.constant 38 : index
    %c0_1020 = arith.constant 0 : index
    %c0_1021 = arith.constant 0 : index
    %1657 = vector.load %arg7[%c38_1019, %c0_1020, %c0_1021] : memref<49x8x128xf32, #tpu.memory_space<vmem>>, vector<1x8x128xf32>
    %1658 = vector.shape_cast %1657 : vector<1x8x128xf32> to vector<8x128xf32>
    %1659 = arith.mulf %1652, %1658 : vector<8x128xf32>
    %1660 = arith.addf %1635, %1659 : vector<8x128xf32>
    %c31_1022 = arith.constant 31 : index
    %c0_1023 = arith.constant 0 : index
    %c0_1024 = arith.constant 0 : index
    %1661 = vector.load %arg7[%c31_1022, %c0_1023, %c0_1024] : memref<49x8x128xf32, #tpu.memory_space<vmem>>, vector<1x8x128xf32>
    %1662 = vector.shape_cast %1661 : vector<1x8x128xf32> to vector<8x128xf32>
    %1663 = arith.mulf %1652, %1662 : vector<8x128xf32>
    %1664 = arith.addf %1639, %1663 : vector<8x128xf32>
    %c24_1025 = arith.constant 24 : index
    %c0_1026 = arith.constant 0 : index
    %c0_1027 = arith.constant 0 : index
    %1665 = vector.load %arg7[%c24_1025, %c0_1026, %c0_1027] : memref<49x8x128xf32, #tpu.memory_space<vmem>>, vector<1x8x128xf32>
    %1666 = vector.shape_cast %1665 : vector<1x8x128xf32> to vector<8x128xf32>
    %1667 = arith.mulf %1652, %1666 : vector<8x128xf32>
    %1668 = arith.addf %1643, %1667 : vector<8x128xf32>
    %c17_1028 = arith.constant 17 : index
    %c0_1029 = arith.constant 0 : index
    %c0_1030 = arith.constant 0 : index
    %1669 = vector.load %arg7[%c17_1028, %c0_1029, %c0_1030] : memref<49x8x128xf32, #tpu.memory_space<vmem>>, vector<1x8x128xf32>
    %1670 = vector.shape_cast %1669 : vector<1x8x128xf32> to vector<8x128xf32>
    %1671 = arith.mulf %1652, %1670 : vector<8x128xf32>
    %1672 = arith.addf %1647, %1671 : vector<8x128xf32>
    %c10_1031 = arith.constant 10 : index
    %c0_1032 = arith.constant 0 : index
    %c0_1033 = arith.constant 0 : index
    %1673 = vector.load %arg7[%c10_1031, %c0_1032, %c0_1033] : memref<49x8x128xf32, #tpu.memory_space<vmem>>, vector<1x8x128xf32>
    %1674 = vector.shape_cast %1673 : vector<1x8x128xf32> to vector<8x128xf32>
    %1675 = arith.mulf %1652, %1674 : vector<8x128xf32>
    %1676 = arith.addf %1651, %1675 : vector<8x128xf32>
    %1677 = vector.extract_strided_slice %1576 {offsets = [4, 0], sizes = [8, 128], strides = [1, 1]} : vector<14x128xf32> to vector<8x128xf32>
    %c46_1034 = arith.constant 46 : index
    %c0_1035 = arith.constant 0 : index
    %c0_1036 = arith.constant 0 : index
    %1678 = vector.load %arg7[%c46_1034, %c0_1035, %c0_1036] : memref<49x8x128xf32, #tpu.memory_space<vmem>>, vector<1x8x128xf32>
    %1679 = vector.shape_cast %1678 : vector<1x8x128xf32> to vector<8x128xf32>
    %1680 = arith.mulf %1677, %1679 : vector<8x128xf32>
    %1681 = arith.addf %1656, %1680 : vector<8x128xf32>
    %c39_1037 = arith.constant 39 : index
    %c0_1038 = arith.constant 0 : index
    %c0_1039 = arith.constant 0 : index
    %1682 = vector.load %arg7[%c39_1037, %c0_1038, %c0_1039] : memref<49x8x128xf32, #tpu.memory_space<vmem>>, vector<1x8x128xf32>
    %1683 = vector.shape_cast %1682 : vector<1x8x128xf32> to vector<8x128xf32>
    %1684 = arith.mulf %1677, %1683 : vector<8x128xf32>
    %1685 = arith.addf %1660, %1684 : vector<8x128xf32>
    %c32_1040 = arith.constant 32 : index
    %c0_1041 = arith.constant 0 : index
    %c0_1042 = arith.constant 0 : index
    %1686 = vector.load %arg7[%c32_1040, %c0_1041, %c0_1042] : memref<49x8x128xf32, #tpu.memory_space<vmem>>, vector<1x8x128xf32>
    %1687 = vector.shape_cast %1686 : vector<1x8x128xf32> to vector<8x128xf32>
    %1688 = arith.mulf %1677, %1687 : vector<8x128xf32>
    %1689 = arith.addf %1664, %1688 : vector<8x128xf32>
    %c25_1043 = arith.constant 25 : index
    %c0_1044 = arith.constant 0 : index
    %c0_1045 = arith.constant 0 : index
    %1690 = vector.load %arg7[%c25_1043, %c0_1044, %c0_1045] : memref<49x8x128xf32, #tpu.memory_space<vmem>>, vector<1x8x128xf32>
    %1691 = vector.shape_cast %1690 : vector<1x8x128xf32> to vector<8x128xf32>
    %1692 = arith.mulf %1677, %1691 : vector<8x128xf32>
    %1693 = arith.addf %1668, %1692 : vector<8x128xf32>
    %c18_1046 = arith.constant 18 : index
    %c0_1047 = arith.constant 0 : index
    %c0_1048 = arith.constant 0 : index
    %1694 = vector.load %arg7[%c18_1046, %c0_1047, %c0_1048] : memref<49x8x128xf32, #tpu.memory_space<vmem>>, vector<1x8x128xf32>
    %1695 = vector.shape_cast %1694 : vector<1x8x128xf32> to vector<8x128xf32>
    %1696 = arith.mulf %1677, %1695 : vector<8x128xf32>
    %1697 = arith.addf %1672, %1696 : vector<8x128xf32>
    %c11_1049 = arith.constant 11 : index
    %c0_1050 = arith.constant 0 : index
    %c0_1051 = arith.constant 0 : index
    %1698 = vector.load %arg7[%c11_1049, %c0_1050, %c0_1051] : memref<49x8x128xf32, #tpu.memory_space<vmem>>, vector<1x8x128xf32>
    %1699 = vector.shape_cast %1698 : vector<1x8x128xf32> to vector<8x128xf32>
    %1700 = arith.mulf %1677, %1699 : vector<8x128xf32>
    %1701 = arith.addf %1676, %1700 : vector<8x128xf32>
    %1702 = vector.extract_strided_slice %1576 {offsets = [5, 0], sizes = [8, 128], strides = [1, 1]} : vector<14x128xf32> to vector<8x128xf32>
    %c47_1052 = arith.constant 47 : index
    %c0_1053 = arith.constant 0 : index
    %c0_1054 = arith.constant 0 : index
    %1703 = vector.load %arg7[%c47_1052, %c0_1053, %c0_1054] : memref<49x8x128xf32, #tpu.memory_space<vmem>>, vector<1x8x128xf32>
    %1704 = vector.shape_cast %1703 : vector<1x8x128xf32> to vector<8x128xf32>
    %1705 = arith.mulf %1702, %1704 : vector<8x128xf32>
    %1706 = arith.addf %1681, %1705 : vector<8x128xf32>
    %c40_1055 = arith.constant 40 : index
    %c0_1056 = arith.constant 0 : index
    %c0_1057 = arith.constant 0 : index
    %1707 = vector.load %arg7[%c40_1055, %c0_1056, %c0_1057] : memref<49x8x128xf32, #tpu.memory_space<vmem>>, vector<1x8x128xf32>
    %1708 = vector.shape_cast %1707 : vector<1x8x128xf32> to vector<8x128xf32>
    %1709 = arith.mulf %1702, %1708 : vector<8x128xf32>
    %1710 = arith.addf %1685, %1709 : vector<8x128xf32>
    %c33_1058 = arith.constant 33 : index
    %c0_1059 = arith.constant 0 : index
    %c0_1060 = arith.constant 0 : index
    %1711 = vector.load %arg7[%c33_1058, %c0_1059, %c0_1060] : memref<49x8x128xf32, #tpu.memory_space<vmem>>, vector<1x8x128xf32>
    %1712 = vector.shape_cast %1711 : vector<1x8x128xf32> to vector<8x128xf32>
    %1713 = arith.mulf %1702, %1712 : vector<8x128xf32>
    %1714 = arith.addf %1689, %1713 : vector<8x128xf32>
    %c26_1061 = arith.constant 26 : index
    %c0_1062 = arith.constant 0 : index
    %c0_1063 = arith.constant 0 : index
    %1715 = vector.load %arg7[%c26_1061, %c0_1062, %c0_1063] : memref<49x8x128xf32, #tpu.memory_space<vmem>>, vector<1x8x128xf32>
    %1716 = vector.shape_cast %1715 : vector<1x8x128xf32> to vector<8x128xf32>
    %1717 = arith.mulf %1702, %1716 : vector<8x128xf32>
    %1718 = arith.addf %1693, %1717 : vector<8x128xf32>
    %c19_1064 = arith.constant 19 : index
    %c0_1065 = arith.constant 0 : index
    %c0_1066 = arith.constant 0 : index
    %1719 = vector.load %arg7[%c19_1064, %c0_1065, %c0_1066] : memref<49x8x128xf32, #tpu.memory_space<vmem>>, vector<1x8x128xf32>
    %1720 = vector.shape_cast %1719 : vector<1x8x128xf32> to vector<8x128xf32>
    %1721 = arith.mulf %1702, %1720 : vector<8x128xf32>
    %1722 = arith.addf %1697, %1721 : vector<8x128xf32>
    %c12_1067 = arith.constant 12 : index
    %c0_1068 = arith.constant 0 : index
    %c0_1069 = arith.constant 0 : index
    %1723 = vector.load %arg7[%c12_1067, %c0_1068, %c0_1069] : memref<49x8x128xf32, #tpu.memory_space<vmem>>, vector<1x8x128xf32>
    %1724 = vector.shape_cast %1723 : vector<1x8x128xf32> to vector<8x128xf32>
    %1725 = arith.mulf %1702, %1724 : vector<8x128xf32>
    %1726 = arith.addf %1701, %1725 : vector<8x128xf32>
    %1727 = vector.extract_strided_slice %1576 {offsets = [6, 0], sizes = [8, 128], strides = [1, 1]} : vector<14x128xf32> to vector<8x128xf32>
    %c48_1070 = arith.constant 48 : index
    %c0_1071 = arith.constant 0 : index
    %c0_1072 = arith.constant 0 : index
    %1728 = vector.load %arg7[%c48_1070, %c0_1071, %c0_1072] : memref<49x8x128xf32, #tpu.memory_space<vmem>>, vector<1x8x128xf32>
    %1729 = vector.shape_cast %1728 : vector<1x8x128xf32> to vector<8x128xf32>
    %1730 = arith.mulf %1727, %1729 : vector<8x128xf32>
    %1731 = arith.addf %1706, %1730 : vector<8x128xf32>
    %c41_1073 = arith.constant 41 : index
    %c0_1074 = arith.constant 0 : index
    %c0_1075 = arith.constant 0 : index
    %1732 = vector.load %arg7[%c41_1073, %c0_1074, %c0_1075] : memref<49x8x128xf32, #tpu.memory_space<vmem>>, vector<1x8x128xf32>
    %1733 = vector.shape_cast %1732 : vector<1x8x128xf32> to vector<8x128xf32>
    %1734 = arith.mulf %1727, %1733 : vector<8x128xf32>
    %1735 = arith.addf %1710, %1734 : vector<8x128xf32>
    %c34_1076 = arith.constant 34 : index
    %c0_1077 = arith.constant 0 : index
    %c0_1078 = arith.constant 0 : index
    %1736 = vector.load %arg7[%c34_1076, %c0_1077, %c0_1078] : memref<49x8x128xf32, #tpu.memory_space<vmem>>, vector<1x8x128xf32>
    %1737 = vector.shape_cast %1736 : vector<1x8x128xf32> to vector<8x128xf32>
    %1738 = arith.mulf %1727, %1737 : vector<8x128xf32>
    %1739 = arith.addf %1714, %1738 : vector<8x128xf32>
    %c27_1079 = arith.constant 27 : index
    %c0_1080 = arith.constant 0 : index
    %c0_1081 = arith.constant 0 : index
    %1740 = vector.load %arg7[%c27_1079, %c0_1080, %c0_1081] : memref<49x8x128xf32, #tpu.memory_space<vmem>>, vector<1x8x128xf32>
    %1741 = vector.shape_cast %1740 : vector<1x8x128xf32> to vector<8x128xf32>
    %1742 = arith.mulf %1727, %1741 : vector<8x128xf32>
    %1743 = arith.addf %1718, %1742 : vector<8x128xf32>
    %c20_1082 = arith.constant 20 : index
    %c0_1083 = arith.constant 0 : index
    %c0_1084 = arith.constant 0 : index
    %1744 = vector.load %arg7[%c20_1082, %c0_1083, %c0_1084] : memref<49x8x128xf32, #tpu.memory_space<vmem>>, vector<1x8x128xf32>
    %1745 = vector.shape_cast %1744 : vector<1x8x128xf32> to vector<8x128xf32>
    %1746 = arith.mulf %1727, %1745 : vector<8x128xf32>
    %1747 = arith.addf %1722, %1746 : vector<8x128xf32>
    %c13_1085 = arith.constant 13 : index
    %c0_1086 = arith.constant 0 : index
    %c0_1087 = arith.constant 0 : index
    %1748 = vector.load %arg7[%c13_1085, %c0_1086, %c0_1087] : memref<49x8x128xf32, #tpu.memory_space<vmem>>, vector<1x8x128xf32>
    %1749 = vector.shape_cast %1748 : vector<1x8x128xf32> to vector<8x128xf32>
    %1750 = arith.mulf %1727, %1749 : vector<8x128xf32>
    %1751 = arith.addf %1726, %1750 : vector<8x128xf32>
    %c9_i32 = arith.constant 9 : i32
    %1752 = arith.addi %496, %c9_i32 : i32
    %1753 = arith.index_cast %1752 : i32 to index
    %c0_1088 = arith.constant 0 : index
    %c0_1089 = arith.constant 0 : index
    %1754 = vector.load %arg6[%1753, %c0_1088, %c0_1089] : memref<14x14x128xf32, #tpu.memory_space<vmem>>, vector<1x14x128xf32>
    %1755 = vector.shape_cast %1754 : vector<1x14x128xf32> to vector<14x128xf32>
    %1756 = vector.extract_strided_slice %1755 {offsets = [0, 0], sizes = [8, 128], strides = [1, 1]} : vector<14x128xf32> to vector<8x128xf32>
    %c42_1090 = arith.constant 42 : index
    %c0_1091 = arith.constant 0 : index
    %c0_1092 = arith.constant 0 : index
    %1757 = vector.load %arg7[%c42_1090, %c0_1091, %c0_1092] : memref<49x8x128xf32, #tpu.memory_space<vmem>>, vector<1x8x128xf32>
    %1758 = vector.shape_cast %1757 : vector<1x8x128xf32> to vector<8x128xf32>
    %1759 = arith.mulf %1756, %1758 : vector<8x128xf32>
    %1760 = arith.addf %1735, %1759 : vector<8x128xf32>
    %c35_1093 = arith.constant 35 : index
    %c0_1094 = arith.constant 0 : index
    %c0_1095 = arith.constant 0 : index
    %1761 = vector.load %arg7[%c35_1093, %c0_1094, %c0_1095] : memref<49x8x128xf32, #tpu.memory_space<vmem>>, vector<1x8x128xf32>
    %1762 = vector.shape_cast %1761 : vector<1x8x128xf32> to vector<8x128xf32>
    %1763 = arith.mulf %1756, %1762 : vector<8x128xf32>
    %1764 = arith.addf %1739, %1763 : vector<8x128xf32>
    %c28_1096 = arith.constant 28 : index
    %c0_1097 = arith.constant 0 : index
    %c0_1098 = arith.constant 0 : index
    %1765 = vector.load %arg7[%c28_1096, %c0_1097, %c0_1098] : memref<49x8x128xf32, #tpu.memory_space<vmem>>, vector<1x8x128xf32>
    %1766 = vector.shape_cast %1765 : vector<1x8x128xf32> to vector<8x128xf32>
    %1767 = arith.mulf %1756, %1766 : vector<8x128xf32>
    %1768 = arith.addf %1743, %1767 : vector<8x128xf32>
    %c21_1099 = arith.constant 21 : index
    %c0_1100 = arith.constant 0 : index
    %c0_1101 = arith.constant 0 : index
    %1769 = vector.load %arg7[%c21_1099, %c0_1100, %c0_1101] : memref<49x8x128xf32, #tpu.memory_space<vmem>>, vector<1x8x128xf32>
    %1770 = vector.shape_cast %1769 : vector<1x8x128xf32> to vector<8x128xf32>
    %1771 = arith.mulf %1756, %1770 : vector<8x128xf32>
    %1772 = arith.addf %1747, %1771 : vector<8x128xf32>
    %c14_1102 = arith.constant 14 : index
    %c0_1103 = arith.constant 0 : index
    %c0_1104 = arith.constant 0 : index
    %1773 = vector.load %arg7[%c14_1102, %c0_1103, %c0_1104] : memref<49x8x128xf32, #tpu.memory_space<vmem>>, vector<1x8x128xf32>
    %1774 = vector.shape_cast %1773 : vector<1x8x128xf32> to vector<8x128xf32>
    %1775 = arith.mulf %1756, %1774 : vector<8x128xf32>
    %1776 = arith.addf %1751, %1775 : vector<8x128xf32>
    %1777 = vector.extract_strided_slice %1755 {offsets = [1, 0], sizes = [8, 128], strides = [1, 1]} : vector<14x128xf32> to vector<8x128xf32>
    %c43_1105 = arith.constant 43 : index
    %c0_1106 = arith.constant 0 : index
    %c0_1107 = arith.constant 0 : index
    %1778 = vector.load %arg7[%c43_1105, %c0_1106, %c0_1107] : memref<49x8x128xf32, #tpu.memory_space<vmem>>, vector<1x8x128xf32>
    %1779 = vector.shape_cast %1778 : vector<1x8x128xf32> to vector<8x128xf32>
    %1780 = arith.mulf %1777, %1779 : vector<8x128xf32>
    %1781 = arith.addf %1760, %1780 : vector<8x128xf32>
    %c36_1108 = arith.constant 36 : index
    %c0_1109 = arith.constant 0 : index
    %c0_1110 = arith.constant 0 : index
    %1782 = vector.load %arg7[%c36_1108, %c0_1109, %c0_1110] : memref<49x8x128xf32, #tpu.memory_space<vmem>>, vector<1x8x128xf32>
    %1783 = vector.shape_cast %1782 : vector<1x8x128xf32> to vector<8x128xf32>
    %1784 = arith.mulf %1777, %1783 : vector<8x128xf32>
    %1785 = arith.addf %1764, %1784 : vector<8x128xf32>
    %c29_1111 = arith.constant 29 : index
    %c0_1112 = arith.constant 0 : index
    %c0_1113 = arith.constant 0 : index
    %1786 = vector.load %arg7[%c29_1111, %c0_1112, %c0_1113] : memref<49x8x128xf32, #tpu.memory_space<vmem>>, vector<1x8x128xf32>
    %1787 = vector.shape_cast %1786 : vector<1x8x128xf32> to vector<8x128xf32>
    %1788 = arith.mulf %1777, %1787 : vector<8x128xf32>
    %1789 = arith.addf %1768, %1788 : vector<8x128xf32>
    %c22_1114 = arith.constant 22 : index
    %c0_1115 = arith.constant 0 : index
    %c0_1116 = arith.constant 0 : index
    %1790 = vector.load %arg7[%c22_1114, %c0_1115, %c0_1116] : memref<49x8x128xf32, #tpu.memory_space<vmem>>, vector<1x8x128xf32>
    %1791 = vector.shape_cast %1790 : vector<1x8x128xf32> to vector<8x128xf32>
    %1792 = arith.mulf %1777, %1791 : vector<8x128xf32>
    %1793 = arith.addf %1772, %1792 : vector<8x128xf32>
    %c15_1117 = arith.constant 15 : index
    %c0_1118 = arith.constant 0 : index
    %c0_1119 = arith.constant 0 : index
    %1794 = vector.load %arg7[%c15_1117, %c0_1118, %c0_1119] : memref<49x8x128xf32, #tpu.memory_space<vmem>>, vector<1x8x128xf32>
    %1795 = vector.shape_cast %1794 : vector<1x8x128xf32> to vector<8x128xf32>
    %1796 = arith.mulf %1777, %1795 : vector<8x128xf32>
    %1797 = arith.addf %1776, %1796 : vector<8x128xf32>
    %1798 = vector.extract_strided_slice %1755 {offsets = [2, 0], sizes = [8, 128], strides = [1, 1]} : vector<14x128xf32> to vector<8x128xf32>
    %c44_1120 = arith.constant 44 : index
    %c0_1121 = arith.constant 0 : index
    %c0_1122 = arith.constant 0 : index
    %1799 = vector.load %arg7[%c44_1120, %c0_1121, %c0_1122] : memref<49x8x128xf32, #tpu.memory_space<vmem>>, vector<1x8x128xf32>
    %1800 = vector.shape_cast %1799 : vector<1x8x128xf32> to vector<8x128xf32>
    %1801 = arith.mulf %1798, %1800 : vector<8x128xf32>
    %1802 = arith.addf %1781, %1801 : vector<8x128xf32>
    %c37_1123 = arith.constant 37 : index
    %c0_1124 = arith.constant 0 : index
    %c0_1125 = arith.constant 0 : index
    %1803 = vector.load %arg7[%c37_1123, %c0_1124, %c0_1125] : memref<49x8x128xf32, #tpu.memory_space<vmem>>, vector<1x8x128xf32>
    %1804 = vector.shape_cast %1803 : vector<1x8x128xf32> to vector<8x128xf32>
    %1805 = arith.mulf %1798, %1804 : vector<8x128xf32>
    %1806 = arith.addf %1785, %1805 : vector<8x128xf32>
    %c30_1126 = arith.constant 30 : index
    %c0_1127 = arith.constant 0 : index
    %c0_1128 = arith.constant 0 : index
    %1807 = vector.load %arg7[%c30_1126, %c0_1127, %c0_1128] : memref<49x8x128xf32, #tpu.memory_space<vmem>>, vector<1x8x128xf32>
    %1808 = vector.shape_cast %1807 : vector<1x8x128xf32> to vector<8x128xf32>
    %1809 = arith.mulf %1798, %1808 : vector<8x128xf32>
    %1810 = arith.addf %1789, %1809 : vector<8x128xf32>
    %c23_1129 = arith.constant 23 : index
    %c0_1130 = arith.constant 0 : index
    %c0_1131 = arith.constant 0 : index
    %1811 = vector.load %arg7[%c23_1129, %c0_1130, %c0_1131] : memref<49x8x128xf32, #tpu.memory_space<vmem>>, vector<1x8x128xf32>
    %1812 = vector.shape_cast %1811 : vector<1x8x128xf32> to vector<8x128xf32>
    %1813 = arith.mulf %1798, %1812 : vector<8x128xf32>
    %1814 = arith.addf %1793, %1813 : vector<8x128xf32>
    %c16_1132 = arith.constant 16 : index
    %c0_1133 = arith.constant 0 : index
    %c0_1134 = arith.constant 0 : index
    %1815 = vector.load %arg7[%c16_1132, %c0_1133, %c0_1134] : memref<49x8x128xf32, #tpu.memory_space<vmem>>, vector<1x8x128xf32>
    %1816 = vector.shape_cast %1815 : vector<1x8x128xf32> to vector<8x128xf32>
    %1817 = arith.mulf %1798, %1816 : vector<8x128xf32>
    %1818 = arith.addf %1797, %1817 : vector<8x128xf32>
    %1819 = vector.extract_strided_slice %1755 {offsets = [3, 0], sizes = [8, 128], strides = [1, 1]} : vector<14x128xf32> to vector<8x128xf32>
    %c45_1135 = arith.constant 45 : index
    %c0_1136 = arith.constant 0 : index
    %c0_1137 = arith.constant 0 : index
    %1820 = vector.load %arg7[%c45_1135, %c0_1136, %c0_1137] : memref<49x8x128xf32, #tpu.memory_space<vmem>>, vector<1x8x128xf32>
    %1821 = vector.shape_cast %1820 : vector<1x8x128xf32> to vector<8x128xf32>
    %1822 = arith.mulf %1819, %1821 : vector<8x128xf32>
    %1823 = arith.addf %1802, %1822 : vector<8x128xf32>
    %c38_1138 = arith.constant 38 : index
    %c0_1139 = arith.constant 0 : index
    %c0_1140 = arith.constant 0 : index
    %1824 = vector.load %arg7[%c38_1138, %c0_1139, %c0_1140] : memref<49x8x128xf32, #tpu.memory_space<vmem>>, vector<1x8x128xf32>
    %1825 = vector.shape_cast %1824 : vector<1x8x128xf32> to vector<8x128xf32>
    %1826 = arith.mulf %1819, %1825 : vector<8x128xf32>
    %1827 = arith.addf %1806, %1826 : vector<8x128xf32>
    %c31_1141 = arith.constant 31 : index
    %c0_1142 = arith.constant 0 : index
    %c0_1143 = arith.constant 0 : index
    %1828 = vector.load %arg7[%c31_1141, %c0_1142, %c0_1143] : memref<49x8x128xf32, #tpu.memory_space<vmem>>, vector<1x8x128xf32>
    %1829 = vector.shape_cast %1828 : vector<1x8x128xf32> to vector<8x128xf32>
    %1830 = arith.mulf %1819, %1829 : vector<8x128xf32>
    %1831 = arith.addf %1810, %1830 : vector<8x128xf32>
    %c24_1144 = arith.constant 24 : index
    %c0_1145 = arith.constant 0 : index
    %c0_1146 = arith.constant 0 : index
    %1832 = vector.load %arg7[%c24_1144, %c0_1145, %c0_1146] : memref<49x8x128xf32, #tpu.memory_space<vmem>>, vector<1x8x128xf32>
    %1833 = vector.shape_cast %1832 : vector<1x8x128xf32> to vector<8x128xf32>
    %1834 = arith.mulf %1819, %1833 : vector<8x128xf32>
    %1835 = arith.addf %1814, %1834 : vector<8x128xf32>
    %c17_1147 = arith.constant 17 : index
    %c0_1148 = arith.constant 0 : index
    %c0_1149 = arith.constant 0 : index
    %1836 = vector.load %arg7[%c17_1147, %c0_1148, %c0_1149] : memref<49x8x128xf32, #tpu.memory_space<vmem>>, vector<1x8x128xf32>
    %1837 = vector.shape_cast %1836 : vector<1x8x128xf32> to vector<8x128xf32>
    %1838 = arith.mulf %1819, %1837 : vector<8x128xf32>
    %1839 = arith.addf %1818, %1838 : vector<8x128xf32>
    %1840 = vector.extract_strided_slice %1755 {offsets = [4, 0], sizes = [8, 128], strides = [1, 1]} : vector<14x128xf32> to vector<8x128xf32>
    %c46_1150 = arith.constant 46 : index
    %c0_1151 = arith.constant 0 : index
    %c0_1152 = arith.constant 0 : index
    %1841 = vector.load %arg7[%c46_1150, %c0_1151, %c0_1152] : memref<49x8x128xf32, #tpu.memory_space<vmem>>, vector<1x8x128xf32>
    %1842 = vector.shape_cast %1841 : vector<1x8x128xf32> to vector<8x128xf32>
    %1843 = arith.mulf %1840, %1842 : vector<8x128xf32>
    %1844 = arith.addf %1823, %1843 : vector<8x128xf32>
    %c39_1153 = arith.constant 39 : index
    %c0_1154 = arith.constant 0 : index
    %c0_1155 = arith.constant 0 : index
    %1845 = vector.load %arg7[%c39_1153, %c0_1154, %c0_1155] : memref<49x8x128xf32, #tpu.memory_space<vmem>>, vector<1x8x128xf32>
    %1846 = vector.shape_cast %1845 : vector<1x8x128xf32> to vector<8x128xf32>
    %1847 = arith.mulf %1840, %1846 : vector<8x128xf32>
    %1848 = arith.addf %1827, %1847 : vector<8x128xf32>
    %c32_1156 = arith.constant 32 : index
    %c0_1157 = arith.constant 0 : index
    %c0_1158 = arith.constant 0 : index
    %1849 = vector.load %arg7[%c32_1156, %c0_1157, %c0_1158] : memref<49x8x128xf32, #tpu.memory_space<vmem>>, vector<1x8x128xf32>
    %1850 = vector.shape_cast %1849 : vector<1x8x128xf32> to vector<8x128xf32>
    %1851 = arith.mulf %1840, %1850 : vector<8x128xf32>
    %1852 = arith.addf %1831, %1851 : vector<8x128xf32>
    %c25_1159 = arith.constant 25 : index
    %c0_1160 = arith.constant 0 : index
    %c0_1161 = arith.constant 0 : index
    %1853 = vector.load %arg7[%c25_1159, %c0_1160, %c0_1161] : memref<49x8x128xf32, #tpu.memory_space<vmem>>, vector<1x8x128xf32>
    %1854 = vector.shape_cast %1853 : vector<1x8x128xf32> to vector<8x128xf32>
    %1855 = arith.mulf %1840, %1854 : vector<8x128xf32>
    %1856 = arith.addf %1835, %1855 : vector<8x128xf32>
    %c18_1162 = arith.constant 18 : index
    %c0_1163 = arith.constant 0 : index
    %c0_1164 = arith.constant 0 : index
    %1857 = vector.load %arg7[%c18_1162, %c0_1163, %c0_1164] : memref<49x8x128xf32, #tpu.memory_space<vmem>>, vector<1x8x128xf32>
    %1858 = vector.shape_cast %1857 : vector<1x8x128xf32> to vector<8x128xf32>
    %1859 = arith.mulf %1840, %1858 : vector<8x128xf32>
    %1860 = arith.addf %1839, %1859 : vector<8x128xf32>
    %1861 = vector.extract_strided_slice %1755 {offsets = [5, 0], sizes = [8, 128], strides = [1, 1]} : vector<14x128xf32> to vector<8x128xf32>
    %c47_1165 = arith.constant 47 : index
    %c0_1166 = arith.constant 0 : index
    %c0_1167 = arith.constant 0 : index
    %1862 = vector.load %arg7[%c47_1165, %c0_1166, %c0_1167] : memref<49x8x128xf32, #tpu.memory_space<vmem>>, vector<1x8x128xf32>
    %1863 = vector.shape_cast %1862 : vector<1x8x128xf32> to vector<8x128xf32>
    %1864 = arith.mulf %1861, %1863 : vector<8x128xf32>
    %1865 = arith.addf %1844, %1864 : vector<8x128xf32>
    %c40_1168 = arith.constant 40 : index
    %c0_1169 = arith.constant 0 : index
    %c0_1170 = arith.constant 0 : index
    %1866 = vector.load %arg7[%c40_1168, %c0_1169, %c0_1170] : memref<49x8x128xf32, #tpu.memory_space<vmem>>, vector<1x8x128xf32>
    %1867 = vector.shape_cast %1866 : vector<1x8x128xf32> to vector<8x128xf32>
    %1868 = arith.mulf %1861, %1867 : vector<8x128xf32>
    %1869 = arith.addf %1848, %1868 : vector<8x128xf32>
    %c33_1171 = arith.constant 33 : index
    %c0_1172 = arith.constant 0 : index
    %c0_1173 = arith.constant 0 : index
    %1870 = vector.load %arg7[%c33_1171, %c0_1172, %c0_1173] : memref<49x8x128xf32, #tpu.memory_space<vmem>>, vector<1x8x128xf32>
    %1871 = vector.shape_cast %1870 : vector<1x8x128xf32> to vector<8x128xf32>
    %1872 = arith.mulf %1861, %1871 : vector<8x128xf32>
    %1873 = arith.addf %1852, %1872 : vector<8x128xf32>
    %c26_1174 = arith.constant 26 : index
    %c0_1175 = arith.constant 0 : index
    %c0_1176 = arith.constant 0 : index
    %1874 = vector.load %arg7[%c26_1174, %c0_1175, %c0_1176] : memref<49x8x128xf32, #tpu.memory_space<vmem>>, vector<1x8x128xf32>
    %1875 = vector.shape_cast %1874 : vector<1x8x128xf32> to vector<8x128xf32>
    %1876 = arith.mulf %1861, %1875 : vector<8x128xf32>
    %1877 = arith.addf %1856, %1876 : vector<8x128xf32>
    %c19_1177 = arith.constant 19 : index
    %c0_1178 = arith.constant 0 : index
    %c0_1179 = arith.constant 0 : index
    %1878 = vector.load %arg7[%c19_1177, %c0_1178, %c0_1179] : memref<49x8x128xf32, #tpu.memory_space<vmem>>, vector<1x8x128xf32>
    %1879 = vector.shape_cast %1878 : vector<1x8x128xf32> to vector<8x128xf32>
    %1880 = arith.mulf %1861, %1879 : vector<8x128xf32>
    %1881 = arith.addf %1860, %1880 : vector<8x128xf32>
    %1882 = vector.extract_strided_slice %1755 {offsets = [6, 0], sizes = [8, 128], strides = [1, 1]} : vector<14x128xf32> to vector<8x128xf32>
    %c48_1180 = arith.constant 48 : index
    %c0_1181 = arith.constant 0 : index
    %c0_1182 = arith.constant 0 : index
    %1883 = vector.load %arg7[%c48_1180, %c0_1181, %c0_1182] : memref<49x8x128xf32, #tpu.memory_space<vmem>>, vector<1x8x128xf32>
    %1884 = vector.shape_cast %1883 : vector<1x8x128xf32> to vector<8x128xf32>
    %1885 = arith.mulf %1882, %1884 : vector<8x128xf32>
    %1886 = arith.addf %1865, %1885 : vector<8x128xf32>
    %c41_1183 = arith.constant 41 : index
    %c0_1184 = arith.constant 0 : index
    %c0_1185 = arith.constant 0 : index
    %1887 = vector.load %arg7[%c41_1183, %c0_1184, %c0_1185] : memref<49x8x128xf32, #tpu.memory_space<vmem>>, vector<1x8x128xf32>
    %1888 = vector.shape_cast %1887 : vector<1x8x128xf32> to vector<8x128xf32>
    %1889 = arith.mulf %1882, %1888 : vector<8x128xf32>
    %1890 = arith.addf %1869, %1889 : vector<8x128xf32>
    %c34_1186 = arith.constant 34 : index
    %c0_1187 = arith.constant 0 : index
    %c0_1188 = arith.constant 0 : index
    %1891 = vector.load %arg7[%c34_1186, %c0_1187, %c0_1188] : memref<49x8x128xf32, #tpu.memory_space<vmem>>, vector<1x8x128xf32>
    %1892 = vector.shape_cast %1891 : vector<1x8x128xf32> to vector<8x128xf32>
    %1893 = arith.mulf %1882, %1892 : vector<8x128xf32>
    %1894 = arith.addf %1873, %1893 : vector<8x128xf32>
    %c27_1189 = arith.constant 27 : index
    %c0_1190 = arith.constant 0 : index
    %c0_1191 = arith.constant 0 : index
    %1895 = vector.load %arg7[%c27_1189, %c0_1190, %c0_1191] : memref<49x8x128xf32, #tpu.memory_space<vmem>>, vector<1x8x128xf32>
    %1896 = vector.shape_cast %1895 : vector<1x8x128xf32> to vector<8x128xf32>
    %1897 = arith.mulf %1882, %1896 : vector<8x128xf32>
    %1898 = arith.addf %1877, %1897 : vector<8x128xf32>
    %c20_1192 = arith.constant 20 : index
    %c0_1193 = arith.constant 0 : index
    %c0_1194 = arith.constant 0 : index
    %1899 = vector.load %arg7[%c20_1192, %c0_1193, %c0_1194] : memref<49x8x128xf32, #tpu.memory_space<vmem>>, vector<1x8x128xf32>
    %1900 = vector.shape_cast %1899 : vector<1x8x128xf32> to vector<8x128xf32>
    %1901 = arith.mulf %1882, %1900 : vector<8x128xf32>
    %1902 = arith.addf %1881, %1901 : vector<8x128xf32>
    %c10_i32 = arith.constant 10 : i32
    %1903 = arith.addi %496, %c10_i32 : i32
    %1904 = arith.index_cast %1903 : i32 to index
    %c0_1195 = arith.constant 0 : index
    %c0_1196 = arith.constant 0 : index
    %1905 = vector.load %arg6[%1904, %c0_1195, %c0_1196] : memref<14x14x128xf32, #tpu.memory_space<vmem>>, vector<1x14x128xf32>
    %1906 = vector.shape_cast %1905 : vector<1x14x128xf32> to vector<14x128xf32>
    %1907 = vector.extract_strided_slice %1906 {offsets = [0, 0], sizes = [8, 128], strides = [1, 1]} : vector<14x128xf32> to vector<8x128xf32>
    %c42_1197 = arith.constant 42 : index
    %c0_1198 = arith.constant 0 : index
    %c0_1199 = arith.constant 0 : index
    %1908 = vector.load %arg7[%c42_1197, %c0_1198, %c0_1199] : memref<49x8x128xf32, #tpu.memory_space<vmem>>, vector<1x8x128xf32>
    %1909 = vector.shape_cast %1908 : vector<1x8x128xf32> to vector<8x128xf32>
    %1910 = arith.mulf %1907, %1909 : vector<8x128xf32>
    %1911 = arith.addf %1890, %1910 : vector<8x128xf32>
    %c35_1200 = arith.constant 35 : index
    %c0_1201 = arith.constant 0 : index
    %c0_1202 = arith.constant 0 : index
    %1912 = vector.load %arg7[%c35_1200, %c0_1201, %c0_1202] : memref<49x8x128xf32, #tpu.memory_space<vmem>>, vector<1x8x128xf32>
    %1913 = vector.shape_cast %1912 : vector<1x8x128xf32> to vector<8x128xf32>
    %1914 = arith.mulf %1907, %1913 : vector<8x128xf32>
    %1915 = arith.addf %1894, %1914 : vector<8x128xf32>
    %c28_1203 = arith.constant 28 : index
    %c0_1204 = arith.constant 0 : index
    %c0_1205 = arith.constant 0 : index
    %1916 = vector.load %arg7[%c28_1203, %c0_1204, %c0_1205] : memref<49x8x128xf32, #tpu.memory_space<vmem>>, vector<1x8x128xf32>
    %1917 = vector.shape_cast %1916 : vector<1x8x128xf32> to vector<8x128xf32>
    %1918 = arith.mulf %1907, %1917 : vector<8x128xf32>
    %1919 = arith.addf %1898, %1918 : vector<8x128xf32>
    %c21_1206 = arith.constant 21 : index
    %c0_1207 = arith.constant 0 : index
    %c0_1208 = arith.constant 0 : index
    %1920 = vector.load %arg7[%c21_1206, %c0_1207, %c0_1208] : memref<49x8x128xf32, #tpu.memory_space<vmem>>, vector<1x8x128xf32>
    %1921 = vector.shape_cast %1920 : vector<1x8x128xf32> to vector<8x128xf32>
    %1922 = arith.mulf %1907, %1921 : vector<8x128xf32>
    %1923 = arith.addf %1902, %1922 : vector<8x128xf32>
    %1924 = vector.extract_strided_slice %1906 {offsets = [1, 0], sizes = [8, 128], strides = [1, 1]} : vector<14x128xf32> to vector<8x128xf32>
    %c43_1209 = arith.constant 43 : index
    %c0_1210 = arith.constant 0 : index
    %c0_1211 = arith.constant 0 : index
    %1925 = vector.load %arg7[%c43_1209, %c0_1210, %c0_1211] : memref<49x8x128xf32, #tpu.memory_space<vmem>>, vector<1x8x128xf32>
    %1926 = vector.shape_cast %1925 : vector<1x8x128xf32> to vector<8x128xf32>
    %1927 = arith.mulf %1924, %1926 : vector<8x128xf32>
    %1928 = arith.addf %1911, %1927 : vector<8x128xf32>
    %c36_1212 = arith.constant 36 : index
    %c0_1213 = arith.constant 0 : index
    %c0_1214 = arith.constant 0 : index
    %1929 = vector.load %arg7[%c36_1212, %c0_1213, %c0_1214] : memref<49x8x128xf32, #tpu.memory_space<vmem>>, vector<1x8x128xf32>
    %1930 = vector.shape_cast %1929 : vector<1x8x128xf32> to vector<8x128xf32>
    %1931 = arith.mulf %1924, %1930 : vector<8x128xf32>
    %1932 = arith.addf %1915, %1931 : vector<8x128xf32>
    %c29_1215 = arith.constant 29 : index
    %c0_1216 = arith.constant 0 : index
    %c0_1217 = arith.constant 0 : index
    %1933 = vector.load %arg7[%c29_1215, %c0_1216, %c0_1217] : memref<49x8x128xf32, #tpu.memory_space<vmem>>, vector<1x8x128xf32>
    %1934 = vector.shape_cast %1933 : vector<1x8x128xf32> to vector<8x128xf32>
    %1935 = arith.mulf %1924, %1934 : vector<8x128xf32>
    %1936 = arith.addf %1919, %1935 : vector<8x128xf32>
    %c22_1218 = arith.constant 22 : index
    %c0_1219 = arith.constant 0 : index
    %c0_1220 = arith.constant 0 : index
    %1937 = vector.load %arg7[%c22_1218, %c0_1219, %c0_1220] : memref<49x8x128xf32, #tpu.memory_space<vmem>>, vector<1x8x128xf32>
    %1938 = vector.shape_cast %1937 : vector<1x8x128xf32> to vector<8x128xf32>
    %1939 = arith.mulf %1924, %1938 : vector<8x128xf32>
    %1940 = arith.addf %1923, %1939 : vector<8x128xf32>
    %1941 = vector.extract_strided_slice %1906 {offsets = [2, 0], sizes = [8, 128], strides = [1, 1]} : vector<14x128xf32> to vector<8x128xf32>
    %c44_1221 = arith.constant 44 : index
    %c0_1222 = arith.constant 0 : index
    %c0_1223 = arith.constant 0 : index
    %1942 = vector.load %arg7[%c44_1221, %c0_1222, %c0_1223] : memref<49x8x128xf32, #tpu.memory_space<vmem>>, vector<1x8x128xf32>
    %1943 = vector.shape_cast %1942 : vector<1x8x128xf32> to vector<8x128xf32>
    %1944 = arith.mulf %1941, %1943 : vector<8x128xf32>
    %1945 = arith.addf %1928, %1944 : vector<8x128xf32>
    %c37_1224 = arith.constant 37 : index
    %c0_1225 = arith.constant 0 : index
    %c0_1226 = arith.constant 0 : index
    %1946 = vector.load %arg7[%c37_1224, %c0_1225, %c0_1226] : memref<49x8x128xf32, #tpu.memory_space<vmem>>, vector<1x8x128xf32>
    %1947 = vector.shape_cast %1946 : vector<1x8x128xf32> to vector<8x128xf32>
    %1948 = arith.mulf %1941, %1947 : vector<8x128xf32>
    %1949 = arith.addf %1932, %1948 : vector<8x128xf32>
    %c30_1227 = arith.constant 30 : index
    %c0_1228 = arith.constant 0 : index
    %c0_1229 = arith.constant 0 : index
    %1950 = vector.load %arg7[%c30_1227, %c0_1228, %c0_1229] : memref<49x8x128xf32, #tpu.memory_space<vmem>>, vector<1x8x128xf32>
    %1951 = vector.shape_cast %1950 : vector<1x8x128xf32> to vector<8x128xf32>
    %1952 = arith.mulf %1941, %1951 : vector<8x128xf32>
    %1953 = arith.addf %1936, %1952 : vector<8x128xf32>
    %c23_1230 = arith.constant 23 : index
    %c0_1231 = arith.constant 0 : index
    %c0_1232 = arith.constant 0 : index
    %1954 = vector.load %arg7[%c23_1230, %c0_1231, %c0_1232] : memref<49x8x128xf32, #tpu.memory_space<vmem>>, vector<1x8x128xf32>
    %1955 = vector.shape_cast %1954 : vector<1x8x128xf32> to vector<8x128xf32>
    %1956 = arith.mulf %1941, %1955 : vector<8x128xf32>
    %1957 = arith.addf %1940, %1956 : vector<8x128xf32>
    %1958 = vector.extract_strided_slice %1906 {offsets = [3, 0], sizes = [8, 128], strides = [1, 1]} : vector<14x128xf32> to vector<8x128xf32>
    %c45_1233 = arith.constant 45 : index
    %c0_1234 = arith.constant 0 : index
    %c0_1235 = arith.constant 0 : index
    %1959 = vector.load %arg7[%c45_1233, %c0_1234, %c0_1235] : memref<49x8x128xf32, #tpu.memory_space<vmem>>, vector<1x8x128xf32>
    %1960 = vector.shape_cast %1959 : vector<1x8x128xf32> to vector<8x128xf32>
    %1961 = arith.mulf %1958, %1960 : vector<8x128xf32>
    %1962 = arith.addf %1945, %1961 : vector<8x128xf32>
    %c38_1236 = arith.constant 38 : index
    %c0_1237 = arith.constant 0 : index
    %c0_1238 = arith.constant 0 : index
    %1963 = vector.load %arg7[%c38_1236, %c0_1237, %c0_1238] : memref<49x8x128xf32, #tpu.memory_space<vmem>>, vector<1x8x128xf32>
    %1964 = vector.shape_cast %1963 : vector<1x8x128xf32> to vector<8x128xf32>
    %1965 = arith.mulf %1958, %1964 : vector<8x128xf32>
    %1966 = arith.addf %1949, %1965 : vector<8x128xf32>
    %c31_1239 = arith.constant 31 : index
    %c0_1240 = arith.constant 0 : index
    %c0_1241 = arith.constant 0 : index
    %1967 = vector.load %arg7[%c31_1239, %c0_1240, %c0_1241] : memref<49x8x128xf32, #tpu.memory_space<vmem>>, vector<1x8x128xf32>
    %1968 = vector.shape_cast %1967 : vector<1x8x128xf32> to vector<8x128xf32>
    %1969 = arith.mulf %1958, %1968 : vector<8x128xf32>
    %1970 = arith.addf %1953, %1969 : vector<8x128xf32>
    %c24_1242 = arith.constant 24 : index
    %c0_1243 = arith.constant 0 : index
    %c0_1244 = arith.constant 0 : index
    %1971 = vector.load %arg7[%c24_1242, %c0_1243, %c0_1244] : memref<49x8x128xf32, #tpu.memory_space<vmem>>, vector<1x8x128xf32>
    %1972 = vector.shape_cast %1971 : vector<1x8x128xf32> to vector<8x128xf32>
    %1973 = arith.mulf %1958, %1972 : vector<8x128xf32>
    %1974 = arith.addf %1957, %1973 : vector<8x128xf32>
    %1975 = vector.extract_strided_slice %1906 {offsets = [4, 0], sizes = [8, 128], strides = [1, 1]} : vector<14x128xf32> to vector<8x128xf32>
    %c46_1245 = arith.constant 46 : index
    %c0_1246 = arith.constant 0 : index
    %c0_1247 = arith.constant 0 : index
    %1976 = vector.load %arg7[%c46_1245, %c0_1246, %c0_1247] : memref<49x8x128xf32, #tpu.memory_space<vmem>>, vector<1x8x128xf32>
    %1977 = vector.shape_cast %1976 : vector<1x8x128xf32> to vector<8x128xf32>
    %1978 = arith.mulf %1975, %1977 : vector<8x128xf32>
    %1979 = arith.addf %1962, %1978 : vector<8x128xf32>
    %c39_1248 = arith.constant 39 : index
    %c0_1249 = arith.constant 0 : index
    %c0_1250 = arith.constant 0 : index
    %1980 = vector.load %arg7[%c39_1248, %c0_1249, %c0_1250] : memref<49x8x128xf32, #tpu.memory_space<vmem>>, vector<1x8x128xf32>
    %1981 = vector.shape_cast %1980 : vector<1x8x128xf32> to vector<8x128xf32>
    %1982 = arith.mulf %1975, %1981 : vector<8x128xf32>
    %1983 = arith.addf %1966, %1982 : vector<8x128xf32>
    %c32_1251 = arith.constant 32 : index
    %c0_1252 = arith.constant 0 : index
    %c0_1253 = arith.constant 0 : index
    %1984 = vector.load %arg7[%c32_1251, %c0_1252, %c0_1253] : memref<49x8x128xf32, #tpu.memory_space<vmem>>, vector<1x8x128xf32>
    %1985 = vector.shape_cast %1984 : vector<1x8x128xf32> to vector<8x128xf32>
    %1986 = arith.mulf %1975, %1985 : vector<8x128xf32>
    %1987 = arith.addf %1970, %1986 : vector<8x128xf32>
    %c25_1254 = arith.constant 25 : index
    %c0_1255 = arith.constant 0 : index
    %c0_1256 = arith.constant 0 : index
    %1988 = vector.load %arg7[%c25_1254, %c0_1255, %c0_1256] : memref<49x8x128xf32, #tpu.memory_space<vmem>>, vector<1x8x128xf32>
    %1989 = vector.shape_cast %1988 : vector<1x8x128xf32> to vector<8x128xf32>
    %1990 = arith.mulf %1975, %1989 : vector<8x128xf32>
    %1991 = arith.addf %1974, %1990 : vector<8x128xf32>
    %1992 = vector.extract_strided_slice %1906 {offsets = [5, 0], sizes = [8, 128], strides = [1, 1]} : vector<14x128xf32> to vector<8x128xf32>
    %c47_1257 = arith.constant 47 : index
    %c0_1258 = arith.constant 0 : index
    %c0_1259 = arith.constant 0 : index
    %1993 = vector.load %arg7[%c47_1257, %c0_1258, %c0_1259] : memref<49x8x128xf32, #tpu.memory_space<vmem>>, vector<1x8x128xf32>
    %1994 = vector.shape_cast %1993 : vector<1x8x128xf32> to vector<8x128xf32>
    %1995 = arith.mulf %1992, %1994 : vector<8x128xf32>
    %1996 = arith.addf %1979, %1995 : vector<8x128xf32>
    %c40_1260 = arith.constant 40 : index
    %c0_1261 = arith.constant 0 : index
    %c0_1262 = arith.constant 0 : index
    %1997 = vector.load %arg7[%c40_1260, %c0_1261, %c0_1262] : memref<49x8x128xf32, #tpu.memory_space<vmem>>, vector<1x8x128xf32>
    %1998 = vector.shape_cast %1997 : vector<1x8x128xf32> to vector<8x128xf32>
    %1999 = arith.mulf %1992, %1998 : vector<8x128xf32>
    %2000 = arith.addf %1983, %1999 : vector<8x128xf32>
    %c33_1263 = arith.constant 33 : index
    %c0_1264 = arith.constant 0 : index
    %c0_1265 = arith.constant 0 : index
    %2001 = vector.load %arg7[%c33_1263, %c0_1264, %c0_1265] : memref<49x8x128xf32, #tpu.memory_space<vmem>>, vector<1x8x128xf32>
    %2002 = vector.shape_cast %2001 : vector<1x8x128xf32> to vector<8x128xf32>
    %2003 = arith.mulf %1992, %2002 : vector<8x128xf32>
    %2004 = arith.addf %1987, %2003 : vector<8x128xf32>
    %c26_1266 = arith.constant 26 : index
    %c0_1267 = arith.constant 0 : index
    %c0_1268 = arith.constant 0 : index
    %2005 = vector.load %arg7[%c26_1266, %c0_1267, %c0_1268] : memref<49x8x128xf32, #tpu.memory_space<vmem>>, vector<1x8x128xf32>
    %2006 = vector.shape_cast %2005 : vector<1x8x128xf32> to vector<8x128xf32>
    %2007 = arith.mulf %1992, %2006 : vector<8x128xf32>
    %2008 = arith.addf %1991, %2007 : vector<8x128xf32>
    %2009 = vector.extract_strided_slice %1906 {offsets = [6, 0], sizes = [8, 128], strides = [1, 1]} : vector<14x128xf32> to vector<8x128xf32>
    %c48_1269 = arith.constant 48 : index
    %c0_1270 = arith.constant 0 : index
    %c0_1271 = arith.constant 0 : index
    %2010 = vector.load %arg7[%c48_1269, %c0_1270, %c0_1271] : memref<49x8x128xf32, #tpu.memory_space<vmem>>, vector<1x8x128xf32>
    %2011 = vector.shape_cast %2010 : vector<1x8x128xf32> to vector<8x128xf32>
    %2012 = arith.mulf %2009, %2011 : vector<8x128xf32>
    %2013 = arith.addf %1996, %2012 : vector<8x128xf32>
    %c41_1272 = arith.constant 41 : index
    %c0_1273 = arith.constant 0 : index
    %c0_1274 = arith.constant 0 : index
    %2014 = vector.load %arg7[%c41_1272, %c0_1273, %c0_1274] : memref<49x8x128xf32, #tpu.memory_space<vmem>>, vector<1x8x128xf32>
    %2015 = vector.shape_cast %2014 : vector<1x8x128xf32> to vector<8x128xf32>
    %2016 = arith.mulf %2009, %2015 : vector<8x128xf32>
    %2017 = arith.addf %2000, %2016 : vector<8x128xf32>
    %c34_1275 = arith.constant 34 : index
    %c0_1276 = arith.constant 0 : index
    %c0_1277 = arith.constant 0 : index
    %2018 = vector.load %arg7[%c34_1275, %c0_1276, %c0_1277] : memref<49x8x128xf32, #tpu.memory_space<vmem>>, vector<1x8x128xf32>
    %2019 = vector.shape_cast %2018 : vector<1x8x128xf32> to vector<8x128xf32>
    %2020 = arith.mulf %2009, %2019 : vector<8x128xf32>
    %2021 = arith.addf %2004, %2020 : vector<8x128xf32>
    %c27_1278 = arith.constant 27 : index
    %c0_1279 = arith.constant 0 : index
    %c0_1280 = arith.constant 0 : index
    %2022 = vector.load %arg7[%c27_1278, %c0_1279, %c0_1280] : memref<49x8x128xf32, #tpu.memory_space<vmem>>, vector<1x8x128xf32>
    %2023 = vector.shape_cast %2022 : vector<1x8x128xf32> to vector<8x128xf32>
    %2024 = arith.mulf %2009, %2023 : vector<8x128xf32>
    %2025 = arith.addf %2008, %2024 : vector<8x128xf32>
    %c11_i32 = arith.constant 11 : i32
    %2026 = arith.addi %496, %c11_i32 : i32
    %2027 = arith.index_cast %2026 : i32 to index
    %c0_1281 = arith.constant 0 : index
    %c0_1282 = arith.constant 0 : index
    %2028 = vector.load %arg6[%2027, %c0_1281, %c0_1282] : memref<14x14x128xf32, #tpu.memory_space<vmem>>, vector<1x14x128xf32>
    %2029 = vector.shape_cast %2028 : vector<1x14x128xf32> to vector<14x128xf32>
    %2030 = vector.extract_strided_slice %2029 {offsets = [0, 0], sizes = [8, 128], strides = [1, 1]} : vector<14x128xf32> to vector<8x128xf32>
    %c42_1283 = arith.constant 42 : index
    %c0_1284 = arith.constant 0 : index
    %c0_1285 = arith.constant 0 : index
    %2031 = vector.load %arg7[%c42_1283, %c0_1284, %c0_1285] : memref<49x8x128xf32, #tpu.memory_space<vmem>>, vector<1x8x128xf32>
    %2032 = vector.shape_cast %2031 : vector<1x8x128xf32> to vector<8x128xf32>
    %2033 = arith.mulf %2030, %2032 : vector<8x128xf32>
    %2034 = arith.addf %2017, %2033 : vector<8x128xf32>
    %c35_1286 = arith.constant 35 : index
    %c0_1287 = arith.constant 0 : index
    %c0_1288 = arith.constant 0 : index
    %2035 = vector.load %arg7[%c35_1286, %c0_1287, %c0_1288] : memref<49x8x128xf32, #tpu.memory_space<vmem>>, vector<1x8x128xf32>
    %2036 = vector.shape_cast %2035 : vector<1x8x128xf32> to vector<8x128xf32>
    %2037 = arith.mulf %2030, %2036 : vector<8x128xf32>
    %2038 = arith.addf %2021, %2037 : vector<8x128xf32>
    %c28_1289 = arith.constant 28 : index
    %c0_1290 = arith.constant 0 : index
    %c0_1291 = arith.constant 0 : index
    %2039 = vector.load %arg7[%c28_1289, %c0_1290, %c0_1291] : memref<49x8x128xf32, #tpu.memory_space<vmem>>, vector<1x8x128xf32>
    %2040 = vector.shape_cast %2039 : vector<1x8x128xf32> to vector<8x128xf32>
    %2041 = arith.mulf %2030, %2040 : vector<8x128xf32>
    %2042 = arith.addf %2025, %2041 : vector<8x128xf32>
    %2043 = vector.extract_strided_slice %2029 {offsets = [1, 0], sizes = [8, 128], strides = [1, 1]} : vector<14x128xf32> to vector<8x128xf32>
    %c43_1292 = arith.constant 43 : index
    %c0_1293 = arith.constant 0 : index
    %c0_1294 = arith.constant 0 : index
    %2044 = vector.load %arg7[%c43_1292, %c0_1293, %c0_1294] : memref<49x8x128xf32, #tpu.memory_space<vmem>>, vector<1x8x128xf32>
    %2045 = vector.shape_cast %2044 : vector<1x8x128xf32> to vector<8x128xf32>
    %2046 = arith.mulf %2043, %2045 : vector<8x128xf32>
    %2047 = arith.addf %2034, %2046 : vector<8x128xf32>
    %c36_1295 = arith.constant 36 : index
    %c0_1296 = arith.constant 0 : index
    %c0_1297 = arith.constant 0 : index
    %2048 = vector.load %arg7[%c36_1295, %c0_1296, %c0_1297] : memref<49x8x128xf32, #tpu.memory_space<vmem>>, vector<1x8x128xf32>
    %2049 = vector.shape_cast %2048 : vector<1x8x128xf32> to vector<8x128xf32>
    %2050 = arith.mulf %2043, %2049 : vector<8x128xf32>
    %2051 = arith.addf %2038, %2050 : vector<8x128xf32>
    %c29_1298 = arith.constant 29 : index
    %c0_1299 = arith.constant 0 : index
    %c0_1300 = arith.constant 0 : index
    %2052 = vector.load %arg7[%c29_1298, %c0_1299, %c0_1300] : memref<49x8x128xf32, #tpu.memory_space<vmem>>, vector<1x8x128xf32>
    %2053 = vector.shape_cast %2052 : vector<1x8x128xf32> to vector<8x128xf32>
    %2054 = arith.mulf %2043, %2053 : vector<8x128xf32>
    %2055 = arith.addf %2042, %2054 : vector<8x128xf32>
    %2056 = vector.extract_strided_slice %2029 {offsets = [2, 0], sizes = [8, 128], strides = [1, 1]} : vector<14x128xf32> to vector<8x128xf32>
    %c44_1301 = arith.constant 44 : index
    %c0_1302 = arith.constant 0 : index
    %c0_1303 = arith.constant 0 : index
    %2057 = vector.load %arg7[%c44_1301, %c0_1302, %c0_1303] : memref<49x8x128xf32, #tpu.memory_space<vmem>>, vector<1x8x128xf32>
    %2058 = vector.shape_cast %2057 : vector<1x8x128xf32> to vector<8x128xf32>
    %2059 = arith.mulf %2056, %2058 : vector<8x128xf32>
    %2060 = arith.addf %2047, %2059 : vector<8x128xf32>
    %c37_1304 = arith.constant 37 : index
    %c0_1305 = arith.constant 0 : index
    %c0_1306 = arith.constant 0 : index
    %2061 = vector.load %arg7[%c37_1304, %c0_1305, %c0_1306] : memref<49x8x128xf32, #tpu.memory_space<vmem>>, vector<1x8x128xf32>
    %2062 = vector.shape_cast %2061 : vector<1x8x128xf32> to vector<8x128xf32>
    %2063 = arith.mulf %2056, %2062 : vector<8x128xf32>
    %2064 = arith.addf %2051, %2063 : vector<8x128xf32>
    %c30_1307 = arith.constant 30 : index
    %c0_1308 = arith.constant 0 : index
    %c0_1309 = arith.constant 0 : index
    %2065 = vector.load %arg7[%c30_1307, %c0_1308, %c0_1309] : memref<49x8x128xf32, #tpu.memory_space<vmem>>, vector<1x8x128xf32>
    %2066 = vector.shape_cast %2065 : vector<1x8x128xf32> to vector<8x128xf32>
    %2067 = arith.mulf %2056, %2066 : vector<8x128xf32>
    %2068 = arith.addf %2055, %2067 : vector<8x128xf32>
    %2069 = vector.extract_strided_slice %2029 {offsets = [3, 0], sizes = [8, 128], strides = [1, 1]} : vector<14x128xf32> to vector<8x128xf32>
    %c45_1310 = arith.constant 45 : index
    %c0_1311 = arith.constant 0 : index
    %c0_1312 = arith.constant 0 : index
    %2070 = vector.load %arg7[%c45_1310, %c0_1311, %c0_1312] : memref<49x8x128xf32, #tpu.memory_space<vmem>>, vector<1x8x128xf32>
    %2071 = vector.shape_cast %2070 : vector<1x8x128xf32> to vector<8x128xf32>
    %2072 = arith.mulf %2069, %2071 : vector<8x128xf32>
    %2073 = arith.addf %2060, %2072 : vector<8x128xf32>
    %c38_1313 = arith.constant 38 : index
    %c0_1314 = arith.constant 0 : index
    %c0_1315 = arith.constant 0 : index
    %2074 = vector.load %arg7[%c38_1313, %c0_1314, %c0_1315] : memref<49x8x128xf32, #tpu.memory_space<vmem>>, vector<1x8x128xf32>
    %2075 = vector.shape_cast %2074 : vector<1x8x128xf32> to vector<8x128xf32>
    %2076 = arith.mulf %2069, %2075 : vector<8x128xf32>
    %2077 = arith.addf %2064, %2076 : vector<8x128xf32>
    %c31_1316 = arith.constant 31 : index
    %c0_1317 = arith.constant 0 : index
    %c0_1318 = arith.constant 0 : index
    %2078 = vector.load %arg7[%c31_1316, %c0_1317, %c0_1318] : memref<49x8x128xf32, #tpu.memory_space<vmem>>, vector<1x8x128xf32>
    %2079 = vector.shape_cast %2078 : vector<1x8x128xf32> to vector<8x128xf32>
    %2080 = arith.mulf %2069, %2079 : vector<8x128xf32>
    %2081 = arith.addf %2068, %2080 : vector<8x128xf32>
    %2082 = vector.extract_strided_slice %2029 {offsets = [4, 0], sizes = [8, 128], strides = [1, 1]} : vector<14x128xf32> to vector<8x128xf32>
    %c46_1319 = arith.constant 46 : index
    %c0_1320 = arith.constant 0 : index
    %c0_1321 = arith.constant 0 : index
    %2083 = vector.load %arg7[%c46_1319, %c0_1320, %c0_1321] : memref<49x8x128xf32, #tpu.memory_space<vmem>>, vector<1x8x128xf32>
    %2084 = vector.shape_cast %2083 : vector<1x8x128xf32> to vector<8x128xf32>
    %2085 = arith.mulf %2082, %2084 : vector<8x128xf32>
    %2086 = arith.addf %2073, %2085 : vector<8x128xf32>
    %c39_1322 = arith.constant 39 : index
    %c0_1323 = arith.constant 0 : index
    %c0_1324 = arith.constant 0 : index
    %2087 = vector.load %arg7[%c39_1322, %c0_1323, %c0_1324] : memref<49x8x128xf32, #tpu.memory_space<vmem>>, vector<1x8x128xf32>
    %2088 = vector.shape_cast %2087 : vector<1x8x128xf32> to vector<8x128xf32>
    %2089 = arith.mulf %2082, %2088 : vector<8x128xf32>
    %2090 = arith.addf %2077, %2089 : vector<8x128xf32>
    %c32_1325 = arith.constant 32 : index
    %c0_1326 = arith.constant 0 : index
    %c0_1327 = arith.constant 0 : index
    %2091 = vector.load %arg7[%c32_1325, %c0_1326, %c0_1327] : memref<49x8x128xf32, #tpu.memory_space<vmem>>, vector<1x8x128xf32>
    %2092 = vector.shape_cast %2091 : vector<1x8x128xf32> to vector<8x128xf32>
    %2093 = arith.mulf %2082, %2092 : vector<8x128xf32>
    %2094 = arith.addf %2081, %2093 : vector<8x128xf32>
    %2095 = vector.extract_strided_slice %2029 {offsets = [5, 0], sizes = [8, 128], strides = [1, 1]} : vector<14x128xf32> to vector<8x128xf32>
    %c47_1328 = arith.constant 47 : index
    %c0_1329 = arith.constant 0 : index
    %c0_1330 = arith.constant 0 : index
    %2096 = vector.load %arg7[%c47_1328, %c0_1329, %c0_1330] : memref<49x8x128xf32, #tpu.memory_space<vmem>>, vector<1x8x128xf32>
    %2097 = vector.shape_cast %2096 : vector<1x8x128xf32> to vector<8x128xf32>
    %2098 = arith.mulf %2095, %2097 : vector<8x128xf32>
    %2099 = arith.addf %2086, %2098 : vector<8x128xf32>
    %c40_1331 = arith.constant 40 : index
    %c0_1332 = arith.constant 0 : index
    %c0_1333 = arith.constant 0 : index
    %2100 = vector.load %arg7[%c40_1331, %c0_1332, %c0_1333] : memref<49x8x128xf32, #tpu.memory_space<vmem>>, vector<1x8x128xf32>
    %2101 = vector.shape_cast %2100 : vector<1x8x128xf32> to vector<8x128xf32>
    %2102 = arith.mulf %2095, %2101 : vector<8x128xf32>
    %2103 = arith.addf %2090, %2102 : vector<8x128xf32>
    %c33_1334 = arith.constant 33 : index
    %c0_1335 = arith.constant 0 : index
    %c0_1336 = arith.constant 0 : index
    %2104 = vector.load %arg7[%c33_1334, %c0_1335, %c0_1336] : memref<49x8x128xf32, #tpu.memory_space<vmem>>, vector<1x8x128xf32>
    %2105 = vector.shape_cast %2104 : vector<1x8x128xf32> to vector<8x128xf32>
    %2106 = arith.mulf %2095, %2105 : vector<8x128xf32>
    %2107 = arith.addf %2094, %2106 : vector<8x128xf32>
    %2108 = vector.extract_strided_slice %2029 {offsets = [6, 0], sizes = [8, 128], strides = [1, 1]} : vector<14x128xf32> to vector<8x128xf32>
    %c48_1337 = arith.constant 48 : index
    %c0_1338 = arith.constant 0 : index
    %c0_1339 = arith.constant 0 : index
    %2109 = vector.load %arg7[%c48_1337, %c0_1338, %c0_1339] : memref<49x8x128xf32, #tpu.memory_space<vmem>>, vector<1x8x128xf32>
    %2110 = vector.shape_cast %2109 : vector<1x8x128xf32> to vector<8x128xf32>
    %2111 = arith.mulf %2108, %2110 : vector<8x128xf32>
    %2112 = arith.addf %2099, %2111 : vector<8x128xf32>
    %c41_1340 = arith.constant 41 : index
    %c0_1341 = arith.constant 0 : index
    %c0_1342 = arith.constant 0 : index
    %2113 = vector.load %arg7[%c41_1340, %c0_1341, %c0_1342] : memref<49x8x128xf32, #tpu.memory_space<vmem>>, vector<1x8x128xf32>
    %2114 = vector.shape_cast %2113 : vector<1x8x128xf32> to vector<8x128xf32>
    %2115 = arith.mulf %2108, %2114 : vector<8x128xf32>
    %2116 = arith.addf %2103, %2115 : vector<8x128xf32>
    %c34_1343 = arith.constant 34 : index
    %c0_1344 = arith.constant 0 : index
    %c0_1345 = arith.constant 0 : index
    %2117 = vector.load %arg7[%c34_1343, %c0_1344, %c0_1345] : memref<49x8x128xf32, #tpu.memory_space<vmem>>, vector<1x8x128xf32>
    %2118 = vector.shape_cast %2117 : vector<1x8x128xf32> to vector<8x128xf32>
    %2119 = arith.mulf %2108, %2118 : vector<8x128xf32>
    %2120 = arith.addf %2107, %2119 : vector<8x128xf32>
    %c12_i32 = arith.constant 12 : i32
    %2121 = arith.addi %496, %c12_i32 : i32
    %2122 = arith.index_cast %2121 : i32 to index
    %c0_1346 = arith.constant 0 : index
    %c0_1347 = arith.constant 0 : index
    %2123 = vector.load %arg6[%2122, %c0_1346, %c0_1347] : memref<14x14x128xf32, #tpu.memory_space<vmem>>, vector<1x14x128xf32>
    %2124 = vector.shape_cast %2123 : vector<1x14x128xf32> to vector<14x128xf32>
    %2125 = vector.extract_strided_slice %2124 {offsets = [0, 0], sizes = [8, 128], strides = [1, 1]} : vector<14x128xf32> to vector<8x128xf32>
    %c42_1348 = arith.constant 42 : index
    %c0_1349 = arith.constant 0 : index
    %c0_1350 = arith.constant 0 : index
    %2126 = vector.load %arg7[%c42_1348, %c0_1349, %c0_1350] : memref<49x8x128xf32, #tpu.memory_space<vmem>>, vector<1x8x128xf32>
    %2127 = vector.shape_cast %2126 : vector<1x8x128xf32> to vector<8x128xf32>
    %2128 = arith.mulf %2125, %2127 : vector<8x128xf32>
    %2129 = arith.addf %2116, %2128 : vector<8x128xf32>
    %c35_1351 = arith.constant 35 : index
    %c0_1352 = arith.constant 0 : index
    %c0_1353 = arith.constant 0 : index
    %2130 = vector.load %arg7[%c35_1351, %c0_1352, %c0_1353] : memref<49x8x128xf32, #tpu.memory_space<vmem>>, vector<1x8x128xf32>
    %2131 = vector.shape_cast %2130 : vector<1x8x128xf32> to vector<8x128xf32>
    %2132 = arith.mulf %2125, %2131 : vector<8x128xf32>
    %2133 = arith.addf %2120, %2132 : vector<8x128xf32>
    %2134 = vector.extract_strided_slice %2124 {offsets = [1, 0], sizes = [8, 128], strides = [1, 1]} : vector<14x128xf32> to vector<8x128xf32>
    %c43_1354 = arith.constant 43 : index
    %c0_1355 = arith.constant 0 : index
    %c0_1356 = arith.constant 0 : index
    %2135 = vector.load %arg7[%c43_1354, %c0_1355, %c0_1356] : memref<49x8x128xf32, #tpu.memory_space<vmem>>, vector<1x8x128xf32>
    %2136 = vector.shape_cast %2135 : vector<1x8x128xf32> to vector<8x128xf32>
    %2137 = arith.mulf %2134, %2136 : vector<8x128xf32>
    %2138 = arith.addf %2129, %2137 : vector<8x128xf32>
    %c36_1357 = arith.constant 36 : index
    %c0_1358 = arith.constant 0 : index
    %c0_1359 = arith.constant 0 : index
    %2139 = vector.load %arg7[%c36_1357, %c0_1358, %c0_1359] : memref<49x8x128xf32, #tpu.memory_space<vmem>>, vector<1x8x128xf32>
    %2140 = vector.shape_cast %2139 : vector<1x8x128xf32> to vector<8x128xf32>
    %2141 = arith.mulf %2134, %2140 : vector<8x128xf32>
    %2142 = arith.addf %2133, %2141 : vector<8x128xf32>
    %2143 = vector.extract_strided_slice %2124 {offsets = [2, 0], sizes = [8, 128], strides = [1, 1]} : vector<14x128xf32> to vector<8x128xf32>
    %c44_1360 = arith.constant 44 : index
    %c0_1361 = arith.constant 0 : index
    %c0_1362 = arith.constant 0 : index
    %2144 = vector.load %arg7[%c44_1360, %c0_1361, %c0_1362] : memref<49x8x128xf32, #tpu.memory_space<vmem>>, vector<1x8x128xf32>
    %2145 = vector.shape_cast %2144 : vector<1x8x128xf32> to vector<8x128xf32>
    %2146 = arith.mulf %2143, %2145 : vector<8x128xf32>
    %2147 = arith.addf %2138, %2146 : vector<8x128xf32>
    %c37_1363 = arith.constant 37 : index
    %c0_1364 = arith.constant 0 : index
    %c0_1365 = arith.constant 0 : index
    %2148 = vector.load %arg7[%c37_1363, %c0_1364, %c0_1365] : memref<49x8x128xf32, #tpu.memory_space<vmem>>, vector<1x8x128xf32>
    %2149 = vector.shape_cast %2148 : vector<1x8x128xf32> to vector<8x128xf32>
    %2150 = arith.mulf %2143, %2149 : vector<8x128xf32>
    %2151 = arith.addf %2142, %2150 : vector<8x128xf32>
    %2152 = vector.extract_strided_slice %2124 {offsets = [3, 0], sizes = [8, 128], strides = [1, 1]} : vector<14x128xf32> to vector<8x128xf32>
    %c45_1366 = arith.constant 45 : index
    %c0_1367 = arith.constant 0 : index
    %c0_1368 = arith.constant 0 : index
    %2153 = vector.load %arg7[%c45_1366, %c0_1367, %c0_1368] : memref<49x8x128xf32, #tpu.memory_space<vmem>>, vector<1x8x128xf32>
    %2154 = vector.shape_cast %2153 : vector<1x8x128xf32> to vector<8x128xf32>
    %2155 = arith.mulf %2152, %2154 : vector<8x128xf32>
    %2156 = arith.addf %2147, %2155 : vector<8x128xf32>
    %c38_1369 = arith.constant 38 : index
    %c0_1370 = arith.constant 0 : index
    %c0_1371 = arith.constant 0 : index
    %2157 = vector.load %arg7[%c38_1369, %c0_1370, %c0_1371] : memref<49x8x128xf32, #tpu.memory_space<vmem>>, vector<1x8x128xf32>
    %2158 = vector.shape_cast %2157 : vector<1x8x128xf32> to vector<8x128xf32>
    %2159 = arith.mulf %2152, %2158 : vector<8x128xf32>
    %2160 = arith.addf %2151, %2159 : vector<8x128xf32>
    %2161 = vector.extract_strided_slice %2124 {offsets = [4, 0], sizes = [8, 128], strides = [1, 1]} : vector<14x128xf32> to vector<8x128xf32>
    %c46_1372 = arith.constant 46 : index
    %c0_1373 = arith.constant 0 : index
    %c0_1374 = arith.constant 0 : index
    %2162 = vector.load %arg7[%c46_1372, %c0_1373, %c0_1374] : memref<49x8x128xf32, #tpu.memory_space<vmem>>, vector<1x8x128xf32>
    %2163 = vector.shape_cast %2162 : vector<1x8x128xf32> to vector<8x128xf32>
    %2164 = arith.mulf %2161, %2163 : vector<8x128xf32>
    %2165 = arith.addf %2156, %2164 : vector<8x128xf32>
    %c39_1375 = arith.constant 39 : index
    %c0_1376 = arith.constant 0 : index
    %c0_1377 = arith.constant 0 : index
    %2166 = vector.load %arg7[%c39_1375, %c0_1376, %c0_1377] : memref<49x8x128xf32, #tpu.memory_space<vmem>>, vector<1x8x128xf32>
    %2167 = vector.shape_cast %2166 : vector<1x8x128xf32> to vector<8x128xf32>
    %2168 = arith.mulf %2161, %2167 : vector<8x128xf32>
    %2169 = arith.addf %2160, %2168 : vector<8x128xf32>
    %2170 = vector.extract_strided_slice %2124 {offsets = [5, 0], sizes = [8, 128], strides = [1, 1]} : vector<14x128xf32> to vector<8x128xf32>
    %c47_1378 = arith.constant 47 : index
    %c0_1379 = arith.constant 0 : index
    %c0_1380 = arith.constant 0 : index
    %2171 = vector.load %arg7[%c47_1378, %c0_1379, %c0_1380] : memref<49x8x128xf32, #tpu.memory_space<vmem>>, vector<1x8x128xf32>
    %2172 = vector.shape_cast %2171 : vector<1x8x128xf32> to vector<8x128xf32>
    %2173 = arith.mulf %2170, %2172 : vector<8x128xf32>
    %2174 = arith.addf %2165, %2173 : vector<8x128xf32>
    %c40_1381 = arith.constant 40 : index
    %c0_1382 = arith.constant 0 : index
    %c0_1383 = arith.constant 0 : index
    %2175 = vector.load %arg7[%c40_1381, %c0_1382, %c0_1383] : memref<49x8x128xf32, #tpu.memory_space<vmem>>, vector<1x8x128xf32>
    %2176 = vector.shape_cast %2175 : vector<1x8x128xf32> to vector<8x128xf32>
    %2177 = arith.mulf %2170, %2176 : vector<8x128xf32>
    %2178 = arith.addf %2169, %2177 : vector<8x128xf32>
    %2179 = vector.extract_strided_slice %2124 {offsets = [6, 0], sizes = [8, 128], strides = [1, 1]} : vector<14x128xf32> to vector<8x128xf32>
    %c48_1384 = arith.constant 48 : index
    %c0_1385 = arith.constant 0 : index
    %c0_1386 = arith.constant 0 : index
    %2180 = vector.load %arg7[%c48_1384, %c0_1385, %c0_1386] : memref<49x8x128xf32, #tpu.memory_space<vmem>>, vector<1x8x128xf32>
    %2181 = vector.shape_cast %2180 : vector<1x8x128xf32> to vector<8x128xf32>
    %2182 = arith.mulf %2179, %2181 : vector<8x128xf32>
    %2183 = arith.addf %2174, %2182 : vector<8x128xf32>
    %c41_1387 = arith.constant 41 : index
    %c0_1388 = arith.constant 0 : index
    %c0_1389 = arith.constant 0 : index
    %2184 = vector.load %arg7[%c41_1387, %c0_1388, %c0_1389] : memref<49x8x128xf32, #tpu.memory_space<vmem>>, vector<1x8x128xf32>
    %2185 = vector.shape_cast %2184 : vector<1x8x128xf32> to vector<8x128xf32>
    %2186 = arith.mulf %2179, %2185 : vector<8x128xf32>
    %2187 = arith.addf %2178, %2186 : vector<8x128xf32>
    %c13_i32 = arith.constant 13 : i32
    %2188 = arith.addi %496, %c13_i32 : i32
    %2189 = arith.index_cast %2188 : i32 to index
    %c0_1390 = arith.constant 0 : index
    %c0_1391 = arith.constant 0 : index
    %2190 = vector.load %arg6[%2189, %c0_1390, %c0_1391] : memref<14x14x128xf32, #tpu.memory_space<vmem>>, vector<1x14x128xf32>
    %2191 = vector.shape_cast %2190 : vector<1x14x128xf32> to vector<14x128xf32>
    %2192 = vector.extract_strided_slice %2191 {offsets = [0, 0], sizes = [8, 128], strides = [1, 1]} : vector<14x128xf32> to vector<8x128xf32>
    %c42_1392 = arith.constant 42 : index
    %c0_1393 = arith.constant 0 : index
    %c0_1394 = arith.constant 0 : index
    %2193 = vector.load %arg7[%c42_1392, %c0_1393, %c0_1394] : memref<49x8x128xf32, #tpu.memory_space<vmem>>, vector<1x8x128xf32>
    %2194 = vector.shape_cast %2193 : vector<1x8x128xf32> to vector<8x128xf32>
    %2195 = arith.mulf %2192, %2194 : vector<8x128xf32>
    %2196 = arith.addf %2187, %2195 : vector<8x128xf32>
    %2197 = vector.extract_strided_slice %2191 {offsets = [1, 0], sizes = [8, 128], strides = [1, 1]} : vector<14x128xf32> to vector<8x128xf32>
    %c43_1395 = arith.constant 43 : index
    %c0_1396 = arith.constant 0 : index
    %c0_1397 = arith.constant 0 : index
    %2198 = vector.load %arg7[%c43_1395, %c0_1396, %c0_1397] : memref<49x8x128xf32, #tpu.memory_space<vmem>>, vector<1x8x128xf32>
    %2199 = vector.shape_cast %2198 : vector<1x8x128xf32> to vector<8x128xf32>
    %2200 = arith.mulf %2197, %2199 : vector<8x128xf32>
    %2201 = arith.addf %2196, %2200 : vector<8x128xf32>
    %2202 = vector.extract_strided_slice %2191 {offsets = [2, 0], sizes = [8, 128], strides = [1, 1]} : vector<14x128xf32> to vector<8x128xf32>
    %c44_1398 = arith.constant 44 : index
    %c0_1399 = arith.constant 0 : index
    %c0_1400 = arith.constant 0 : index
    %2203 = vector.load %arg7[%c44_1398, %c0_1399, %c0_1400] : memref<49x8x128xf32, #tpu.memory_space<vmem>>, vector<1x8x128xf32>
    %2204 = vector.shape_cast %2203 : vector<1x8x128xf32> to vector<8x128xf32>
    %2205 = arith.mulf %2202, %2204 : vector<8x128xf32>
    %2206 = arith.addf %2201, %2205 : vector<8x128xf32>
    %2207 = vector.extract_strided_slice %2191 {offsets = [3, 0], sizes = [8, 128], strides = [1, 1]} : vector<14x128xf32> to vector<8x128xf32>
    %c45_1401 = arith.constant 45 : index
    %c0_1402 = arith.constant 0 : index
    %c0_1403 = arith.constant 0 : index
    %2208 = vector.load %arg7[%c45_1401, %c0_1402, %c0_1403] : memref<49x8x128xf32, #tpu.memory_space<vmem>>, vector<1x8x128xf32>
    %2209 = vector.shape_cast %2208 : vector<1x8x128xf32> to vector<8x128xf32>
    %2210 = arith.mulf %2207, %2209 : vector<8x128xf32>
    %2211 = arith.addf %2206, %2210 : vector<8x128xf32>
    %2212 = vector.extract_strided_slice %2191 {offsets = [4, 0], sizes = [8, 128], strides = [1, 1]} : vector<14x128xf32> to vector<8x128xf32>
    %c46_1404 = arith.constant 46 : index
    %c0_1405 = arith.constant 0 : index
    %c0_1406 = arith.constant 0 : index
    %2213 = vector.load %arg7[%c46_1404, %c0_1405, %c0_1406] : memref<49x8x128xf32, #tpu.memory_space<vmem>>, vector<1x8x128xf32>
    %2214 = vector.shape_cast %2213 : vector<1x8x128xf32> to vector<8x128xf32>
    %2215 = arith.mulf %2212, %2214 : vector<8x128xf32>
    %2216 = arith.addf %2211, %2215 : vector<8x128xf32>
    %2217 = vector.extract_strided_slice %2191 {offsets = [5, 0], sizes = [8, 128], strides = [1, 1]} : vector<14x128xf32> to vector<8x128xf32>
    %c47_1407 = arith.constant 47 : index
    %c0_1408 = arith.constant 0 : index
    %c0_1409 = arith.constant 0 : index
    %2218 = vector.load %arg7[%c47_1407, %c0_1408, %c0_1409] : memref<49x8x128xf32, #tpu.memory_space<vmem>>, vector<1x8x128xf32>
    %2219 = vector.shape_cast %2218 : vector<1x8x128xf32> to vector<8x128xf32>
    %2220 = arith.mulf %2217, %2219 : vector<8x128xf32>
    %2221 = arith.addf %2216, %2220 : vector<8x128xf32>
    %2222 = vector.extract_strided_slice %2191 {offsets = [6, 0], sizes = [8, 128], strides = [1, 1]} : vector<14x128xf32> to vector<8x128xf32>
    %c48_1410 = arith.constant 48 : index
    %c0_1411 = arith.constant 0 : index
    %c0_1412 = arith.constant 0 : index
    %2223 = vector.load %arg7[%c48_1410, %c0_1411, %c0_1412] : memref<49x8x128xf32, #tpu.memory_space<vmem>>, vector<1x8x128xf32>
    %2224 = vector.shape_cast %2223 : vector<1x8x128xf32> to vector<8x128xf32>
    %2225 = arith.mulf %2222, %2224 : vector<8x128xf32>
    %2226 = arith.addf %2221, %2225 : vector<8x128xf32>
    %2227 = tpu.concatenate %1341, %1548, %1731, %1886, %2013, %2112, %2183, %2226 in 0 : vector<8x128xf32>, vector<8x128xf32>, vector<8x128xf32>, vector<8x128xf32>, vector<8x128xf32>, vector<8x128xf32>, vector<8x128xf32>, vector<8x128xf32> -> vector<64x128xf32>
    %2228 = vector.broadcast %368 : vector<1x128xf32> to vector<64x128xf32>
    %2229 = arith.addf %2227, %2228 : vector<64x128xf32>
    %c8_i32_1413 = arith.constant 8 : i32
    %2230 = arith.muli %496, %c8_i32_1413 : i32
    %c1_i32_1414 = arith.constant 1 : i32
    %2231 = arith.addi %c1_i32_1414, %2230 : i32
    %c0_1415 = arith.constant 0 : index
    %2232 = arith.index_cast %2231 : i32 to index
    %c0_1416 = arith.constant 0 : index
    %2233 = vector.load %arg5[%c0_1415, %2232, %c0_1416] : memref<1x65x128xf32, #tpu.memory_space<vmem>>, vector<1x64x128xf32>
    %2234 = vector.shape_cast %2233 : vector<1x64x128xf32> to vector<64x128xf32>
    %2235 = vector.shape_cast %2229 : vector<64x128xf32> to vector<1x64x128xf32>
    tpu.vector_store %arg5[%c0_1415, %2232, %c0_1416], %2235 {strides = array<i32>} : memref<1x65x128xf32, #tpu.memory_space<vmem>>, vector<1x64x128xf32>,
    %c1_i32_1417 = arith.constant 1 : i32
    return
  }
  func.func @transform_0(%arg0: i32, %arg1: i32) -> (i32, i32, i32) {
    %c0_i32 = arith.constant 0 : i32
    %c0_i32_0 = arith.constant 0 : i32
    return %arg0, %c0_i32, %arg1 : i32, i32, i32
  }
  func.func @transform_1(%arg0: i32, %arg1: i32) -> (i32, i32, i32) {
    %c0_i32 = arith.constant 0 : i32
    %c0_i32_0 = arith.constant 0 : i32
    %c0_i32_1 = arith.constant 0 : i32
    return %c0_i32, %c0_i32_0, %arg1 : i32, i32, i32
  }
  func.func @transform_2(%arg0: i32, %arg1: i32) -> (i32, i32) {
    %c0_i32 = arith.constant 0 : i32
    %c0_i32_0 = arith.constant 0 : i32
    return %c0_i32, %arg1 : i32, i32
  }
  func.func @transform_3(%arg0: i32, %arg1: i32) -> (i32, i32, i32) {
    %c0_i32 = arith.constant 0 : i32
    %c0_i32_0 = arith.constant 0 : i32
    return %arg0, %c0_i32, %arg1 : i32, i32, i32
  }
}

</mosaic_0001>

<llo_original>
// kernel: ppeg_forward.1
$region0: #{ppeg_forward.1}
  #allocation0 [shape = 'u32[]', space=smem, size = 0x4, offset = 0x4, fixed_abs, tag = 'smem constant byte address 0x4 - core index']
  #allocation1 [shape = 'u32[144,128]{1,0:T(1,128)}', space=vmem, size = 0x12000, scoped, tag = 'internal scratch']
  #allocation2 [shape = 'f32[14,14,128]{2,1,0:T(8,128)}', space=vmem, size = 0x1c000, scoped, tag = 'scratch operand']
  #allocation3 [shape = 'f32[49,8,128]{2,1,0:T(8,128)}', space=vmem, size = 0x31000, scoped, tag = 'scratch operand']
  %s0 = inlined_call_operand.vmem [shape: f32[2,65,128], index: 0, kind: input, shape index: {}]
  %s1 = inlined_call_operand.vmem [shape: f32[7,7,128], index: 1, kind: input, shape index: {}]
  %s2 = inlined_call_operand.vmem [shape: f32[1,128], index: 2, kind: input, shape index: {}]
  %s3 = inlined_call_operand.vmem [shape: f32[2,65,128], index: 3, kind: output, shape index: {}]
  %s4 = sld [smem:[#allocation0]]
  $region45: #{ppeg_forward.1} parent=0
    _
  %s6 = ssub.s32 1, %s4
  %s7 = scalar_select 0, %s6, %s4
  loop: start=0, step=1, limit=4
  $region2: #{ppeg_forward.1} parent=0 // loop_pre_header
    _
  $region3: #{ppeg_forward.1} parent=0 // loop_header
    %s9 = sphi 0, %s13
    %p10 = scmp.ge.s32.totalorder %s9, 4
    %s16 = sphi 0, %s28
    %s17 = sphi 0, %s24
    %s18 = sphi 0, %s16
    %s19 = sphi 0, %s17
    %s20 = sphi 0, %s18
    %s21 = sphi 0, %s19
    %s33 = sphi 0, %s35
    %s36 = sphi 0, %s33
    %s37 = sphi 0, %s36
    %s53 = sphi 0, %s37
    %s59 = sphi 0, %s61
    %s62 = sphi 0, %s59
    %s63 = sphi 0, %s62
    %s79 = sphi 0, %s63
    %s85 = sphi 0, %s87
    %s88 = sphi 0, %s85
    %s89 = sphi 0, %s88
    %s105 = sphi 0, %s89
    %s113 = sphi 0, %s115
    %s116 = sphi 0, %s113
    %s117 = sphi 0, %s116
    %s133 = sphi 0, %s117
  $region4: #{ppeg_forward.1} parent=0 // loop_header_branch
    %12 = sbr.rel (%p10) target = $region8
  $region5: #{ppeg_forward.1} parent=0 // loop_body
    %s14 = ssub.s32 %s9, 1
    %s15 = ssub.s32 %s9, 2
    %s22 = sadd.s32 1, %s17
    %p23 = scmp.ge.s32.totalorder %s22, 1
    %s24 = scalar_select %p23, 0, %s22
    %s25 = sadd.s32 1, %s16
    %s26 = scalar_select %p23, %s25, %s16
    %p27 = scmp.ge.s32.totalorder %s26, 2
    %s28 = scalar_select %p27, 0, %s26
    %s29 = ssub.s32 %s16, %s28
    %s30 = ssub.s32 %s17, %s24
    %s31 = sor.u32 %s29, %s30
    %p32 = scmp.eq.s32.totalorder %s31, 0
    %s34 = sadd.s32 %s33, 1
    %s35 = scalar_select %p32, %s33, %s34
    %p38 = pneg %p32
    %p39 = scmp.eq.s32.totalorder %s9, 1
    %p40 = por %p38, %p39
    %p41 = scmp.ne.s32.totalorder %s33, %s36
    %p42 = scmp.eq.s32.totalorder %s9, 0
    %p43 = por %p41, %p42
    %p44 = scmp.ne.s32.totalorder %s33, %s36
    %p45 = scmp.eq.s32.totalorder %s14, 1
    %p46 = por %p44, %p45
    %p47 = scmp.ne.s32.totalorder %s36, %s37
    %p48 = scmp.eq.s32.totalorder %s14, 0
    %p49 = por %p47, %p48
    %p50 = scmp.ne.s32.totalorder %s36, %s37
    %p51 = scmp.eq.s32.totalorder %s15, 1
    %p52 = por %p50, %p51
    %p54 = scmp.ne.s32.totalorder %s37, %s53
    %p55 = scmp.eq.s32.totalorder %s15, 0
    %p56 = por %p54, %p55
    %s57 = ssub.s32 %s17, %s24
    %p58 = scmp.eq.s32.totalorder %s57, 0
    %s60 = sadd.s32 %s59, 1
    %s61 = scalar_select %p58, %s59, %s60
    %p64 = pneg %p58
    %p65 = scmp.eq.s32.totalorder %s9, 1
    %p66 = por %p64, %p65
    %p67 = scmp.ne.s32.totalorder %s59, %s62
    %p68 = scmp.eq.s32.totalorder %s9, 0
    %p69 = por %p67, %p68
    %p70 = scmp.ne.s32.totalorder %s59, %s62
    %p71 = scmp.eq.s32.totalorder %s14, 1
    %p72 = por %p70, %p71
    %p73 = scmp.ne.s32.totalorder %s62, %s63
    %p74 = scmp.eq.s32.totalorder %s14, 0
    %p75 = por %p73, %p74
    %p76 = scmp.ne.s32.totalorder %s62, %s63
    %p77 = scmp.eq.s32.totalorder %s15, 1
    %p78 = por %p76, %p77
    %p80 = scmp.ne.s32.totalorder %s63, %s79
    %p81 = scmp.eq.s32.totalorder %s15, 0
    %p82 = por %p80, %p81
    %s83 = ssub.s32 %s17, %s24
    %p84 = scmp.eq.s32.totalorder %s83, 0
    %s86 = sadd.s32 %s85, 1
    %s87 = scalar_select %p84, %s85, %s86
    %p90 = pneg %p84
    %p91 = scmp.eq.s32.totalorder %s9, 1
    %p92 = por %p90, %p91
    %p93 = scmp.ne.s32.totalorder %s85, %s88
    %p94 = scmp.eq.s32.totalorder %s9, 0
    %p95 = por %p93, %p94
    %p96 = scmp.ne.s32.totalorder %s85, %s88
    %p97 = scmp.eq.s32.totalorder %s14, 1
    %p98 = por %p96, %p97
    %p99 = scmp.ne.s32.totalorder %s88, %s89
    %p100 = scmp.eq.s32.totalorder %s14, 0
    %p101 = por %p99, %p100
    %p102 = scmp.ne.s32.totalorder %s88, %s89
    %p103 = scmp.eq.s32.totalorder %s15, 1
    %p104 = por %p102, %p103
    %p106 = scmp.ne.s32.totalorder %s89, %s105
    %p107 = scmp.eq.s32.totalorder %s15, 0
    %p108 = por %p106, %p107
    %s109 = ssub.s32 %s16, %s28
    %s110 = ssub.s32 %s17, %s24
    %s111 = sor.u32 %s109, %s110
    %p112 = scmp.eq.s32.totalorder %s111, 0
    %s114 = sadd.s32 %s113, 1
    %s115 = scalar_select %p112, %s113, %s114
    %p118 = pneg %p112
    %p119 = scmp.eq.s32.totalorder %s9, 1
    %p120 = por %p118, %p119
    %p121 = scmp.ne.s32.totalorder %s113, %s116
    %p122 = scmp.eq.s32.totalorder %s9, 0
    %p123 = por %p121, %p122
    %p124 = scmp.ne.s32.totalorder %s113, %s116
    %p125 = scmp.eq.s32.totalorder %s14, 1
    %p126 = por %p124, %p125
    %p127 = scmp.ne.s32.totalorder %s116, %s117
    %p128 = scmp.eq.s32.totalorder %s14, 0
    %p129 = por %p127, %p128
    %p130 = scmp.ne.s32.totalorder %s116, %s117
    %p131 = scmp.eq.s32.totalorder %s15, 1
    %p132 = por %p130, %p131
    %p134 = scmp.ne.s32.totalorder %s117, %s133
    %p135 = scmp.eq.s32.totalorder %s15, 0
    %p136 = por %p134, %p135
    %p137 = scmp.le.s32.totalorder 1, %s9
    %p138 = scmp.lt.s32.totalorder %s9, 3
    %p139 = pnand %p137, %p138
    %p140 = pneg %p139
    // Predicated region
    $region9: #{ppeg_forward.1} parent=5 // pred_check
      _
    $region10: #{ppeg_forward.1} parent=5 // pred_check_branch
      %142 = sbr.rel (%p139) target = $region12
    $region11: #{ppeg_forward.1} parent=5 // pred_region
      %s143 = ssub.s32 %s9, 1
      // Predicated region
      $region13: #{ppeg_forward.1} parent=11 // pred_check
        %p144 = pneg %p75
      $region14: #{ppeg_forward.1} parent=11 // pred_check_branch
        %146 = sbr.rel (%p144) target = $region16
      $region15: #{ppeg_forward.1} parent=11 // pred_region
        %p147 = scmp.lt.s32.totalorder %s19, 0
        %s148 = scalar_select %p147, %s19, 0
        %s149 = smul.addr %s148, 8
        %s150 = scalar_lea.vmem %s1, %s149
      $region16: #{ppeg_forward.1} parent=11 // pred_fallthru
        _
      // Predicated region
      $region17: #{ppeg_forward.1} parent=11 // pred_check
        %p151 = pneg %p101
      $region18: #{ppeg_forward.1} parent=11 // pred_check_branch
        %153 = sbr.rel (%p151) target = $region20
      $region19: #{ppeg_forward.1} parent=11 // pred_region
        %p154 = scmp.lt.s32.totalorder %s19, 0
        %s155 = scalar_select %p154, %s19, 0
        %s156 = scalar_lea.vmem %s2, %s155
      $region20: #{ppeg_forward.1} parent=11 // pred_fallthru
        _
    $region12: #{ppeg_forward.1} parent=5 // pred_fallthru
      _
    %p157 = scmp.lt.s32.totalorder %s9, 2
    // Predicated region
    $region21: #{ppeg_forward.1} parent=5 // pred_check
      %p158 = pneg %p157
    $region22: #{ppeg_forward.1} parent=5 // pred_check_branch
      %160 = sbr.rel (%p158) target = $region24
    $region23: #{ppeg_forward.1} parent=5 // pred_region
      // Predicated region
      $region25: #{ppeg_forward.1} parent=23 // pred_check
        %p161 = pneg %p43
      $region26: #{ppeg_forward.1} parent=23 // pred_check_branch
        %163 = sbr.rel (%p161) target = $region28
      $region27: #{ppeg_forward.1} parent=23 // pred_region
        %p164 = scmp.lt.s32.totalorder %s16, 1
        %s165 = scalar_select %p164, %s16, 1
        %p166 = scmp.lt.s32.totalorder %s17, 0
        %s167 = scalar_select %p166, %s17, 0
        %s168 = smul.addr %s165, 9
        %s169 = sadd.s32 %s167, %s168
        %s170 = smul.addr %s169, 8
        %s171 = scalar_lea.vmem %s0, %s170
      $region28: #{ppeg_forward.1} parent=23 // pred_fallthru
        _
    $region24: #{ppeg_forward.1} parent=5 // pred_fallthru
      _
    %p172 = scmp.le.s32.totalorder 1, %s9
    %p173 = scmp.lt.s32.totalorder %s9, 3
    %p174 = pnand %p172, %p173
    %p175 = pneg %p174
    // Predicated region
    $region29: #{ppeg_forward.1} parent=5 // pred_check
      _
    $region30: #{ppeg_forward.1} parent=5 // pred_check_branch
      %177 = sbr.rel (%p174) target = $region32
    $region31: #{ppeg_forward.1} parent=5 // pred_region
      %s178 = ssub.s32 %s9, 1
      %p179 = scmp.lt.s32.totalorder %s18, 1
      %s180 = scalar_select %p179, %s18, 1
      %p181 = scmp.lt.s32.totalorder %s19, 0
      %s182 = scalar_select %p181, %s19, 0
      %s183 = smul.addr %s180, 9
      %s184 = sadd.s32 %s182, %s183
      %s185 = smul.addr %s184, 8
      %s186 = scalar_lea.vmem %s0, %s185
      %p187 = pneg %p49
      %p188 = pneg %p46
      %p189 = scmp.lt.s32.totalorder %s19, 0
      %s190 = scalar_select %p189, %s19, 0
      %s191 = smul.addr %s190, 8
      %s192 = scalar_lea.vmem %s1, %s191
      %p193 = pneg %p75
      %p194 = pneg %p72
      %p195 = scmp.lt.s32.totalorder %s19, 0
      %s196 = scalar_select %p195, %s19, 0
      %s197 = scalar_lea.vmem %s2, %s196
      %p198 = pneg %p101
      %p199 = pneg %p98
      %p200 = pneg %p129
      %p201 = pneg %p126
      %p202 = scmp.lt.s32.totalorder %s18, 1
      %s203 = scalar_select %p202, %s18, 1
      %p204 = scmp.lt.s32.totalorder %s19, 0
      %s205 = scalar_select %p204, %s19, 0
      %s206 = smul.addr %s203, 9
      %s207 = sadd.s32 %s205, %s206
      %s208 = smul.addr %s207, 8
      %s209 = scalar_lea.vmem %s3, %s208
      %p210 = scmp.lt.s32.totalorder %s18, 1
      %s211 = scalar_select %p210, %s18, 1
      %p212 = scmp.lt.s32.totalorder %s19, 0
      %s213 = scalar_select %p212, %s19, 0
      %s214 = smul.addr %s211, 9
      %s215 = sadd.s32 %s213, %s214
      %s216 = smul.addr %s215, 8
      %s217 = scalar_lea.vmem %s0, %s216
      %p218 = scmp.lt.s32.totalorder %s19, 0
      %s219 = scalar_select %p218, %s19, 0
      %s220 = smul.addr %s219, 8
      %s221 = scalar_lea.vmem %s1, %s220
      %p222 = scmp.lt.s32.totalorder %s19, 0
      %s223 = scalar_select %p222, %s19, 0
      %s224 = scalar_lea.vmem %s2, %s223
      %p225 = scmp.lt.s32.totalorder %s18, 1
      %s226 = scalar_select %p225, %s18, 1
      %p227 = scmp.lt.s32.totalorder %s19, 0
      %s228 = scalar_select %p227, %s19, 0
      %s229 = smul.addr %s226, 9
      %s230 = sadd.s32 %s228, %s229
      %s231 = smul.addr %s230, 8
      %s232 = scalar_lea.vmem %s3, %s231
      %v233 = vld [vmem:[%s217] sm:$0x1]
      %234 = vst [vmem:[%s232] sm:$0x1] %v233
      %235 = vst [vmem:[#allocation2] sm:$0xff] 0.0
      %236 = vst [vmem:[#allocation2 + $0x8] sm:$0x3f] 0.0
      %s237 = scalar_lea.vmem [#allocation2], 176
      %238 = vst [vmem:[%s237] sm:$0xff] 0.0
      %239 = vst [vmem:[%s237 + $0x8] sm:$0x3f] 0.0
      %s240 = scalar_lea.vmem [#allocation2], 16
      %241 = vst [vmem:[%s240] sm:$0xff] 0.0
      %242 = vst [vmem:[%s240 + $0x8] sm:$0x3f] 0.0
      %s243 = scalar_lea.vmem [#allocation2], 192
      %244 = vst [vmem:[%s243] sm:$0xff] 0.0
      %245 = vst [vmem:[%s243 + $0x8] sm:$0x3f] 0.0
      %s246 = scalar_lea.vmem [#allocation2], 32
      %247 = vst [vmem:[%s246] sm:$0xff] 0.0
      %248 = vst [vmem:[%s246 + $0x8] sm:$0x3f] 0.0
      %s249 = scalar_lea.vmem [#allocation2], 208
      %250 = vst [vmem:[%s249] sm:$0xff] 0.0
      %251 = vst [vmem:[%s249 + $0x8] sm:$0x3f] 0.0
      %v252 = vld [vmem:[%s221] sm:$0x7f]
      %v253 = vld [vmem:[%s221 + $0x8] sm:$0x7f]
      %v254 = vld [vmem:[%s221 + $0x10] sm:$0x7f]
      %v255 = vld [vmem:[%s221 + $0x18] sm:$0x7f]
      %v256 = vld [vmem:[%s221 + $0x20] sm:$0x7f]
      %v257 = vld [vmem:[%s221 + $0x28] sm:$0x7f]
      %v258 = vld [vmem:[%s221 + $0x30] sm:$0x7f]
      %v259 = vlaneseq
      %v260 = vshrl.u32 %v259, 7
      %v261 = vsub.s32 0, %v260
      %v262 = vrot.slane %v252, %v261
      %263 = vst [vmem:[#allocation3] sm:$0xff] %v262
      %v264 = vlaneseq
      %v265 = vshrl.u32 %v264, 7
      %v266 = vsub.s32 1, %v265
      %v267 = vrot.slane %v252, %v266
      %s268 = scalar_lea.vmem [#allocation3], 8
      %269 = vst [vmem:[%s268] sm:$0xff] %v267
      %v270 = vlaneseq
      %v271 = vshrl.u32 %v270, 7
      %v272 = vsub.s32 2, %v271
      %v273 = vrot.slane %v252, %v272
      %s274 = scalar_lea.vmem [#allocation3], 16
      %275 = vst [vmem:[%s274] sm:$0xff] %v273
      %v276 = vlaneseq
      %v277 = vshrl.u32 %v276, 7
      %v278 = vsub.s32 3, %v277
      %v279 = vrot.slane %v252, %v278
      %s280 = scalar_lea.vmem [#allocation3], 24
      %281 = vst [vmem:[%s280] sm:$0xff] %v279
      %v282 = vlaneseq
      %v283 = vshrl.u32 %v282, 7
      %v284 = vsub.s32 4, %v283
      %v285 = vrot.slane %v252, %v284
      %s286 = scalar_lea.vmem [#allocation3], 32
      %287 = vst [vmem:[%s286] sm:$0xff] %v285
      %v288 = vlaneseq
      %v289 = vshrl.u32 %v288, 7
      %v290 = vsub.s32 5, %v289
      %v291 = vrot.slane %v252, %v290
      %s292 = scalar_lea.vmem [#allocation3], 40
      %293 = vst [vmem:[%s292] sm:$0xff] %v291
      %v294 = vlaneseq
      %v295 = vshrl.u32 %v294, 7
      %v296 = vsub.s32 6, %v295
      %v297 = vrot.slane %v252, %v296
      %s298 = scalar_lea.vmem [#allocation3], 48
      %299 = vst [vmem:[%s298] sm:$0xff] %v297
      %v300 = vlaneseq
      %v301 = vshrl.u32 %v300, 7
      %v302 = vsub.s32 0, %v301
      %v303 = vrot.slane %v253, %v302
      %s304 = scalar_lea.vmem [#allocation3], 56
      %305 = vst [vmem:[%s304] sm:$0xff] %v303
      %v306 = vlaneseq
      %v307 = vshrl.u32 %v306, 7
      %v308 = vsub.s32 1, %v307
      %v309 = vrot.slane %v253, %v308
      %s310 = scalar_lea.vmem [#allocation3], 64
      %311 = vst [vmem:[%s310] sm:$0xff] %v309
      %v312 = vlaneseq
      %v313 = vshrl.u32 %v312, 7
      %v314 = vsub.s32 2, %v313
      %v315 = vrot.slane %v253, %v314
      %s316 = scalar_lea.vmem [#allocation3], 72
      %317 = vst [vmem:[%s316] sm:$0xff] %v315
      %v318 = vlaneseq
      %v319 = vshrl.u32 %v318, 7
      %v320 = vsub.s32 3, %v319
      %v321 = vrot.slane %v253, %v320
      %s322 = scalar_lea.vmem [#allocation3], 80
      %323 = vst [vmem:[%s322] sm:$0xff] %v321
      %v324 = vlaneseq
      %v325 = vshrl.u32 %v324, 7
      %v326 = vsub.s32 4, %v325
      %v327 = vrot.slane %v253, %v326
      %s328 = scalar_lea.vmem [#allocation3], 88
      %329 = vst [vmem:[%s328] sm:$0xff] %v327
      %v330 = vlaneseq
      %v331 = vshrl.u32 %v330, 7
      %v332 = vsub.s32 5, %v331
      %v333 = vrot.slane %v253, %v332
      %s334 = scalar_lea.vmem [#allocation3], 96
      %335 = vst [vmem:[%s334] sm:$0xff] %v333
      %v336 = vlaneseq
      %v337 = vshrl.u32 %v336, 7
      %v338 = vsub.s32 6, %v337
      %v339 = vrot.slane %v253, %v338
      %s340 = scalar_lea.vmem [#allocation3], 104
      %341 = vst [vmem:[%s340] sm:$0xff] %v339
      %v342 = vlaneseq
      %v343 = vshrl.u32 %v342, 7
      %v344 = vsub.s32 0, %v343
      %v345 = vrot.slane %v254, %v344
      %s346 = scalar_lea.vmem [#allocation3], 112
      %347 = vst [vmem:[%s346] sm:$0xff] %v345
      %v348 = vlaneseq
      %v349 = vshrl.u32 %v348, 7
      %v350 = vsub.s32 1, %v349
      %v351 = vrot.slane %v254, %v350
      %s352 = scalar_lea.vmem [#allocation3], 120
      %353 = vst [vmem:[%s352] sm:$0xff] %v351
      %v354 = vlaneseq
      %v355 = vshrl.u32 %v354, 7
      %v356 = vsub.s32 2, %v355
      %v357 = vrot.slane %v254, %v356
      %s358 = scalar_lea.vmem [#allocation3], 128
      %359 = vst [vmem:[%s358] sm:$0xff] %v357
      %v360 = vlaneseq
      %v361 = vshrl.u32 %v360, 7
      %v362 = vsub.s32 3, %v361
      %v363 = vrot.slane %v254, %v362
      %s364 = scalar_lea.vmem [#allocation3], 136
      %365 = vst [vmem:[%s364] sm:$0xff] %v363
      %v366 = vlaneseq
      %v367 = vshrl.u32 %v366, 7
      %v368 = vsub.s32 4, %v367
      %v369 = vrot.slane %v254, %v368
      %s370 = scalar_lea.vmem [#allocation3], 144
      %371 = vst [vmem:[%s370] sm:$0xff] %v369
      %v372 = vlaneseq
      %v373 = vshrl.u32 %v372, 7
      %v374 = vsub.s32 5, %v373
      %v375 = vrot.slane %v254, %v374
      %s376 = scalar_lea.vmem [#allocation3], 152
      %377 = vst [vmem:[%s376] sm:$0xff] %v375
      %v378 = vlaneseq
      %v379 = vshrl.u32 %v378, 7
      %v380 = vsub.s32 6, %v379
      %v381 = vrot.slane %v254, %v380
      %s382 = scalar_lea.vmem [#allocation3], 160
      %383 = vst [vmem:[%s382] sm:$0xff] %v381
      %v384 = vlaneseq
      %v385 = vshrl.u32 %v384, 7
      %v386 = vsub.s32 0, %v385
      %v387 = vrot.slane %v255, %v386
      %s388 = scalar_lea.vmem [#allocation3], 168
      %389 = vst [vmem:[%s388] sm:$0xff] %v387
      %v390 = vlaneseq
      %v391 = vshrl.u32 %v390, 7
      %v392 = vsub.s32 1, %v391
      %v393 = vrot.slane %v255, %v392
      %s394 = scalar_lea.vmem [#allocation3], 176
      %395 = vst [vmem:[%s394] sm:$0xff] %v393
      %v396 = vlaneseq
      %v397 = vshrl.u32 %v396, 7
      %v398 = vsub.s32 2, %v397
      %v399 = vrot.slane %v255, %v398
      %s400 = scalar_lea.vmem [#allocation3], 184
      %401 = vst [vmem:[%s400] sm:$0xff] %v399
      %v402 = vlaneseq
      %v403 = vshrl.u32 %v402, 7
      %v404 = vsub.s32 3, %v403
      %v405 = vrot.slane %v255, %v404
      %s406 = scalar_lea.vmem [#allocation3], 192
      %407 = vst [vmem:[%s406] sm:$0xff] %v405
      %v408 = vlaneseq
      %v409 = vshrl.u32 %v408, 7
      %v410 = vsub.s32 4, %v409
      %v411 = vrot.slane %v255, %v410
      %s412 = scalar_lea.vmem [#allocation3], 200
      %413 = vst [vmem:[%s412] sm:$0xff] %v411
      %v414 = vlaneseq
      %v415 = vshrl.u32 %v414, 7
      %v416 = vsub.s32 5, %v415
      %v417 = vrot.slane %v255, %v416
      %s418 = scalar_lea.vmem [#allocation3], 208
      %419 = vst [vmem:[%s418] sm:$0xff] %v417
      %v420 = vlaneseq
      %v421 = vshrl.u32 %v420, 7
      %v422 = vsub.s32 6, %v421
      %v423 = vrot.slane %v255, %v422
      %s424 = scalar_lea.vmem [#allocation3], 216
      %425 = vst [vmem:[%s424] sm:$0xff] %v423
      %v426 = vlaneseq
      %v427 = vshrl.u32 %v426, 7
      %v428 = vsub.s32 0, %v427
      %v429 = vrot.slane %v256, %v428
      %s430 = scalar_lea.vmem [#allocation3], 224
      %431 = vst [vmem:[%s430] sm:$0xff] %v429
      %v432 = vlaneseq
      %v433 = vshrl.u32 %v432, 7
      %v434 = vsub.s32 1, %v433
      %v435 = vrot.slane %v256, %v434
      %s436 = scalar_lea.vmem [#allocation3], 232
      %437 = vst [vmem:[%s436] sm:$0xff] %v435
      %v438 = vlaneseq
      %v439 = vshrl.u32 %v438, 7
      %v440 = vsub.s32 2, %v439
      %v441 = vrot.slane %v256, %v440
      %s442 = scalar_lea.vmem [#allocation3], 240
      %443 = vst [vmem:[%s442] sm:$0xff] %v441
      %v444 = vlaneseq
      %v445 = vshrl.u32 %v444, 7
      %v446 = vsub.s32 3, %v445
      %v447 = vrot.slane %v256, %v446
      %s448 = scalar_lea.vmem [#allocation3], 248
      %449 = vst [vmem:[%s448] sm:$0xff] %v447
      %v450 = vlaneseq
      %v451 = vshrl.u32 %v450, 7
      %v452 = vsub.s32 4, %v451
      %v453 = vrot.slane %v256, %v452
      %s454 = scalar_lea.vmem [#allocation3], 256
      %455 = vst [vmem:[%s454] sm:$0xff] %v453
      %v456 = vlaneseq
      %v457 = vshrl.u32 %v456, 7
      %v458 = vsub.s32 5, %v457
      %v459 = vrot.slane %v256, %v458
      %s460 = scalar_lea.vmem [#allocation3], 264
      %461 = vst [vmem:[%s460] sm:$0xff] %v459
      %v462 = vlaneseq
      %v463 = vshrl.u32 %v462, 7
      %v464 = vsub.s32 6, %v463
      %v465 = vrot.slane %v256, %v464
      %s466 = scalar_lea.vmem [#allocation3], 272
      %467 = vst [vmem:[%s466] sm:$0xff] %v465
      %v468 = vlaneseq
      %v469 = vshrl.u32 %v468, 7
      %v470 = vsub.s32 0, %v469
      %v471 = vrot.slane %v257, %v470
      %s472 = scalar_lea.vmem [#allocation3], 280
      %473 = vst [vmem:[%s472] sm:$0xff] %v471
      %v474 = vlaneseq
      %v475 = vshrl.u32 %v474, 7
      %v476 = vsub.s32 1, %v475
      %v477 = vrot.slane %v257, %v476
      %s478 = scalar_lea.vmem [#allocation3], 288
      %479 = vst [vmem:[%s478] sm:$0xff] %v477
      %v480 = vlaneseq
      %v481 = vshrl.u32 %v480, 7
      %v482 = vsub.s32 2, %v481
      %v483 = vrot.slane %v257, %v482
      %s484 = scalar_lea.vmem [#allocation3], 296
      %485 = vst [vmem:[%s484] sm:$0xff] %v483
      %v486 = vlaneseq
      %v487 = vshrl.u32 %v486, 7
      %v488 = vsub.s32 3, %v487
      %v489 = vrot.slane %v257, %v488
      %s490 = scalar_lea.vmem [#allocation3], 304
      %491 = vst [vmem:[%s490] sm:$0xff] %v489
      %v492 = vlaneseq
      %v493 = vshrl.u32 %v492, 7
      %v494 = vsub.s32 4, %v493
      %v495 = vrot.slane %v257, %v494
      %s496 = scalar_lea.vmem [#allocation3], 312
      %497 = vst [vmem:[%s496] sm:$0xff] %v495
      %v498 = vlaneseq
      %v499 = vshrl.u32 %v498, 7
      %v500 = vsub.s32 5, %v499
      %v501 = vrot.slane %v257, %v500
      %s502 = scalar_lea.vmem [#allocation3], 320
      %503 = vst [vmem:[%s502] sm:$0xff] %v501
      %v504 = vlaneseq
      %v505 = vshrl.u32 %v504, 7
      %v506 = vsub.s32 6, %v505
      %v507 = vrot.slane %v257, %v506
      %s508 = scalar_lea.vmem [#allocation3], 328
      %509 = vst [vmem:[%s508] sm:$0xff] %v507
      %v510 = vlaneseq
      %v511 = vshrl.u32 %v510, 7
      %v512 = vsub.s32 0, %v511
      %v513 = vrot.slane %v258, %v512
      %s514 = scalar_lea.vmem [#allocation3], 336
      %515 = vst [vmem:[%s514] sm:$0xff] %v513
      %v516 = vlaneseq
      %v517 = vshrl.u32 %v516, 7
      %v518 = vsub.s32 1, %v517
      %v519 = vrot.slane %v258, %v518
      %s520 = scalar_lea.vmem [#allocation3], 344
      %521 = vst [vmem:[%s520] sm:$0xff] %v519
      %v522 = vlaneseq
      %v523 = vshrl.u32 %v522, 7
      %v524 = vsub.s32 2, %v523
      %v525 = vrot.slane %v258, %v524
      %s526 = scalar_lea.vmem [#allocation3], 352
      %527 = vst [vmem:[%s526] sm:$0xff] %v525
      %v528 = vlaneseq
      %v529 = vshrl.u32 %v528, 7
      %v530 = vsub.s32 3, %v529
      %v531 = vrot.slane %v258, %v530
      %s532 = scalar_lea.vmem [#allocation3], 360
      %533 = vst [vmem:[%s532] sm:$0xff] %v531
      %v534 = vlaneseq
      %v535 = vshrl.u32 %v534, 7
      %v536 = vsub.s32 4, %v535
      %v537 = vrot.slane %v258, %v536
      %s538 = scalar_lea.vmem [#allocation3], 368
      %539 = vst [vmem:[%s538] sm:$0xff] %v537
      %v540 = vlaneseq
      %v541 = vshrl.u32 %v540, 7
      %v542 = vsub.s32 5, %v541
      %v543 = vrot.slane %v258, %v542
      %s544 = scalar_lea.vmem [#allocation3], 376
      %545 = vst [vmem:[%s544] sm:$0xff] %v543
      %v546 = vlaneseq
      %v547 = vshrl.u32 %v546, 7
      %v548 = vsub.s32 6, %v547
      %v549 = vrot.slane %v258, %v548
      %s550 = scalar_lea.vmem [#allocation3], 384
      %551 = vst [vmem:[%s550] sm:$0xff] %v549
      %v552 = vld [vmem:[%s224] sm:$0x1]
      %v553 = vld [vmem:[%s217 + $0x1] sm:$0xff]
      %v554 = vld [vmem:[%s217 + $0x9] sm:$0xff]
      %v555 = vld [vmem:[%s217 + $0x11] sm:$0xff]
      %v556 = vld [vmem:[%s217 + $0x19] sm:$0xff]
      %v557 = vld [vmem:[%s217 + $0x21] sm:$0xff]
      %v558 = vld [vmem:[%s217 + $0x29] sm:$0xff]
      %v559 = vld [vmem:[%s217 + $0x31] sm:$0xff]
      %v560 = vld [vmem:[%s217 + $0x39] sm:$0xff]
      %s561 = scalar_lea.vmem [#allocation2], 48
      %562 = vst [vmem:[%s561] sm:$0x7] 0.0
      %563 = vst [vmem:[%s561 + $0xb] sm:$0x7] 0.0
      %564 = vst [vmem:[%s561 + $0x3] sm:$0xff] %v553
      %s565 = scalar_lea.vmem [#allocation2], 64
      %566 = vst [vmem:[%s565] sm:$0x7] 0.0
      %567 = vst [vmem:[%s565 + $0xb] sm:$0x7] 0.0
      %568 = vst [vmem:[%s565 + $0x3] sm:$0xff] %v554
      %s569 = scalar_lea.vmem [#allocation2], 80
      %570 = vst [vmem:[%s569] sm:$0x7] 0.0
      %571 = vst [vmem:[%s569 + $0xb] sm:$0x7] 0.0
      %572 = vst [vmem:[%s569 + $0x3] sm:$0xff] %v555
      %s573 = scalar_lea.vmem [#allocation2], 96
      %574 = vst [vmem:[%s573] sm:$0x7] 0.0
      %575 = vst [vmem:[%s573 + $0xb] sm:$0x7] 0.0
      %576 = vst [vmem:[%s573 + $0x3] sm:$0xff] %v556
      %s577 = scalar_lea.vmem [#allocation2], 112
      %578 = vst [vmem:[%s577] sm:$0x7] 0.0
      %579 = vst [vmem:[%s577 + $0xb] sm:$0x7] 0.0
      %580 = vst [vmem:[%s577 + $0x3] sm:$0xff] %v557
      %s581 = scalar_lea.vmem [#allocation2], 128
      %582 = vst [vmem:[%s581] sm:$0x7] 0.0
      %583 = vst [vmem:[%s581 + $0xb] sm:$0x7] 0.0
      %584 = vst [vmem:[%s581 + $0x3] sm:$0xff] %v558
      %s585 = scalar_lea.vmem [#allocation2], 144
      %586 = vst [vmem:[%s585] sm:$0x7] 0.0
      %587 = vst [vmem:[%s585 + $0xb] sm:$0x7] 0.0
      %588 = vst [vmem:[%s585 + $0x3] sm:$0xff] %v559
      %s589 = scalar_lea.vmem [#allocation2], 160
      %590 = vst [vmem:[%s589] sm:$0x7] 0.0
      %591 = vst [vmem:[%s589 + $0xb] sm:$0x7] 0.0
      %592 = vst [vmem:[%s589 + $0x3] sm:$0xff] %v560
      %v593 = vld [vmem:[#allocation2] sm:$0xff]
      %v594 = vld [vmem:[#allocation2 + $0x8] sm:$0x3f]
      %v595 = vld [vmem:[#allocation3] sm:$0xff]
      %v596 = vmul.f32 %v593, %v595
      %v597 = vadd.f32 %v596, 0.0
      %v598 = vld [vmem:[%s268] sm:$0xff]
      %v600 = vrot.slane %v598, 7
      %v602 = vmul.f32 %v593, %v600
      %v603 = vmul.f32 %v594, %v600
      %vm606 = vcmask 1046528
      %v607 = vrot.slane %v602, 1
      %v608 = vrot.slane %v603, 1
      %v609 = vsel %vm606, %v607, %v608
      %v611 = vadd.f32 %v597, %v609
      %v612 = vld [vmem:[%s274] sm:$0xff]
      %v614 = vrot.slane %v612, 6
      %v616 = vmul.f32 %v593, %v614
      %v617 = vmul.f32 %v594, %v614
      %vm620 = vcmask 1045504
      %v621 = vrot.slane %v616, 2
      %v622 = vrot.slane %v617, 2
      %v623 = vsel %vm620, %v621, %v622
      %v625 = vadd.f32 %v611, %v623
      %v626 = vld [vmem:[%s280] sm:$0xff]
      %v628 = vrot.slane %v626, 5
      %v630 = vmul.f32 %v593, %v628
      %v631 = vmul.f32 %v594, %v628
      %vm634 = vcmask 1044480
      %v635 = vrot.slane %v630, 3
      %v636 = vrot.slane %v631, 3
      %v637 = vsel %vm634, %v635, %v636
      %v639 = vadd.f32 %v625, %v637
      %v640 = vld [vmem:[%s286] sm:$0xff]
      %v642 = vrot.slane %v640, 4
      %v644 = vmul.f32 %v593, %v642
      %v645 = vmul.f32 %v594, %v642
      %vm648 = vcmask 1043456
      %v649 = vrot.slane %v644, 4
      %v650 = vrot.slane %v645, 4
      %v651 = vsel %vm648, %v649, %v650
      %v653 = vadd.f32 %v639, %v651
      %v654 = vld [vmem:[%s292] sm:$0xff]
      %v656 = vrot.slane %v654, 3
      %v658 = vmul.f32 %v593, %v656
      %v659 = vmul.f32 %v594, %v656
      %vm662 = vcmask 1042432
      %v663 = vrot.slane %v658, 5
      %v664 = vrot.slane %v659, 5
      %v665 = vsel %vm662, %v663, %v664
      %v667 = vadd.f32 %v653, %v665
      %v668 = vld [vmem:[%s298] sm:$0xff]
      %v670 = vrot.slane %v668, 2
      %v672 = vmul.f32 %v593, %v670
      %v673 = vmul.f32 %v594, %v670
      %vm676 = vcmask 1041408
      %v677 = vrot.slane %v672, 6
      %v678 = vrot.slane %v673, 6
      %v679 = vsel %vm676, %v677, %v678
      %v681 = vadd.f32 %v667, %v679
      %v682 = vld [vmem:[%s240] sm:$0xff]
      %v683 = vld [vmem:[%s240 + $0x8] sm:$0x3f]
      %v684 = vld [vmem:[%s304] sm:$0xff]
      %v685 = vmul.f32 %v682, %v684
      %v686 = vadd.f32 %v681, %v685
      %v687 = vmul.f32 %v682, %v595
      %v688 = vadd.f32 %v687, 0.0
      %v689 = vld [vmem:[%s310] sm:$0xff]
      %v691 = vrot.slane %v689, 7
      %v693 = vmul.f32 %v682, %v691
      %v694 = vmul.f32 %v683, %v691
      %v697 = vrot.slane %v693, 1
      %v698 = vrot.slane %v694, 1
      %v699 = vsel %vm606, %v697, %v698
      %v701 = vadd.f32 %v686, %v699
      %v702 = vmul.f32 %v682, %v600
      %v703 = vmul.f32 %v683, %v600
      %v706 = vrot.slane %v702, 1
      %v707 = vrot.slane %v703, 1
      %v708 = vsel %vm606, %v706, %v707
      %v710 = vadd.f32 %v688, %v708
      %v711 = vld [vmem:[%s316] sm:$0xff]
      %v713 = vrot.slane %v711, 6
      %v715 = vmul.f32 %v682, %v713
      %v716 = vmul.f32 %v683, %v713
      %v719 = vrot.slane %v715, 2
      %v720 = vrot.slane %v716, 2
      %v721 = vsel %vm620, %v719, %v720
      %v723 = vadd.f32 %v701, %v721
      %v724 = vmul.f32 %v682, %v614
      %v725 = vmul.f32 %v683, %v614
      %v728 = vrot.slane %v724, 2
      %v729 = vrot.slane %v725, 2
      %v730 = vsel %vm620, %v728, %v729
      %v732 = vadd.f32 %v710, %v730
      %v733 = vld [vmem:[%s322] sm:$0xff]
      %v735 = vrot.slane %v733, 5
      %v737 = vmul.f32 %v682, %v735
      %v738 = vmul.f32 %v683, %v735
      %v741 = vrot.slane %v737, 3
      %v742 = vrot.slane %v738, 3
      %v743 = vsel %vm634, %v741, %v742
      %v745 = vadd.f32 %v723, %v743
      %v746 = vmul.f32 %v682, %v628
      %v747 = vmul.f32 %v683, %v628
      %v750 = vrot.slane %v746, 3
      %v751 = vrot.slane %v747, 3
      %v752 = vsel %vm634, %v750, %v751
      %v754 = vadd.f32 %v732, %v752
      %v755 = vld [vmem:[%s328] sm:$0xff]
      %v757 = vrot.slane %v755, 4
      %v759 = vmul.f32 %v682, %v757
      %v760 = vmul.f32 %v683, %v757
      %v763 = vrot.slane %v759, 4
      %v764 = vrot.slane %v760, 4
      %v765 = vsel %vm648, %v763, %v764
      %v767 = vadd.f32 %v745, %v765
      %v768 = vmul.f32 %v682, %v642
      %v769 = vmul.f32 %v683, %v642
      %v772 = vrot.slane %v768, 4
      %v773 = vrot.slane %v769, 4
      %v774 = vsel %vm648, %v772, %v773
      %v776 = vadd.f32 %v754, %v774
      %v777 = vld [vmem:[%s334] sm:$0xff]
      %v779 = vrot.slane %v777, 3
      %v781 = vmul.f32 %v682, %v779
      %v782 = vmul.f32 %v683, %v779
      %v785 = vrot.slane %v781, 5
      %v786 = vrot.slane %v782, 5
      %v787 = vsel %vm662, %v785, %v786
      %v789 = vadd.f32 %v767, %v787
      %v790 = vmul.f32 %v682, %v656
      %v791 = vmul.f32 %v683, %v656
      %v794 = vrot.slane %v790, 5
      %v795 = vrot.slane %v791, 5
      %v796 = vsel %vm662, %v794, %v795
      %v798 = vadd.f32 %v776, %v796
      %v799 = vld [vmem:[%s340] sm:$0xff]
      %v801 = vrot.slane %v799, 2
      %v803 = vmul.f32 %v682, %v801
      %v804 = vmul.f32 %v683, %v801
      %v807 = vrot.slane %v803, 6
      %v808 = vrot.slane %v804, 6
      %v809 = vsel %vm676, %v807, %v808
      %v811 = vadd.f32 %v789, %v809
      %v812 = vmul.f32 %v682, %v670
      %v813 = vmul.f32 %v683, %v670
      %v816 = vrot.slane %v812, 6
      %v817 = vrot.slane %v813, 6
      %v818 = vsel %vm676, %v816, %v817
      %v820 = vadd.f32 %v798, %v818
      %v821 = vld [vmem:[%s246] sm:$0xff]
      %v822 = vld [vmem:[%s246 + $0x8] sm:$0x3f]
      %v823 = vld [vmem:[%s346] sm:$0xff]
      %v824 = vmul.f32 %v821, %v823
      %v825 = vadd.f32 %v811, %v824
      %v826 = vmul.f32 %v821, %v684
      %v827 = vadd.f32 %v820, %v826
      %v828 = vmul.f32 %v821, %v595
      %v829 = vadd.f32 %v828, 0.0
      %v830 = vld [vmem:[%s352] sm:$0xff]
      %v832 = vrot.slane %v830, 7
      %v834 = vmul.f32 %v821, %v832
      %v835 = vmul.f32 %v822, %v832
      %v838 = vrot.slane %v834, 1
      %v839 = vrot.slane %v835, 1
      %v840 = vsel %vm606, %v838, %v839
      %v842 = vadd.f32 %v825, %v840
      %v843 = vmul.f32 %v821, %v691
      %v844 = vmul.f32 %v822, %v691
      %v847 = vrot.slane %v843, 1
      %v848 = vrot.slane %v844, 1
      %v849 = vsel %vm606, %v847, %v848
      %v851 = vadd.f32 %v827, %v849
      %v852 = vmul.f32 %v821, %v600
      %v853 = vmul.f32 %v822, %v600
      %v856 = vrot.slane %v852, 1
      %v857 = vrot.slane %v853, 1
      %v858 = vsel %vm606, %v856, %v857
      %v860 = vadd.f32 %v829, %v858
      %v861 = vld [vmem:[%s358] sm:$0xff]
      %v863 = vrot.slane %v861, 6
      %v865 = vmul.f32 %v821, %v863
      %v866 = vmul.f32 %v822, %v863
      %v869 = vrot.slane %v865, 2
      %v870 = vrot.slane %v866, 2
      %v871 = vsel %vm620, %v869, %v870
      %v873 = vadd.f32 %v842, %v871
      %v874 = vmul.f32 %v821, %v713
      %v875 = vmul.f32 %v822, %v713
      %v878 = vrot.slane %v874, 2
      %v879 = vrot.slane %v875, 2
      %v880 = vsel %vm620, %v878, %v879
      %v882 = vadd.f32 %v851, %v880
      %v883 = vmul.f32 %v821, %v614
      %v884 = vmul.f32 %v822, %v614
      %v887 = vrot.slane %v883, 2
      %v888 = vrot.slane %v884, 2
      %v889 = vsel %vm620, %v887, %v888
      %v891 = vadd.f32 %v860, %v889
      %v892 = vld [vmem:[%s364] sm:$0xff]
      %v894 = vrot.slane %v892, 5
      %v896 = vmul.f32 %v821, %v894
      %v897 = vmul.f32 %v822, %v894
      %v900 = vrot.slane %v896, 3
      %v901 = vrot.slane %v897, 3
      %v902 = vsel %vm634, %v900, %v901
      %v904 = vadd.f32 %v873, %v902
      %v905 = vmul.f32 %v821, %v735
      %v906 = vmul.f32 %v822, %v735
      %v909 = vrot.slane %v905, 3
      %v910 = vrot.slane %v906, 3
      %v911 = vsel %vm634, %v909, %v910
      %v913 = vadd.f32 %v882, %v911
      %v914 = vmul.f32 %v821, %v628
      %v915 = vmul.f32 %v822, %v628
      %v918 = vrot.slane %v914, 3
      %v919 = vrot.slane %v915, 3
      %v920 = vsel %vm634, %v918, %v919
      %v922 = vadd.f32 %v891, %v920
      %v923 = vld [vmem:[%s370] sm:$0xff]
      %v925 = vrot.slane %v923, 4
      %v927 = vmul.f32 %v821, %v925
      %v928 = vmul.f32 %v822, %v925
      %v931 = vrot.slane %v927, 4
      %v932 = vrot.slane %v928, 4
      %v933 = vsel %vm648, %v931, %v932
      %v935 = vadd.f32 %v904, %v933
      %v936 = vmul.f32 %v821, %v757
      %v937 = vmul.f32 %v822, %v757
      %v940 = vrot.slane %v936, 4
      %v941 = vrot.slane %v937, 4
      %v942 = vsel %vm648, %v940, %v941
      %v944 = vadd.f32 %v913, %v942
      %v945 = vmul.f32 %v821, %v642
      %v946 = vmul.f32 %v822, %v642
      %v949 = vrot.slane %v945, 4
      %v950 = vrot.slane %v946, 4
      %v951 = vsel %vm648, %v949, %v950
      %v953 = vadd.f32 %v922, %v951
      %v954 = vld [vmem:[%s376] sm:$0xff]
      %v956 = vrot.slane %v954, 3
      %v958 = vmul.f32 %v821, %v956
      %v959 = vmul.f32 %v822, %v956
      %v962 = vrot.slane %v958, 5
      %v963 = vrot.slane %v959, 5
      %v964 = vsel %vm662, %v962, %v963
      %v966 = vadd.f32 %v935, %v964
      %v967 = vmul.f32 %v821, %v779
      %v968 = vmul.f32 %v822, %v779
      %v971 = vrot.slane %v967, 5
      %v972 = vrot.slane %v968, 5
      %v973 = vsel %vm662, %v971, %v972
      %v975 = vadd.f32 %v944, %v973
      %v976 = vmul.f32 %v821, %v656
      %v977 = vmul.f32 %v822, %v656
      %v980 = vrot.slane %v976, 5
      %v981 = vrot.slane %v977, 5
      %v982 = vsel %vm662, %v980, %v981
      %v984 = vadd.f32 %v953, %v982
      %v985 = vld [vmem:[%s382] sm:$0xff]
      %v987 = vrot.slane %v985, 2
      %v989 = vmul.f32 %v821, %v987
      %v990 = vmul.f32 %v822, %v987
      %v993 = vrot.slane %v989, 6
      %v994 = vrot.slane %v990, 6
      %v995 = vsel %vm676, %v993, %v994
      %v997 = vadd.f32 %v966, %v995
      %v998 = vmul.f32 %v821, %v801
      %v999 = vmul.f32 %v822, %v801
      %v1002 = vrot.slane %v998, 6
      %v1003 = vrot.slane %v999, 6
      %v1004 = vsel %vm676, %v1002, %v1003
      %v1006 = vadd.f32 %v975, %v1004
      %v1007 = vmul.f32 %v821, %v670
      %v1008 = vmul.f32 %v822, %v670
      %v1011 = vrot.slane %v1007, 6
      %v1012 = vrot.slane %v1008, 6
      %v1013 = vsel %vm676, %v1011, %v1012
      %v1015 = vadd.f32 %v984, %v1013
      %v1016 = vld [vmem:[%s561] sm:$0xff]
      %v1017 = vld [vmem:[%s561 + $0x8] sm:$0x3f]
      %v1018 = vld [vmem:[%s388] sm:$0xff]
      %v1019 = vmul.f32 %v1016, %v1018
      %v1020 = vadd.f32 %v997, %v1019
      %v1021 = vmul.f32 %v1016, %v823
      %v1022 = vadd.f32 %v1006, %v1021
      %v1023 = vmul.f32 %v1016, %v684
      %v1024 = vadd.f32 %v1015, %v1023
      %v1025 = vmul.f32 %v1016, %v595
      %v1026 = vadd.f32 %v1025, 0.0
      %v1027 = vld [vmem:[%s394] sm:$0xff]
      %v1029 = vrot.slane %v1027, 7
      %v1031 = vmul.f32 %v1016, %v1029
      %v1032 = vmul.f32 %v1017, %v1029
      %v1035 = vrot.slane %v1031, 1
      %v1036 = vrot.slane %v1032, 1
      %v1037 = vsel %vm606, %v1035, %v1036
      %v1039 = vadd.f32 %v1020, %v1037
      %v1040 = vmul.f32 %v1016, %v832
      %v1041 = vmul.f32 %v1017, %v832
      %v1044 = vrot.slane %v1040, 1
      %v1045 = vrot.slane %v1041, 1
      %v1046 = vsel %vm606, %v1044, %v1045
      %v1048 = vadd.f32 %v1022, %v1046
      %v1049 = vmul.f32 %v1016, %v691
      %v1050 = vmul.f32 %v1017, %v691
      %v1053 = vrot.slane %v1049, 1
      %v1054 = vrot.slane %v1050, 1
      %v1055 = vsel %vm606, %v1053, %v1054
      %v1057 = vadd.f32 %v1024, %v1055
      %v1058 = vmul.f32 %v1016, %v600
      %v1059 = vmul.f32 %v1017, %v600
      %v1062 = vrot.slane %v1058, 1
      %v1063 = vrot.slane %v1059, 1
      %v1064 = vsel %vm606, %v1062, %v1063
      %v1066 = vadd.f32 %v1026, %v1064
      %v1067 = vld [vmem:[%s400] sm:$0xff]
      %v1069 = vrot.slane %v1067, 6
      %v1071 = vmul.f32 %v1016, %v1069
      %v1072 = vmul.f32 %v1017, %v1069
      %v1075 = vrot.slane %v1071, 2
      %v1076 = vrot.slane %v1072, 2
      %v1077 = vsel %vm620, %v1075, %v1076
      %v1079 = vadd.f32 %v1039, %v1077
      %v1080 = vmul.f32 %v1016, %v863
      %v1081 = vmul.f32 %v1017, %v863
      %v1084 = vrot.slane %v1080, 2
      %v1085 = vrot.slane %v1081, 2
      %v1086 = vsel %vm620, %v1084, %v1085
      %v1088 = vadd.f32 %v1048, %v1086
      %v1089 = vmul.f32 %v1016, %v713
      %v1090 = vmul.f32 %v1017, %v713
      %v1093 = vrot.slane %v1089, 2
      %v1094 = vrot.slane %v1090, 2
      %v1095 = vsel %vm620, %v1093, %v1094
      %v1097 = vadd.f32 %v1057, %v1095
      %v1098 = vmul.f32 %v1016, %v614
      %v1099 = vmul.f32 %v1017, %v614
      %v1102 = vrot.slane %v1098, 2
      %v1103 = vrot.slane %v1099, 2
      %v1104 = vsel %vm620, %v1102, %v1103
      %v1106 = vadd.f32 %v1066, %v1104
      %v1107 = vld [vmem:[%s406] sm:$0xff]
      %v1109 = vrot.slane %v1107, 5
      %v1111 = vmul.f32 %v1016, %v1109
      %v1112 = vmul.f32 %v1017, %v1109
      %v1115 = vrot.slane %v1111, 3
      %v1116 = vrot.slane %v1112, 3
      %v1117 = vsel %vm634, %v1115, %v1116
      %v1119 = vadd.f32 %v1079, %v1117
      %v1120 = vmul.f32 %v1016, %v894
      %v1121 = vmul.f32 %v1017, %v894
      %v1124 = vrot.slane %v1120, 3
      %v1125 = vrot.slane %v1121, 3
      %v1126 = vsel %vm634, %v1124, %v1125
      %v1128 = vadd.f32 %v1088, %v1126
      %v1129 = vmul.f32 %v1016, %v735
      %v1130 = vmul.f32 %v1017, %v735
      %v1133 = vrot.slane %v1129, 3
      %v1134 = vrot.slane %v1130, 3
      %v1135 = vsel %vm634, %v1133, %v1134
      %v1137 = vadd.f32 %v1097, %v1135
      %v1138 = vmul.f32 %v1016, %v628
      %v1139 = vmul.f32 %v1017, %v628
      %v1142 = vrot.slane %v1138, 3
      %v1143 = vrot.slane %v1139, 3
      %v1144 = vsel %vm634, %v1142, %v1143
      %v1146 = vadd.f32 %v1106, %v1144
      %v1147 = vld [vmem:[%s412] sm:$0xff]
      %v1149 = vrot.slane %v1147, 4
      %v1151 = vmul.f32 %v1016, %v1149
      %v1152 = vmul.f32 %v1017, %v1149
      %v1155 = vrot.slane %v1151, 4
      %v1156 = vrot.slane %v1152, 4
      %v1157 = vsel %vm648, %v1155, %v1156
      %v1159 = vadd.f32 %v1119, %v1157
      %v1160 = vmul.f32 %v1016, %v925
      %v1161 = vmul.f32 %v1017, %v925
      %v1164 = vrot.slane %v1160, 4
      %v1165 = vrot.slane %v1161, 4
      %v1166 = vsel %vm648, %v1164, %v1165
      %v1168 = vadd.f32 %v1128, %v1166
      %v1169 = vmul.f32 %v1016, %v757
      %v1170 = vmul.f32 %v1017, %v757
      %v1173 = vrot.slane %v1169, 4
      %v1174 = vrot.slane %v1170, 4
      %v1175 = vsel %vm648, %v1173, %v1174
      %v1177 = vadd.f32 %v1137, %v1175
      %v1178 = vmul.f32 %v1016, %v642
      %v1179 = vmul.f32 %v1017, %v642
      %v1182 = vrot.slane %v1178, 4
      %v1183 = vrot.slane %v1179, 4
      %v1184 = vsel %vm648, %v1182, %v1183
      %v1186 = vadd.f32 %v1146, %v1184
      %v1187 = vld [vmem:[%s418] sm:$0xff]
      %v1189 = vrot.slane %v1187, 3
      %v1191 = vmul.f32 %v1016, %v1189
      %v1192 = vmul.f32 %v1017, %v1189
      %v1195 = vrot.slane %v1191, 5
      %v1196 = vrot.slane %v1192, 5
      %v1197 = vsel %vm662, %v1195, %v1196
      %v1199 = vadd.f32 %v1159, %v1197
      %v1200 = vmul.f32 %v1016, %v956
      %v1201 = vmul.f32 %v1017, %v956
      %v1204 = vrot.slane %v1200, 5
      %v1205 = vrot.slane %v1201, 5
      %v1206 = vsel %vm662, %v1204, %v1205
      %v1208 = vadd.f32 %v1168, %v1206
      %v1209 = vmul.f32 %v1016, %v779
      %v1210 = vmul.f32 %v1017, %v779
      %v1213 = vrot.slane %v1209, 5
      %v1214 = vrot.slane %v1210, 5
      %v1215 = vsel %vm662, %v1213, %v1214
      %v1217 = vadd.f32 %v1177, %v1215
      %v1218 = vmul.f32 %v1016, %v656
      %v1219 = vmul.f32 %v1017, %v656
      %v1222 = vrot.slane %v1218, 5
      %v1223 = vrot.slane %v1219, 5
      %v1224 = vsel %vm662, %v1222, %v1223
      %v1226 = vadd.f32 %v1186, %v1224
      %v1227 = vld [vmem:[%s424] sm:$0xff]
      %v1229 = vrot.slane %v1227, 2
      %v1231 = vmul.f32 %v1016, %v1229
      %v1232 = vmul.f32 %v1017, %v1229
      %v1235 = vrot.slane %v1231, 6
      %v1236 = vrot.slane %v1232, 6
      %v1237 = vsel %vm676, %v1235, %v1236
      %v1239 = vadd.f32 %v1199, %v1237
      %v1240 = vmul.f32 %v1016, %v987
      %v1241 = vmul.f32 %v1017, %v987
      %v1244 = vrot.slane %v1240, 6
      %v1245 = vrot.slane %v1241, 6
      %v1246 = vsel %vm676, %v1244, %v1245
      %v1248 = vadd.f32 %v1208, %v1246
      %v1249 = vmul.f32 %v1016, %v801
      %v1250 = vmul.f32 %v1017, %v801
      %v1253 = vrot.slane %v1249, 6
      %v1254 = vrot.slane %v1250, 6
      %v1255 = vsel %vm676, %v1253, %v1254
      %v1257 = vadd.f32 %v1217, %v1255
      %v1258 = vmul.f32 %v1016, %v670
      %v1259 = vmul.f32 %v1017, %v670
      %v1262 = vrot.slane %v1258, 6
      %v1263 = vrot.slane %v1259, 6
      %v1264 = vsel %vm676, %v1262, %v1263
      %v1266 = vadd.f32 %v1226, %v1264
      %v1267 = vld [vmem:[%s565] sm:$0xff]
      %v1268 = vld [vmem:[%s565 + $0x8] sm:$0x3f]
      %v1269 = vld [vmem:[%s430] sm:$0xff]
      %v1270 = vmul.f32 %v1267, %v1269
      %v1271 = vadd.f32 %v1239, %v1270
      %v1272 = vmul.f32 %v1267, %v1018
      %v1273 = vadd.f32 %v1248, %v1272
      %v1274 = vmul.f32 %v1267, %v823
      %v1275 = vadd.f32 %v1257, %v1274
      %v1276 = vmul.f32 %v1267, %v684
      %v1277 = vadd.f32 %v1266, %v1276
      %v1278 = vmul.f32 %v1267, %v595
      %v1279 = vadd.f32 %v1278, 0.0
      %v1280 = vld [vmem:[%s436] sm:$0xff]
      %v1282 = vrot.slane %v1280, 7
      %v1284 = vmul.f32 %v1267, %v1282
      %v1285 = vmul.f32 %v1268, %v1282
      %v1288 = vrot.slane %v1284, 1
      %v1289 = vrot.slane %v1285, 1
      %v1290 = vsel %vm606, %v1288, %v1289
      %v1292 = vadd.f32 %v1271, %v1290
      %v1293 = vmul.f32 %v1267, %v1029
      %v1294 = vmul.f32 %v1268, %v1029
      %v1297 = vrot.slane %v1293, 1
      %v1298 = vrot.slane %v1294, 1
      %v1299 = vsel %vm606, %v1297, %v1298
      %v1301 = vadd.f32 %v1273, %v1299
      %v1302 = vmul.f32 %v1267, %v832
      %v1303 = vmul.f32 %v1268, %v832
      %v1306 = vrot.slane %v1302, 1
      %v1307 = vrot.slane %v1303, 1
      %v1308 = vsel %vm606, %v1306, %v1307
      %v1310 = vadd.f32 %v1275, %v1308
      %v1311 = vmul.f32 %v1267, %v691
      %v1312 = vmul.f32 %v1268, %v691
      %v1315 = vrot.slane %v1311, 1
      %v1316 = vrot.slane %v1312, 1
      %v1317 = vsel %vm606, %v1315, %v1316
      %v1319 = vadd.f32 %v1277, %v1317
      %v1320 = vmul.f32 %v1267, %v600
      %v1321 = vmul.f32 %v1268, %v600
      %v1324 = vrot.slane %v1320, 1
      %v1325 = vrot.slane %v1321, 1
      %v1326 = vsel %vm606, %v1324, %v1325
      %v1328 = vadd.f32 %v1279, %v1326
      %v1329 = vld [vmem:[%s442] sm:$0xff]
      %v1331 = vrot.slane %v1329, 6
      %v1333 = vmul.f32 %v1267, %v1331
      %v1334 = vmul.f32 %v1268, %v1331
      %v1337 = vrot.slane %v1333, 2
      %v1338 = vrot.slane %v1334, 2
      %v1339 = vsel %vm620, %v1337, %v1338
      %v1341 = vadd.f32 %v1292, %v1339
      %v1342 = vmul.f32 %v1267, %v1069
      %v1343 = vmul.f32 %v1268, %v1069
      %v1346 = vrot.slane %v1342, 2
      %v1347 = vrot.slane %v1343, 2
      %v1348 = vsel %vm620, %v1346, %v1347
      %v1350 = vadd.f32 %v1301, %v1348
      %v1351 = vmul.f32 %v1267, %v863
      %v1352 = vmul.f32 %v1268, %v863
      %v1355 = vrot.slane %v1351, 2
      %v1356 = vrot.slane %v1352, 2
      %v1357 = vsel %vm620, %v1355, %v1356
      %v1359 = vadd.f32 %v1310, %v1357
      %v1360 = vmul.f32 %v1267, %v713
      %v1361 = vmul.f32 %v1268, %v713
      %v1364 = vrot.slane %v1360, 2
      %v1365 = vrot.slane %v1361, 2
      %v1366 = vsel %vm620, %v1364, %v1365
      %v1368 = vadd.f32 %v1319, %v1366
      %v1369 = vmul.f32 %v1267, %v614
      %v1370 = vmul.f32 %v1268, %v614
      %v1373 = vrot.slane %v1369, 2
      %v1374 = vrot.slane %v1370, 2
      %v1375 = vsel %vm620, %v1373, %v1374
      %v1377 = vadd.f32 %v1328, %v1375
      %v1378 = vld [vmem:[%s448] sm:$0xff]
      %v1380 = vrot.slane %v1378, 5
      %v1382 = vmul.f32 %v1267, %v1380
      %v1383 = vmul.f32 %v1268, %v1380
      %v1386 = vrot.slane %v1382, 3
      %v1387 = vrot.slane %v1383, 3
      %v1388 = vsel %vm634, %v1386, %v1387
      %v1390 = vadd.f32 %v1341, %v1388
      %v1391 = vmul.f32 %v1267, %v1109
      %v1392 = vmul.f32 %v1268, %v1109
      %v1395 = vrot.slane %v1391, 3
      %v1396 = vrot.slane %v1392, 3
      %v1397 = vsel %vm634, %v1395, %v1396
      %v1399 = vadd.f32 %v1350, %v1397
      %v1400 = vmul.f32 %v1267, %v894
      %v1401 = vmul.f32 %v1268, %v894
      %v1404 = vrot.slane %v1400, 3
      %v1405 = vrot.slane %v1401, 3
      %v1406 = vsel %vm634, %v1404, %v1405
      %v1408 = vadd.f32 %v1359, %v1406
      %v1409 = vmul.f32 %v1267, %v735
      %v1410 = vmul.f32 %v1268, %v735
      %v1413 = vrot.slane %v1409, 3
      %v1414 = vrot.slane %v1410, 3
      %v1415 = vsel %vm634, %v1413, %v1414
      %v1417 = vadd.f32 %v1368, %v1415
      %v1418 = vmul.f32 %v1267, %v628
      %v1419 = vmul.f32 %v1268, %v628
      %v1422 = vrot.slane %v1418, 3
      %v1423 = vrot.slane %v1419, 3
      %v1424 = vsel %vm634, %v1422, %v1423
      %v1426 = vadd.f32 %v1377, %v1424
      %v1427 = vld [vmem:[%s454] sm:$0xff]
      %v1429 = vrot.slane %v1427, 4
      %v1431 = vmul.f32 %v1267, %v1429
      %v1432 = vmul.f32 %v1268, %v1429
      %v1435 = vrot.slane %v1431, 4
      %v1436 = vrot.slane %v1432, 4
      %v1437 = vsel %vm648, %v1435, %v1436
      %v1439 = vadd.f32 %v1390, %v1437
      %v1440 = vmul.f32 %v1267, %v1149
      %v1441 = vmul.f32 %v1268, %v1149
      %v1444 = vrot.slane %v1440, 4
      %v1445 = vrot.slane %v1441, 4
      %v1446 = vsel %vm648, %v1444, %v1445
      %v1448 = vadd.f32 %v1399, %v1446
      %v1449 = vmul.f32 %v1267, %v925
      %v1450 = vmul.f32 %v1268, %v925
      %v1453 = vrot.slane %v1449, 4
      %v1454 = vrot.slane %v1450, 4
      %v1455 = vsel %vm648, %v1453, %v1454
      %v1457 = vadd.f32 %v1408, %v1455
      %v1458 = vmul.f32 %v1267, %v757
      %v1459 = vmul.f32 %v1268, %v757
      %v1462 = vrot.slane %v1458, 4
      %v1463 = vrot.slane %v1459, 4
      %v1464 = vsel %vm648, %v1462, %v1463
      %v1466 = vadd.f32 %v1417, %v1464
      %v1467 = vmul.f32 %v1267, %v642
      %v1468 = vmul.f32 %v1268, %v642
      %v1471 = vrot.slane %v1467, 4
      %v1472 = vrot.slane %v1468, 4
      %v1473 = vsel %vm648, %v1471, %v1472
      %v1475 = vadd.f32 %v1426, %v1473
      %v1476 = vld [vmem:[%s460] sm:$0xff]
      %v1478 = vrot.slane %v1476, 3
      %v1480 = vmul.f32 %v1267, %v1478
      %v1481 = vmul.f32 %v1268, %v1478
      %v1484 = vrot.slane %v1480, 5
      %v1485 = vrot.slane %v1481, 5
      %v1486 = vsel %vm662, %v1484, %v1485
      %v1488 = vadd.f32 %v1439, %v1486
      %v1489 = vmul.f32 %v1267, %v1189
      %v1490 = vmul.f32 %v1268, %v1189
      %v1493 = vrot.slane %v1489, 5
      %v1494 = vrot.slane %v1490, 5
      %v1495 = vsel %vm662, %v1493, %v1494
      %v1497 = vadd.f32 %v1448, %v1495
      %v1498 = vmul.f32 %v1267, %v956
      %v1499 = vmul.f32 %v1268, %v956
      %v1502 = vrot.slane %v1498, 5
      %v1503 = vrot.slane %v1499, 5
      %v1504 = vsel %vm662, %v1502, %v1503
      %v1506 = vadd.f32 %v1457, %v1504
      %v1507 = vmul.f32 %v1267, %v779
      %v1508 = vmul.f32 %v1268, %v779
      %v1511 = vrot.slane %v1507, 5
      %v1512 = vrot.slane %v1508, 5
      %v1513 = vsel %vm662, %v1511, %v1512
      %v1515 = vadd.f32 %v1466, %v1513
      %v1516 = vmul.f32 %v1267, %v656
      %v1517 = vmul.f32 %v1268, %v656
      %v1520 = vrot.slane %v1516, 5
      %v1521 = vrot.slane %v1517, 5
      %v1522 = vsel %vm662, %v1520, %v1521
      %v1524 = vadd.f32 %v1475, %v1522
      %v1525 = vld [vmem:[%s466] sm:$0xff]
      %v1527 = vrot.slane %v1525, 2
      %v1529 = vmul.f32 %v1267, %v1527
      %v1530 = vmul.f32 %v1268, %v1527
      %v1533 = vrot.slane %v1529, 6
      %v1534 = vrot.slane %v1530, 6
      %v1535 = vsel %vm676, %v1533, %v1534
      %v1537 = vadd.f32 %v1488, %v1535
      %v1538 = vmul.f32 %v1267, %v1229
      %v1539 = vmul.f32 %v1268, %v1229
      %v1542 = vrot.slane %v1538, 6
      %v1543 = vrot.slane %v1539, 6
      %v1544 = vsel %vm676, %v1542, %v1543
      %v1546 = vadd.f32 %v1497, %v1544
      %v1547 = vmul.f32 %v1267, %v987
      %v1548 = vmul.f32 %v1268, %v987
      %v1551 = vrot.slane %v1547, 6
      %v1552 = vrot.slane %v1548, 6
      %v1553 = vsel %vm676, %v1551, %v1552
      %v1555 = vadd.f32 %v1506, %v1553
      %v1556 = vmul.f32 %v1267, %v801
      %v1557 = vmul.f32 %v1268, %v801
      %v1560 = vrot.slane %v1556, 6
      %v1561 = vrot.slane %v1557, 6
      %v1562 = vsel %vm676, %v1560, %v1561
      %v1564 = vadd.f32 %v1515, %v1562
      %v1565 = vmul.f32 %v1267, %v670
      %v1566 = vmul.f32 %v1268, %v670
      %v1569 = vrot.slane %v1565, 6
      %v1570 = vrot.slane %v1566, 6
      %v1571 = vsel %vm676, %v1569, %v1570
      %v1573 = vadd.f32 %v1524, %v1571
      %v1574 = vld [vmem:[%s569] sm:$0xff]
      %v1575 = vld [vmem:[%s569 + $0x8] sm:$0x3f]
      %v1576 = vld [vmem:[%s472] sm:$0xff]
      %v1577 = vmul.f32 %v1574, %v1576
      %v1578 = vadd.f32 %v1537, %v1577
      %v1579 = vmul.f32 %v1574, %v1269
      %v1580 = vadd.f32 %v1546, %v1579
      %v1581 = vmul.f32 %v1574, %v1018
      %v1582 = vadd.f32 %v1555, %v1581
      %v1583 = vmul.f32 %v1574, %v823
      %v1584 = vadd.f32 %v1564, %v1583
      %v1585 = vmul.f32 %v1574, %v684
      %v1586 = vadd.f32 %v1573, %v1585
      %v1587 = vmul.f32 %v1574, %v595
      %v1588 = vadd.f32 %v1587, 0.0
      %v1589 = vld [vmem:[%s478] sm:$0xff]
      %v1591 = vrot.slane %v1589, 7
      %v1593 = vmul.f32 %v1574, %v1591
      %v1594 = vmul.f32 %v1575, %v1591
      %v1597 = vrot.slane %v1593, 1
      %v1598 = vrot.slane %v1594, 1
      %v1599 = vsel %vm606, %v1597, %v1598
      %v1601 = vadd.f32 %v1578, %v1599
      %v1602 = vmul.f32 %v1574, %v1282
      %v1603 = vmul.f32 %v1575, %v1282
      %v1606 = vrot.slane %v1602, 1
      %v1607 = vrot.slane %v1603, 1
      %v1608 = vsel %vm606, %v1606, %v1607
      %v1610 = vadd.f32 %v1580, %v1608
      %v1611 = vmul.f32 %v1574, %v1029
      %v1612 = vmul.f32 %v1575, %v1029
      %v1615 = vrot.slane %v1611, 1
      %v1616 = vrot.slane %v1612, 1
      %v1617 = vsel %vm606, %v1615, %v1616
      %v1619 = vadd.f32 %v1582, %v1617
      %v1620 = vmul.f32 %v1574, %v832
      %v1621 = vmul.f32 %v1575, %v832
      %v1624 = vrot.slane %v1620, 1
      %v1625 = vrot.slane %v1621, 1
      %v1626 = vsel %vm606, %v1624, %v1625
      %v1628 = vadd.f32 %v1584, %v1626
      %v1629 = vmul.f32 %v1574, %v691
      %v1630 = vmul.f32 %v1575, %v691
      %v1633 = vrot.slane %v1629, 1
      %v1634 = vrot.slane %v1630, 1
      %v1635 = vsel %vm606, %v1633, %v1634
      %v1637 = vadd.f32 %v1586, %v1635
      %v1638 = vmul.f32 %v1574, %v600
      %v1639 = vmul.f32 %v1575, %v600
      %v1642 = vrot.slane %v1638, 1
      %v1643 = vrot.slane %v1639, 1
      %v1644 = vsel %vm606, %v1642, %v1643
      %v1646 = vadd.f32 %v1588, %v1644
      %v1647 = vld [vmem:[%s484] sm:$0xff]
      %v1649 = vrot.slane %v1647, 6
      %v1651 = vmul.f32 %v1574, %v1649
      %v1652 = vmul.f32 %v1575, %v1649
      %v1655 = vrot.slane %v1651, 2
      %v1656 = vrot.slane %v1652, 2
      %v1657 = vsel %vm620, %v1655, %v1656
      %v1659 = vadd.f32 %v1601, %v1657
      %v1660 = vmul.f32 %v1574, %v1331
      %v1661 = vmul.f32 %v1575, %v1331
      %v1664 = vrot.slane %v1660, 2
      %v1665 = vrot.slane %v1661, 2
      %v1666 = vsel %vm620, %v1664, %v1665
      %v1668 = vadd.f32 %v1610, %v1666
      %v1669 = vmul.f32 %v1574, %v1069
      %v1670 = vmul.f32 %v1575, %v1069
      %v1673 = vrot.slane %v1669, 2
      %v1674 = vrot.slane %v1670, 2
      %v1675 = vsel %vm620, %v1673, %v1674
      %v1677 = vadd.f32 %v1619, %v1675
      %v1678 = vmul.f32 %v1574, %v863
      %v1679 = vmul.f32 %v1575, %v863
      %v1682 = vrot.slane %v1678, 2
      %v1683 = vrot.slane %v1679, 2
      %v1684 = vsel %vm620, %v1682, %v1683
      %v1686 = vadd.f32 %v1628, %v1684
      %v1687 = vmul.f32 %v1574, %v713
      %v1688 = vmul.f32 %v1575, %v713
      %v1691 = vrot.slane %v1687, 2
      %v1692 = vrot.slane %v1688, 2
      %v1693 = vsel %vm620, %v1691, %v1692
      %v1695 = vadd.f32 %v1637, %v1693
      %v1696 = vmul.f32 %v1574, %v614
      %v1697 = vmul.f32 %v1575, %v614
      %v1700 = vrot.slane %v1696, 2
      %v1701 = vrot.slane %v1697, 2
      %v1702 = vsel %vm620, %v1700, %v1701
      %v1704 = vadd.f32 %v1646, %v1702
      %v1705 = vld [vmem:[%s490] sm:$0xff]
      %v1707 = vrot.slane %v1705, 5
      %v1709 = vmul.f32 %v1574, %v1707
      %v1710 = vmul.f32 %v1575, %v1707
      %v1713 = vrot.slane %v1709, 3
      %v1714 = vrot.slane %v1710, 3
      %v1715 = vsel %vm634, %v1713, %v1714
      %v1717 = vadd.f32 %v1659, %v1715
      %v1718 = vmul.f32 %v1574, %v1380
      %v1719 = vmul.f32 %v1575, %v1380
      %v1722 = vrot.slane %v1718, 3
      %v1723 = vrot.slane %v1719, 3
      %v1724 = vsel %vm634, %v1722, %v1723
      %v1726 = vadd.f32 %v1668, %v1724
      %v1727 = vmul.f32 %v1574, %v1109
      %v1728 = vmul.f32 %v1575, %v1109
      %v1731 = vrot.slane %v1727, 3
      %v1732 = vrot.slane %v1728, 3
      %v1733 = vsel %vm634, %v1731, %v1732
      %v1735 = vadd.f32 %v1677, %v1733
      %v1736 = vmul.f32 %v1574, %v894
      %v1737 = vmul.f32 %v1575, %v894
      %v1740 = vrot.slane %v1736, 3
      %v1741 = vrot.slane %v1737, 3
      %v1742 = vsel %vm634, %v1740, %v1741
      %v1744 = vadd.f32 %v1686, %v1742
      %v1745 = vmul.f32 %v1574, %v735
      %v1746 = vmul.f32 %v1575, %v735
      %v1749 = vrot.slane %v1745, 3
      %v1750 = vrot.slane %v1746, 3
      %v1751 = vsel %vm634, %v1749, %v1750
      %v1753 = vadd.f32 %v1695, %v1751
      %v1754 = vmul.f32 %v1574, %v628
      %v1755 = vmul.f32 %v1575, %v628
      %v1758 = vrot.slane %v1754, 3
      %v1759 = vrot.slane %v1755, 3
      %v1760 = vsel %vm634, %v1758, %v1759
      %v1762 = vadd.f32 %v1704, %v1760
      %v1763 = vld [vmem:[%s496] sm:$0xff]
      %v1765 = vrot.slane %v1763, 4
      %v1767 = vmul.f32 %v1574, %v1765
      %v1768 = vmul.f32 %v1575, %v1765
      %v1771 = vrot.slane %v1767, 4
      %v1772 = vrot.slane %v1768, 4
      %v1773 = vsel %vm648, %v1771, %v1772
      %v1775 = vadd.f32 %v1717, %v1773
      %v1776 = vmul.f32 %v1574, %v1429
      %v1777 = vmul.f32 %v1575, %v1429
      %v1780 = vrot.slane %v1776, 4
      %v1781 = vrot.slane %v1777, 4
      %v1782 = vsel %vm648, %v1780, %v1781
      %v1784 = vadd.f32 %v1726, %v1782
      %v1785 = vmul.f32 %v1574, %v1149
      %v1786 = vmul.f32 %v1575, %v1149
      %v1789 = vrot.slane %v1785, 4
      %v1790 = vrot.slane %v1786, 4
      %v1791 = vsel %vm648, %v1789, %v1790
      %v1793 = vadd.f32 %v1735, %v1791
      %v1794 = vmul.f32 %v1574, %v925
      %v1795 = vmul.f32 %v1575, %v925
      %v1798 = vrot.slane %v1794, 4
      %v1799 = vrot.slane %v1795, 4
      %v1800 = vsel %vm648, %v1798, %v1799
      %v1802 = vadd.f32 %v1744, %v1800
      %v1803 = vmul.f32 %v1574, %v757
      %v1804 = vmul.f32 %v1575, %v757
      %v1807 = vrot.slane %v1803, 4
      %v1808 = vrot.slane %v1804, 4
      %v1809 = vsel %vm648, %v1807, %v1808
      %v1811 = vadd.f32 %v1753, %v1809
      %v1812 = vmul.f32 %v1574, %v642
      %v1813 = vmul.f32 %v1575, %v642
      %v1816 = vrot.slane %v1812, 4
      %v1817 = vrot.slane %v1813, 4
      %v1818 = vsel %vm648, %v1816, %v1817
      %v1820 = vadd.f32 %v1762, %v1818
      %v1821 = vld [vmem:[%s502] sm:$0xff]
      %v1823 = vrot.slane %v1821, 3
      %v1825 = vmul.f32 %v1574, %v1823
      %v1826 = vmul.f32 %v1575, %v1823
      %v1829 = vrot.slane %v1825, 5
      %v1830 = vrot.slane %v1826, 5
      %v1831 = vsel %vm662, %v1829, %v1830
      %v1833 = vadd.f32 %v1775, %v1831
      %v1834 = vmul.f32 %v1574, %v1478
      %v1835 = vmul.f32 %v1575, %v1478
      %v1838 = vrot.slane %v1834, 5
      %v1839 = vrot.slane %v1835, 5
      %v1840 = vsel %vm662, %v1838, %v1839
      %v1842 = vadd.f32 %v1784, %v1840
      %v1843 = vmul.f32 %v1574, %v1189
      %v1844 = vmul.f32 %v1575, %v1189
      %v1847 = vrot.slane %v1843, 5
      %v1848 = vrot.slane %v1844, 5
      %v1849 = vsel %vm662, %v1847, %v1848
      %v1851 = vadd.f32 %v1793, %v1849
      %v1852 = vmul.f32 %v1574, %v956
      %v1853 = vmul.f32 %v1575, %v956
      %v1856 = vrot.slane %v1852, 5
      %v1857 = vrot.slane %v1853, 5
      %v1858 = vsel %vm662, %v1856, %v1857
      %v1860 = vadd.f32 %v1802, %v1858
      %v1861 = vmul.f32 %v1574, %v779
      %v1862 = vmul.f32 %v1575, %v779
      %v1865 = vrot.slane %v1861, 5
      %v1866 = vrot.slane %v1862, 5
      %v1867 = vsel %vm662, %v1865, %v1866
      %v1869 = vadd.f32 %v1811, %v1867
      %v1870 = vmul.f32 %v1574, %v656
      %v1871 = vmul.f32 %v1575, %v656
      %v1874 = vrot.slane %v1870, 5
      %v1875 = vrot.slane %v1871, 5
      %v1876 = vsel %vm662, %v1874, %v1875
      %v1878 = vadd.f32 %v1820, %v1876
      %v1879 = vld [vmem:[%s508] sm:$0xff]
      %v1881 = vrot.slane %v1879, 2
      %v1883 = vmul.f32 %v1574, %v1881
      %v1884 = vmul.f32 %v1575, %v1881
      %v1887 = vrot.slane %v1883, 6
      %v1888 = vrot.slane %v1884, 6
      %v1889 = vsel %vm676, %v1887, %v1888
      %v1891 = vadd.f32 %v1833, %v1889
      %v1892 = vmul.f32 %v1574, %v1527
      %v1893 = vmul.f32 %v1575, %v1527
      %v1896 = vrot.slane %v1892, 6
      %v1897 = vrot.slane %v1893, 6
      %v1898 = vsel %vm676, %v1896, %v1897
      %v1900 = vadd.f32 %v1842, %v1898
      %v1901 = vmul.f32 %v1574, %v1229
      %v1902 = vmul.f32 %v1575, %v1229
      %v1905 = vrot.slane %v1901, 6
      %v1906 = vrot.slane %v1902, 6
      %v1907 = vsel %vm676, %v1905, %v1906
      %v1909 = vadd.f32 %v1851, %v1907
      %v1910 = vmul.f32 %v1574, %v987
      %v1911 = vmul.f32 %v1575, %v987
      %v1914 = vrot.slane %v1910, 6
      %v1915 = vrot.slane %v1911, 6
      %v1916 = vsel %vm676, %v1914, %v1915
      %v1918 = vadd.f32 %v1860, %v1916
      %v1919 = vmul.f32 %v1574, %v801
      %v1920 = vmul.f32 %v1575, %v801
      %v1923 = vrot.slane %v1919, 6
      %v1924 = vrot.slane %v1920, 6
      %v1925 = vsel %vm676, %v1923, %v1924
      %v1927 = vadd.f32 %v1869, %v1925
      %v1928 = vmul.f32 %v1574, %v670
      %v1929 = vmul.f32 %v1575, %v670
      %v1932 = vrot.slane %v1928, 6
      %v1933 = vrot.slane %v1929, 6
      %v1934 = vsel %vm676, %v1932, %v1933
      %v1936 = vadd.f32 %v1878, %v1934
      %v1937 = vld [vmem:[%s573] sm:$0xff]
      %v1938 = vld [vmem:[%s573 + $0x8] sm:$0x3f]
      %v1939 = vld [vmem:[%s514] sm:$0xff]
      %v1940 = vmul.f32 %v1937, %v1939
      %v1941 = vadd.f32 %v1891, %v1940
      %v1942 = vmul.f32 %v1937, %v1576
      %v1943 = vadd.f32 %v1900, %v1942
      %v1944 = vmul.f32 %v1937, %v1269
      %v1945 = vadd.f32 %v1909, %v1944
      %v1946 = vmul.f32 %v1937, %v1018
      %v1947 = vadd.f32 %v1918, %v1946
      %v1948 = vmul.f32 %v1937, %v823
      %v1949 = vadd.f32 %v1927, %v1948
      %v1950 = vmul.f32 %v1937, %v684
      %v1951 = vadd.f32 %v1936, %v1950
      %v1952 = vmul.f32 %v1937, %v595
      %v1953 = vadd.f32 %v1952, 0.0
      %v1954 = vld [vmem:[%s520] sm:$0xff]
      %v1956 = vrot.slane %v1954, 7
      %v1958 = vmul.f32 %v1937, %v1956
      %v1959 = vmul.f32 %v1938, %v1956
      %v1962 = vrot.slane %v1958, 1
      %v1963 = vrot.slane %v1959, 1
      %v1964 = vsel %vm606, %v1962, %v1963
      %v1966 = vadd.f32 %v1941, %v1964
      %v1967 = vmul.f32 %v1937, %v1591
      %v1968 = vmul.f32 %v1938, %v1591
      %v1971 = vrot.slane %v1967, 1
      %v1972 = vrot.slane %v1968, 1
      %v1973 = vsel %vm606, %v1971, %v1972
      %v1975 = vadd.f32 %v1943, %v1973
      %v1976 = vmul.f32 %v1937, %v1282
      %v1977 = vmul.f32 %v1938, %v1282
      %v1980 = vrot.slane %v1976, 1
      %v1981 = vrot.slane %v1977, 1
      %v1982 = vsel %vm606, %v1980, %v1981
      %v1984 = vadd.f32 %v1945, %v1982
      %v1985 = vmul.f32 %v1937, %v1029
      %v1986 = vmul.f32 %v1938, %v1029
      %v1989 = vrot.slane %v1985, 1
      %v1990 = vrot.slane %v1986, 1
      %v1991 = vsel %vm606, %v1989, %v1990
      %v1993 = vadd.f32 %v1947, %v1991
      %v1994 = vmul.f32 %v1937, %v832
      %v1995 = vmul.f32 %v1938, %v832
      %v1998 = vrot.slane %v1994, 1
      %v1999 = vrot.slane %v1995, 1
      %v2000 = vsel %vm606, %v1998, %v1999
      %v2002 = vadd.f32 %v1949, %v2000
      %v2003 = vmul.f32 %v1937, %v691
      %v2004 = vmul.f32 %v1938, %v691
      %v2007 = vrot.slane %v2003, 1
      %v2008 = vrot.slane %v2004, 1
      %v2009 = vsel %vm606, %v2007, %v2008
      %v2011 = vadd.f32 %v1951, %v2009
      %v2012 = vmul.f32 %v1937, %v600
      %v2013 = vmul.f32 %v1938, %v600
      %v2016 = vrot.slane %v2012, 1
      %v2017 = vrot.slane %v2013, 1
      %v2018 = vsel %vm606, %v2016, %v2017
      %v2020 = vadd.f32 %v1953, %v2018
      %v2021 = vld [vmem:[%s526] sm:$0xff]
      %v2023 = vrot.slane %v2021, 6
      %v2025 = vmul.f32 %v1937, %v2023
      %v2026 = vmul.f32 %v1938, %v2023
      %v2029 = vrot.slane %v2025, 2
      %v2030 = vrot.slane %v2026, 2
      %v2031 = vsel %vm620, %v2029, %v2030
      %v2033 = vadd.f32 %v1966, %v2031
      %v2034 = vmul.f32 %v1937, %v1649
      %v2035 = vmul.f32 %v1938, %v1649
      %v2038 = vrot.slane %v2034, 2
      %v2039 = vrot.slane %v2035, 2
      %v2040 = vsel %vm620, %v2038, %v2039
      %v2042 = vadd.f32 %v1975, %v2040
      %v2043 = vmul.f32 %v1937, %v1331
      %v2044 = vmul.f32 %v1938, %v1331
      %v2047 = vrot.slane %v2043, 2
      %v2048 = vrot.slane %v2044, 2
      %v2049 = vsel %vm620, %v2047, %v2048
      %v2051 = vadd.f32 %v1984, %v2049
      %v2052 = vmul.f32 %v1937, %v1069
      %v2053 = vmul.f32 %v1938, %v1069
      %v2056 = vrot.slane %v2052, 2
      %v2057 = vrot.slane %v2053, 2
      %v2058 = vsel %vm620, %v2056, %v2057
      %v2060 = vadd.f32 %v1993, %v2058
      %v2061 = vmul.f32 %v1937, %v863
      %v2062 = vmul.f32 %v1938, %v863
      %v2065 = vrot.slane %v2061, 2
      %v2066 = vrot.slane %v2062, 2
      %v2067 = vsel %vm620, %v2065, %v2066
      %v2069 = vadd.f32 %v2002, %v2067
      %v2070 = vmul.f32 %v1937, %v713
      %v2071 = vmul.f32 %v1938, %v713
      %v2074 = vrot.slane %v2070, 2
      %v2075 = vrot.slane %v2071, 2
      %v2076 = vsel %vm620, %v2074, %v2075
      %v2078 = vadd.f32 %v2011, %v2076
      %v2079 = vmul.f32 %v1937, %v614
      %v2080 = vmul.f32 %v1938, %v614
      %v2083 = vrot.slane %v2079, 2
      %v2084 = vrot.slane %v2080, 2
      %v2085 = vsel %vm620, %v2083, %v2084
      %v2087 = vadd.f32 %v2020, %v2085
      %v2088 = vld [vmem:[%s532] sm:$0xff]
      %v2090 = vrot.slane %v2088, 5
      %v2092 = vmul.f32 %v1937, %v2090
      %v2093 = vmul.f32 %v1938, %v2090
      %v2096 = vrot.slane %v2092, 3
      %v2097 = vrot.slane %v2093, 3
      %v2098 = vsel %vm634, %v2096, %v2097
      %v2100 = vadd.f32 %v2033, %v2098
      %v2101 = vmul.f32 %v1937, %v1707
      %v2102 = vmul.f32 %v1938, %v1707
      %v2105 = vrot.slane %v2101, 3
      %v2106 = vrot.slane %v2102, 3
      %v2107 = vsel %vm634, %v2105, %v2106
      %v2109 = vadd.f32 %v2042, %v2107
      %v2110 = vmul.f32 %v1937, %v1380
      %v2111 = vmul.f32 %v1938, %v1380
      %v2114 = vrot.slane %v2110, 3
      %v2115 = vrot.slane %v2111, 3
      %v2116 = vsel %vm634, %v2114, %v2115
      %v2118 = vadd.f32 %v2051, %v2116
      %v2119 = vmul.f32 %v1937, %v1109
      %v2120 = vmul.f32 %v1938, %v1109
      %v2123 = vrot.slane %v2119, 3
      %v2124 = vrot.slane %v2120, 3
      %v2125 = vsel %vm634, %v2123, %v2124
      %v2127 = vadd.f32 %v2060, %v2125
      %v2128 = vmul.f32 %v1937, %v894
      %v2129 = vmul.f32 %v1938, %v894
      %v2132 = vrot.slane %v2128, 3
      %v2133 = vrot.slane %v2129, 3
      %v2134 = vsel %vm634, %v2132, %v2133
      %v2136 = vadd.f32 %v2069, %v2134
      %v2137 = vmul.f32 %v1937, %v735
      %v2138 = vmul.f32 %v1938, %v735
      %v2141 = vrot.slane %v2137, 3
      %v2142 = vrot.slane %v2138, 3
      %v2143 = vsel %vm634, %v2141, %v2142
      %v2145 = vadd.f32 %v2078, %v2143
      %v2146 = vmul.f32 %v1937, %v628
      %v2147 = vmul.f32 %v1938, %v628
      %v2150 = vrot.slane %v2146, 3
      %v2151 = vrot.slane %v2147, 3
      %v2152 = vsel %vm634, %v2150, %v2151
      %v2154 = vadd.f32 %v2087, %v2152
      %v2155 = vld [vmem:[%s538] sm:$0xff]
      %v2157 = vrot.slane %v2155, 4
      %v2159 = vmul.f32 %v1937, %v2157
      %v2160 = vmul.f32 %v1938, %v2157
      %v2163 = vrot.slane %v2159, 4
      %v2164 = vrot.slane %v2160, 4
      %v2165 = vsel %vm648, %v2163, %v2164
      %v2167 = vadd.f32 %v2100, %v2165
      %v2168 = vmul.f32 %v1937, %v1765
      %v2169 = vmul.f32 %v1938, %v1765
      %v2172 = vrot.slane %v2168, 4
      %v2173 = vrot.slane %v2169, 4
      %v2174 = vsel %vm648, %v2172, %v2173
      %v2176 = vadd.f32 %v2109, %v2174
      %v2177 = vmul.f32 %v1937, %v1429
      %v2178 = vmul.f32 %v1938, %v1429
      %v2181 = vrot.slane %v2177, 4
      %v2182 = vrot.slane %v2178, 4
      %v2183 = vsel %vm648, %v2181, %v2182
      %v2185 = vadd.f32 %v2118, %v2183
      %v2186 = vmul.f32 %v1937, %v1149
      %v2187 = vmul.f32 %v1938, %v1149
      %v2190 = vrot.slane %v2186, 4
      %v2191 = vrot.slane %v2187, 4
      %v2192 = vsel %vm648, %v2190, %v2191
      %v2194 = vadd.f32 %v2127, %v2192
      %v2195 = vmul.f32 %v1937, %v925
      %v2196 = vmul.f32 %v1938, %v925
      %v2199 = vrot.slane %v2195, 4
      %v2200 = vrot.slane %v2196, 4
      %v2201 = vsel %vm648, %v2199, %v2200
      %v2203 = vadd.f32 %v2136, %v2201
      %v2204 = vmul.f32 %v1937, %v757
      %v2205 = vmul.f32 %v1938, %v757
      %v2208 = vrot.slane %v2204, 4
      %v2209 = vrot.slane %v2205, 4
      %v2210 = vsel %vm648, %v2208, %v2209
      %v2212 = vadd.f32 %v2145, %v2210
      %v2213 = vmul.f32 %v1937, %v642
      %v2214 = vmul.f32 %v1938, %v642
      %v2217 = vrot.slane %v2213, 4
      %v2218 = vrot.slane %v2214, 4
      %v2219 = vsel %vm648, %v2217, %v2218
      %v2221 = vadd.f32 %v2154, %v2219
      %v2222 = vld [vmem:[%s544] sm:$0xff]
      %v2224 = vrot.slane %v2222, 3
      %v2226 = vmul.f32 %v1937, %v2224
      %v2227 = vmul.f32 %v1938, %v2224
      %v2230 = vrot.slane %v2226, 5
      %v2231 = vrot.slane %v2227, 5
      %v2232 = vsel %vm662, %v2230, %v2231
      %v2234 = vadd.f32 %v2167, %v2232
      %v2235 = vmul.f32 %v1937, %v1823
      %v2236 = vmul.f32 %v1938, %v1823
      %v2239 = vrot.slane %v2235, 5
      %v2240 = vrot.slane %v2236, 5
      %v2241 = vsel %vm662, %v2239, %v2240
      %v2243 = vadd.f32 %v2176, %v2241
      %v2244 = vmul.f32 %v1937, %v1478
      %v2245 = vmul.f32 %v1938, %v1478
      %v2248 = vrot.slane %v2244, 5
      %v2249 = vrot.slane %v2245, 5
      %v2250 = vsel %vm662, %v2248, %v2249
      %v2252 = vadd.f32 %v2185, %v2250
      %v2253 = vmul.f32 %v1937, %v1189
      %v2254 = vmul.f32 %v1938, %v1189
      %v2257 = vrot.slane %v2253, 5
      %v2258 = vrot.slane %v2254, 5
      %v2259 = vsel %vm662, %v2257, %v2258
      %v2261 = vadd.f32 %v2194, %v2259
      %v2262 = vmul.f32 %v1937, %v956
      %v2263 = vmul.f32 %v1938, %v956
      %v2266 = vrot.slane %v2262, 5
      %v2267 = vrot.slane %v2263, 5
      %v2268 = vsel %vm662, %v2266, %v2267
      %v2270 = vadd.f32 %v2203, %v2268
      %v2271 = vmul.f32 %v1937, %v779
      %v2272 = vmul.f32 %v1938, %v779
      %v2275 = vrot.slane %v2271, 5
      %v2276 = vrot.slane %v2272, 5
      %v2277 = vsel %vm662, %v2275, %v2276
      %v2279 = vadd.f32 %v2212, %v2277
      %v2280 = vmul.f32 %v1937, %v656
      %v2281 = vmul.f32 %v1938, %v656
      %v2284 = vrot.slane %v2280, 5
      %v2285 = vrot.slane %v2281, 5
      %v2286 = vsel %vm662, %v2284, %v2285
      %v2288 = vadd.f32 %v2221, %v2286
      %v2289 = vld [vmem:[%s550] sm:$0xff]
      %v2291 = vrot.slane %v2289, 2
      %v2293 = vmul.f32 %v1937, %v2291
      %v2294 = vmul.f32 %v1938, %v2291
      %v2297 = vrot.slane %v2293, 6
      %v2298 = vrot.slane %v2294, 6
      %v2299 = vsel %vm676, %v2297, %v2298
      %v2301 = vadd.f32 %v2234, %v2299
      %v2302 = vmul.f32 %v1937, %v1881
      %v2303 = vmul.f32 %v1938, %v1881
      %v2306 = vrot.slane %v2302, 6
      %v2307 = vrot.slane %v2303, 6
      %v2308 = vsel %vm676, %v2306, %v2307
      %v2310 = vadd.f32 %v2243, %v2308
      %v2311 = vmul.f32 %v1937, %v1527
      %v2312 = vmul.f32 %v1938, %v1527
      %v2315 = vrot.slane %v2311, 6
      %v2316 = vrot.slane %v2312, 6
      %v2317 = vsel %vm676, %v2315, %v2316
      %v2319 = vadd.f32 %v2252, %v2317
      %v2320 = vmul.f32 %v1937, %v1229
      %v2321 = vmul.f32 %v1938, %v1229
      %v2324 = vrot.slane %v2320, 6
      %v2325 = vrot.slane %v2321, 6
      %v2326 = vsel %vm676, %v2324, %v2325
      %v2328 = vadd.f32 %v2261, %v2326
      %v2329 = vmul.f32 %v1937, %v987
      %v2330 = vmul.f32 %v1938, %v987
      %v2333 = vrot.slane %v2329, 6
      %v2334 = vrot.slane %v2330, 6
      %v2335 = vsel %vm676, %v2333, %v2334
      %v2337 = vadd.f32 %v2270, %v2335
      %v2338 = vmul.f32 %v1937, %v801
      %v2339 = vmul.f32 %v1938, %v801
      %v2342 = vrot.slane %v2338, 6
      %v2343 = vrot.slane %v2339, 6
      %v2344 = vsel %vm676, %v2342, %v2343
      %v2346 = vadd.f32 %v2279, %v2344
      %v2347 = vmul.f32 %v1937, %v670
      %v2348 = vmul.f32 %v1938, %v670
      %v2351 = vrot.slane %v2347, 6
      %v2352 = vrot.slane %v2348, 6
      %v2353 = vsel %vm676, %v2351, %v2352
      %v2355 = vadd.f32 %v2288, %v2353
      %v2356 = vld [vmem:[%s577] sm:$0xff]
      %v2357 = vld [vmem:[%s577 + $0x8] sm:$0x3f]
      %v2358 = vmul.f32 %v2356, %v1939
      %v2359 = vadd.f32 %v2310, %v2358
      %v2360 = vmul.f32 %v2356, %v1576
      %v2361 = vadd.f32 %v2319, %v2360
      %v2362 = vmul.f32 %v2356, %v1269
      %v2363 = vadd.f32 %v2328, %v2362
      %v2364 = vmul.f32 %v2356, %v1018
      %v2365 = vadd.f32 %v2337, %v2364
      %v2366 = vmul.f32 %v2356, %v823
      %v2367 = vadd.f32 %v2346, %v2366
      %v2368 = vmul.f32 %v2356, %v684
      %v2369 = vadd.f32 %v2355, %v2368
      %v2370 = vmul.f32 %v2356, %v595
      %v2371 = vadd.f32 %v2370, 0.0
      %v2372 = vmul.f32 %v2356, %v1956
      %v2373 = vmul.f32 %v2357, %v1956
      %v2376 = vrot.slane %v2372, 1
      %v2377 = vrot.slane %v2373, 1
      %v2378 = vsel %vm606, %v2376, %v2377
      %v2380 = vadd.f32 %v2359, %v2378
      %v2381 = vmul.f32 %v2356, %v1591
      %v2382 = vmul.f32 %v2357, %v1591
      %v2385 = vrot.slane %v2381, 1
      %v2386 = vrot.slane %v2382, 1
      %v2387 = vsel %vm606, %v2385, %v2386
      %v2389 = vadd.f32 %v2361, %v2387
      %v2390 = vmul.f32 %v2356, %v1282
      %v2391 = vmul.f32 %v2357, %v1282
      %v2394 = vrot.slane %v2390, 1
      %v2395 = vrot.slane %v2391, 1
      %v2396 = vsel %vm606, %v2394, %v2395
      %v2398 = vadd.f32 %v2363, %v2396
      %v2399 = vmul.f32 %v2356, %v1029
      %v2400 = vmul.f32 %v2357, %v1029
      %v2403 = vrot.slane %v2399, 1
      %v2404 = vrot.slane %v2400, 1
      %v2405 = vsel %vm606, %v2403, %v2404
      %v2407 = vadd.f32 %v2365, %v2405
      %v2408 = vmul.f32 %v2356, %v832
      %v2409 = vmul.f32 %v2357, %v832
      %v2412 = vrot.slane %v2408, 1
      %v2413 = vrot.slane %v2409, 1
      %v2414 = vsel %vm606, %v2412, %v2413
      %v2416 = vadd.f32 %v2367, %v2414
      %v2417 = vmul.f32 %v2356, %v691
      %v2418 = vmul.f32 %v2357, %v691
      %v2421 = vrot.slane %v2417, 1
      %v2422 = vrot.slane %v2418, 1
      %v2423 = vsel %vm606, %v2421, %v2422
      %v2425 = vadd.f32 %v2369, %v2423
      %v2426 = vmul.f32 %v2356, %v600
      %v2427 = vmul.f32 %v2357, %v600
      %v2430 = vrot.slane %v2426, 1
      %v2431 = vrot.slane %v2427, 1
      %v2432 = vsel %vm606, %v2430, %v2431
      %v2434 = vadd.f32 %v2371, %v2432
      %v2435 = vmul.f32 %v2356, %v2023
      %v2436 = vmul.f32 %v2357, %v2023
      %v2439 = vrot.slane %v2435, 2
      %v2440 = vrot.slane %v2436, 2
      %v2441 = vsel %vm620, %v2439, %v2440
      %v2443 = vadd.f32 %v2380, %v2441
      %v2444 = vmul.f32 %v2356, %v1649
      %v2445 = vmul.f32 %v2357, %v1649
      %v2448 = vrot.slane %v2444, 2
      %v2449 = vrot.slane %v2445, 2
      %v2450 = vsel %vm620, %v2448, %v2449
      %v2452 = vadd.f32 %v2389, %v2450
      %v2453 = vmul.f32 %v2356, %v1331
      %v2454 = vmul.f32 %v2357, %v1331
      %v2457 = vrot.slane %v2453, 2
      %v2458 = vrot.slane %v2454, 2
      %v2459 = vsel %vm620, %v2457, %v2458
      %v2461 = vadd.f32 %v2398, %v2459
      %v2462 = vmul.f32 %v2356, %v1069
      %v2463 = vmul.f32 %v2357, %v1069
      %v2466 = vrot.slane %v2462, 2
      %v2467 = vrot.slane %v2463, 2
      %v2468 = vsel %vm620, %v2466, %v2467
      %v2470 = vadd.f32 %v2407, %v2468
      %v2471 = vmul.f32 %v2356, %v863
      %v2472 = vmul.f32 %v2357, %v863
      %v2475 = vrot.slane %v2471, 2
      %v2476 = vrot.slane %v2472, 2
      %v2477 = vsel %vm620, %v2475, %v2476
      %v2479 = vadd.f32 %v2416, %v2477
      %v2480 = vmul.f32 %v2356, %v713
      %v2481 = vmul.f32 %v2357, %v713
      %v2484 = vrot.slane %v2480, 2
      %v2485 = vrot.slane %v2481, 2
      %v2486 = vsel %vm620, %v2484, %v2485
      %v2488 = vadd.f32 %v2425, %v2486
      %v2489 = vmul.f32 %v2356, %v614
      %v2490 = vmul.f32 %v2357, %v614
      %v2493 = vrot.slane %v2489, 2
      %v2494 = vrot.slane %v2490, 2
      %v2495 = vsel %vm620, %v2493, %v2494
      %v2497 = vadd.f32 %v2434, %v2495
      %v2498 = vmul.f32 %v2356, %v2090
      %v2499 = vmul.f32 %v2357, %v2090
      %v2502 = vrot.slane %v2498, 3
      %v2503 = vrot.slane %v2499, 3
      %v2504 = vsel %vm634, %v2502, %v2503
      %v2506 = vadd.f32 %v2443, %v2504
      %v2507 = vmul.f32 %v2356, %v1707
      %v2508 = vmul.f32 %v2357, %v1707
      %v2511 = vrot.slane %v2507, 3
      %v2512 = vrot.slane %v2508, 3
      %v2513 = vsel %vm634, %v2511, %v2512
      %v2515 = vadd.f32 %v2452, %v2513
      %v2516 = vmul.f32 %v2356, %v1380
      %v2517 = vmul.f32 %v2357, %v1380
      %v2520 = vrot.slane %v2516, 3
      %v2521 = vrot.slane %v2517, 3
      %v2522 = vsel %vm634, %v2520, %v2521
      %v2524 = vadd.f32 %v2461, %v2522
      %v2525 = vmul.f32 %v2356, %v1109
      %v2526 = vmul.f32 %v2357, %v1109
      %v2529 = vrot.slane %v2525, 3
      %v2530 = vrot.slane %v2526, 3
      %v2531 = vsel %vm634, %v2529, %v2530
      %v2533 = vadd.f32 %v2470, %v2531
      %v2534 = vmul.f32 %v2356, %v894
      %v2535 = vmul.f32 %v2357, %v894
      %v2538 = vrot.slane %v2534, 3
      %v2539 = vrot.slane %v2535, 3
      %v2540 = vsel %vm634, %v2538, %v2539
      %v2542 = vadd.f32 %v2479, %v2540
      %v2543 = vmul.f32 %v2356, %v735
      %v2544 = vmul.f32 %v2357, %v735
      %v2547 = vrot.slane %v2543, 3
      %v2548 = vrot.slane %v2544, 3
      %v2549 = vsel %vm634, %v2547, %v2548
      %v2551 = vadd.f32 %v2488, %v2549
      %v2552 = vmul.f32 %v2356, %v628
      %v2553 = vmul.f32 %v2357, %v628
      %v2556 = vrot.slane %v2552, 3
      %v2557 = vrot.slane %v2553, 3
      %v2558 = vsel %vm634, %v2556, %v2557
      %v2560 = vadd.f32 %v2497, %v2558
      %v2561 = vmul.f32 %v2356, %v2157
      %v2562 = vmul.f32 %v2357, %v2157
      %v2565 = vrot.slane %v2561, 4
      %v2566 = vrot.slane %v2562, 4
      %v2567 = vsel %vm648, %v2565, %v2566
      %v2569 = vadd.f32 %v2506, %v2567
      %v2570 = vmul.f32 %v2356, %v1765
      %v2571 = vmul.f32 %v2357, %v1765
      %v2574 = vrot.slane %v2570, 4
      %v2575 = vrot.slane %v2571, 4
      %v2576 = vsel %vm648, %v2574, %v2575
      %v2578 = vadd.f32 %v2515, %v2576
      %v2579 = vmul.f32 %v2356, %v1429
      %v2580 = vmul.f32 %v2357, %v1429
      %v2583 = vrot.slane %v2579, 4
      %v2584 = vrot.slane %v2580, 4
      %v2585 = vsel %vm648, %v2583, %v2584
      %v2587 = vadd.f32 %v2524, %v2585
      %v2588 = vmul.f32 %v2356, %v1149
      %v2589 = vmul.f32 %v2357, %v1149
      %v2592 = vrot.slane %v2588, 4
      %v2593 = vrot.slane %v2589, 4
      %v2594 = vsel %vm648, %v2592, %v2593
      %v2596 = vadd.f32 %v2533, %v2594
      %v2597 = vmul.f32 %v2356, %v925
      %v2598 = vmul.f32 %v2357, %v925
      %v2601 = vrot.slane %v2597, 4
      %v2602 = vrot.slane %v2598, 4
      %v2603 = vsel %vm648, %v2601, %v2602
      %v2605 = vadd.f32 %v2542, %v2603
      %v2606 = vmul.f32 %v2356, %v757
      %v2607 = vmul.f32 %v2357, %v757
      %v2610 = vrot.slane %v2606, 4
      %v2611 = vrot.slane %v2607, 4
      %v2612 = vsel %vm648, %v2610, %v2611
      %v2614 = vadd.f32 %v2551, %v2612
      %v2615 = vmul.f32 %v2356, %v642
      %v2616 = vmul.f32 %v2357, %v642
      %v2619 = vrot.slane %v2615, 4
      %v2620 = vrot.slane %v2616, 4
      %v2621 = vsel %vm648, %v2619, %v2620
      %v2623 = vadd.f32 %v2560, %v2621
      %v2624 = vmul.f32 %v2356, %v2224
      %v2625 = vmul.f32 %v2357, %v2224
      %v2628 = vrot.slane %v2624, 5
      %v2629 = vrot.slane %v2625, 5
      %v2630 = vsel %vm662, %v2628, %v2629
      %v2632 = vadd.f32 %v2569, %v2630
      %v2633 = vmul.f32 %v2356, %v1823
      %v2634 = vmul.f32 %v2357, %v1823
      %v2637 = vrot.slane %v2633, 5
      %v2638 = vrot.slane %v2634, 5
      %v2639 = vsel %vm662, %v2637, %v2638
      %v2641 = vadd.f32 %v2578, %v2639
      %v2642 = vmul.f32 %v2356, %v1478
      %v2643 = vmul.f32 %v2357, %v1478
      %v2646 = vrot.slane %v2642, 5
      %v2647 = vrot.slane %v2643, 5
      %v2648 = vsel %vm662, %v2646, %v2647
      %v2650 = vadd.f32 %v2587, %v2648
      %v2651 = vmul.f32 %v2356, %v1189
      %v2652 = vmul.f32 %v2357, %v1189
      %v2655 = vrot.slane %v2651, 5
      %v2656 = vrot.slane %v2652, 5
      %v2657 = vsel %vm662, %v2655, %v2656
      %v2659 = vadd.f32 %v2596, %v2657
      %v2660 = vmul.f32 %v2356, %v956
      %v2661 = vmul.f32 %v2357, %v956
      %v2664 = vrot.slane %v2660, 5
      %v2665 = vrot.slane %v2661, 5
      %v2666 = vsel %vm662, %v2664, %v2665
      %v2668 = vadd.f32 %v2605, %v2666
      %v2669 = vmul.f32 %v2356, %v779
      %v2670 = vmul.f32 %v2357, %v779
      %v2673 = vrot.slane %v2669, 5
      %v2674 = vrot.slane %v2670, 5
      %v2675 = vsel %vm662, %v2673, %v2674
      %v2677 = vadd.f32 %v2614, %v2675
      %v2678 = vmul.f32 %v2356, %v656
      %v2679 = vmul.f32 %v2357, %v656
      %v2682 = vrot.slane %v2678, 5
      %v2683 = vrot.slane %v2679, 5
      %v2684 = vsel %vm662, %v2682, %v2683
      %v2686 = vadd.f32 %v2623, %v2684
      %v2687 = vmul.f32 %v2356, %v2291
      %v2688 = vmul.f32 %v2357, %v2291
      %v2691 = vrot.slane %v2687, 6
      %v2692 = vrot.slane %v2688, 6
      %v2693 = vsel %vm676, %v2691, %v2692
      %v2695 = vadd.f32 %v2632, %v2693
      %v2696 = vmul.f32 %v2356, %v1881
      %v2697 = vmul.f32 %v2357, %v1881
      %v2700 = vrot.slane %v2696, 6
      %v2701 = vrot.slane %v2697, 6
      %v2702 = vsel %vm676, %v2700, %v2701
      %v2704 = vadd.f32 %v2641, %v2702
      %v2705 = vmul.f32 %v2356, %v1527
      %v2706 = vmul.f32 %v2357, %v1527
      %v2709 = vrot.slane %v2705, 6
      %v2710 = vrot.slane %v2706, 6
      %v2711 = vsel %vm676, %v2709, %v2710
      %v2713 = vadd.f32 %v2650, %v2711
      %v2714 = vmul.f32 %v2356, %v1229
      %v2715 = vmul.f32 %v2357, %v1229
      %v2718 = vrot.slane %v2714, 6
      %v2719 = vrot.slane %v2715, 6
      %v2720 = vsel %vm676, %v2718, %v2719
      %v2722 = vadd.f32 %v2659, %v2720
      %v2723 = vmul.f32 %v2356, %v987
      %v2724 = vmul.f32 %v2357, %v987
      %v2727 = vrot.slane %v2723, 6
      %v2728 = vrot.slane %v2724, 6
      %v2729 = vsel %vm676, %v2727, %v2728
      %v2731 = vadd.f32 %v2668, %v2729
      %v2732 = vmul.f32 %v2356, %v801
      %v2733 = vmul.f32 %v2357, %v801
      %v2736 = vrot.slane %v2732, 6
      %v2737 = vrot.slane %v2733, 6
      %v2738 = vsel %vm676, %v2736, %v2737
      %v2740 = vadd.f32 %v2677, %v2738
      %v2741 = vmul.f32 %v2356, %v670
      %v2742 = vmul.f32 %v2357, %v670
      %v2745 = vrot.slane %v2741, 6
      %v2746 = vrot.slane %v2742, 6
      %v2747 = vsel %vm676, %v2745, %v2746
      %v2749 = vadd.f32 %v2686, %v2747
      %v2750 = vld [vmem:[%s581] sm:$0xff]
      %v2751 = vld [vmem:[%s581 + $0x8] sm:$0x3f]
      %v2752 = vmul.f32 %v2750, %v1939
      %v2753 = vadd.f32 %v2704, %v2752
      %v2754 = vmul.f32 %v2750, %v1576
      %v2755 = vadd.f32 %v2713, %v2754
      %v2756 = vmul.f32 %v2750, %v1269
      %v2757 = vadd.f32 %v2722, %v2756
      %v2758 = vmul.f32 %v2750, %v1018
      %v2759 = vadd.f32 %v2731, %v2758
      %v2760 = vmul.f32 %v2750, %v823
      %v2761 = vadd.f32 %v2740, %v2760
      %v2762 = vmul.f32 %v2750, %v684
      %v2763 = vadd.f32 %v2749, %v2762
      %v2764 = vmul.f32 %v2750, %v1956
      %v2765 = vmul.f32 %v2751, %v1956
      %v2768 = vrot.slane %v2764, 1
      %v2769 = vrot.slane %v2765, 1
      %v2770 = vsel %vm606, %v2768, %v2769
      %v2772 = vadd.f32 %v2753, %v2770
      %v2773 = vmul.f32 %v2750, %v1591
      %v2774 = vmul.f32 %v2751, %v1591
      %v2777 = vrot.slane %v2773, 1
      %v2778 = vrot.slane %v2774, 1
      %v2779 = vsel %vm606, %v2777, %v2778
      %v2781 = vadd.f32 %v2755, %v2779
      %v2782 = vmul.f32 %v2750, %v1282
      %v2783 = vmul.f32 %v2751, %v1282
      %v2786 = vrot.slane %v2782, 1
      %v2787 = vrot.slane %v2783, 1
      %v2788 = vsel %vm606, %v2786, %v2787
      %v2790 = vadd.f32 %v2757, %v2788
      %v2791 = vmul.f32 %v2750, %v1029
      %v2792 = vmul.f32 %v2751, %v1029
      %v2795 = vrot.slane %v2791, 1
      %v2796 = vrot.slane %v2792, 1
      %v2797 = vsel %vm606, %v2795, %v2796
      %v2799 = vadd.f32 %v2759, %v2797
      %v2800 = vmul.f32 %v2750, %v832
      %v2801 = vmul.f32 %v2751, %v832
      %v2804 = vrot.slane %v2800, 1
      %v2805 = vrot.slane %v2801, 1
      %v2806 = vsel %vm606, %v2804, %v2805
      %v2808 = vadd.f32 %v2761, %v2806
      %v2809 = vmul.f32 %v2750, %v691
      %v2810 = vmul.f32 %v2751, %v691
      %v2813 = vrot.slane %v2809, 1
      %v2814 = vrot.slane %v2810, 1
      %v2815 = vsel %vm606, %v2813, %v2814
      %v2817 = vadd.f32 %v2763, %v2815
      %v2818 = vmul.f32 %v2750, %v2023
      %v2819 = vmul.f32 %v2751, %v2023
      %v2822 = vrot.slane %v2818, 2
      %v2823 = vrot.slane %v2819, 2
      %v2824 = vsel %vm620, %v2822, %v2823
      %v2826 = vadd.f32 %v2772, %v2824
      %v2827 = vmul.f32 %v2750, %v1649
      %v2828 = vmul.f32 %v2751, %v1649
      %v2831 = vrot.slane %v2827, 2
      %v2832 = vrot.slane %v2828, 2
      %v2833 = vsel %vm620, %v2831, %v2832
      %v2835 = vadd.f32 %v2781, %v2833
      %v2836 = vmul.f32 %v2750, %v1331
      %v2837 = vmul.f32 %v2751, %v1331
      %v2840 = vrot.slane %v2836, 2
      %v2841 = vrot.slane %v2837, 2
      %v2842 = vsel %vm620, %v2840, %v2841
      %v2844 = vadd.f32 %v2790, %v2842
      %v2845 = vmul.f32 %v2750, %v1069
      %v2846 = vmul.f32 %v2751, %v1069
      %v2849 = vrot.slane %v2845, 2
      %v2850 = vrot.slane %v2846, 2
      %v2851 = vsel %vm620, %v2849, %v2850
      %v2853 = vadd.f32 %v2799, %v2851
      %v2854 = vmul.f32 %v2750, %v863
      %v2855 = vmul.f32 %v2751, %v863
      %v2858 = vrot.slane %v2854, 2
      %v2859 = vrot.slane %v2855, 2
      %v2860 = vsel %vm620, %v2858, %v2859
      %v2862 = vadd.f32 %v2808, %v2860
      %v2863 = vmul.f32 %v2750, %v713
      %v2864 = vmul.f32 %v2751, %v713
      %v2867 = vrot.slane %v2863, 2
      %v2868 = vrot.slane %v2864, 2
      %v2869 = vsel %vm620, %v2867, %v2868
      %v2871 = vadd.f32 %v2817, %v2869
      %v2872 = vmul.f32 %v2750, %v2090
      %v2873 = vmul.f32 %v2751, %v2090
      %v2876 = vrot.slane %v2872, 3
      %v2877 = vrot.slane %v2873, 3
      %v2878 = vsel %vm634, %v2876, %v2877
      %v2880 = vadd.f32 %v2826, %v2878
      %v2881 = vmul.f32 %v2750, %v1707
      %v2882 = vmul.f32 %v2751, %v1707
      %v2885 = vrot.slane %v2881, 3
      %v2886 = vrot.slane %v2882, 3
      %v2887 = vsel %vm634, %v2885, %v2886
      %v2889 = vadd.f32 %v2835, %v2887
      %v2890 = vmul.f32 %v2750, %v1380
      %v2891 = vmul.f32 %v2751, %v1380
      %v2894 = vrot.slane %v2890, 3
      %v2895 = vrot.slane %v2891, 3
      %v2896 = vsel %vm634, %v2894, %v2895
      %v2898 = vadd.f32 %v2844, %v2896
      %v2899 = vmul.f32 %v2750, %v1109
      %v2900 = vmul.f32 %v2751, %v1109
      %v2903 = vrot.slane %v2899, 3
      %v2904 = vrot.slane %v2900, 3
      %v2905 = vsel %vm634, %v2903, %v2904
      %v2907 = vadd.f32 %v2853, %v2905
      %v2908 = vmul.f32 %v2750, %v894
      %v2909 = vmul.f32 %v2751, %v894
      %v2912 = vrot.slane %v2908, 3
      %v2913 = vrot.slane %v2909, 3
      %v2914 = vsel %vm634, %v2912, %v2913
      %v2916 = vadd.f32 %v2862, %v2914
      %v2917 = vmul.f32 %v2750, %v735
      %v2918 = vmul.f32 %v2751, %v735
      %v2921 = vrot.slane %v2917, 3
      %v2922 = vrot.slane %v2918, 3
      %v2923 = vsel %vm634, %v2921, %v2922
      %v2925 = vadd.f32 %v2871, %v2923
      %v2926 = vmul.f32 %v2750, %v2157
      %v2927 = vmul.f32 %v2751, %v2157
      %v2930 = vrot.slane %v2926, 4
      %v2931 = vrot.slane %v2927, 4
      %v2932 = vsel %vm648, %v2930, %v2931
      %v2934 = vadd.f32 %v2880, %v2932
      %v2935 = vmul.f32 %v2750, %v1765
      %v2936 = vmul.f32 %v2751, %v1765
      %v2939 = vrot.slane %v2935, 4
      %v2940 = vrot.slane %v2936, 4
      %v2941 = vsel %vm648, %v2939, %v2940
      %v2943 = vadd.f32 %v2889, %v2941
      %v2944 = vmul.f32 %v2750, %v1429
      %v2945 = vmul.f32 %v2751, %v1429
      %v2948 = vrot.slane %v2944, 4
      %v2949 = vrot.slane %v2945, 4
      %v2950 = vsel %vm648, %v2948, %v2949
      %v2952 = vadd.f32 %v2898, %v2950
      %v2953 = vmul.f32 %v2750, %v1149
      %v2954 = vmul.f32 %v2751, %v1149
      %v2957 = vrot.slane %v2953, 4
      %v2958 = vrot.slane %v2954, 4
      %v2959 = vsel %vm648, %v2957, %v2958
      %v2961 = vadd.f32 %v2907, %v2959
      %v2962 = vmul.f32 %v2750, %v925
      %v2963 = vmul.f32 %v2751, %v925
      %v2966 = vrot.slane %v2962, 4
      %v2967 = vrot.slane %v2963, 4
      %v2968 = vsel %vm648, %v2966, %v2967
      %v2970 = vadd.f32 %v2916, %v2968
      %v2971 = vmul.f32 %v2750, %v757
      %v2972 = vmul.f32 %v2751, %v757
      %v2975 = vrot.slane %v2971, 4
      %v2976 = vrot.slane %v2972, 4
      %v2977 = vsel %vm648, %v2975, %v2976
      %v2979 = vadd.f32 %v2925, %v2977
      %v2980 = vmul.f32 %v2750, %v2224
      %v2981 = vmul.f32 %v2751, %v2224
      %v2984 = vrot.slane %v2980, 5
      %v2985 = vrot.slane %v2981, 5
      %v2986 = vsel %vm662, %v2984, %v2985
      %v2988 = vadd.f32 %v2934, %v2986
      %v2989 = vmul.f32 %v2750, %v1823
      %v2990 = vmul.f32 %v2751, %v1823
      %v2993 = vrot.slane %v2989, 5
      %v2994 = vrot.slane %v2990, 5
      %v2995 = vsel %vm662, %v2993, %v2994
      %v2997 = vadd.f32 %v2943, %v2995
      %v2998 = vmul.f32 %v2750, %v1478
      %v2999 = vmul.f32 %v2751, %v1478
      %v3002 = vrot.slane %v2998, 5
      %v3003 = vrot.slane %v2999, 5
      %v3004 = vsel %vm662, %v3002, %v3003
      %v3006 = vadd.f32 %v2952, %v3004
      %v3007 = vmul.f32 %v2750, %v1189
      %v3008 = vmul.f32 %v2751, %v1189
      %v3011 = vrot.slane %v3007, 5
      %v3012 = vrot.slane %v3008, 5
      %v3013 = vsel %vm662, %v3011, %v3012
      %v3015 = vadd.f32 %v2961, %v3013
      %v3016 = vmul.f32 %v2750, %v956
      %v3017 = vmul.f32 %v2751, %v956
      %v3020 = vrot.slane %v3016, 5
      %v3021 = vrot.slane %v3017, 5
      %v3022 = vsel %vm662, %v3020, %v3021
      %v3024 = vadd.f32 %v2970, %v3022
      %v3025 = vmul.f32 %v2750, %v779
      %v3026 = vmul.f32 %v2751, %v779
      %v3029 = vrot.slane %v3025, 5
      %v3030 = vrot.slane %v3026, 5
      %v3031 = vsel %vm662, %v3029, %v3030
      %v3033 = vadd.f32 %v2979, %v3031
      %v3034 = vmul.f32 %v2750, %v2291
      %v3035 = vmul.f32 %v2751, %v2291
      %v3038 = vrot.slane %v3034, 6
      %v3039 = vrot.slane %v3035, 6
      %v3040 = vsel %vm676, %v3038, %v3039
      %v3042 = vadd.f32 %v2988, %v3040
      %v3043 = vmul.f32 %v2750, %v1881
      %v3044 = vmul.f32 %v2751, %v1881
      %v3047 = vrot.slane %v3043, 6
      %v3048 = vrot.slane %v3044, 6
      %v3049 = vsel %vm676, %v3047, %v3048
      %v3051 = vadd.f32 %v2997, %v3049
      %v3052 = vmul.f32 %v2750, %v1527
      %v3053 = vmul.f32 %v2751, %v1527
      %v3056 = vrot.slane %v3052, 6
      %v3057 = vrot.slane %v3053, 6
      %v3058 = vsel %vm676, %v3056, %v3057
      %v3060 = vadd.f32 %v3006, %v3058
      %v3061 = vmul.f32 %v2750, %v1229
      %v3062 = vmul.f32 %v2751, %v1229
      %v3065 = vrot.slane %v3061, 6
      %v3066 = vrot.slane %v3062, 6
      %v3067 = vsel %vm676, %v3065, %v3066
      %v3069 = vadd.f32 %v3015, %v3067
      %v3070 = vmul.f32 %v2750, %v987
      %v3071 = vmul.f32 %v2751, %v987
      %v3074 = vrot.slane %v3070, 6
      %v3075 = vrot.slane %v3071, 6
      %v3076 = vsel %vm676, %v3074, %v3075
      %v3078 = vadd.f32 %v3024, %v3076
      %v3079 = vmul.f32 %v2750, %v801
      %v3080 = vmul.f32 %v2751, %v801
      %v3083 = vrot.slane %v3079, 6
      %v3084 = vrot.slane %v3080, 6
      %v3085 = vsel %vm676, %v3083, %v3084
      %v3087 = vadd.f32 %v3033, %v3085
      %v3088 = vld [vmem:[%s585] sm:$0xff]
      %v3089 = vld [vmem:[%s585 + $0x8] sm:$0x3f]
      %v3090 = vmul.f32 %v3088, %v1939
      %v3091 = vadd.f32 %v3051, %v3090
      %v3092 = vmul.f32 %v3088, %v1576
      %v3093 = vadd.f32 %v3060, %v3092
      %v3094 = vmul.f32 %v3088, %v1269
      %v3095 = vadd.f32 %v3069, %v3094
      %v3096 = vmul.f32 %v3088, %v1018
      %v3097 = vadd.f32 %v3078, %v3096
      %v3098 = vmul.f32 %v3088, %v823
      %v3099 = vadd.f32 %v3087, %v3098
      %v3100 = vmul.f32 %v3088, %v1956
      %v3101 = vmul.f32 %v3089, %v1956
      %v3104 = vrot.slane %v3100, 1
      %v3105 = vrot.slane %v3101, 1
      %v3106 = vsel %vm606, %v3104, %v3105
      %v3108 = vadd.f32 %v3091, %v3106
      %v3109 = vmul.f32 %v3088, %v1591
      %v3110 = vmul.f32 %v3089, %v1591
      %v3113 = vrot.slane %v3109, 1
      %v3114 = vrot.slane %v3110, 1
      %v3115 = vsel %vm606, %v3113, %v3114
      %v3117 = vadd.f32 %v3093, %v3115
      %v3118 = vmul.f32 %v3088, %v1282
      %v3119 = vmul.f32 %v3089, %v1282
      %v3122 = vrot.slane %v3118, 1
      %v3123 = vrot.slane %v3119, 1
      %v3124 = vsel %vm606, %v3122, %v3123
      %v3126 = vadd.f32 %v3095, %v3124
      %v3127 = vmul.f32 %v3088, %v1029
      %v3128 = vmul.f32 %v3089, %v1029
      %v3131 = vrot.slane %v3127, 1
      %v3132 = vrot.slane %v3128, 1
      %v3133 = vsel %vm606, %v3131, %v3132
      %v3135 = vadd.f32 %v3097, %v3133
      %v3136 = vmul.f32 %v3088, %v832
      %v3137 = vmul.f32 %v3089, %v832
      %v3140 = vrot.slane %v3136, 1
      %v3141 = vrot.slane %v3137, 1
      %v3142 = vsel %vm606, %v3140, %v3141
      %v3144 = vadd.f32 %v3099, %v3142
      %v3145 = vmul.f32 %v3088, %v2023
      %v3146 = vmul.f32 %v3089, %v2023
      %v3149 = vrot.slane %v3145, 2
      %v3150 = vrot.slane %v3146, 2
      %v3151 = vsel %vm620, %v3149, %v3150
      %v3153 = vadd.f32 %v3108, %v3151
      %v3154 = vmul.f32 %v3088, %v1649
      %v3155 = vmul.f32 %v3089, %v1649
      %v3158 = vrot.slane %v3154, 2
      %v3159 = vrot.slane %v3155, 2
      %v3160 = vsel %vm620, %v3158, %v3159
      %v3162 = vadd.f32 %v3117, %v3160
      %v3163 = vmul.f32 %v3088, %v1331
      %v3164 = vmul.f32 %v3089, %v1331
      %v3167 = vrot.slane %v3163, 2
      %v3168 = vrot.slane %v3164, 2
      %v3169 = vsel %vm620, %v3167, %v3168
      %v3171 = vadd.f32 %v3126, %v3169
      %v3172 = vmul.f32 %v3088, %v1069
      %v3173 = vmul.f32 %v3089, %v1069
      %v3176 = vrot.slane %v3172, 2
      %v3177 = vrot.slane %v3173, 2
      %v3178 = vsel %vm620, %v3176, %v3177
      %v3180 = vadd.f32 %v3135, %v3178
      %v3181 = vmul.f32 %v3088, %v863
      %v3182 = vmul.f32 %v3089, %v863
      %v3185 = vrot.slane %v3181, 2
      %v3186 = vrot.slane %v3182, 2
      %v3187 = vsel %vm620, %v3185, %v3186
      %v3189 = vadd.f32 %v3144, %v3187
      %v3190 = vmul.f32 %v3088, %v2090
      %v3191 = vmul.f32 %v3089, %v2090
      %v3194 = vrot.slane %v3190, 3
      %v3195 = vrot.slane %v3191, 3
      %v3196 = vsel %vm634, %v3194, %v3195
      %v3198 = vadd.f32 %v3153, %v3196
      %v3199 = vmul.f32 %v3088, %v1707
      %v3200 = vmul.f32 %v3089, %v1707
      %v3203 = vrot.slane %v3199, 3
      %v3204 = vrot.slane %v3200, 3
      %v3205 = vsel %vm634, %v3203, %v3204
      %v3207 = vadd.f32 %v3162, %v3205
      %v3208 = vmul.f32 %v3088, %v1380
      %v3209 = vmul.f32 %v3089, %v1380
      %v3212 = vrot.slane %v3208, 3
      %v3213 = vrot.slane %v3209, 3
      %v3214 = vsel %vm634, %v3212, %v3213
      %v3216 = vadd.f32 %v3171, %v3214
      %v3217 = vmul.f32 %v3088, %v1109
      %v3218 = vmul.f32 %v3089, %v1109
      %v3221 = vrot.slane %v3217, 3
      %v3222 = vrot.slane %v3218, 3
      %v3223 = vsel %vm634, %v3221, %v3222
      %v3225 = vadd.f32 %v3180, %v3223
      %v3226 = vmul.f32 %v3088, %v894
      %v3227 = vmul.f32 %v3089, %v894
      %v3230 = vrot.slane %v3226, 3
      %v3231 = vrot.slane %v3227, 3
      %v3232 = vsel %vm634, %v3230, %v3231
      %v3234 = vadd.f32 %v3189, %v3232
      %v3235 = vmul.f32 %v3088, %v2157
      %v3236 = vmul.f32 %v3089, %v2157
      %v3239 = vrot.slane %v3235, 4
      %v3240 = vrot.slane %v3236, 4
      %v3241 = vsel %vm648, %v3239, %v3240
      %v3243 = vadd.f32 %v3198, %v3241
      %v3244 = vmul.f32 %v3088, %v1765
      %v3245 = vmul.f32 %v3089, %v1765
      %v3248 = vrot.slane %v3244, 4
      %v3249 = vrot.slane %v3245, 4
      %v3250 = vsel %vm648, %v3248, %v3249
      %v3252 = vadd.f32 %v3207, %v3250
      %v3253 = vmul.f32 %v3088, %v1429
      %v3254 = vmul.f32 %v3089, %v1429
      %v3257 = vrot.slane %v3253, 4
      %v3258 = vrot.slane %v3254, 4
      %v3259 = vsel %vm648, %v3257, %v3258
      %v3261 = vadd.f32 %v3216, %v3259
      %v3262 = vmul.f32 %v3088, %v1149
      %v3263 = vmul.f32 %v3089, %v1149
      %v3266 = vrot.slane %v3262, 4
      %v3267 = vrot.slane %v3263, 4
      %v3268 = vsel %vm648, %v3266, %v3267
      %v3270 = vadd.f32 %v3225, %v3268
      %v3271 = vmul.f32 %v3088, %v925
      %v3272 = vmul.f32 %v3089, %v925
      %v3275 = vrot.slane %v3271, 4
      %v3276 = vrot.slane %v3272, 4
      %v3277 = vsel %vm648, %v3275, %v3276
      %v3279 = vadd.f32 %v3234, %v3277
      %v3280 = vmul.f32 %v3088, %v2224
      %v3281 = vmul.f32 %v3089, %v2224
      %v3284 = vrot.slane %v3280, 5
      %v3285 = vrot.slane %v3281, 5
      %v3286 = vsel %vm662, %v3284, %v3285
      %v3288 = vadd.f32 %v3243, %v3286
      %v3289 = vmul.f32 %v3088, %v1823
      %v3290 = vmul.f32 %v3089, %v1823
      %v3293 = vrot.slane %v3289, 5
      %v3294 = vrot.slane %v3290, 5
      %v3295 = vsel %vm662, %v3293, %v3294
      %v3297 = vadd.f32 %v3252, %v3295
      %v3298 = vmul.f32 %v3088, %v1478
      %v3299 = vmul.f32 %v3089, %v1478
      %v3302 = vrot.slane %v3298, 5
      %v3303 = vrot.slane %v3299, 5
      %v3304 = vsel %vm662, %v3302, %v3303
      %v3306 = vadd.f32 %v3261, %v3304
      %v3307 = vmul.f32 %v3088, %v1189
      %v3308 = vmul.f32 %v3089, %v1189
      %v3311 = vrot.slane %v3307, 5
      %v3312 = vrot.slane %v3308, 5
      %v3313 = vsel %vm662, %v3311, %v3312
      %v3315 = vadd.f32 %v3270, %v3313
      %v3316 = vmul.f32 %v3088, %v956
      %v3317 = vmul.f32 %v3089, %v956
      %v3320 = vrot.slane %v3316, 5
      %v3321 = vrot.slane %v3317, 5
      %v3322 = vsel %vm662, %v3320, %v3321
      %v3324 = vadd.f32 %v3279, %v3322
      %v3325 = vmul.f32 %v3088, %v2291
      %v3326 = vmul.f32 %v3089, %v2291
      %v3329 = vrot.slane %v3325, 6
      %v3330 = vrot.slane %v3326, 6
      %v3331 = vsel %vm676, %v3329, %v3330
      %v3333 = vadd.f32 %v3288, %v3331
      %v3334 = vmul.f32 %v3088, %v1881
      %v3335 = vmul.f32 %v3089, %v1881
      %v3338 = vrot.slane %v3334, 6
      %v3339 = vrot.slane %v3335, 6
      %v3340 = vsel %vm676, %v3338, %v3339
      %v3342 = vadd.f32 %v3297, %v3340
      %v3343 = vmul.f32 %v3088, %v1527
      %v3344 = vmul.f32 %v3089, %v1527
      %v3347 = vrot.slane %v3343, 6
      %v3348 = vrot.slane %v3344, 6
      %v3349 = vsel %vm676, %v3347, %v3348
      %v3351 = vadd.f32 %v3306, %v3349
      %v3352 = vmul.f32 %v3088, %v1229
      %v3353 = vmul.f32 %v3089, %v1229
      %v3356 = vrot.slane %v3352, 6
      %v3357 = vrot.slane %v3353, 6
      %v3358 = vsel %vm676, %v3356, %v3357
      %v3360 = vadd.f32 %v3315, %v3358
      %v3361 = vmul.f32 %v3088, %v987
      %v3362 = vmul.f32 %v3089, %v987
      %v3365 = vrot.slane %v3361, 6
      %v3366 = vrot.slane %v3362, 6
      %v3367 = vsel %vm676, %v3365, %v3366
      %v3369 = vadd.f32 %v3324, %v3367
      %v3370 = vld [vmem:[%s589] sm:$0xff]
      %v3371 = vld [vmem:[%s589 + $0x8] sm:$0x3f]
      %v3372 = vmul.f32 %v3370, %v1939
      %v3373 = vadd.f32 %v3342, %v3372
      %v3374 = vmul.f32 %v3370, %v1576
      %v3375 = vadd.f32 %v3351, %v3374
      %v3376 = vmul.f32 %v3370, %v1269
      %v3377 = vadd.f32 %v3360, %v3376
      %v3378 = vmul.f32 %v3370, %v1018
      %v3379 = vadd.f32 %v3369, %v3378
      %v3380 = vmul.f32 %v3370, %v1956
      %v3381 = vmul.f32 %v3371, %v1956
      %v3384 = vrot.slane %v3380, 1
      %v3385 = vrot.slane %v3381, 1
      %v3386 = vsel %vm606, %v3384, %v3385
      %v3388 = vadd.f32 %v3373, %v3386
      %v3389 = vmul.f32 %v3370, %v1591
      %v3390 = vmul.f32 %v3371, %v1591
      %v3393 = vrot.slane %v3389, 1
      %v3394 = vrot.slane %v3390, 1
      %v3395 = vsel %vm606, %v3393, %v3394
      %v3397 = vadd.f32 %v3375, %v3395
      %v3398 = vmul.f32 %v3370, %v1282
      %v3399 = vmul.f32 %v3371, %v1282
      %v3402 = vrot.slane %v3398, 1
      %v3403 = vrot.slane %v3399, 1
      %v3404 = vsel %vm606, %v3402, %v3403
      %v3406 = vadd.f32 %v3377, %v3404
      %v3407 = vmul.f32 %v3370, %v1029
      %v3408 = vmul.f32 %v3371, %v1029
      %v3411 = vrot.slane %v3407, 1
      %v3412 = vrot.slane %v3408, 1
      %v3413 = vsel %vm606, %v3411, %v3412
      %v3415 = vadd.f32 %v3379, %v3413
      %v3416 = vmul.f32 %v3370, %v2023
      %v3417 = vmul.f32 %v3371, %v2023
      %v3420 = vrot.slane %v3416, 2
      %v3421 = vrot.slane %v3417, 2
      %v3422 = vsel %vm620, %v3420, %v3421
      %v3424 = vadd.f32 %v3388, %v3422
      %v3425 = vmul.f32 %v3370, %v1649
      %v3426 = vmul.f32 %v3371, %v1649
      %v3429 = vrot.slane %v3425, 2
      %v3430 = vrot.slane %v3426, 2
      %v3431 = vsel %vm620, %v3429, %v3430
      %v3433 = vadd.f32 %v3397, %v3431
      %v3434 = vmul.f32 %v3370, %v1331
      %v3435 = vmul.f32 %v3371, %v1331
      %v3438 = vrot.slane %v3434, 2
      %v3439 = vrot.slane %v3435, 2
      %v3440 = vsel %vm620, %v3438, %v3439
      %v3442 = vadd.f32 %v3406, %v3440
      %v3443 = vmul.f32 %v3370, %v1069
      %v3444 = vmul.f32 %v3371, %v1069
      %v3447 = vrot.slane %v3443, 2
      %v3448 = vrot.slane %v3444, 2
      %v3449 = vsel %vm620, %v3447, %v3448
      %v3451 = vadd.f32 %v3415, %v3449
      %v3452 = vmul.f32 %v3370, %v2090
      %v3453 = vmul.f32 %v3371, %v2090
      %v3456 = vrot.slane %v3452, 3
      %v3457 = vrot.slane %v3453, 3
      %v3458 = vsel %vm634, %v3456, %v3457
      %v3460 = vadd.f32 %v3424, %v3458
      %v3461 = vmul.f32 %v3370, %v1707
      %v3462 = vmul.f32 %v3371, %v1707
      %v3465 = vrot.slane %v3461, 3
      %v3466 = vrot.slane %v3462, 3
      %v3467 = vsel %vm634, %v3465, %v3466
      %v3469 = vadd.f32 %v3433, %v3467
      %v3470 = vmul.f32 %v3370, %v1380
      %v3471 = vmul.f32 %v3371, %v1380
      %v3474 = vrot.slane %v3470, 3
      %v3475 = vrot.slane %v3471, 3
      %v3476 = vsel %vm634, %v3474, %v3475
      %v3478 = vadd.f32 %v3442, %v3476
      %v3479 = vmul.f32 %v3370, %v1109
      %v3480 = vmul.f32 %v3371, %v1109
      %v3483 = vrot.slane %v3479, 3
      %v3484 = vrot.slane %v3480, 3
      %v3485 = vsel %vm634, %v3483, %v3484
      %v3487 = vadd.f32 %v3451, %v3485
      %v3488 = vmul.f32 %v3370, %v2157
      %v3489 = vmul.f32 %v3371, %v2157
      %v3492 = vrot.slane %v3488, 4
      %v3493 = vrot.slane %v3489, 4
      %v3494 = vsel %vm648, %v3492, %v3493
      %v3496 = vadd.f32 %v3460, %v3494
      %v3497 = vmul.f32 %v3370, %v1765
      %v3498 = vmul.f32 %v3371, %v1765
      %v3501 = vrot.slane %v3497, 4
      %v3502 = vrot.slane %v3498, 4
      %v3503 = vsel %vm648, %v3501, %v3502
      %v3505 = vadd.f32 %v3469, %v3503
      %v3506 = vmul.f32 %v3370, %v1429
      %v3507 = vmul.f32 %v3371, %v1429
      %v3510 = vrot.slane %v3506, 4
      %v3511 = vrot.slane %v3507, 4
      %v3512 = vsel %vm648, %v3510, %v3511
      %v3514 = vadd.f32 %v3478, %v3512
      %v3515 = vmul.f32 %v3370, %v1149
      %v3516 = vmul.f32 %v3371, %v1149
      %v3519 = vrot.slane %v3515, 4
      %v3520 = vrot.slane %v3516, 4
      %v3521 = vsel %vm648, %v3519, %v3520
      %v3523 = vadd.f32 %v3487, %v3521
      %v3524 = vmul.f32 %v3370, %v2224
      %v3525 = vmul.f32 %v3371, %v2224
      %v3528 = vrot.slane %v3524, 5
      %v3529 = vrot.slane %v3525, 5
      %v3530 = vsel %vm662, %v3528, %v3529
      %v3532 = vadd.f32 %v3496, %v3530
      %v3533 = vmul.f32 %v3370, %v1823
      %v3534 = vmul.f32 %v3371, %v1823
      %v3537 = vrot.slane %v3533, 5
      %v3538 = vrot.slane %v3534, 5
      %v3539 = vsel %vm662, %v3537, %v3538
      %v3541 = vadd.f32 %v3505, %v3539
      %v3542 = vmul.f32 %v3370, %v1478
      %v3543 = vmul.f32 %v3371, %v1478
      %v3546 = vrot.slane %v3542, 5
      %v3547 = vrot.slane %v3543, 5
      %v3548 = vsel %vm662, %v3546, %v3547
      %v3550 = vadd.f32 %v3514, %v3548
      %v3551 = vmul.f32 %v3370, %v1189
      %v3552 = vmul.f32 %v3371, %v1189
      %v3555 = vrot.slane %v3551, 5
      %v3556 = vrot.slane %v3552, 5
      %v3557 = vsel %vm662, %v3555, %v3556
      %v3559 = vadd.f32 %v3523, %v3557
      %v3560 = vmul.f32 %v3370, %v2291
      %v3561 = vmul.f32 %v3371, %v2291
      %v3564 = vrot.slane %v3560, 6
      %v3565 = vrot.slane %v3561, 6
      %v3566 = vsel %vm676, %v3564, %v3565
      %v3568 = vadd.f32 %v3532, %v3566
      %v3569 = vmul.f32 %v3370, %v1881
      %v3570 = vmul.f32 %v3371, %v1881
      %v3573 = vrot.slane %v3569, 6
      %v3574 = vrot.slane %v3570, 6
      %v3575 = vsel %vm676, %v3573, %v3574
      %v3577 = vadd.f32 %v3541, %v3575
      %v3578 = vmul.f32 %v3370, %v1527
      %v3579 = vmul.f32 %v3371, %v1527
      %v3582 = vrot.slane %v3578, 6
      %v3583 = vrot.slane %v3579, 6
      %v3584 = vsel %vm676, %v3582, %v3583
      %v3586 = vadd.f32 %v3550, %v3584
      %v3587 = vmul.f32 %v3370, %v1229
      %v3588 = vmul.f32 %v3371, %v1229
      %v3591 = vrot.slane %v3587, 6
      %v3592 = vrot.slane %v3588, 6
      %v3593 = vsel %vm676, %v3591, %v3592
      %v3595 = vadd.f32 %v3559, %v3593
      %v3596 = vld [vmem:[%s237] sm:$0xff]
      %v3597 = vld [vmem:[%s237 + $0x8] sm:$0x3f]
      %v3598 = vmul.f32 %v3596, %v1939
      %v3599 = vadd.f32 %v3577, %v3598
      %v3600 = vmul.f32 %v3596, %v1576
      %v3601 = vadd.f32 %v3586, %v3600
      %v3602 = vmul.f32 %v3596, %v1269
      %v3603 = vadd.f32 %v3595, %v3602
      %v3604 = vmul.f32 %v3596, %v1956
      %v3605 = vmul.f32 %v3597, %v1956
      %v3608 = vrot.slane %v3604, 1
      %v3609 = vrot.slane %v3605, 1
      %v3610 = vsel %vm606, %v3608, %v3609
      %v3612 = vadd.f32 %v3599, %v3610
      %v3613 = vmul.f32 %v3596, %v1591
      %v3614 = vmul.f32 %v3597, %v1591
      %v3617 = vrot.slane %v3613, 1
      %v3618 = vrot.slane %v3614, 1
      %v3619 = vsel %vm606, %v3617, %v3618
      %v3621 = vadd.f32 %v3601, %v3619
      %v3622 = vmul.f32 %v3596, %v1282
      %v3623 = vmul.f32 %v3597, %v1282
      %v3626 = vrot.slane %v3622, 1
      %v3627 = vrot.slane %v3623, 1
      %v3628 = vsel %vm606, %v3626, %v3627
      %v3630 = vadd.f32 %v3603, %v3628
      %v3631 = vmul.f32 %v3596, %v2023
      %v3632 = vmul.f32 %v3597, %v2023
      %v3635 = vrot.slane %v3631, 2
      %v3636 = vrot.slane %v3632, 2
      %v3637 = vsel %vm620, %v3635, %v3636
      %v3639 = vadd.f32 %v3612, %v3637
      %v3640 = vmul.f32 %v3596, %v1649
      %v3641 = vmul.f32 %v3597, %v1649
      %v3644 = vrot.slane %v3640, 2
      %v3645 = vrot.slane %v3641, 2
      %v3646 = vsel %vm620, %v3644, %v3645
      %v3648 = vadd.f32 %v3621, %v3646
      %v3649 = vmul.f32 %v3596, %v1331
      %v3650 = vmul.f32 %v3597, %v1331
      %v3653 = vrot.slane %v3649, 2
      %v3654 = vrot.slane %v3650, 2
      %v3655 = vsel %vm620, %v3653, %v3654
      %v3657 = vadd.f32 %v3630, %v3655
      %v3658 = vmul.f32 %v3596, %v2090
      %v3659 = vmul.f32 %v3597, %v2090
      %v3662 = vrot.slane %v3658, 3
      %v3663 = vrot.slane %v3659, 3
      %v3664 = vsel %vm634, %v3662, %v3663
      %v3666 = vadd.f32 %v3639, %v3664
      %v3667 = vmul.f32 %v3596, %v1707
      %v3668 = vmul.f32 %v3597, %v1707
      %v3671 = vrot.slane %v3667, 3
      %v3672 = vrot.slane %v3668, 3
      %v3673 = vsel %vm634, %v3671, %v3672
      %v3675 = vadd.f32 %v3648, %v3673
      %v3676 = vmul.f32 %v3596, %v1380
      %v3677 = vmul.f32 %v3597, %v1380
      %v3680 = vrot.slane %v3676, 3
      %v3681 = vrot.slane %v3677, 3
      %v3682 = vsel %vm634, %v3680, %v3681
      %v3684 = vadd.f32 %v3657, %v3682
      %v3685 = vmul.f32 %v3596, %v2157
      %v3686 = vmul.f32 %v3597, %v2157
      %v3689 = vrot.slane %v3685, 4
      %v3690 = vrot.slane %v3686, 4
      %v3691 = vsel %vm648, %v3689, %v3690
      %v3693 = vadd.f32 %v3666, %v3691
      %v3694 = vmul.f32 %v3596, %v1765
      %v3695 = vmul.f32 %v3597, %v1765
      %v3698 = vrot.slane %v3694, 4
      %v3699 = vrot.slane %v3695, 4
      %v3700 = vsel %vm648, %v3698, %v3699
      %v3702 = vadd.f32 %v3675, %v3700
      %v3703 = vmul.f32 %v3596, %v1429
      %v3704 = vmul.f32 %v3597, %v1429
      %v3707 = vrot.slane %v3703, 4
      %v3708 = vrot.slane %v3704, 4
      %v3709 = vsel %vm648, %v3707, %v3708
      %v3711 = vadd.f32 %v3684, %v3709
      %v3712 = vmul.f32 %v3596, %v2224
      %v3713 = vmul.f32 %v3597, %v2224
      %v3716 = vrot.slane %v3712, 5
      %v3717 = vrot.slane %v3713, 5
      %v3718 = vsel %vm662, %v3716, %v3717
      %v3720 = vadd.f32 %v3693, %v3718
      %v3721 = vmul.f32 %v3596, %v1823
      %v3722 = vmul.f32 %v3597, %v1823
      %v3725 = vrot.slane %v3721, 5
      %v3726 = vrot.slane %v3722, 5
      %v3727 = vsel %vm662, %v3725, %v3726
      %v3729 = vadd.f32 %v3702, %v3727
      %v3730 = vmul.f32 %v3596, %v1478
      %v3731 = vmul.f32 %v3597, %v1478
      %v3734 = vrot.slane %v3730, 5
      %v3735 = vrot.slane %v3731, 5
      %v3736 = vsel %vm662, %v3734, %v3735
      %v3738 = vadd.f32 %v3711, %v3736
      %v3739 = vmul.f32 %v3596, %v2291
      %v3740 = vmul.f32 %v3597, %v2291
      %v3743 = vrot.slane %v3739, 6
      %v3744 = vrot.slane %v3740, 6
      %v3745 = vsel %vm676, %v3743, %v3744
      %v3747 = vadd.f32 %v3720, %v3745
      %v3748 = vmul.f32 %v3596, %v1881
      %v3749 = vmul.f32 %v3597, %v1881
      %v3752 = vrot.slane %v3748, 6
      %v3753 = vrot.slane %v3749, 6
      %v3754 = vsel %vm676, %v3752, %v3753
      %v3756 = vadd.f32 %v3729, %v3754
      %v3757 = vmul.f32 %v3596, %v1527
      %v3758 = vmul.f32 %v3597, %v1527
      %v3761 = vrot.slane %v3757, 6
      %v3762 = vrot.slane %v3758, 6
      %v3763 = vsel %vm676, %v3761, %v3762
      %v3765 = vadd.f32 %v3738, %v3763
      %v3766 = vld [vmem:[%s243] sm:$0xff]
      %v3767 = vld [vmem:[%s243 + $0x8] sm:$0x3f]
      %v3768 = vmul.f32 %v3766, %v1939
      %v3769 = vadd.f32 %v3756, %v3768
      %v3770 = vmul.f32 %v3766, %v1576
      %v3771 = vadd.f32 %v3765, %v3770
      %v3772 = vmul.f32 %v3766, %v1956
      %v3773 = vmul.f32 %v3767, %v1956
      %v3776 = vrot.slane %v3772, 1
      %v3777 = vrot.slane %v3773, 1
      %v3778 = vsel %vm606, %v3776, %v3777
      %v3780 = vadd.f32 %v3769, %v3778
      %v3781 = vmul.f32 %v3766, %v1591
      %v3782 = vmul.f32 %v3767, %v1591
      %v3785 = vrot.slane %v3781, 1
      %v3786 = vrot.slane %v3782, 1
      %v3787 = vsel %vm606, %v3785, %v3786
      %v3789 = vadd.f32 %v3771, %v3787
      %v3790 = vmul.f32 %v3766, %v2023
      %v3791 = vmul.f32 %v3767, %v2023
      %v3794 = vrot.slane %v3790, 2
      %v3795 = vrot.slane %v3791, 2
      %v3796 = vsel %vm620, %v3794, %v3795
      %v3798 = vadd.f32 %v3780, %v3796
      %v3799 = vmul.f32 %v3766, %v1649
      %v3800 = vmul.f32 %v3767, %v1649
      %v3803 = vrot.slane %v3799, 2
      %v3804 = vrot.slane %v3800, 2
      %v3805 = vsel %vm620, %v3803, %v3804
      %v3807 = vadd.f32 %v3789, %v3805
      %v3808 = vmul.f32 %v3766, %v2090
      %v3809 = vmul.f32 %v3767, %v2090
      %v3812 = vrot.slane %v3808, 3
      %v3813 = vrot.slane %v3809, 3
      %v3814 = vsel %vm634, %v3812, %v3813
      %v3816 = vadd.f32 %v3798, %v3814
      %v3817 = vmul.f32 %v3766, %v1707
      %v3818 = vmul.f32 %v3767, %v1707
      %v3821 = vrot.slane %v3817, 3
      %v3822 = vrot.slane %v3818, 3
      %v3823 = vsel %vm634, %v3821, %v3822
      %v3825 = vadd.f32 %v3807, %v3823
      %v3826 = vmul.f32 %v3766, %v2157
      %v3827 = vmul.f32 %v3767, %v2157
      %v3830 = vrot.slane %v3826, 4
      %v3831 = vrot.slane %v3827, 4
      %v3832 = vsel %vm648, %v3830, %v3831
      %v3834 = vadd.f32 %v3816, %v3832
      %v3835 = vmul.f32 %v3766, %v1765
      %v3836 = vmul.f32 %v3767, %v1765
      %v3839 = vrot.slane %v3835, 4
      %v3840 = vrot.slane %v3836, 4
      %v3841 = vsel %vm648, %v3839, %v3840
      %v3843 = vadd.f32 %v3825, %v3841
      %v3844 = vmul.f32 %v3766, %v2224
      %v3845 = vmul.f32 %v3767, %v2224
      %v3848 = vrot.slane %v3844, 5
      %v3849 = vrot.slane %v3845, 5
      %v3850 = vsel %vm662, %v3848, %v3849
      %v3852 = vadd.f32 %v3834, %v3850
      %v3853 = vmul.f32 %v3766, %v1823
      %v3854 = vmul.f32 %v3767, %v1823
      %v3857 = vrot.slane %v3853, 5
      %v3858 = vrot.slane %v3854, 5
      %v3859 = vsel %vm662, %v3857, %v3858
      %v3861 = vadd.f32 %v3843, %v3859
      %v3862 = vmul.f32 %v3766, %v2291
      %v3863 = vmul.f32 %v3767, %v2291
      %v3866 = vrot.slane %v3862, 6
      %v3867 = vrot.slane %v3863, 6
      %v3868 = vsel %vm676, %v3866, %v3867
      %v3870 = vadd.f32 %v3852, %v3868
      %v3871 = vmul.f32 %v3766, %v1881
      %v3872 = vmul.f32 %v3767, %v1881
      %v3875 = vrot.slane %v3871, 6
      %v3876 = vrot.slane %v3872, 6
      %v3877 = vsel %vm676, %v3875, %v3876
      %v3879 = vadd.f32 %v3861, %v3877
      %v3880 = vld [vmem:[%s249] sm:$0xff]
      %v3881 = vld [vmem:[%s249 + $0x8] sm:$0x3f]
      %v3882 = vmul.f32 %v3880, %v1939
      %v3883 = vadd.f32 %v3879, %v3882
      %v3884 = vmul.f32 %v3880, %v1956
      %v3885 = vmul.f32 %v3881, %v1956
      %v3888 = vrot.slane %v3884, 1
      %v3889 = vrot.slane %v3885, 1
      %v3890 = vsel %vm606, %v3888, %v3889
      %v3892 = vadd.f32 %v3883, %v3890
      %v3893 = vmul.f32 %v3880, %v2023
      %v3894 = vmul.f32 %v3881, %v2023
      %v3897 = vrot.slane %v3893, 2
      %v3898 = vrot.slane %v3894, 2
      %v3899 = vsel %vm620, %v3897, %v3898
      %v3901 = vadd.f32 %v3892, %v3899
      %v3902 = vmul.f32 %v3880, %v2090
      %v3903 = vmul.f32 %v3881, %v2090
      %v3906 = vrot.slane %v3902, 3
      %v3907 = vrot.slane %v3903, 3
      %v3908 = vsel %vm634, %v3906, %v3907
      %v3910 = vadd.f32 %v3901, %v3908
      %v3911 = vmul.f32 %v3880, %v2157
      %v3912 = vmul.f32 %v3881, %v2157
      %v3915 = vrot.slane %v3911, 4
      %v3916 = vrot.slane %v3912, 4
      %v3917 = vsel %vm648, %v3915, %v3916
      %v3919 = vadd.f32 %v3910, %v3917
      %v3920 = vmul.f32 %v3880, %v2224
      %v3921 = vmul.f32 %v3881, %v2224
      %v3924 = vrot.slane %v3920, 5
      %v3925 = vrot.slane %v3921, 5
      %v3926 = vsel %vm662, %v3924, %v3925
      %v3928 = vadd.f32 %v3919, %v3926
      %v3929 = vmul.f32 %v3880, %v2291
      %v3930 = vmul.f32 %v3881, %v2291
      %v3933 = vrot.slane %v3929, 6
      %v3934 = vrot.slane %v3930, 6
      %v3935 = vsel %vm676, %v3933, %v3934
      %v3937 = vadd.f32 %v3928, %v3935
      %v3939 = vlaneseq
      %v3940 = vshrl.u32 %v3939, 7
      %v3941 = vsub.s32 0, %v3940
      %v3942 = vrot.slane %v552, %v3941
      %v3944 = vadd.f32 %v2301, %v3942
      %v3945 = vadd.f32 %v2695, %v3942
      %v3946 = vadd.f32 %v3042, %v3942
      %v3947 = vadd.f32 %v3333, %v3942
      %v3948 = vadd.f32 %v3568, %v3942
      %v3949 = vadd.f32 %v3747, %v3942
      %v3950 = vadd.f32 %v3870, %v3942
      %v3951 = vadd.f32 %v3937, %v3942
      %3952 = vst [vmem:[%s232 + $0x1] sm:$0xff] %v3944
      %3953 = vst [vmem:[%s232 + $0x9] sm:$0xff] %v3945
      %3954 = vst [vmem:[%s232 + $0x11] sm:$0xff] %v3946
      %3955 = vst [vmem:[%s232 + $0x19] sm:$0xff] %v3947
      %3956 = vst [vmem:[%s232 + $0x21] sm:$0xff] %v3948
      %3957 = vst [vmem:[%s232 + $0x29] sm:$0xff] %v3949
      %3958 = vst [vmem:[%s232 + $0x31] sm:$0xff] %v3950
      %3959 = vst [vmem:[%s232 + $0x39] sm:$0xff] %v3951
      %p3960 = scmp.lt.s32.totalorder %s18, 1
      %s3961 = scalar_select %p3960, %s18, 1
      %p3962 = scmp.lt.s32.totalorder %s19, 0
      %s3963 = scalar_select %p3962, %s19, 0
      %s3964 = smul.addr %s3961, 9
      %s3965 = sadd.s32 %s3963, %s3964
      %s3966 = smul.addr %s3965, 8
      %s3967 = scalar_lea.vmem %s3, %s3966
      // Predicated region
      $region33: #{ppeg_forward.1} parent=31 // pred_check
        %p3968 = pneg %p126
      $region34: #{ppeg_forward.1} parent=31 // pred_check_branch
        %3970 = sbr.rel (%p3968) target = $region36
      $region35: #{ppeg_forward.1} parent=31 // pred_region
        _
      $region36: #{ppeg_forward.1} parent=31 // pred_fallthru
        _
    $region32: #{ppeg_forward.1} parent=5 // pred_fallthru
      _
    %p3971 = scmp.le.s32.totalorder 2, %s9
    // Predicated region
    $region37: #{ppeg_forward.1} parent=5 // pred_check
      %p3972 = pneg %p3971
    $region38: #{ppeg_forward.1} parent=5 // pred_check_branch
      %3974 = sbr.rel (%p3972) target = $region40
    $region39: #{ppeg_forward.1} parent=5 // pred_region
      %s3975 = ssub.s32 %s9, 2
      // Predicated region
      $region41: #{ppeg_forward.1} parent=39 // pred_check
        %p3976 = pneg %p132
      $region42: #{ppeg_forward.1} parent=39 // pred_check_branch
        %3978 = sbr.rel (%p3976) target = $region44
      $region43: #{ppeg_forward.1} parent=39 // pred_region
        %p3979 = scmp.lt.s32.totalorder %s20, 1
        %s3980 = scalar_select %p3979, %s20, 1
        %p3981 = scmp.lt.s32.totalorder %s21, 0
        %s3982 = scalar_select %p3981, %s21, 0
        %s3983 = smul.addr %s3980, 9
        %s3984 = sadd.s32 %s3982, %s3983
        %s3985 = smul.addr %s3984, 8
        %s3986 = scalar_lea.vmem %s3, %s3985
      $region44: #{ppeg_forward.1} parent=39 // pred_fallthru
        _
    $region40: #{ppeg_forward.1} parent=5 // pred_fallthru
      _
  $region6: #{ppeg_forward.1} parent=0 // loop_footer
    %s13 = sadd.s32 1, %s9
  $region7: #{ppeg_forward.1} parent=0 // loop_footer_branch
    %8 = sbr.rel target = $region3
  $region8: #{ppeg_forward.1} parent=0 // loop_exit
    _

</llo_original>
